<compile_context>
chip_gen: v7x
topology: tpu7x:2x2x1
jax: 0.10.0
libtpu: 0.0.40
codegen_flags: <defaults>
</compile_context>

<pallas_src>
import functools

import jax
import jax.numpy as jnp
from jax.experimental import pallas as pl
from jax.experimental.pallas import tpu as pltpu


TILE_M_MAX = 512    # rows of the im2col matrix per grid step (multiple of 8)
TILE_K_MAX = 2048   # contraction tile (multiple of 128)


def _round_up(x, m):
    return ((x + m - 1) // m) * m


# ---------------------------------------------------------------------------
# Pallas kernel: tiled (patches @ weight) with K-axis accumulation and fused
# LeakyReLU on the final K step.
# ---------------------------------------------------------------------------
def _matmul_act_kernel(p_ref, w_ref, o_ref, acc_ref, *, negative_slope):
    k = pl.program_id(1)

    @pl.when(k == 0)
    def _():
        acc_ref[...] = jnp.zeros_like(acc_ref)

    acc_ref[...] += jnp.dot(p_ref[...], w_ref[...],
                            preferred_element_type=jnp.float32)

    @pl.when(k == pl.num_programs(1) - 1)
    def _():
        acc = acc_ref[...]
        if negative_slope is not None:
            acc = jnp.where(acc >= 0.0, acc, negative_slope * acc)
        o_ref[...] = acc.astype(o_ref.dtype)


def _pallas_matmul_act(patches, wmat, *, negative_slope):
    """patches: (M, K) ; wmat: (K, Cout).  Returns f32 (M, Cout)."""
    m, k = patches.shape
    k_w, cout = wmat.shape
    assert k == k_w

    # --- M tiling: sublane-aligned, capped at TILE_M_MAX. ---
    m8 = _round_up(m, 8)
    if m8 > TILE_M_MAX:
        tile_m = TILE_M_MAX
        m_pad = _round_up(m, tile_m)
    else:
        tile_m = m8
        m_pad = m8

    # --- K tiling: full K if it fits, else lane-aligned 2048 slabs. ---
    if k <= TILE_K_MAX:
        tile_k = k
        k_pad = k
    else:
        tile_k = TILE_K_MAX
        k_pad = _round_up(k, tile_k)

    if (m_pad != m) or (k_pad != k):
        patches = jnp.pad(patches, ((0, m_pad - m), (0, k_pad - k)))
    if k_pad != k:
        wmat = jnp.pad(wmat, ((0, k_pad - k), (0, 0)))

    # bf16 inputs -> MXU peak; f32 accumulation in the kernel.
    patches = patches.astype(jnp.bfloat16)
    wmat = wmat.astype(jnp.bfloat16)

    grid = (m_pad // tile_m, k_pad // tile_k)
    flops = 2 * m_pad * k_pad * cout
    bytes_accessed = (m_pad * k_pad + k_pad * cout) * 2 + m_pad * cout * 4

    out = pl.pallas_call(
        functools.partial(_matmul_act_kernel, negative_slope=negative_slope),
        out_shape=jax.ShapeDtypeStruct((m_pad, cout), jnp.float32),
        grid=grid,
        in_specs=[
            pl.BlockSpec((tile_m, tile_k), lambda i, kk: (i, kk)),
            pl.BlockSpec((tile_k, cout), lambda i, kk: (kk, 0)),
        ],
        out_specs=pl.BlockSpec((tile_m, cout), lambda i, kk: (i, 0)),
        scratch_shapes=[pltpu.VMEM((tile_m, cout), jnp.float32)],
        compiler_params=pltpu.CompilerParams(
            dimension_semantics=("parallel", "arbitrary")),
        cost_estimate=pl.CostEstimate(
            flops=flops, transcendentals=0, bytes_accessed=bytes_accessed),
    )(patches, wmat)

    if m_pad != m:
        out = out[:m]
    return out


# ---------------------------------------------------------------------------
# Glue: im2col, weight packing, spectral norm (init-time weight scaling)
# ---------------------------------------------------------------------------
def _im2col(x_nhwc, ksize, stride, pad):
    """x_nhwc: (N, H, W, C) -> patches (N*Ho*Wo, ksize*ksize*C), ordering (kh, kw, ci)."""
    n, h, w, c = x_nhwc.shape
    ho = (h + 2 * pad - ksize) // stride + 1
    wo = (w + 2 * pad - ksize) // stride + 1
    xp = jnp.pad(x_nhwc, ((0, 0), (pad, pad), (pad, pad), (0, 0)))
    cols = []
    for ky in range(ksize):
        for kx in range(ksize):
            cols.append(
                xp[:, ky:ky + stride * ho:stride, kx:kx + stride * wo:stride, :]
            )
    patches = jnp.concatenate(cols, axis=-1)  # (N, Ho, Wo, k*k*C)
    return patches.reshape(n * ho * wo, ksize * ksize * c), (n, ho, wo)


def _pack_weight(w_oihw):
    """(Cout, Cin, kh, kw) -> (kh*kw*Cin, Cout), matching im2col ordering (kh, kw, ci)."""
    cout = w_oihw.shape[0]
    return jnp.transpose(w_oihw, (2, 3, 1, 0)).reshape(-1, cout)


def _spectral_normalize(w_oihw, key, n_power_iterations=1, eps=1e-12):
    """One power-iteration spectral norm (same scheme torch's spectral_norm applies)."""
    cout = w_oihw.shape[0]
    wm = w_oihw.reshape(cout, -1)
    u = jax.random.normal(key, (cout,), dtype=jnp.float32)
    u = u / (jnp.linalg.norm(u) + eps)
    v = None
    for _ in range(n_power_iterations):
        v = wm.T @ u
        v = v / (jnp.linalg.norm(v) + eps)
        u = wm @ v
        u = u / (jnp.linalg.norm(u) + eps)
    sigma = u @ (wm @ v)
    return w_oihw / sigma


def _conv_layer_pallas(x_nhwc, w_oihw, stride, *, negative_slope):
    """One 4x4 conv (pad=1, no bias) + fused activation via the Pallas matmul kernel."""
    # Cast before im2col so the 16x patch blowup lives in HBM as bf16.
    patches, (n, ho, wo) = _im2col(x_nhwc.astype(jnp.bfloat16),
                                   ksize=4, stride=stride, pad=1)
    wmat = _pack_weight(w_oihw)
    cout = wmat.shape[1]

    # Lane-pad tiny output channel counts (the final Cout=1 conv) to 128 so the
    # kernel's stores are unmasked / lane-dense; slice back on the host.
    cout_pad = 128 if cout < 64 else cout
    if cout_pad != cout:
        wmat = jnp.pad(wmat, ((0, 0), (0, cout_pad - cout)))

    out = _pallas_matmul_act(patches, wmat, negative_slope=negative_slope)
    if cout_pad != cout:
        out = out[:, :cout]
    return out.reshape(n, ho, wo, cout)


# ---------------------------------------------------------------------------
# Discriminator forward (mirrors the PyTorch module)
# ---------------------------------------------------------------------------
def init_discriminator_params(key, in_channels, gain=0.02):
    """Deterministic init: normal(0, gain) weights (init_weights 'normal'), no bias,
    then spectral normalization of each conv weight."""
    shapes = [
        (64, in_channels, 4, 4),
        (128, 64, 4, 4),
        (256, 128, 4, 4),
        (512, 256, 4, 4),
        (1, 512, 4, 4),
    ]
    params = []
    keys = jax.random.split(key, 2 * len(shapes))
    for i, shp in enumerate(shapes):
        w = gain * jax.random.normal(keys[2 * i], shp, dtype=jnp.float32)
        w = _spectral_normalize(w, keys[2 * i + 1])
        params.append(w)
    return params


def discriminator_forward(x_nchw, params, use_sigmoid=True):
    """Returns (outputs, [conv1..conv5]) with every tensor in NCHW, like PyTorch."""
    x = jnp.transpose(x_nchw, (0, 2, 3, 1))  # NCHW -> NHWC

    conv1 = _conv_layer_pallas(x, params[0], stride=2, negative_slope=0.2)
    conv2 = _conv_layer_pallas(conv1, params[1], stride=2, negative_slope=0.2)
    conv3 = _conv_layer_pallas(conv2, params[2], stride=2, negative_slope=0.2)
    conv4 = _conv_layer_pallas(conv3, params[3], stride=1, negative_slope=0.2)
    conv5_raw = _conv_layer_pallas(conv4, params[4], stride=1, negative_slope=None)

    if use_sigmoid:
        # conv5 output is tiny (N x Ho x Wo x 1); host-side sigmoid is cheaper
        # than a second 1-lane kernel output.
        outputs_nhwc = jax.nn.sigmoid(conv5_raw)
    else:
        outputs_nhwc = conv5_raw

    to_nchw = lambda t: jnp.transpose(t, (0, 3, 1, 2))
    feats = [to_nchw(conv1), to_nchw(conv2), to_nchw(conv3),
             to_nchw(conv4), to_nchw(conv5_raw)]
    return to_nchw(outputs_nhwc), feats


if __name__ == "__main__":
    key = jax.random.PRNGKey(0)
    k_x, k_w = jax.random.split(key)

    in_channels = 3
    # spatial 32 is the smallest round size for which all 5 convs stay valid
    # (32 -> 16 -> 8 -> 4 -> 3 -> 2).
    x = jax.random.normal(k_x, (2, in_channels, 32, 32), dtype=jnp.float32)

    params = init_discriminator_params(k_w, in_channels)

    fwd = jax.jit(lambda xx: discriminator_forward(xx, params, use_sigmoid=True))
    outputs, feats = fwd(x)
    jax.block_until_ready(outputs)
    jax.block_until_ready(feats)

    # sanity-check shapes against the PyTorch reference
    assert outputs.shape == (2, 1, 2, 2)
    assert feats[0].shape == (2, 64, 16, 16)
    assert feats[1].shape == (2, 128, 8, 8)
    assert feats[2].shape == (2, 256, 4, 4)
    assert feats[3].shape == (2, 512, 3, 3)
    assert feats[4].shape == (2, 1, 2, 2)

    # basic numeric sanity: sigmoid output in (0, 1), finite activations
    assert bool(jnp.all((outputs > 0.0) & (outputs < 1.0)))
    assert bool(jnp.all(jnp.isfinite(feats[3])))

    print("KERNEL_OK")
</pallas_src>

<mosaic_0001>
module attributes {stable_mosaic.version = 11 : i64} {
  func.func @_matmul_act_kernel(%arg0: i32, %arg1: i32, %arg2: memref<512x48xbf16, #tpu.memory_space<vmem>>, %arg3: memref<48x64xbf16, #tpu.memory_space<vmem>>, %arg4: memref<512x64xf32, #tpu.memory_space<vmem>>, %arg5: memref<512x64xf32, #tpu.memory_space<vmem>>) attributes {dimension_semantics = [#tpu.dimension_semantics<parallel>, #tpu.dimension_semantics<arbitrary>], iteration_bounds = array<i64: 1, 1>, scalar_prefetch = 0 : i64, scratch_operands = 1 : i64, tpu.core_type = #tpu.core_type<tc>, window_params = [{transform_indices = @transform_0, window_bounds = array<i64: 512, 48>}, {transform_indices = @transform_1, window_bounds = array<i64: 48, 64>}, {transform_indices = @transform_2, window_bounds = array<i64: 512, 64>}]} {
    %c0_i32 = arith.constant 0 : i32
    %0 = arith.cmpi eq, %arg1, %c0_i32 : i32
    %1 = arith.extui %0 : i1 to i32
    %c0_i32_0 = arith.constant 0 : i32
    %2 = arith.cmpi ne, %1, %c0_i32_0 : i32
    scf.if %2 {
      %cst_10 = arith.constant 0.000000e+00 : f32
      %12 = vector.broadcast %cst_10 : f32 to vector<512x64xf32>
      %c0_11 = arith.constant 0 : index
      %c0_12 = arith.constant 0 : index
      %13 = vector.load %arg5[%c0_11, %c0_12] : memref<512x64xf32, #tpu.memory_space<vmem>>, vector<512x64xf32>
      tpu.vector_store %arg5[%c0_11, %c0_12], %12 {strides = array<i32>} : memref<512x64xf32, #tpu.memory_space<vmem>>, vector<512x64xf32>,
    } else {
    }
    %c0 = arith.constant 0 : index
    %c0_1 = arith.constant 0 : index
    %3 = vector.load %arg5[%c0, %c0_1] : memref<512x64xf32, #tpu.memory_space<vmem>>, vector<512x64xf32>
    %c0_2 = arith.constant 0 : index
    %c0_3 = arith.constant 0 : index
    %4 = vector.load %arg2[%c0_2, %c0_3] : memref<512x48xbf16, #tpu.memory_space<vmem>>, vector<512x48xbf16>
    %c0_4 = arith.constant 0 : index
    %c0_5 = arith.constant 0 : index
    %5 = vector.load %arg3[%c0_4, %c0_5] : memref<48x64xbf16, #tpu.memory_space<vmem>>, vector<48x64xbf16>
    %cst = arith.constant dense<0.000000e+00> : vector<512x64xf32>
    %6 = tpu.matmul %4, %5, %cst {dimension_numbers = #tpu.dot_dimension_numbers<[1], [0], [0], [1], [0, 0, 1, 1], [], []>} : vector<512x48xbf16>, vector<48x64xbf16>, vector<512x64xf32> -> vector<512x64xf32>
    %7 = arith.addf %3, %6 : vector<512x64xf32>
    %c0_6 = arith.constant 0 : index
    %c0_7 = arith.constant 0 : index
    %8 = vector.load %arg5[%c0_6, %c0_7] : memref<512x64xf32, #tpu.memory_space<vmem>>, vector<512x64xf32>
    tpu.vector_store %arg5[%c0_6, %c0_7], %7 {strides = array<i32>} : memref<512x64xf32, #tpu.memory_space<vmem>>, vector<512x64xf32>,
    %c0_i32_8 = arith.constant 0 : i32
    %9 = arith.cmpi eq, %arg1, %c0_i32_8 : i32
    %10 = arith.extui %9 : i1 to i32
    %c0_i32_9 = arith.constant 0 : i32
    %11 = arith.cmpi ne, %10, %c0_i32_9 : i32
    scf.if %11 {
      %c0_10 = arith.constant 0 : index
      %c0_11 = arith.constant 0 : index
      %12 = vector.load %arg5[%c0_10, %c0_11] : memref<512x64xf32, #tpu.memory_space<vmem>>, vector<512x64xf32>
      %cst_12 = arith.constant 0.000000e+00 : f32
      %13 = vector.broadcast %cst_12 : f32 to vector<512x64xf32>
      %14 = arith.cmpf oge, %12, %13 : vector<512x64xf32>
      %cst_13 = arith.constant 2.000000e-01 : f32
      %15 = vector.broadcast %cst_13 : f32 to vector<512x64xf32>
      %16 = arith.mulf %15, %12 : vector<512x64xf32>
      %17 = arith.select %14, %12, %16 : vector<512x64xi1>, vector<512x64xf32>
      %c0_14 = arith.constant 0 : index
      %c0_15 = arith.constant 0 : index
      %18 = vector.load %arg4[%c0_14, %c0_15] : memref<512x64xf32, #tpu.memory_space<vmem>>, vector<512x64xf32>
      tpu.vector_store %arg4[%c0_14, %c0_15], %17 {strides = array<i32>} : memref<512x64xf32, #tpu.memory_space<vmem>>, vector<512x64xf32>,
    } else {
    }
    return
  }
  func.func @transform_0(%arg0: i32, %arg1: i32) -> (i32, i32) {
    %c0_i32 = arith.constant 0 : i32
    return %arg0, %arg1 : i32, i32
  }
  func.func @transform_1(%arg0: i32, %arg1: i32) -> (i32, i32) {
    %c0_i32 = arith.constant 0 : i32
    %c0_i32_0 = arith.constant 0 : i32
    return %arg1, %c0_i32 : i32, i32
  }
  func.func @transform_2(%arg0: i32, %arg1: i32) -> (i32, i32) {
    %c0_i32 = arith.constant 0 : i32
    %c0_i32_0 = arith.constant 0 : i32
    return %arg0, %c0_i32 : i32, i32
  }
}

module attributes {stable_mosaic.version = 11 : i64} {
  func.func @_matmul_act_kernel(%arg0: i32, %arg1: i32, %arg2: memref<128x1024xbf16, #tpu.memory_space<vmem>>, %arg3: memref<1024x128xbf16, #tpu.memory_space<vmem>>, %arg4: memref<128x128xf32, #tpu.memory_space<vmem>>, %arg5: memref<128x128xf32, #tpu.memory_space<vmem>>) attributes {dimension_semantics = [#tpu.dimension_semantics<parallel>, #tpu.dimension_semantics<arbitrary>], iteration_bounds = array<i64: 1, 1>, scalar_prefetch = 0 : i64, scratch_operands = 1 : i64, tpu.core_type = #tpu.core_type<tc>, window_params = [{transform_indices = @transform_0, window_bounds = array<i64: 128, 1024>}, {transform_indices = @transform_1, window_bounds = array<i64: 1024, 128>}, {transform_indices = @transform_2, window_bounds = array<i64: 128, 128>}]} {
    %c0_i32 = arith.constant 0 : i32
    %0 = arith.cmpi eq, %arg1, %c0_i32 : i32
    %1 = arith.extui %0 : i1 to i32
    %c0_i32_0 = arith.constant 0 : i32
    %2 = arith.cmpi ne, %1, %c0_i32_0 : i32
    scf.if %2 {
      %cst_10 = arith.constant 0.000000e+00 : f32
      %12 = vector.broadcast %cst_10 : f32 to vector<128x128xf32>
      %c0_11 = arith.constant 0 : index
      %c0_12 = arith.constant 0 : index
      %13 = vector.load %arg5[%c0_11, %c0_12] : memref<128x128xf32, #tpu.memory_space<vmem>>, vector<128x128xf32>
      tpu.vector_store %arg5[%c0_11, %c0_12], %12 {strides = array<i32>} : memref<128x128xf32, #tpu.memory_space<vmem>>, vector<128x128xf32>,
    } else {
    }
    %c0 = arith.constant 0 : index
    %c0_1 = arith.constant 0 : index
    %3 = vector.load %arg5[%c0, %c0_1] : memref<128x128xf32, #tpu.memory_space<vmem>>, vector<128x128xf32>
    %c0_2 = arith.constant 0 : index
    %c0_3 = arith.constant 0 : index
    %4 = vector.load %arg2[%c0_2, %c0_3] : memref<128x1024xbf16, #tpu.memory_space<vmem>>, vector<128x1024xbf16>
    %c0_4 = arith.constant 0 : index
    %c0_5 = arith.constant 0 : index
    %5 = vector.load %arg3[%c0_4, %c0_5] : memref<1024x128xbf16, #tpu.memory_space<vmem>>, vector<1024x128xbf16>
    %cst = arith.constant dense<0.000000e+00> : vector<128x128xf32>
    %6 = tpu.matmul %4, %5, %cst {dimension_numbers = #tpu.dot_dimension_numbers<[1], [0], [0], [1], [0, 0, 1, 1], [], []>} : vector<128x1024xbf16>, vector<1024x128xbf16>, vector<128x128xf32> -> vector<128x128xf32>
    %7 = arith.addf %3, %6 : vector<128x128xf32>
    %c0_6 = arith.constant 0 : index
    %c0_7 = arith.constant 0 : index
    %8 = vector.load %arg5[%c0_6, %c0_7] : memref<128x128xf32, #tpu.memory_space<vmem>>, vector<128x128xf32>
    tpu.vector_store %arg5[%c0_6, %c0_7], %7 {strides = array<i32>} : memref<128x128xf32, #tpu.memory_space<vmem>>, vector<128x128xf32>,
    %c0_i32_8 = arith.constant 0 : i32
    %9 = arith.cmpi eq, %arg1, %c0_i32_8 : i32
    %10 = arith.extui %9 : i1 to i32
    %c0_i32_9 = arith.constant 0 : i32
    %11 = arith.cmpi ne, %10, %c0_i32_9 : i32
    scf.if %11 {
      %c0_10 = arith.constant 0 : index
      %c0_11 = arith.constant 0 : index
      %12 = vector.load %arg5[%c0_10, %c0_11] : memref<128x128xf32, #tpu.memory_space<vmem>>, vector<128x128xf32>
      %cst_12 = arith.constant 0.000000e+00 : f32
      %13 = vector.broadcast %cst_12 : f32 to vector<128x128xf32>
      %14 = arith.cmpf oge, %12, %13 : vector<128x128xf32>
      %cst_13 = arith.constant 2.000000e-01 : f32
      %15 = vector.broadcast %cst_13 : f32 to vector<128x128xf32>
      %16 = arith.mulf %15, %12 : vector<128x128xf32>
      %17 = arith.select %14, %12, %16 : vector<128x128xi1>, vector<128x128xf32>
      %c0_14 = arith.constant 0 : index
      %c0_15 = arith.constant 0 : index
      %18 = vector.load %arg4[%c0_14, %c0_15] : memref<128x128xf32, #tpu.memory_space<vmem>>, vector<128x128xf32>
      tpu.vector_store %arg4[%c0_14, %c0_15], %17 {strides = array<i32>} : memref<128x128xf32, #tpu.memory_space<vmem>>, vector<128x128xf32>,
    } else {
    }
    return
  }
  func.func @transform_0(%arg0: i32, %arg1: i32) -> (i32, i32) {
    %c0_i32 = arith.constant 0 : i32
    return %arg0, %arg1 : i32, i32
  }
  func.func @transform_1(%arg0: i32, %arg1: i32) -> (i32, i32) {
    %c0_i32 = arith.constant 0 : i32
    %c0_i32_0 = arith.constant 0 : i32
    return %arg1, %c0_i32 : i32, i32
  }
  func.func @transform_2(%arg0: i32, %arg1: i32) -> (i32, i32) {
    %c0_i32 = arith.constant 0 : i32
    %c0_i32_0 = arith.constant 0 : i32
    return %arg0, %c0_i32 : i32, i32
  }
}

module attributes {stable_mosaic.version = 11 : i64} {
  func.func @_matmul_act_kernel(%arg0: i32, %arg1: i32, %arg2: memref<32x2048xbf16, #tpu.memory_space<vmem>>, %arg3: memref<2048x256xbf16, #tpu.memory_space<vmem>>, %arg4: memref<32x256xf32, #tpu.memory_space<vmem>>, %arg5: memref<32x256xf32, #tpu.memory_space<vmem>>) attributes {dimension_semantics = [#tpu.dimension_semantics<parallel>, #tpu.dimension_semantics<arbitrary>], iteration_bounds = array<i64: 1, 1>, scalar_prefetch = 0 : i64, scratch_operands = 1 : i64, tpu.core_type = #tpu.core_type<tc>, window_params = [{transform_indices = @transform_0, window_bounds = array<i64: 32, 2048>}, {transform_indices = @transform_1, window_bounds = array<i64: 2048, 256>}, {transform_indices = @transform_2, window_bounds = array<i64: 32, 256>}]} {
    %c0_i32 = arith.constant 0 : i32
    %0 = arith.cmpi eq, %arg1, %c0_i32 : i32
    %1 = arith.extui %0 : i1 to i32
    %c0_i32_0 = arith.constant 0 : i32
    %2 = arith.cmpi ne, %1, %c0_i32_0 : i32
    scf.if %2 {
      %cst_10 = arith.constant 0.000000e+00 : f32
      %12 = vector.broadcast %cst_10 : f32 to vector<32x256xf32>
      %c0_11 = arith.constant 0 : index
      %c0_12 = arith.constant 0 : index
      %13 = vector.load %arg5[%c0_11, %c0_12] : memref<32x256xf32, #tpu.memory_space<vmem>>, vector<32x256xf32>
      tpu.vector_store %arg5[%c0_11, %c0_12], %12 {strides = array<i32>} : memref<32x256xf32, #tpu.memory_space<vmem>>, vector<32x256xf32>,
    } else {
    }
    %c0 = arith.constant 0 : index
    %c0_1 = arith.constant 0 : index
    %3 = vector.load %arg5[%c0, %c0_1] : memref<32x256xf32, #tpu.memory_space<vmem>>, vector<32x256xf32>
    %c0_2 = arith.constant 0 : index
    %c0_3 = arith.constant 0 : index
    %4 = vector.load %arg2[%c0_2, %c0_3] : memref<32x2048xbf16, #tpu.memory_space<vmem>>, vector<32x2048xbf16>
    %c0_4 = arith.constant 0 : index
    %c0_5 = arith.constant 0 : index
    %5 = vector.load %arg3[%c0_4, %c0_5] : memref<2048x256xbf16, #tpu.memory_space<vmem>>, vector<2048x256xbf16>
    %cst = arith.constant dense<0.000000e+00> : vector<32x256xf32>
    %6 = tpu.matmul %4, %5, %cst {dimension_numbers = #tpu.dot_dimension_numbers<[1], [0], [0], [1], [0, 0, 1, 1], [], []>} : vector<32x2048xbf16>, vector<2048x256xbf16>, vector<32x256xf32> -> vector<32x256xf32>
    %7 = arith.addf %3, %6 : vector<32x256xf32>
    %c0_6 = arith.constant 0 : index
    %c0_7 = arith.constant 0 : index
    %8 = vector.load %arg5[%c0_6, %c0_7] : memref<32x256xf32, #tpu.memory_space<vmem>>, vector<32x256xf32>
    tpu.vector_store %arg5[%c0_6, %c0_7], %7 {strides = array<i32>} : memref<32x256xf32, #tpu.memory_space<vmem>>, vector<32x256xf32>,
    %c0_i32_8 = arith.constant 0 : i32
    %9 = arith.cmpi eq, %arg1, %c0_i32_8 : i32
    %10 = arith.extui %9 : i1 to i32
    %c0_i32_9 = arith.constant 0 : i32
    %11 = arith.cmpi ne, %10, %c0_i32_9 : i32
    scf.if %11 {
      %c0_10 = arith.constant 0 : index
      %c0_11 = arith.constant 0 : index
      %12 = vector.load %arg5[%c0_10, %c0_11] : memref<32x256xf32, #tpu.memory_space<vmem>>, vector<32x256xf32>
      %cst_12 = arith.constant 0.000000e+00 : f32
      %13 = vector.broadcast %cst_12 : f32 to vector<32x256xf32>
      %14 = arith.cmpf oge, %12, %13 : vector<32x256xf32>
      %cst_13 = arith.constant 2.000000e-01 : f32
      %15 = vector.broadcast %cst_13 : f32 to vector<32x256xf32>
      %16 = arith.mulf %15, %12 : vector<32x256xf32>
      %17 = arith.select %14, %12, %16 : vector<32x256xi1>, vector<32x256xf32>
      %c0_14 = arith.constant 0 : index
      %c0_15 = arith.constant 0 : index
      %18 = vector.load %arg4[%c0_14, %c0_15] : memref<32x256xf32, #tpu.memory_space<vmem>>, vector<32x256xf32>
      tpu.vector_store %arg4[%c0_14, %c0_15], %17 {strides = array<i32>} : memref<32x256xf32, #tpu.memory_space<vmem>>, vector<32x256xf32>,
    } else {
    }
    return
  }
  func.func @transform_0(%arg0: i32, %arg1: i32) -> (i32, i32) {
    %c0_i32 = arith.constant 0 : i32
    return %arg0, %arg1 : i32, i32
  }
  func.func @transform_1(%arg0: i32, %arg1: i32) -> (i32, i32) {
    %c0_i32 = arith.constant 0 : i32
    %c0_i32_0 = arith.constant 0 : i32
    return %arg1, %c0_i32 : i32, i32
  }
  func.func @transform_2(%arg0: i32, %arg1: i32) -> (i32, i32) {
    %c0_i32 = arith.constant 0 : i32
    %c0_i32_0 = arith.constant 0 : i32
    return %arg0, %c0_i32 : i32, i32
  }
}

module attributes {stable_mosaic.version = 11 : i64} {
  func.func @_matmul_act_kernel(%arg0: i32, %arg1: i32, %arg2: memref<24x2048xbf16, #tpu.memory_space<vmem>>, %arg3: memref<2048x512xbf16, #tpu.memory_space<vmem>>, %arg4: memref<24x512xf32, #tpu.memory_space<vmem>>, %arg5: memref<24x512xf32, #tpu.memory_space<vmem>>) attributes {dimension_semantics = [#tpu.dimension_semantics<parallel>, #tpu.dimension_semantics<arbitrary>], iteration_bounds = array<i64: 1, 2>, scalar_prefetch = 0 : i64, scratch_operands = 1 : i64, tpu.core_type = #tpu.core_type<tc>, window_params = [{transform_indices = @transform_0, window_bounds = array<i64: 24, 2048>}, {transform_indices = @transform_1, window_bounds = array<i64: 2048, 512>}, {transform_indices = @transform_2, window_bounds = array<i64: 24, 512>}]} {
    %c0_i32 = arith.constant 0 : i32
    %0 = arith.cmpi eq, %arg1, %c0_i32 : i32
    %1 = arith.extui %0 : i1 to i32
    %c0_i32_0 = arith.constant 0 : i32
    %2 = arith.cmpi ne, %1, %c0_i32_0 : i32
    scf.if %2 {
      %cst_9 = arith.constant 0.000000e+00 : f32
      %12 = vector.broadcast %cst_9 : f32 to vector<24x512xf32>
      %c0_10 = arith.constant 0 : index
      %c0_11 = arith.constant 0 : index
      %13 = vector.load %arg5[%c0_10, %c0_11] : memref<24x512xf32, #tpu.memory_space<vmem>>, vector<24x512xf32>
      tpu.vector_store %arg5[%c0_10, %c0_11], %12 {strides = array<i32>} : memref<24x512xf32, #tpu.memory_space<vmem>>, vector<24x512xf32>,
    } else {
    }
    %c0 = arith.constant 0 : index
    %c0_1 = arith.constant 0 : index
    %3 = vector.load %arg5[%c0, %c0_1] : memref<24x512xf32, #tpu.memory_space<vmem>>, vector<24x512xf32>
    %c0_2 = arith.constant 0 : index
    %c0_3 = arith.constant 0 : index
    %4 = vector.load %arg2[%c0_2, %c0_3] : memref<24x2048xbf16, #tpu.memory_space<vmem>>, vector<24x2048xbf16>
    %c0_4 = arith.constant 0 : index
    %c0_5 = arith.constant 0 : index
    %5 = vector.load %arg3[%c0_4, %c0_5] : memref<2048x512xbf16, #tpu.memory_space<vmem>>, vector<2048x512xbf16>
    %cst = arith.constant dense<0.000000e+00> : vector<24x512xf32>
    %6 = tpu.matmul %4, %5, %cst {dimension_numbers = #tpu.dot_dimension_numbers<[1], [0], [0], [1], [0, 0, 1, 1], [], []>} : vector<24x2048xbf16>, vector<2048x512xbf16>, vector<24x512xf32> -> vector<24x512xf32>
    %7 = arith.addf %3, %6 : vector<24x512xf32>
    %c0_6 = arith.constant 0 : index
    %c0_7 = arith.constant 0 : index
    %8 = vector.load %arg5[%c0_6, %c0_7] : memref<24x512xf32, #tpu.memory_space<vmem>>, vector<24x512xf32>
    tpu.vector_store %arg5[%c0_6, %c0_7], %7 {strides = array<i32>} : memref<24x512xf32, #tpu.memory_space<vmem>>, vector<24x512xf32>,
    %c1_i32 = arith.constant 1 : i32
    %9 = arith.cmpi eq, %arg1, %c1_i32 : i32
    %10 = arith.extui %9 : i1 to i32
    %c0_i32_8 = arith.constant 0 : i32
    %11 = arith.cmpi ne, %10, %c0_i32_8 : i32
    scf.if %11 {
      %c0_9 = arith.constant 0 : index
      %c0_10 = arith.constant 0 : index
      %12 = vector.load %arg5[%c0_9, %c0_10] : memref<24x512xf32, #tpu.memory_space<vmem>>, vector<24x512xf32>
      %cst_11 = arith.constant 0.000000e+00 : f32
      %13 = vector.broadcast %cst_11 : f32 to vector<24x512xf32>
      %14 = arith.cmpf oge, %12, %13 : vector<24x512xf32>
      %cst_12 = arith.constant 2.000000e-01 : f32
      %15 = vector.broadcast %cst_12 : f32 to vector<24x512xf32>
      %16 = arith.mulf %15, %12 : vector<24x512xf32>
      %17 = arith.select %14, %12, %16 : vector<24x512xi1>, vector<24x512xf32>
      %c0_13 = arith.constant 0 : index
      %c0_14 = arith.constant 0 : index
      %18 = vector.load %arg4[%c0_13, %c0_14] : memref<24x512xf32, #tpu.memory_space<vmem>>, vector<24x512xf32>
      tpu.vector_store %arg4[%c0_13, %c0_14], %17 {strides = array<i32>} : memref<24x512xf32, #tpu.memory_space<vmem>>, vector<24x512xf32>,
    } else {
    }
    return
  }
  func.func @transform_0(%arg0: i32, %arg1: i32) -> (i32, i32) {
    %c0_i32 = arith.constant 0 : i32
    return %arg0, %arg1 : i32, i32
  }
  func.func @transform_1(%arg0: i32, %arg1: i32) -> (i32, i32) {
    %c0_i32 = arith.constant 0 : i32
    %c0_i32_0 = arith.constant 0 : i32
    return %arg1, %c0_i32 : i32, i32
  }
  func.func @transform_2(%arg0: i32, %arg1: i32) -> (i32, i32) {
    %c0_i32 = arith.constant 0 : i32
    %c0_i32_0 = arith.constant 0 : i32
    return %arg0, %c0_i32 : i32, i32
  }
}

module attributes {stable_mosaic.version = 11 : i64} {
  func.func @_matmul_act_kernel(%arg0: i32, %arg1: i32, %arg2: memref<8x2048xbf16, #tpu.memory_space<vmem>>, %arg3: memref<2048x128xbf16, #tpu.memory_space<vmem>>, %arg4: memref<8x128xf32, #tpu.memory_space<vmem>>, %arg5: memref<8x128xf32, #tpu.memory_space<vmem>>) attributes {dimension_semantics = [#tpu.dimension_semantics<parallel>, #tpu.dimension_semantics<arbitrary>], iteration_bounds = array<i64: 1, 4>, scalar_prefetch = 0 : i64, scratch_operands = 1 : i64, tpu.core_type = #tpu.core_type<tc>, window_params = [{transform_indices = @transform_0, window_bounds = array<i64: 8, 2048>}, {transform_indices = @transform_1, window_bounds = array<i64: 2048, 128>}, {transform_indices = @transform_2, window_bounds = array<i64: 8, 128>}]} {
    %c0_i32 = arith.constant 0 : i32
    %0 = arith.cmpi eq, %arg1, %c0_i32 : i32
    %1 = arith.extui %0 : i1 to i32
    %c0_i32_0 = arith.constant 0 : i32
    %2 = arith.cmpi ne, %1, %c0_i32_0 : i32
    scf.if %2 {
      %cst_9 = arith.constant 0.000000e+00 : f32
      %12 = vector.broadcast %cst_9 : f32 to vector<8x128xf32>
      %c0_10 = arith.constant 0 : index
      %c0_11 = arith.constant 0 : index
      %13 = vector.load %arg5[%c0_10, %c0_11] : memref<8x128xf32, #tpu.memory_space<vmem>>, vector<8x128xf32>
      tpu.vector_store %arg5[%c0_10, %c0_11], %12 {strides = array<i32>} : memref<8x128xf32, #tpu.memory_space<vmem>>, vector<8x128xf32>,
    } else {
    }
    %c0 = arith.constant 0 : index
    %c0_1 = arith.constant 0 : index
    %3 = vector.load %arg5[%c0, %c0_1] : memref<8x128xf32, #tpu.memory_space<vmem>>, vector<8x128xf32>
    %c0_2 = arith.constant 0 : index
    %c0_3 = arith.constant 0 : index
    %4 = vector.load %arg2[%c0_2, %c0_3] : memref<8x2048xbf16, #tpu.memory_space<vmem>>, vector<8x2048xbf16>
    %c0_4 = arith.constant 0 : index
    %c0_5 = arith.constant 0 : index
    %5 = vector.load %arg3[%c0_4, %c0_5] : memref<2048x128xbf16, #tpu.memory_space<vmem>>, vector<2048x128xbf16>
    %cst = arith.constant dense<0.000000e+00> : vector<8x128xf32>
    %6 = tpu.matmul %4, %5, %cst {dimension_numbers = #tpu.dot_dimension_numbers<[1], [0], [0], [1], [0, 0, 1, 1], [], []>} : vector<8x2048xbf16>, vector<2048x128xbf16>, vector<8x128xf32> -> vector<8x128xf32>
    %7 = arith.addf %3, %6 : vector<8x128xf32>
    %c0_6 = arith.constant 0 : index
    %c0_7 = arith.constant 0 : index
    %8 = vector.load %arg5[%c0_6, %c0_7] : memref<8x128xf32, #tpu.memory_space<vmem>>, vector<8x128xf32>
    tpu.vector_store %arg5[%c0_6, %c0_7], %7 {strides = array<i32>} : memref<8x128xf32, #tpu.memory_space<vmem>>, vector<8x128xf32>,
    %c3_i32 = arith.constant 3 : i32
    %9 = arith.cmpi eq, %arg1, %c3_i32 : i32
    %10 = arith.extui %9 : i1 to i32
    %c0_i32_8 = arith.constant 0 : i32
    %11 = arith.cmpi ne, %10, %c0_i32_8 : i32
    scf.if %11 {
      %c0_9 = arith.constant 0 : index
      %c0_10 = arith.constant 0 : index
      %12 = vector.load %arg5[%c0_9, %c0_10] : memref<8x128xf32, #tpu.memory_space<vmem>>, vector<8x128xf32>
      %c0_11 = arith.constant 0 : index
      %c0_12 = arith.constant 0 : index
      %13 = vector.load %arg4[%c0_11, %c0_12] : memref<8x128xf32, #tpu.memory_space<vmem>>, vector<8x128xf32>
      tpu.vector_store %arg4[%c0_11, %c0_12], %12 {strides = array<i32>} : memref<8x128xf32, #tpu.memory_space<vmem>>, vector<8x128xf32>,
    } else {
    }
    return
  }
  func.func @transform_0(%arg0: i32, %arg1: i32) -> (i32, i32) {
    %c0_i32 = arith.constant 0 : i32
    return %arg0, %arg1 : i32, i32
  }
  func.func @transform_1(%arg0: i32, %arg1: i32) -> (i32, i32) {
    %c0_i32 = arith.constant 0 : i32
    %c0_i32_0 = arith.constant 0 : i32
    return %arg1, %c0_i32 : i32, i32
  }
  func.func @transform_2(%arg0: i32, %arg1: i32) -> (i32, i32) {
    %c0_i32 = arith.constant 0 : i32
    %c0_i32_0 = arith.constant 0 : i32
    return %arg0, %c0_i32 : i32, i32
  }
}

</mosaic_0001>

<llo_original>
// kernel: _lambda_.5
$region0: #{_lambda_.5}
  #allocation0 [shape = 'u32[]', space=smem, size = 0x4, offset = 0x4, fixed_abs, tag = 'smem constant byte address 0x4 - core index']
  #allocation1 [shape = 'u32[144,128]{1,0:T(1,128)}', space=vmem, size = 0x12000, scoped, tag = 'internal scratch']
  #allocation2 [shape = 'f32[512,64]{1,0:T(8,128)}', space=vmem, size = 0x40000, scoped, tag = 'scratch operand']
  %s0 = inlined_call_operand.vmem [shape: bf16[512,48], index: 0, kind: input, shape index: {}]
  %s1 = inlined_call_operand.vmem [shape: bf16[48,64], index: 1, kind: input, shape index: {}]
  %s2 = inlined_call_operand.vmem [shape: f32[512,64], index: 2, kind: output, shape index: {}]
  %s3 = sld [smem:[#allocation0]]
  $region26: #{_lambda_.5} parent=0
    _
  %s5 = ssub.s32 1, %s3
  %s6 = scalar_select 0, %s5, %s3
  // Predicated region
  $region2: #{_lambda_.5} parent=0 // pred_check
    _
  $region3: #{_lambda_.5} parent=0 // pred_check_branch
    %8 = sbr.rel (0) target = $region5
  $region4: #{_lambda_.5} parent=0 // pred_region
    _
  $region5: #{_lambda_.5} parent=0 // pred_fallthru
    _
  // Predicated region
  $region6: #{_lambda_.5} parent=0 // pred_check
    _
  $region7: #{_lambda_.5} parent=0 // pred_check_branch
    %10 = sbr.rel (0) target = $region9
  $region8: #{_lambda_.5} parent=0 // pred_region
    _
  $region9: #{_lambda_.5} parent=0 // pred_fallthru
    _
  %p12 = scmp.eq.s32.totalorder 0, 0
  // Predicated region
  $region10: #{_lambda_.5} parent=0 // pred_check
    %p13 = pneg %p12
  $region11: #{_lambda_.5} parent=0 // pred_check_branch
    %15 = sbr.rel (%p13) target = $region13
  $region12: #{_lambda_.5} parent=0 // pred_region
    %vm16 = vcmask 523264
    %17 = vst.msk [vmem:[#allocation2] sm:$0xff] %vm16, 0.0
    %18 = vst.msk [vmem:[#allocation2 + $0x8] sm:$0xff] %vm16, 0.0
    %19 = vst.msk [vmem:[#allocation2 + $0x10] sm:$0xff] %vm16, 0.0
    %20 = vst.msk [vmem:[#allocation2 + $0x18] sm:$0xff] %vm16, 0.0
    %21 = vst.msk [vmem:[#allocation2 + $0x20] sm:$0xff] %vm16, 0.0
    %22 = vst.msk [vmem:[#allocation2 + $0x28] sm:$0xff] %vm16, 0.0
    %23 = vst.msk [vmem:[#allocation2 + $0x30] sm:$0xff] %vm16, 0.0
    %24 = vst.msk [vmem:[#allocation2 + $0x38] sm:$0xff] %vm16, 0.0
    %25 = vst.msk [vmem:[#allocation2 + $0x40] sm:$0xff] %vm16, 0.0
    %26 = vst.msk [vmem:[#allocation2 + $0x48] sm:$0xff] %vm16, 0.0
    %27 = vst.msk [vmem:[#allocation2 + $0x50] sm:$0xff] %vm16, 0.0
    %28 = vst.msk [vmem:[#allocation2 + $0x58] sm:$0xff] %vm16, 0.0
    %29 = vst.msk [vmem:[#allocation2 + $0x60] sm:$0xff] %vm16, 0.0
    %30 = vst.msk [vmem:[#allocation2 + $0x68] sm:$0xff] %vm16, 0.0
    %31 = vst.msk [vmem:[#allocation2 + $0x70] sm:$0xff] %vm16, 0.0
    %32 = vst.msk [vmem:[#allocation2 + $0x78] sm:$0xff] %vm16, 0.0
    %33 = vst.msk [vmem:[#allocation2 + $0x80] sm:$0xff] %vm16, 0.0
    %34 = vst.msk [vmem:[#allocation2 + $0x88] sm:$0xff] %vm16, 0.0
    %35 = vst.msk [vmem:[#allocation2 + $0x90] sm:$0xff] %vm16, 0.0
    %36 = vst.msk [vmem:[#allocation2 + $0x98] sm:$0xff] %vm16, 0.0
    %37 = vst.msk [vmem:[#allocation2 + $0xa0] sm:$0xff] %vm16, 0.0
    %38 = vst.msk [vmem:[#allocation2 + $0xa8] sm:$0xff] %vm16, 0.0
    %39 = vst.msk [vmem:[#allocation2 + $0xb0] sm:$0xff] %vm16, 0.0
    %40 = vst.msk [vmem:[#allocation2 + $0xb8] sm:$0xff] %vm16, 0.0
    %41 = vst.msk [vmem:[#allocation2 + $0xc0] sm:$0xff] %vm16, 0.0
    %42 = vst.msk [vmem:[#allocation2 + $0xc8] sm:$0xff] %vm16, 0.0
    %43 = vst.msk [vmem:[#allocation2 + $0xd0] sm:$0xff] %vm16, 0.0
    %44 = vst.msk [vmem:[#allocation2 + $0xd8] sm:$0xff] %vm16, 0.0
    %45 = vst.msk [vmem:[#allocation2 + $0xe0] sm:$0xff] %vm16, 0.0
    %46 = vst.msk [vmem:[#allocation2 + $0xe8] sm:$0xff] %vm16, 0.0
    %47 = vst.msk [vmem:[#allocation2 + $0xf0] sm:$0xff] %vm16, 0.0
    %48 = vst.msk [vmem:[#allocation2 + $0xf8] sm:$0xff] %vm16, 0.0
    %49 = vst.msk [vmem:[#allocation2 + $0x100] sm:$0xff] %vm16, 0.0
    %50 = vst.msk [vmem:[#allocation2 + $0x108] sm:$0xff] %vm16, 0.0
    %51 = vst.msk [vmem:[#allocation2 + $0x110] sm:$0xff] %vm16, 0.0
    %52 = vst.msk [vmem:[#allocation2 + $0x118] sm:$0xff] %vm16, 0.0
    %53 = vst.msk [vmem:[#allocation2 + $0x120] sm:$0xff] %vm16, 0.0
    %54 = vst.msk [vmem:[#allocation2 + $0x128] sm:$0xff] %vm16, 0.0
    %55 = vst.msk [vmem:[#allocation2 + $0x130] sm:$0xff] %vm16, 0.0
    %56 = vst.msk [vmem:[#allocation2 + $0x138] sm:$0xff] %vm16, 0.0
    %57 = vst.msk [vmem:[#allocation2 + $0x140] sm:$0xff] %vm16, 0.0
    %58 = vst.msk [vmem:[#allocation2 + $0x148] sm:$0xff] %vm16, 0.0
    %59 = vst.msk [vmem:[#allocation2 + $0x150] sm:$0xff] %vm16, 0.0
    %60 = vst.msk [vmem:[#allocation2 + $0x158] sm:$0xff] %vm16, 0.0
    %61 = vst.msk [vmem:[#allocation2 + $0x160] sm:$0xff] %vm16, 0.0
    %62 = vst.msk [vmem:[#allocation2 + $0x168] sm:$0xff] %vm16, 0.0
    %63 = vst.msk [vmem:[#allocation2 + $0x170] sm:$0xff] %vm16, 0.0
    %64 = vst.msk [vmem:[#allocation2 + $0x178] sm:$0xff] %vm16, 0.0
    %65 = vst.msk [vmem:[#allocation2 + $0x180] sm:$0xff] %vm16, 0.0
    %66 = vst.msk [vmem:[#allocation2 + $0x188] sm:$0xff] %vm16, 0.0
    %67 = vst.msk [vmem:[#allocation2 + $0x190] sm:$0xff] %vm16, 0.0
    %68 = vst.msk [vmem:[#allocation2 + $0x198] sm:$0xff] %vm16, 0.0
    %69 = vst.msk [vmem:[#allocation2 + $0x1a0] sm:$0xff] %vm16, 0.0
    %70 = vst.msk [vmem:[#allocation2 + $0x1a8] sm:$0xff] %vm16, 0.0
    %71 = vst.msk [vmem:[#allocation2 + $0x1b0] sm:$0xff] %vm16, 0.0
    %72 = vst.msk [vmem:[#allocation2 + $0x1b8] sm:$0xff] %vm16, 0.0
    %73 = vst.msk [vmem:[#allocation2 + $0x1c0] sm:$0xff] %vm16, 0.0
    %74 = vst.msk [vmem:[#allocation2 + $0x1c8] sm:$0xff] %vm16, 0.0
    %75 = vst.msk [vmem:[#allocation2 + $0x1d0] sm:$0xff] %vm16, 0.0
    %76 = vst.msk [vmem:[#allocation2 + $0x1d8] sm:$0xff] %vm16, 0.0
    %77 = vst.msk [vmem:[#allocation2 + $0x1e0] sm:$0xff] %vm16, 0.0
    %78 = vst.msk [vmem:[#allocation2 + $0x1e8] sm:$0xff] %vm16, 0.0
    %79 = vst.msk [vmem:[#allocation2 + $0x1f0] sm:$0xff] %vm16, 0.0
    %80 = vst.msk [vmem:[#allocation2 + $0x1f8] sm:$0xff] %vm16, 0.0
  $region13: #{_lambda_.5} parent=0 // pred_fallthru
    _
  %v81 = vld [vmem:[#allocation2] sm:$0xff]
  %v82 = vld [vmem:[#allocation2 + $0x8] sm:$0xff]
  %v83 = vld [vmem:[#allocation2 + $0x10] sm:$0xff]
  %v84 = vld [vmem:[#allocation2 + $0x18] sm:$0xff]
  %v85 = vld [vmem:[#allocation2 + $0x20] sm:$0xff]
  %v86 = vld [vmem:[#allocation2 + $0x28] sm:$0xff]
  %v87 = vld [vmem:[#allocation2 + $0x30] sm:$0xff]
  %v88 = vld [vmem:[#allocation2 + $0x38] sm:$0xff]
  %v89 = vld [vmem:[#allocation2 + $0x40] sm:$0xff]
  %v90 = vld [vmem:[#allocation2 + $0x48] sm:$0xff]
  %v91 = vld [vmem:[#allocation2 + $0x50] sm:$0xff]
  %v92 = vld [vmem:[#allocation2 + $0x58] sm:$0xff]
  %v93 = vld [vmem:[#allocation2 + $0x60] sm:$0xff]
  %v94 = vld [vmem:[#allocation2 + $0x68] sm:$0xff]
  %v95 = vld [vmem:[#allocation2 + $0x70] sm:$0xff]
  %v96 = vld [vmem:[#allocation2 + $0x78] sm:$0xff]
  %v97 = vld [vmem:[#allocation2 + $0x80] sm:$0xff]
  %v98 = vld [vmem:[#allocation2 + $0x88] sm:$0xff]
  %v99 = vld [vmem:[#allocation2 + $0x90] sm:$0xff]
  %v100 = vld [vmem:[#allocation2 + $0x98] sm:$0xff]
  %v101 = vld [vmem:[#allocation2 + $0xa0] sm:$0xff]
  %v102 = vld [vmem:[#allocation2 + $0xa8] sm:$0xff]
  %v103 = vld [vmem:[#allocation2 + $0xb0] sm:$0xff]
  %v104 = vld [vmem:[#allocation2 + $0xb8] sm:$0xff]
  %v105 = vld [vmem:[#allocation2 + $0xc0] sm:$0xff]
  %v106 = vld [vmem:[#allocation2 + $0xc8] sm:$0xff]
  %v107 = vld [vmem:[#allocation2 + $0xd0] sm:$0xff]
  %v108 = vld [vmem:[#allocation2 + $0xd8] sm:$0xff]
  %v109 = vld [vmem:[#allocation2 + $0xe0] sm:$0xff]
  %v110 = vld [vmem:[#allocation2 + $0xe8] sm:$0xff]
  %v111 = vld [vmem:[#allocation2 + $0xf0] sm:$0xff]
  %v112 = vld [vmem:[#allocation2 + $0xf8] sm:$0xff]
  %v113 = vld [vmem:[#allocation2 + $0x100] sm:$0xff]
  %v114 = vld [vmem:[#allocation2 + $0x108] sm:$0xff]
  %v115 = vld [vmem:[#allocation2 + $0x110] sm:$0xff]
  %v116 = vld [vmem:[#allocation2 + $0x118] sm:$0xff]
  %v117 = vld [vmem:[#allocation2 + $0x120] sm:$0xff]
  %v118 = vld [vmem:[#allocation2 + $0x128] sm:$0xff]
  %v119 = vld [vmem:[#allocation2 + $0x130] sm:$0xff]
  %v120 = vld [vmem:[#allocation2 + $0x138] sm:$0xff]
  %v121 = vld [vmem:[#allocation2 + $0x140] sm:$0xff]
  %v122 = vld [vmem:[#allocation2 + $0x148] sm:$0xff]
  %v123 = vld [vmem:[#allocation2 + $0x150] sm:$0xff]
  %v124 = vld [vmem:[#allocation2 + $0x158] sm:$0xff]
  %v125 = vld [vmem:[#allocation2 + $0x160] sm:$0xff]
  %v126 = vld [vmem:[#allocation2 + $0x168] sm:$0xff]
  %v127 = vld [vmem:[#allocation2 + $0x170] sm:$0xff]
  %v128 = vld [vmem:[#allocation2 + $0x178] sm:$0xff]
  %v129 = vld [vmem:[#allocation2 + $0x180] sm:$0xff]
  %v130 = vld [vmem:[#allocation2 + $0x188] sm:$0xff]
  %v131 = vld [vmem:[#allocation2 + $0x190] sm:$0xff]
  %v132 = vld [vmem:[#allocation2 + $0x198] sm:$0xff]
  %v133 = vld [vmem:[#allocation2 + $0x1a0] sm:$0xff]
  %v134 = vld [vmem:[#allocation2 + $0x1a8] sm:$0xff]
  %v135 = vld [vmem:[#allocation2 + $0x1b0] sm:$0xff]
  %v136 = vld [vmem:[#allocation2 + $0x1b8] sm:$0xff]
  %v137 = vld [vmem:[#allocation2 + $0x1c0] sm:$0xff]
  %v138 = vld [vmem:[#allocation2 + $0x1c8] sm:$0xff]
  %v139 = vld [vmem:[#allocation2 + $0x1d0] sm:$0xff]
  %v140 = vld [vmem:[#allocation2 + $0x1d8] sm:$0xff]
  %v141 = vld [vmem:[#allocation2 + $0x1e0] sm:$0xff]
  %v142 = vld [vmem:[#allocation2 + $0x1e8] sm:$0xff]
  %v143 = vld [vmem:[#allocation2 + $0x1f0] sm:$0xff]
  %v144 = vld [vmem:[#allocation2 + $0x1f8] sm:$0xff]
  %v145 = vld [vmem:[%s0] sm:$0xf]
  %v146 = vld [vmem:[%s0 + $0x4] sm:$0xf]
  %v147 = vld [vmem:[%s0 + $0x8] sm:$0xf]
  %v148 = vld [vmem:[%s0 + $0xc] sm:$0xf]
  %v149 = vld [vmem:[%s0 + $0x10] sm:$0xf]
  %v150 = vld [vmem:[%s0 + $0x14] sm:$0xf]
  %v151 = vld [vmem:[%s0 + $0x18] sm:$0xf]
  %v152 = vld [vmem:[%s0 + $0x1c] sm:$0xf]
  %v153 = vld [vmem:[%s0 + $0x20] sm:$0xf]
  %v154 = vld [vmem:[%s0 + $0x24] sm:$0xf]
  %v155 = vld [vmem:[%s0 + $0x28] sm:$0xf]
  %v156 = vld [vmem:[%s0 + $0x2c] sm:$0xf]
  %v157 = vld [vmem:[%s0 + $0x30] sm:$0xf]
  %v158 = vld [vmem:[%s0 + $0x34] sm:$0xf]
  %v159 = vld [vmem:[%s0 + $0x38] sm:$0xf]
  %v160 = vld [vmem:[%s0 + $0x3c] sm:$0xf]
  %v161 = vld [vmem:[%s0 + $0x40] sm:$0xf]
  %v162 = vld [vmem:[%s0 + $0x44] sm:$0xf]
  %v163 = vld [vmem:[%s0 + $0x48] sm:$0xf]
  %v164 = vld [vmem:[%s0 + $0x4c] sm:$0xf]
  %v165 = vld [vmem:[%s0 + $0x50] sm:$0xf]
  %v166 = vld [vmem:[%s0 + $0x54] sm:$0xf]
  %v167 = vld [vmem:[%s0 + $0x58] sm:$0xf]
  %v168 = vld [vmem:[%s0 + $0x5c] sm:$0xf]
  %v169 = vld [vmem:[%s0 + $0x60] sm:$0xf]
  %v170 = vld [vmem:[%s0 + $0x64] sm:$0xf]
  %v171 = vld [vmem:[%s0 + $0x68] sm:$0xf]
  %v172 = vld [vmem:[%s0 + $0x6c] sm:$0xf]
  %v173 = vld [vmem:[%s0 + $0x70] sm:$0xf]
  %v174 = vld [vmem:[%s0 + $0x74] sm:$0xf]
  %v175 = vld [vmem:[%s0 + $0x78] sm:$0xf]
  %v176 = vld [vmem:[%s0 + $0x7c] sm:$0xf]
  %v177 = vld [vmem:[%s0 + $0x80] sm:$0xf]
  %v178 = vld [vmem:[%s0 + $0x84] sm:$0xf]
  %v179 = vld [vmem:[%s0 + $0x88] sm:$0xf]
  %v180 = vld [vmem:[%s0 + $0x8c] sm:$0xf]
  %v181 = vld [vmem:[%s0 + $0x90] sm:$0xf]
  %v182 = vld [vmem:[%s0 + $0x94] sm:$0xf]
  %v183 = vld [vmem:[%s0 + $0x98] sm:$0xf]
  %v184 = vld [vmem:[%s0 + $0x9c] sm:$0xf]
  %v185 = vld [vmem:[%s0 + $0xa0] sm:$0xf]
  %v186 = vld [vmem:[%s0 + $0xa4] sm:$0xf]
  %v187 = vld [vmem:[%s0 + $0xa8] sm:$0xf]
  %v188 = vld [vmem:[%s0 + $0xac] sm:$0xf]
  %v189 = vld [vmem:[%s0 + $0xb0] sm:$0xf]
  %v190 = vld [vmem:[%s0 + $0xb4] sm:$0xf]
  %v191 = vld [vmem:[%s0 + $0xb8] sm:$0xf]
  %v192 = vld [vmem:[%s0 + $0xbc] sm:$0xf]
  %v193 = vld [vmem:[%s0 + $0xc0] sm:$0xf]
  %v194 = vld [vmem:[%s0 + $0xc4] sm:$0xf]
  %v195 = vld [vmem:[%s0 + $0xc8] sm:$0xf]
  %v196 = vld [vmem:[%s0 + $0xcc] sm:$0xf]
  %v197 = vld [vmem:[%s0 + $0xd0] sm:$0xf]
  %v198 = vld [vmem:[%s0 + $0xd4] sm:$0xf]
  %v199 = vld [vmem:[%s0 + $0xd8] sm:$0xf]
  %v200 = vld [vmem:[%s0 + $0xdc] sm:$0xf]
  %v201 = vld [vmem:[%s0 + $0xe0] sm:$0xf]
  %v202 = vld [vmem:[%s0 + $0xe4] sm:$0xf]
  %v203 = vld [vmem:[%s0 + $0xe8] sm:$0xf]
  %v204 = vld [vmem:[%s0 + $0xec] sm:$0xf]
  %v205 = vld [vmem:[%s0 + $0xf0] sm:$0xf]
  %v206 = vld [vmem:[%s0 + $0xf4] sm:$0xf]
  %v207 = vld [vmem:[%s0 + $0xf8] sm:$0xf]
  %v208 = vld [vmem:[%s0 + $0xfc] sm:$0xf]
  %v209 = vld [vmem:[%s1] sm:$0xf]
  %v210 = vld [vmem:[%s1 + $0x4] sm:$0xf]
  %v211 = vld [vmem:[%s1 + $0x8] sm:$0xf]
  %v212 = vld [vmem:[%s1 + $0xc] sm:$0xf]
  %v213 = vld [vmem:[%s1 + $0x10] sm:$0xf]
  %v214 = vld [vmem:[%s1 + $0x14] sm:$0xf]
  %v279 = vunpack.c.l.b16 %v145
  %v280 = vunpack.c.l.b16 %v146
  %v281 = vunpack.c.l.b16 %v147
  %v282 = vunpack.c.l.b16 %v148
  %v283 = vunpack.c.l.b16 %v149
  %v284 = vunpack.c.l.b16 %v150
  %v285 = vunpack.c.l.b16 %v151
  %v286 = vunpack.c.l.b16 %v152
  %v287 = vunpack.c.l.b16 %v153
  %v288 = vunpack.c.l.b16 %v154
  %v289 = vunpack.c.l.b16 %v155
  %v290 = vunpack.c.l.b16 %v156
  %v291 = vunpack.c.l.b16 %v157
  %v292 = vunpack.c.l.b16 %v158
  %v293 = vunpack.c.l.b16 %v159
  %v294 = vunpack.c.l.b16 %v160
  %v295 = vunpack.c.l.b16 %v161
  %v296 = vunpack.c.l.b16 %v162
  %v297 = vunpack.c.l.b16 %v163
  %v298 = vunpack.c.l.b16 %v164
  %v299 = vunpack.c.l.b16 %v165
  %v300 = vunpack.c.l.b16 %v166
  %v301 = vunpack.c.l.b16 %v167
  %v302 = vunpack.c.l.b16 %v168
  %v303 = vunpack.c.l.b16 %v169
  %v304 = vunpack.c.l.b16 %v170
  %v305 = vunpack.c.l.b16 %v171
  %v306 = vunpack.c.l.b16 %v172
  %v307 = vunpack.c.l.b16 %v173
  %v308 = vunpack.c.l.b16 %v174
  %v309 = vunpack.c.l.b16 %v175
  %v310 = vunpack.c.l.b16 %v176
  %v311 = vunpack.c.l.b16 %v177
  %v312 = vunpack.c.l.b16 %v178
  %v313 = vunpack.c.l.b16 %v179
  %v314 = vunpack.c.l.b16 %v180
  %v315 = vunpack.c.l.b16 %v181
  %v316 = vunpack.c.l.b16 %v182
  %v317 = vunpack.c.l.b16 %v183
  %v318 = vunpack.c.l.b16 %v184
  %v319 = vunpack.c.l.b16 %v185
  %v320 = vunpack.c.l.b16 %v186
  %v321 = vunpack.c.l.b16 %v187
  %v322 = vunpack.c.l.b16 %v188
  %v323 = vunpack.c.l.b16 %v189
  %v324 = vunpack.c.l.b16 %v190
  %v325 = vunpack.c.l.b16 %v191
  %v326 = vunpack.c.l.b16 %v192
  %v327 = vunpack.c.l.b16 %v193
  %v328 = vunpack.c.l.b16 %v194
  %v329 = vunpack.c.l.b16 %v195
  %v330 = vunpack.c.l.b16 %v196
  %v331 = vunpack.c.l.b16 %v197
  %v332 = vunpack.c.l.b16 %v198
  %v333 = vunpack.c.l.b16 %v199
  %v334 = vunpack.c.l.b16 %v200
  %v335 = vunpack.c.l.b16 %v201
  %v336 = vunpack.c.l.b16 %v202
  %v337 = vunpack.c.l.b16 %v203
  %v338 = vunpack.c.l.b16 %v204
  %v339 = vunpack.c.l.b16 %v205
  %v340 = vunpack.c.l.b16 %v206
  %v341 = vunpack.c.l.b16 %v207
  %v342 = vunpack.c.l.b16 %v208
  %v343 = vpack.c.b16 %v280, %v279
  %v344 = vpack.c.b16 %v282, %v281
  %v345 = vpack.c.b16 %v284, %v283
  %v346 = vpack.c.b16 %v286, %v285
  %v347 = vpack.c.b16 %v288, %v287
  %v348 = vpack.c.b16 %v290, %v289
  %v349 = vpack.c.b16 %v292, %v291
  %v350 = vpack.c.b16 %v294, %v293
  %v351 = vpack.c.b16 %v296, %v295
  %v352 = vpack.c.b16 %v298, %v297
  %v353 = vpack.c.b16 %v300, %v299
  %v354 = vpack.c.b16 %v302, %v301
  %v355 = vpack.c.b16 %v304, %v303
  %v356 = vpack.c.b16 %v306, %v305
  %v357 = vpack.c.b16 %v308, %v307
  %v358 = vpack.c.b16 %v310, %v309
  %v359 = vpack.c.b16 %v312, %v311
  %v360 = vpack.c.b16 %v314, %v313
  %v361 = vpack.c.b16 %v316, %v315
  %v362 = vpack.c.b16 %v318, %v317
  %v363 = vpack.c.b16 %v320, %v319
  %v364 = vpack.c.b16 %v322, %v321
  %v365 = vpack.c.b16 %v324, %v323
  %v366 = vpack.c.b16 %v326, %v325
  %v367 = vpack.c.b16 %v328, %v327
  %v368 = vpack.c.b16 %v330, %v329
  %v369 = vpack.c.b16 %v332, %v331
  %v370 = vpack.c.b16 %v334, %v333
  %v371 = vpack.c.b16 %v336, %v335
  %v372 = vpack.c.b16 %v338, %v337
  %v373 = vpack.c.b16 %v340, %v339
  %v374 = vpack.c.b16 %v342, %v341
  %v381 = vunpack.c.l.b16 %v209
  %v382 = vunpack.c.l.b16 %v210
  %v383 = vunpack.c.l.b16 %v211
  %v384 = vunpack.c.l.b16 %v212
  %v385 = vunpack.c.l.b16 %v213
  %v386 = vunpack.c.l.b16 %v214
  %v387 = vpack.c.b16 %v382, %v381
  %v388 = vpack.c.b16 %v384, %v383
  %v389 = vpack.c.b16 %v386, %v385
  %vm393 = vcmask 392192
  %v395 = vsel %vm393, %v343, 0
  %v398 = vsel %vm393, %v344, 0
  %v401 = vsel %vm393, %v345, 0
  %v404 = vsel %vm393, %v346, 0
  %v407 = vsel %vm393, %v347, 0
  %v410 = vsel %vm393, %v348, 0
  %v413 = vsel %vm393, %v349, 0
  %v416 = vsel %vm393, %v350, 0
  %v419 = vsel %vm393, %v351, 0
  %v422 = vsel %vm393, %v352, 0
  %v425 = vsel %vm393, %v353, 0
  %v428 = vsel %vm393, %v354, 0
  %v431 = vsel %vm393, %v355, 0
  %v434 = vsel %vm393, %v356, 0
  %v437 = vsel %vm393, %v357, 0
  %v440 = vsel %vm393, %v358, 0
  %v443 = vsel %vm393, %v359, 0
  %v446 = vsel %vm393, %v360, 0
  %v449 = vsel %vm393, %v361, 0
  %v452 = vsel %vm393, %v362, 0
  %v455 = vsel %vm393, %v363, 0
  %v458 = vsel %vm393, %v364, 0
  %v461 = vsel %vm393, %v365, 0
  %v464 = vsel %vm393, %v366, 0
  %v467 = vsel %vm393, %v367, 0
  %v470 = vsel %vm393, %v368, 0
  %v473 = vsel %vm393, %v369, 0
  %v476 = vsel %vm393, %v370, 0
  %v479 = vsel %vm393, %v371, 0
  %v482 = vsel %vm393, %v372, 0
  %v485 = vsel %vm393, %v373, 0
  %v488 = vsel %vm393, %v374, 0
  %490 = vmatprep.subr.bf16.mxu0 0
  %491 = vmatpush1.bf16.msra.mxu0 %v387
  %492 = vmatprep.subr.bf16.mxu0 0
  %493 = vmatpush1.bf16.msra.mxu0 %v388
  %494 = vmatprep.subr.bf16.mxu0 0
  %495 = vmatpush1.bf16.msra.mxu0 %v389
  %496 = vmatprep.subr.bf16.mxu0 0
  %497 = vmatpush1.bf16.msra.mxu0 0
  %498 = vmatprep.subr.bf16.mxu0 0
  %499 = vmatpush1.bf16.msra.mxu0 0
  %500 = vmatprep.subr.bf16.mxu0 0
  %501 = vmatpush1.bf16.msra.mxu0 0
  %502 = vmatprep.subr.bf16.mxu0 0
  %503 = vmatpush1.bf16.msra.mxu0 0
  %504 = vmatprep.subr.bf16.mxu0 0
  %505 = vmatpush1.bf16.msra.mxu0 0
  %506 = vmatprep.subr.bf16.mxu0 0
  %507 = vmatpush1.bf16.msra.mxu0 0
  %508 = vmatprep.subr.bf16.mxu0 0
  %509 = vmatpush1.bf16.msra.mxu0 0
  %510 = vmatprep.subr.bf16.mxu0 0
  %511 = vmatpush1.bf16.msra.mxu0 0
  %512 = vmatprep.subr.bf16.mxu0 0
  %513 = vmatpush1.bf16.msra.mxu0 0
  %514 = vmatprep.subr.bf16.mxu0 0
  %515 = vmatpush1.bf16.msra.mxu0 0
  %516 = vmatprep.subr.bf16.mxu0 0
  %517 = vmatpush1.bf16.msra.mxu0 0
  %518 = vmatprep.subr.bf16.mxu0 0
  %519 = vmatpush1.bf16.msra.mxu0 0
  %520 = vmatprep.subr.bf16.mxu0 0
  %521 = vmatpush1.bf16.msra.mxu0 0
  %522 = vmatprep.mubr.bf16.mxu0 0
  %523 = vmatmul.mubr.bf16.gmra.mrb[0].mxu0 %v395
  %v524 = vpop.f32.mrb[0].mxu0
  %v525 = vadd.f32 0.0, %v524
  %v526 = vpop.f32.mrb[0].mxu0
  %v527 = vpop.f32.mrb[0].mxu0
  %v528 = vadd.f32 0.0, %v527
  %v529 = vpop.f32.mrb[0].mxu0
  %530 = vmatprep.mubr.bf16.mxu0 0
  %531 = vmatmul.mubr.bf16.gmra.mrb[0].mxu0 %v398
  %v532 = vpop.f32.mrb[0].mxu0
  %v533 = vadd.f32 0.0, %v532
  %v534 = vpop.f32.mrb[0].mxu0
  %v535 = vpop.f32.mrb[0].mxu0
  %v536 = vadd.f32 0.0, %v535
  %v537 = vpop.f32.mrb[0].mxu0
  %538 = vmatprep.mubr.bf16.mxu0 0
  %539 = vmatmul.mubr.bf16.gmra.mrb[0].mxu0 %v401
  %v540 = vpop.f32.mrb[0].mxu0
  %v541 = vadd.f32 0.0, %v540
  %v542 = vpop.f32.mrb[0].mxu0
  %v543 = vpop.f32.mrb[0].mxu0
  %v544 = vadd.f32 0.0, %v543
  %v545 = vpop.f32.mrb[0].mxu0
  %546 = vmatprep.mubr.bf16.mxu0 0
  %547 = vmatmul.mubr.bf16.gmra.mrb[0].mxu0 %v404
  %v548 = vpop.f32.mrb[0].mxu0
  %v549 = vadd.f32 0.0, %v548
  %v550 = vpop.f32.mrb[0].mxu0
  %v551 = vpop.f32.mrb[0].mxu0
  %v552 = vadd.f32 0.0, %v551
  %v553 = vpop.f32.mrb[0].mxu0
  %554 = vmatprep.mubr.bf16.mxu0 0
  %555 = vmatmul.mubr.bf16.gmra.mrb[0].mxu0 %v407
  %v556 = vpop.f32.mrb[0].mxu0
  %v557 = vadd.f32 0.0, %v556
  %v558 = vpop.f32.mrb[0].mxu0
  %v559 = vpop.f32.mrb[0].mxu0
  %v560 = vadd.f32 0.0, %v559
  %v561 = vpop.f32.mrb[0].mxu0
  %562 = vmatprep.mubr.bf16.mxu0 0
  %563 = vmatmul.mubr.bf16.gmra.mrb[0].mxu0 %v410
  %v564 = vpop.f32.mrb[0].mxu0
  %v565 = vadd.f32 0.0, %v564
  %v566 = vpop.f32.mrb[0].mxu0
  %v567 = vpop.f32.mrb[0].mxu0
  %v568 = vadd.f32 0.0, %v567
  %v569 = vpop.f32.mrb[0].mxu0
  %570 = vmatprep.mubr.bf16.mxu0 0
  %571 = vmatmul.mubr.bf16.gmra.mrb[0].mxu0 %v413
  %v572 = vpop.f32.mrb[0].mxu0
  %v573 = vadd.f32 0.0, %v572
  %v574 = vpop.f32.mrb[0].mxu0
  %v575 = vpop.f32.mrb[0].mxu0
  %v576 = vadd.f32 0.0, %v575
  %v577 = vpop.f32.mrb[0].mxu0
  %578 = vmatprep.mubr.bf16.mxu0 0
  %579 = vmatmul.mubr.bf16.gmra.mrb[0].mxu0 %v416
  %v580 = vpop.f32.mrb[0].mxu0
  %v581 = vadd.f32 0.0, %v580
  %v582 = vpop.f32.mrb[0].mxu0
  %v583 = vpop.f32.mrb[0].mxu0
  %v584 = vadd.f32 0.0, %v583
  %v585 = vpop.f32.mrb[0].mxu0
  %586 = vmatprep.mubr.bf16.mxu0 0
  %587 = vmatmul.mubr.bf16.gmra.mrb[0].mxu0 %v419
  %v588 = vpop.f32.mrb[0].mxu0
  %v589 = vadd.f32 0.0, %v588
  %v590 = vpop.f32.mrb[0].mxu0
  %v591 = vpop.f32.mrb[0].mxu0
  %v592 = vadd.f32 0.0, %v591
  %v593 = vpop.f32.mrb[0].mxu0
  %594 = vmatprep.mubr.bf16.mxu0 0
  %595 = vmatmul.mubr.bf16.gmra.mrb[0].mxu0 %v422
  %v596 = vpop.f32.mrb[0].mxu0
  %v597 = vadd.f32 0.0, %v596
  %v598 = vpop.f32.mrb[0].mxu0
  %v599 = vpop.f32.mrb[0].mxu0
  %v600 = vadd.f32 0.0, %v599
  %v601 = vpop.f32.mrb[0].mxu0
  %602 = vmatprep.mubr.bf16.mxu0 0
  %603 = vmatmul.mubr.bf16.gmra.mrb[0].mxu0 %v425
  %v604 = vpop.f32.mrb[0].mxu0
  %v605 = vadd.f32 0.0, %v604
  %v606 = vpop.f32.mrb[0].mxu0
  %v607 = vpop.f32.mrb[0].mxu0
  %v608 = vadd.f32 0.0, %v607
  %v609 = vpop.f32.mrb[0].mxu0
  %610 = vmatprep.mubr.bf16.mxu0 0
  %611 = vmatmul.mubr.bf16.gmra.mrb[0].mxu0 %v428
  %v612 = vpop.f32.mrb[0].mxu0
  %v613 = vadd.f32 0.0, %v612
  %v614 = vpop.f32.mrb[0].mxu0
  %v615 = vpop.f32.mrb[0].mxu0
  %v616 = vadd.f32 0.0, %v615
  %v617 = vpop.f32.mrb[0].mxu0
  %618 = vmatprep.mubr.bf16.mxu0 0
  %619 = vmatmul.mubr.bf16.gmra.mrb[0].mxu0 %v431
  %v620 = vpop.f32.mrb[0].mxu0
  %v621 = vadd.f32 0.0, %v620
  %v622 = vpop.f32.mrb[0].mxu0
  %v623 = vpop.f32.mrb[0].mxu0
  %v624 = vadd.f32 0.0, %v623
  %v625 = vpop.f32.mrb[0].mxu0
  %626 = vmatprep.mubr.bf16.mxu0 0
  %627 = vmatmul.mubr.bf16.gmra.mrb[0].mxu0 %v434
  %v628 = vpop.f32.mrb[0].mxu0
  %v629 = vadd.f32 0.0, %v628
  %v630 = vpop.f32.mrb[0].mxu0
  %v631 = vpop.f32.mrb[0].mxu0
  %v632 = vadd.f32 0.0, %v631
  %v633 = vpop.f32.mrb[0].mxu0
  %634 = vmatprep.mubr.bf16.mxu0 0
  %635 = vmatmul.mubr.bf16.gmra.mrb[0].mxu0 %v437
  %v636 = vpop.f32.mrb[0].mxu0
  %v637 = vadd.f32 0.0, %v636
  %v638 = vpop.f32.mrb[0].mxu0
  %v639 = vpop.f32.mrb[0].mxu0
  %v640 = vadd.f32 0.0, %v639
  %v641 = vpop.f32.mrb[0].mxu0
  %642 = vmatprep.mubr.bf16.mxu0 0
  %643 = vmatmul.mubr.bf16.gmra.mrb[0].mxu0 %v440
  %v644 = vpop.f32.mrb[0].mxu0
  %v645 = vadd.f32 0.0, %v644
  %v646 = vpop.f32.mrb[0].mxu0
  %v647 = vpop.f32.mrb[0].mxu0
  %v648 = vadd.f32 0.0, %v647
  %v649 = vpop.f32.mrb[0].mxu0
  %650 = vmatprep.mubr.bf16.mxu0 0
  %651 = vmatmul.mubr.bf16.gmra.mrb[0].mxu0 %v443
  %v652 = vpop.f32.mrb[0].mxu0
  %v653 = vadd.f32 0.0, %v652
  %v654 = vpop.f32.mrb[0].mxu0
  %v655 = vpop.f32.mrb[0].mxu0
  %v656 = vadd.f32 0.0, %v655
  %v657 = vpop.f32.mrb[0].mxu0
  %658 = vmatprep.mubr.bf16.mxu0 0
  %659 = vmatmul.mubr.bf16.gmra.mrb[0].mxu0 %v446
  %v660 = vpop.f32.mrb[0].mxu0
  %v661 = vadd.f32 0.0, %v660
  %v662 = vpop.f32.mrb[0].mxu0
  %v663 = vpop.f32.mrb[0].mxu0
  %v664 = vadd.f32 0.0, %v663
  %v665 = vpop.f32.mrb[0].mxu0
  %666 = vmatprep.mubr.bf16.mxu0 0
  %667 = vmatmul.mubr.bf16.gmra.mrb[0].mxu0 %v449
  %v668 = vpop.f32.mrb[0].mxu0
  %v669 = vadd.f32 0.0, %v668
  %v670 = vpop.f32.mrb[0].mxu0
  %v671 = vpop.f32.mrb[0].mxu0
  %v672 = vadd.f32 0.0, %v671
  %v673 = vpop.f32.mrb[0].mxu0
  %674 = vmatprep.mubr.bf16.mxu0 0
  %675 = vmatmul.mubr.bf16.gmra.mrb[0].mxu0 %v452
  %v676 = vpop.f32.mrb[0].mxu0
  %v677 = vadd.f32 0.0, %v676
  %v678 = vpop.f32.mrb[0].mxu0
  %v679 = vpop.f32.mrb[0].mxu0
  %v680 = vadd.f32 0.0, %v679
  %v681 = vpop.f32.mrb[0].mxu0
  %682 = vmatprep.mubr.bf16.mxu0 0
  %683 = vmatmul.mubr.bf16.gmra.mrb[0].mxu0 %v455
  %v684 = vpop.f32.mrb[0].mxu0
  %v685 = vadd.f32 0.0, %v684
  %v686 = vpop.f32.mrb[0].mxu0
  %v687 = vpop.f32.mrb[0].mxu0
  %v688 = vadd.f32 0.0, %v687
  %v689 = vpop.f32.mrb[0].mxu0
  %690 = vmatprep.mubr.bf16.mxu0 0
  %691 = vmatmul.mubr.bf16.gmra.mrb[0].mxu0 %v458
  %v692 = vpop.f32.mrb[0].mxu0
  %v693 = vadd.f32 0.0, %v692
  %v694 = vpop.f32.mrb[0].mxu0
  %v695 = vpop.f32.mrb[0].mxu0
  %v696 = vadd.f32 0.0, %v695
  %v697 = vpop.f32.mrb[0].mxu0
  %698 = vmatprep.mubr.bf16.mxu0 0
  %699 = vmatmul.mubr.bf16.gmra.mrb[0].mxu0 %v461
  %v700 = vpop.f32.mrb[0].mxu0
  %v701 = vadd.f32 0.0, %v700
  %v702 = vpop.f32.mrb[0].mxu0
  %v703 = vpop.f32.mrb[0].mxu0
  %v704 = vadd.f32 0.0, %v703
  %v705 = vpop.f32.mrb[0].mxu0
  %706 = vmatprep.mubr.bf16.mxu0 0
  %707 = vmatmul.mubr.bf16.gmra.mrb[0].mxu0 %v464
  %v708 = vpop.f32.mrb[0].mxu0
  %v709 = vadd.f32 0.0, %v708
  %v710 = vpop.f32.mrb[0].mxu0
  %v711 = vpop.f32.mrb[0].mxu0
  %v712 = vadd.f32 0.0, %v711
  %v713 = vpop.f32.mrb[0].mxu0
  %714 = vmatprep.mubr.bf16.mxu0 0
  %715 = vmatmul.mubr.bf16.gmra.mrb[0].mxu0 %v467
  %v716 = vpop.f32.mrb[0].mxu0
  %v717 = vadd.f32 0.0, %v716
  %v718 = vpop.f32.mrb[0].mxu0
  %v719 = vpop.f32.mrb[0].mxu0
  %v720 = vadd.f32 0.0, %v719
  %v721 = vpop.f32.mrb[0].mxu0
  %722 = vmatprep.mubr.bf16.mxu0 0
  %723 = vmatmul.mubr.bf16.gmra.mrb[0].mxu0 %v470
  %v724 = vpop.f32.mrb[0].mxu0
  %v725 = vadd.f32 0.0, %v724
  %v726 = vpop.f32.mrb[0].mxu0
  %v727 = vpop.f32.mrb[0].mxu0
  %v728 = vadd.f32 0.0, %v727
  %v729 = vpop.f32.mrb[0].mxu0
  %730 = vmatprep.mubr.bf16.mxu0 0
  %731 = vmatmul.mubr.bf16.gmra.mrb[0].mxu0 %v473
  %v732 = vpop.f32.mrb[0].mxu0
  %v733 = vadd.f32 0.0, %v732
  %v734 = vpop.f32.mrb[0].mxu0
  %v735 = vpop.f32.mrb[0].mxu0
  %v736 = vadd.f32 0.0, %v735
  %v737 = vpop.f32.mrb[0].mxu0
  %738 = vmatprep.mubr.bf16.mxu0 0
  %739 = vmatmul.mubr.bf16.gmra.mrb[0].mxu0 %v476
  %v740 = vpop.f32.mrb[0].mxu0
  %v741 = vadd.f32 0.0, %v740
  %v742 = vpop.f32.mrb[0].mxu0
  %v743 = vpop.f32.mrb[0].mxu0
  %v744 = vadd.f32 0.0, %v743
  %v745 = vpop.f32.mrb[0].mxu0
  %746 = vmatprep.mubr.bf16.mxu0 0
  %747 = vmatmul.mubr.bf16.gmra.mrb[0].mxu0 %v479
  %v748 = vpop.f32.mrb[0].mxu0
  %v749 = vadd.f32 0.0, %v748
  %v750 = vpop.f32.mrb[0].mxu0
  %v751 = vpop.f32.mrb[0].mxu0
  %v752 = vadd.f32 0.0, %v751
  %v753 = vpop.f32.mrb[0].mxu0
  %754 = vmatprep.mubr.bf16.mxu0 0
  %755 = vmatmul.mubr.bf16.gmra.mrb[0].mxu0 %v482
  %v756 = vpop.f32.mrb[0].mxu0
  %v757 = vadd.f32 0.0, %v756
  %v758 = vpop.f32.mrb[0].mxu0
  %v759 = vpop.f32.mrb[0].mxu0
  %v760 = vadd.f32 0.0, %v759
  %v761 = vpop.f32.mrb[0].mxu0
  %762 = vmatprep.mubr.bf16.mxu0 0
  %763 = vmatmul.mubr.bf16.gmra.mrb[0].mxu0 %v485
  %v764 = vpop.f32.mrb[0].mxu0
  %v765 = vadd.f32 0.0, %v764
  %v766 = vpop.f32.mrb[0].mxu0
  %v767 = vpop.f32.mrb[0].mxu0
  %v768 = vadd.f32 0.0, %v767
  %v769 = vpop.f32.mrb[0].mxu0
  %770 = vmatprep.mubr.bf16.mxu0 0
  %771 = vmatmul.mubr.bf16.gmra.mrb[0].mxu0 %v488
  %v772 = vpop.f32.mrb[0].mxu0
  %v773 = vadd.f32 0.0, %v772
  %v774 = vpop.f32.mrb[0].mxu0
  %v775 = vpop.f32.mrb[0].mxu0
  %v776 = vadd.f32 0.0, %v775
  %v777 = vpop.f32.mrb[0].mxu0
  %778 = vdwg.mxu0
  %v779 = vadd.f32 %v81, %v525
  %v780 = vadd.f32 %v82, %v528
  %v781 = vadd.f32 %v83, %v533
  %v782 = vadd.f32 %v84, %v536
  %v783 = vadd.f32 %v85, %v541
  %v784 = vadd.f32 %v86, %v544
  %v785 = vadd.f32 %v87, %v549
  %v786 = vadd.f32 %v88, %v552
  %v787 = vadd.f32 %v89, %v557
  %v788 = vadd.f32 %v90, %v560
  %v789 = vadd.f32 %v91, %v565
  %v790 = vadd.f32 %v92, %v568
  %v791 = vadd.f32 %v93, %v573
  %v792 = vadd.f32 %v94, %v576
  %v793 = vadd.f32 %v95, %v581
  %v794 = vadd.f32 %v96, %v584
  %v795 = vadd.f32 %v97, %v589
  %v796 = vadd.f32 %v98, %v592
  %v797 = vadd.f32 %v99, %v597
  %v798 = vadd.f32 %v100, %v600
  %v799 = vadd.f32 %v101, %v605
  %v800 = vadd.f32 %v102, %v608
  %v801 = vadd.f32 %v103, %v613
  %v802 = vadd.f32 %v104, %v616
  %v803 = vadd.f32 %v105, %v621
  %v804 = vadd.f32 %v106, %v624
  %v805 = vadd.f32 %v107, %v629
  %v806 = vadd.f32 %v108, %v632
  %v807 = vadd.f32 %v109, %v637
  %v808 = vadd.f32 %v110, %v640
  %v809 = vadd.f32 %v111, %v645
  %v810 = vadd.f32 %v112, %v648
  %v811 = vadd.f32 %v113, %v653
  %v812 = vadd.f32 %v114, %v656
  %v813 = vadd.f32 %v115, %v661
  %v814 = vadd.f32 %v116, %v664
  %v815 = vadd.f32 %v117, %v669
  %v816 = vadd.f32 %v118, %v672
  %v817 = vadd.f32 %v119, %v677
  %v818 = vadd.f32 %v120, %v680
  %v819 = vadd.f32 %v121, %v685
  %v820 = vadd.f32 %v122, %v688
  %v821 = vadd.f32 %v123, %v693
  %v822 = vadd.f32 %v124, %v696
  %v823 = vadd.f32 %v125, %v701
  %v824 = vadd.f32 %v126, %v704
  %v825 = vadd.f32 %v127, %v709
  %v826 = vadd.f32 %v128, %v712
  %v827 = vadd.f32 %v129, %v717
  %v828 = vadd.f32 %v130, %v720
  %v829 = vadd.f32 %v131, %v725
  %v830 = vadd.f32 %v132, %v728
  %v831 = vadd.f32 %v133, %v733
  %v832 = vadd.f32 %v134, %v736
  %v833 = vadd.f32 %v135, %v741
  %v834 = vadd.f32 %v136, %v744
  %v835 = vadd.f32 %v137, %v749
  %v836 = vadd.f32 %v138, %v752
  %v837 = vadd.f32 %v139, %v757
  %v838 = vadd.f32 %v140, %v760
  %v839 = vadd.f32 %v141, %v765
  %v840 = vadd.f32 %v142, %v768
  %v841 = vadd.f32 %v143, %v773
  %v842 = vadd.f32 %v144, %v776
  %vm843 = vcmask 523264
  %844 = vst.msk [vmem:[#allocation2] sm:$0xff] %vm843, %v779
  %845 = vst.msk [vmem:[#allocation2 + $0x8] sm:$0xff] %vm843, %v780
  %846 = vst.msk [vmem:[#allocation2 + $0x10] sm:$0xff] %vm843, %v781
  %847 = vst.msk [vmem:[#allocation2 + $0x18] sm:$0xff] %vm843, %v782
  %848 = vst.msk [vmem:[#allocation2 + $0x20] sm:$0xff] %vm843, %v783
  %849 = vst.msk [vmem:[#allocation2 + $0x28] sm:$0xff] %vm843, %v784
  %850 = vst.msk [vmem:[#allocation2 + $0x30] sm:$0xff] %vm843, %v785
  %851 = vst.msk [vmem:[#allocation2 + $0x38] sm:$0xff] %vm843, %v786
  %852 = vst.msk [vmem:[#allocation2 + $0x40] sm:$0xff] %vm843, %v787
  %853 = vst.msk [vmem:[#allocation2 + $0x48] sm:$0xff] %vm843, %v788
  %854 = vst.msk [vmem:[#allocation2 + $0x50] sm:$0xff] %vm843, %v789
  %855 = vst.msk [vmem:[#allocation2 + $0x58] sm:$0xff] %vm843, %v790
  %856 = vst.msk [vmem:[#allocation2 + $0x60] sm:$0xff] %vm843, %v791
  %857 = vst.msk [vmem:[#allocation2 + $0x68] sm:$0xff] %vm843, %v792
  %858 = vst.msk [vmem:[#allocation2 + $0x70] sm:$0xff] %vm843, %v793
  %859 = vst.msk [vmem:[#allocation2 + $0x78] sm:$0xff] %vm843, %v794
  %860 = vst.msk [vmem:[#allocation2 + $0x80] sm:$0xff] %vm843, %v795
  %861 = vst.msk [vmem:[#allocation2 + $0x88] sm:$0xff] %vm843, %v796
  %862 = vst.msk [vmem:[#allocation2 + $0x90] sm:$0xff] %vm843, %v797
  %863 = vst.msk [vmem:[#allocation2 + $0x98] sm:$0xff] %vm843, %v798
  %864 = vst.msk [vmem:[#allocation2 + $0xa0] sm:$0xff] %vm843, %v799
  %865 = vst.msk [vmem:[#allocation2 + $0xa8] sm:$0xff] %vm843, %v800
  %866 = vst.msk [vmem:[#allocation2 + $0xb0] sm:$0xff] %vm843, %v801
  %867 = vst.msk [vmem:[#allocation2 + $0xb8] sm:$0xff] %vm843, %v802
  %868 = vst.msk [vmem:[#allocation2 + $0xc0] sm:$0xff] %vm843, %v803
  %869 = vst.msk [vmem:[#allocation2 + $0xc8] sm:$0xff] %vm843, %v804
  %870 = vst.msk [vmem:[#allocation2 + $0xd0] sm:$0xff] %vm843, %v805
  %871 = vst.msk [vmem:[#allocation2 + $0xd8] sm:$0xff] %vm843, %v806
  %872 = vst.msk [vmem:[#allocation2 + $0xe0] sm:$0xff] %vm843, %v807
  %873 = vst.msk [vmem:[#allocation2 + $0xe8] sm:$0xff] %vm843, %v808
  %874 = vst.msk [vmem:[#allocation2 + $0xf0] sm:$0xff] %vm843, %v809
  %875 = vst.msk [vmem:[#allocation2 + $0xf8] sm:$0xff] %vm843, %v810
  %876 = vst.msk [vmem:[#allocation2 + $0x100] sm:$0xff] %vm843, %v811
  %877 = vst.msk [vmem:[#allocation2 + $0x108] sm:$0xff] %vm843, %v812
  %878 = vst.msk [vmem:[#allocation2 + $0x110] sm:$0xff] %vm843, %v813
  %879 = vst.msk [vmem:[#allocation2 + $0x118] sm:$0xff] %vm843, %v814
  %880 = vst.msk [vmem:[#allocation2 + $0x120] sm:$0xff] %vm843, %v815
  %881 = vst.msk [vmem:[#allocation2 + $0x128] sm:$0xff] %vm843, %v816
  %882 = vst.msk [vmem:[#allocation2 + $0x130] sm:$0xff] %vm843, %v817
  %883 = vst.msk [vmem:[#allocation2 + $0x138] sm:$0xff] %vm843, %v818
  %884 = vst.msk [vmem:[#allocation2 + $0x140] sm:$0xff] %vm843, %v819
  %885 = vst.msk [vmem:[#allocation2 + $0x148] sm:$0xff] %vm843, %v820
  %886 = vst.msk [vmem:[#allocation2 + $0x150] sm:$0xff] %vm843, %v821
  %887 = vst.msk [vmem:[#allocation2 + $0x158] sm:$0xff] %vm843, %v822
  %888 = vst.msk [vmem:[#allocation2 + $0x160] sm:$0xff] %vm843, %v823
  %889 = vst.msk [vmem:[#allocation2 + $0x168] sm:$0xff] %vm843, %v824
  %890 = vst.msk [vmem:[#allocation2 + $0x170] sm:$0xff] %vm843, %v825
  %891 = vst.msk [vmem:[#allocation2 + $0x178] sm:$0xff] %vm843, %v826
  %892 = vst.msk [vmem:[#allocation2 + $0x180] sm:$0xff] %vm843, %v827
  %893 = vst.msk [vmem:[#allocation2 + $0x188] sm:$0xff] %vm843, %v828
  %894 = vst.msk [vmem:[#allocation2 + $0x190] sm:$0xff] %vm843, %v829
  %895 = vst.msk [vmem:[#allocation2 + $0x198] sm:$0xff] %vm843, %v830
  %896 = vst.msk [vmem:[#allocation2 + $0x1a0] sm:$0xff] %vm843, %v831
  %897 = vst.msk [vmem:[#allocation2 + $0x1a8] sm:$0xff] %vm843, %v832
  %898 = vst.msk [vmem:[#allocation2 + $0x1b0] sm:$0xff] %vm843, %v833
  %899 = vst.msk [vmem:[#allocation2 + $0x1b8] sm:$0xff] %vm843, %v834
  %900 = vst.msk [vmem:[#allocation2 + $0x1c0] sm:$0xff] %vm843, %v835
  %901 = vst.msk [vmem:[#allocation2 + $0x1c8] sm:$0xff] %vm843, %v836
  %902 = vst.msk [vmem:[#allocation2 + $0x1d0] sm:$0xff] %vm843, %v837
  %903 = vst.msk [vmem:[#allocation2 + $0x1d8] sm:$0xff] %vm843, %v838
  %904 = vst.msk [vmem:[#allocation2 + $0x1e0] sm:$0xff] %vm843, %v839
  %905 = vst.msk [vmem:[#allocation2 + $0x1e8] sm:$0xff] %vm843, %v840
  %906 = vst.msk [vmem:[#allocation2 + $0x1f0] sm:$0xff] %vm843, %v841
  %907 = vst.msk [vmem:[#allocation2 + $0x1f8] sm:$0xff] %vm843, %v842
  // Predicated region
  $region14: #{_lambda_.5} parent=0 // pred_check
    %p908 = pneg %p12
  $region15: #{_lambda_.5} parent=0 // pred_check_branch
    %910 = sbr.rel (%p908) target = $region17
  $region16: #{_lambda_.5} parent=0 // pred_region
    %v911 = vld [vmem:[#allocation2] sm:$0xff]
    %v912 = vld [vmem:[#allocation2 + $0x8] sm:$0xff]
    %v913 = vld [vmem:[#allocation2 + $0x10] sm:$0xff]
    %v914 = vld [vmem:[#allocation2 + $0x18] sm:$0xff]
    %v915 = vld [vmem:[#allocation2 + $0x20] sm:$0xff]
    %v916 = vld [vmem:[#allocation2 + $0x28] sm:$0xff]
    %v917 = vld [vmem:[#allocation2 + $0x30] sm:$0xff]
    %v918 = vld [vmem:[#allocation2 + $0x38] sm:$0xff]
    %v919 = vld [vmem:[#allocation2 + $0x40] sm:$0xff]
    %v920 = vld [vmem:[#allocation2 + $0x48] sm:$0xff]
    %v921 = vld [vmem:[#allocation2 + $0x50] sm:$0xff]
    %v922 = vld [vmem:[#allocation2 + $0x58] sm:$0xff]
    %v923 = vld [vmem:[#allocation2 + $0x60] sm:$0xff]
    %v924 = vld [vmem:[#allocation2 + $0x68] sm:$0xff]
    %v925 = vld [vmem:[#allocation2 + $0x70] sm:$0xff]
    %v926 = vld [vmem:[#allocation2 + $0x78] sm:$0xff]
    %v927 = vld [vmem:[#allocation2 + $0x80] sm:$0xff]
    %v928 = vld [vmem:[#allocation2 + $0x88] sm:$0xff]
    %v929 = vld [vmem:[#allocation2 + $0x90] sm:$0xff]
    %v930 = vld [vmem:[#allocation2 + $0x98] sm:$0xff]
    %v931 = vld [vmem:[#allocation2 + $0xa0] sm:$0xff]
    %v932 = vld [vmem:[#allocation2 + $0xa8] sm:$0xff]
    %v933 = vld [vmem:[#allocation2 + $0xb0] sm:$0xff]
    %v934 = vld [vmem:[#allocation2 + $0xb8] sm:$0xff]
    %v935 = vld [vmem:[#allocation2 + $0xc0] sm:$0xff]
    %v936 = vld [vmem:[#allocation2 + $0xc8] sm:$0xff]
    %v937 = vld [vmem:[#allocation2 + $0xd0] sm:$0xff]
    %v938 = vld [vmem:[#allocation2 + $0xd8] sm:$0xff]
    %v939 = vld [vmem:[#allocation2 + $0xe0] sm:$0xff]
    %v940 = vld [vmem:[#allocation2 + $0xe8] sm:$0xff]
    %v941 = vld [vmem:[#allocation2 + $0xf0] sm:$0xff]
    %v942 = vld [vmem:[#allocation2 + $0xf8] sm:$0xff]
    %v943 = vld [vmem:[#allocation2 + $0x100] sm:$0xff]
    %v944 = vld [vmem:[#allocation2 + $0x108] sm:$0xff]
    %v945 = vld [vmem:[#allocation2 + $0x110] sm:$0xff]
    %v946 = vld [vmem:[#allocation2 + $0x118] sm:$0xff]
    %v947 = vld [vmem:[#allocation2 + $0x120] sm:$0xff]
    %v948 = vld [vmem:[#allocation2 + $0x128] sm:$0xff]
    %v949 = vld [vmem:[#allocation2 + $0x130] sm:$0xff]
    %v950 = vld [vmem:[#allocation2 + $0x138] sm:$0xff]
    %v951 = vld [vmem:[#allocation2 + $0x140] sm:$0xff]
    %v952 = vld [vmem:[#allocation2 + $0x148] sm:$0xff]
    %v953 = vld [vmem:[#allocation2 + $0x150] sm:$0xff]
    %v954 = vld [vmem:[#allocation2 + $0x158] sm:$0xff]
    %v955 = vld [vmem:[#allocation2 + $0x160] sm:$0xff]
    %v956 = vld [vmem:[#allocation2 + $0x168] sm:$0xff]
    %v957 = vld [vmem:[#allocation2 + $0x170] sm:$0xff]
    %v958 = vld [vmem:[#allocation2 + $0x178] sm:$0xff]
    %v959 = vld [vmem:[#allocation2 + $0x180] sm:$0xff]
    %v960 = vld [vmem:[#allocation2 + $0x188] sm:$0xff]
    %v961 = vld [vmem:[#allocation2 + $0x190] sm:$0xff]
    %v962 = vld [vmem:[#allocation2 + $0x198] sm:$0xff]
    %v963 = vld [vmem:[#allocation2 + $0x1a0] sm:$0xff]
    %v964 = vld [vmem:[#allocation2 + $0x1a8] sm:$0xff]
    %v965 = vld [vmem:[#allocation2 + $0x1b0] sm:$0xff]
    %v966 = vld [vmem:[#allocation2 + $0x1b8] sm:$0xff]
    %v967 = vld [vmem:[#allocation2 + $0x1c0] sm:$0xff]
    %v968 = vld [vmem:[#allocation2 + $0x1c8] sm:$0xff]
    %v969 = vld [vmem:[#allocation2 + $0x1d0] sm:$0xff]
    %v970 = vld [vmem:[#allocation2 + $0x1d8] sm:$0xff]
    %v971 = vld [vmem:[#allocation2 + $0x1e0] sm:$0xff]
    %v972 = vld [vmem:[#allocation2 + $0x1e8] sm:$0xff]
    %v973 = vld [vmem:[#allocation2 + $0x1f0] sm:$0xff]
    %v974 = vld [vmem:[#allocation2 + $0x1f8] sm:$0xff]
    %vm975 = vcmp.ge.f32.partialorder %v911, 0.0
    %vm976 = vcmp.ge.f32.partialorder %v912, 0.0
    %vm977 = vcmp.ge.f32.partialorder %v913, 0.0
    %vm978 = vcmp.ge.f32.partialorder %v914, 0.0
    %vm979 = vcmp.ge.f32.partialorder %v915, 0.0
    %vm980 = vcmp.ge.f32.partialorder %v916, 0.0
    %vm981 = vcmp.ge.f32.partialorder %v917, 0.0
    %vm982 = vcmp.ge.f32.partialorder %v918, 0.0
    %vm983 = vcmp.ge.f32.partialorder %v919, 0.0
    %vm984 = vcmp.ge.f32.partialorder %v920, 0.0
    %vm985 = vcmp.ge.f32.partialorder %v921, 0.0
    %vm986 = vcmp.ge.f32.partialorder %v922, 0.0
    %vm987 = vcmp.ge.f32.partialorder %v923, 0.0
    %vm988 = vcmp.ge.f32.partialorder %v924, 0.0
    %vm989 = vcmp.ge.f32.partialorder %v925, 0.0
    %vm990 = vcmp.ge.f32.partialorder %v926, 0.0
    %vm991 = vcmp.ge.f32.partialorder %v927, 0.0
    %vm992 = vcmp.ge.f32.partialorder %v928, 0.0
    %vm993 = vcmp.ge.f32.partialorder %v929, 0.0
    %vm994 = vcmp.ge.f32.partialorder %v930, 0.0
    %vm995 = vcmp.ge.f32.partialorder %v931, 0.0
    %vm996 = vcmp.ge.f32.partialorder %v932, 0.0
    %vm997 = vcmp.ge.f32.partialorder %v933, 0.0
    %vm998 = vcmp.ge.f32.partialorder %v934, 0.0
    %vm999 = vcmp.ge.f32.partialorder %v935, 0.0
    %vm1000 = vcmp.ge.f32.partialorder %v936, 0.0
    %vm1001 = vcmp.ge.f32.partialorder %v937, 0.0
    %vm1002 = vcmp.ge.f32.partialorder %v938, 0.0
    %vm1003 = vcmp.ge.f32.partialorder %v939, 0.0
    %vm1004 = vcmp.ge.f32.partialorder %v940, 0.0
    %vm1005 = vcmp.ge.f32.partialorder %v941, 0.0
    %vm1006 = vcmp.ge.f32.partialorder %v942, 0.0
    %vm1007 = vcmp.ge.f32.partialorder %v943, 0.0
    %vm1008 = vcmp.ge.f32.partialorder %v944, 0.0
    %vm1009 = vcmp.ge.f32.partialorder %v945, 0.0
    %vm1010 = vcmp.ge.f32.partialorder %v946, 0.0
    %vm1011 = vcmp.ge.f32.partialorder %v947, 0.0
    %vm1012 = vcmp.ge.f32.partialorder %v948, 0.0
    %vm1013 = vcmp.ge.f32.partialorder %v949, 0.0
    %vm1014 = vcmp.ge.f32.partialorder %v950, 0.0
    %vm1015 = vcmp.ge.f32.partialorder %v951, 0.0
    %vm1016 = vcmp.ge.f32.partialorder %v952, 0.0
    %vm1017 = vcmp.ge.f32.partialorder %v953, 0.0
    %vm1018 = vcmp.ge.f32.partialorder %v954, 0.0
    %vm1019 = vcmp.ge.f32.partialorder %v955, 0.0
    %vm1020 = vcmp.ge.f32.partialorder %v956, 0.0
    %vm1021 = vcmp.ge.f32.partialorder %v957, 0.0
    %vm1022 = vcmp.ge.f32.partialorder %v958, 0.0
    %vm1023 = vcmp.ge.f32.partialorder %v959, 0.0
    %vm1024 = vcmp.ge.f32.partialorder %v960, 0.0
    %vm1025 = vcmp.ge.f32.partialorder %v961, 0.0
    %vm1026 = vcmp.ge.f32.partialorder %v962, 0.0
    %vm1027 = vcmp.ge.f32.partialorder %v963, 0.0
    %vm1028 = vcmp.ge.f32.partialorder %v964, 0.0
    %vm1029 = vcmp.ge.f32.partialorder %v965, 0.0
    %vm1030 = vcmp.ge.f32.partialorder %v966, 0.0
    %vm1031 = vcmp.ge.f32.partialorder %v967, 0.0
    %vm1032 = vcmp.ge.f32.partialorder %v968, 0.0
    %vm1033 = vcmp.ge.f32.partialorder %v969, 0.0
    %vm1034 = vcmp.ge.f32.partialorder %v970, 0.0
    %vm1035 = vcmp.ge.f32.partialorder %v971, 0.0
    %vm1036 = vcmp.ge.f32.partialorder %v972, 0.0
    %vm1037 = vcmp.ge.f32.partialorder %v973, 0.0
    %vm1038 = vcmp.ge.f32.partialorder %v974, 0.0
    %v1039 = vmul.f32 %v911, 0.2
    %v1040 = vmul.f32 %v912, 0.2
    %v1041 = vmul.f32 %v913, 0.2
    %v1042 = vmul.f32 %v914, 0.2
    %v1043 = vmul.f32 %v915, 0.2
    %v1044 = vmul.f32 %v916, 0.2
    %v1045 = vmul.f32 %v917, 0.2
    %v1046 = vmul.f32 %v918, 0.2
    %v1047 = vmul.f32 %v919, 0.2
    %v1048 = vmul.f32 %v920, 0.2
    %v1049 = vmul.f32 %v921, 0.2
    %v1050 = vmul.f32 %v922, 0.2
    %v1051 = vmul.f32 %v923, 0.2
    %v1052 = vmul.f32 %v924, 0.2
    %v1053 = vmul.f32 %v925, 0.2
    %v1054 = vmul.f32 %v926, 0.2
    %v1055 = vmul.f32 %v927, 0.2
    %v1056 = vmul.f32 %v928, 0.2
    %v1057 = vmul.f32 %v929, 0.2
    %v1058 = vmul.f32 %v930, 0.2
    %v1059 = vmul.f32 %v931, 0.2
    %v1060 = vmul.f32 %v932, 0.2
    %v1061 = vmul.f32 %v933, 0.2
    %v1062 = vmul.f32 %v934, 0.2
    %v1063 = vmul.f32 %v935, 0.2
    %v1064 = vmul.f32 %v936, 0.2
    %v1065 = vmul.f32 %v937, 0.2
    %v1066 = vmul.f32 %v938, 0.2
    %v1067 = vmul.f32 %v939, 0.2
    %v1068 = vmul.f32 %v940, 0.2
    %v1069 = vmul.f32 %v941, 0.2
    %v1070 = vmul.f32 %v942, 0.2
    %v1071 = vmul.f32 %v943, 0.2
    %v1072 = vmul.f32 %v944, 0.2
    %v1073 = vmul.f32 %v945, 0.2
    %v1074 = vmul.f32 %v946, 0.2
    %v1075 = vmul.f32 %v947, 0.2
    %v1076 = vmul.f32 %v948, 0.2
    %v1077 = vmul.f32 %v949, 0.2
    %v1078 = vmul.f32 %v950, 0.2
    %v1079 = vmul.f32 %v951, 0.2
    %v1080 = vmul.f32 %v952, 0.2
    %v1081 = vmul.f32 %v953, 0.2
    %v1082 = vmul.f32 %v954, 0.2
    %v1083 = vmul.f32 %v955, 0.2
    %v1084 = vmul.f32 %v956, 0.2
    %v1085 = vmul.f32 %v957, 0.2
    %v1086 = vmul.f32 %v958, 0.2
    %v1087 = vmul.f32 %v959, 0.2
    %v1088 = vmul.f32 %v960, 0.2
    %v1089 = vmul.f32 %v961, 0.2
    %v1090 = vmul.f32 %v962, 0.2
    %v1091 = vmul.f32 %v963, 0.2
    %v1092 = vmul.f32 %v964, 0.2
    %v1093 = vmul.f32 %v965, 0.2
    %v1094 = vmul.f32 %v966, 0.2
    %v1095 = vmul.f32 %v967, 0.2
    %v1096 = vmul.f32 %v968, 0.2
    %v1097 = vmul.f32 %v969, 0.2
    %v1098 = vmul.f32 %v970, 0.2
    %v1099 = vmul.f32 %v971, 0.2
    %v1100 = vmul.f32 %v972, 0.2
    %v1101 = vmul.f32 %v973, 0.2
    %v1102 = vmul.f32 %v974, 0.2
    %v1103 = vsel %vm975, %v911, %v1039
    %v1104 = vsel %vm976, %v912, %v1040
    %v1105 = vsel %vm977, %v913, %v1041
    %v1106 = vsel %vm978, %v914, %v1042
    %v1107 = vsel %vm979, %v915, %v1043
    %v1108 = vsel %vm980, %v916, %v1044
    %v1109 = vsel %vm981, %v917, %v1045
    %v1110 = vsel %vm982, %v918, %v1046
    %v1111 = vsel %vm983, %v919, %v1047
    %v1112 = vsel %vm984, %v920, %v1048
    %v1113 = vsel %vm985, %v921, %v1049
    %v1114 = vsel %vm986, %v922, %v1050
    %v1115 = vsel %vm987, %v923, %v1051
    %v1116 = vsel %vm988, %v924, %v1052
    %v1117 = vsel %vm989, %v925, %v1053
    %v1118 = vsel %vm990, %v926, %v1054
    %v1119 = vsel %vm991, %v927, %v1055
    %v1120 = vsel %vm992, %v928, %v1056
    %v1121 = vsel %vm993, %v929, %v1057
    %v1122 = vsel %vm994, %v930, %v1058
    %v1123 = vsel %vm995, %v931, %v1059
    %v1124 = vsel %vm996, %v932, %v1060
    %v1125 = vsel %vm997, %v933, %v1061
    %v1126 = vsel %vm998, %v934, %v1062
    %v1127 = vsel %vm999, %v935, %v1063
    %v1128 = vsel %vm1000, %v936, %v1064
    %v1129 = vsel %vm1001, %v937, %v1065
    %v1130 = vsel %vm1002, %v938, %v1066
    %v1131 = vsel %vm1003, %v939, %v1067
    %v1132 = vsel %vm1004, %v940, %v1068
    %v1133 = vsel %vm1005, %v941, %v1069
    %v1134 = vsel %vm1006, %v942, %v1070
    %v1135 = vsel %vm1007, %v943, %v1071
    %v1136 = vsel %vm1008, %v944, %v1072
    %v1137 = vsel %vm1009, %v945, %v1073
    %v1138 = vsel %vm1010, %v946, %v1074
    %v1139 = vsel %vm1011, %v947, %v1075
    %v1140 = vsel %vm1012, %v948, %v1076
    %v1141 = vsel %vm1013, %v949, %v1077
    %v1142 = vsel %vm1014, %v950, %v1078
    %v1143 = vsel %vm1015, %v951, %v1079
    %v1144 = vsel %vm1016, %v952, %v1080
    %v1145 = vsel %vm1017, %v953, %v1081
    %v1146 = vsel %vm1018, %v954, %v1082
    %v1147 = vsel %vm1019, %v955, %v1083
    %v1148 = vsel %vm1020, %v956, %v1084
    %v1149 = vsel %vm1021, %v957, %v1085
    %v1150 = vsel %vm1022, %v958, %v1086
    %v1151 = vsel %vm1023, %v959, %v1087
    %v1152 = vsel %vm1024, %v960, %v1088
    %v1153 = vsel %vm1025, %v961, %v1089
    %v1154 = vsel %vm1026, %v962, %v1090
    %v1155 = vsel %vm1027, %v963, %v1091
    %v1156 = vsel %vm1028, %v964, %v1092
    %v1157 = vsel %vm1029, %v965, %v1093
    %v1158 = vsel %vm1030, %v966, %v1094
    %v1159 = vsel %vm1031, %v967, %v1095
    %v1160 = vsel %vm1032, %v968, %v1096
    %v1161 = vsel %vm1033, %v969, %v1097
    %v1162 = vsel %vm1034, %v970, %v1098
    %v1163 = vsel %vm1035, %v971, %v1099
    %v1164 = vsel %vm1036, %v972, %v1100
    %v1165 = vsel %vm1037, %v973, %v1101
    %v1166 = vsel %vm1038, %v974, %v1102
    %1167 = vst.msk [vmem:[%s2] sm:$0xff] %vm843, %v1103
    %1168 = vst.msk [vmem:[%s2 + $0x8] sm:$0xff] %vm843, %v1104
    %1169 = vst.msk [vmem:[%s2 + $0x10] sm:$0xff] %vm843, %v1105
    %1170 = vst.msk [vmem:[%s2 + $0x18] sm:$0xff] %vm843, %v1106
    %1171 = vst.msk [vmem:[%s2 + $0x20] sm:$0xff] %vm843, %v1107
    %1172 = vst.msk [vmem:[%s2 + $0x28] sm:$0xff] %vm843, %v1108
    %1173 = vst.msk [vmem:[%s2 + $0x30] sm:$0xff] %vm843, %v1109
    %1174 = vst.msk [vmem:[%s2 + $0x38] sm:$0xff] %vm843, %v1110
    %1175 = vst.msk [vmem:[%s2 + $0x40] sm:$0xff] %vm843, %v1111
    %1176 = vst.msk [vmem:[%s2 + $0x48] sm:$0xff] %vm843, %v1112
    %1177 = vst.msk [vmem:[%s2 + $0x50] sm:$0xff] %vm843, %v1113
    %1178 = vst.msk [vmem:[%s2 + $0x58] sm:$0xff] %vm843, %v1114
    %1179 = vst.msk [vmem:[%s2 + $0x60] sm:$0xff] %vm843, %v1115
    %1180 = vst.msk [vmem:[%s2 + $0x68] sm:$0xff] %vm843, %v1116
    %1181 = vst.msk [vmem:[%s2 + $0x70] sm:$0xff] %vm843, %v1117
    %1182 = vst.msk [vmem:[%s2 + $0x78] sm:$0xff] %vm843, %v1118
    %1183 = vst.msk [vmem:[%s2 + $0x80] sm:$0xff] %vm843, %v1119
    %1184 = vst.msk [vmem:[%s2 + $0x88] sm:$0xff] %vm843, %v1120
    %1185 = vst.msk [vmem:[%s2 + $0x90] sm:$0xff] %vm843, %v1121
    %1186 = vst.msk [vmem:[%s2 + $0x98] sm:$0xff] %vm843, %v1122
    %1187 = vst.msk [vmem:[%s2 + $0xa0] sm:$0xff] %vm843, %v1123
    %1188 = vst.msk [vmem:[%s2 + $0xa8] sm:$0xff] %vm843, %v1124
    %1189 = vst.msk [vmem:[%s2 + $0xb0] sm:$0xff] %vm843, %v1125
    %1190 = vst.msk [vmem:[%s2 + $0xb8] sm:$0xff] %vm843, %v1126
    %1191 = vst.msk [vmem:[%s2 + $0xc0] sm:$0xff] %vm843, %v1127
    %1192 = vst.msk [vmem:[%s2 + $0xc8] sm:$0xff] %vm843, %v1128
    %1193 = vst.msk [vmem:[%s2 + $0xd0] sm:$0xff] %vm843, %v1129
    %1194 = vst.msk [vmem:[%s2 + $0xd8] sm:$0xff] %vm843, %v1130
    %1195 = vst.msk [vmem:[%s2 + $0xe0] sm:$0xff] %vm843, %v1131
    %1196 = vst.msk [vmem:[%s2 + $0xe8] sm:$0xff] %vm843, %v1132
    %1197 = vst.msk [vmem:[%s2 + $0xf0] sm:$0xff] %vm843, %v1133
    %1198 = vst.msk [vmem:[%s2 + $0xf8] sm:$0xff] %vm843, %v1134
    %1199 = vst.msk [vmem:[%s2 + $0x100] sm:$0xff] %vm843, %v1135
    %1200 = vst.msk [vmem:[%s2 + $0x108] sm:$0xff] %vm843, %v1136
    %1201 = vst.msk [vmem:[%s2 + $0x110] sm:$0xff] %vm843, %v1137
    %1202 = vst.msk [vmem:[%s2 + $0x118] sm:$0xff] %vm843, %v1138
    %1203 = vst.msk [vmem:[%s2 + $0x120] sm:$0xff] %vm843, %v1139
    %1204 = vst.msk [vmem:[%s2 + $0x128] sm:$0xff] %vm843, %v1140
    %1205 = vst.msk [vmem:[%s2 + $0x130] sm:$0xff] %vm843, %v1141
    %1206 = vst.msk [vmem:[%s2 + $0x138] sm:$0xff] %vm843, %v1142
    %1207 = vst.msk [vmem:[%s2 + $0x140] sm:$0xff] %vm843, %v1143
    %1208 = vst.msk [vmem:[%s2 + $0x148] sm:$0xff] %vm843, %v1144
    %1209 = vst.msk [vmem:[%s2 + $0x150] sm:$0xff] %vm843, %v1145
    %1210 = vst.msk [vmem:[%s2 + $0x158] sm:$0xff] %vm843, %v1146
    %1211 = vst.msk [vmem:[%s2 + $0x160] sm:$0xff] %vm843, %v1147
    %1212 = vst.msk [vmem:[%s2 + $0x168] sm:$0xff] %vm843, %v1148
    %1213 = vst.msk [vmem:[%s2 + $0x170] sm:$0xff] %vm843, %v1149
    %1214 = vst.msk [vmem:[%s2 + $0x178] sm:$0xff] %vm843, %v1150
    %1215 = vst.msk [vmem:[%s2 + $0x180] sm:$0xff] %vm843, %v1151
    %1216 = vst.msk [vmem:[%s2 + $0x188] sm:$0xff] %vm843, %v1152
    %1217 = vst.msk [vmem:[%s2 + $0x190] sm:$0xff] %vm843, %v1153
    %1218 = vst.msk [vmem:[%s2 + $0x198] sm:$0xff] %vm843, %v1154
    %1219 = vst.msk [vmem:[%s2 + $0x1a0] sm:$0xff] %vm843, %v1155
    %1220 = vst.msk [vmem:[%s2 + $0x1a8] sm:$0xff] %vm843, %v1156
    %1221 = vst.msk [vmem:[%s2 + $0x1b0] sm:$0xff] %vm843, %v1157
    %1222 = vst.msk [vmem:[%s2 + $0x1b8] sm:$0xff] %vm843, %v1158
    %1223 = vst.msk [vmem:[%s2 + $0x1c0] sm:$0xff] %vm843, %v1159
    %1224 = vst.msk [vmem:[%s2 + $0x1c8] sm:$0xff] %vm843, %v1160
    %1225 = vst.msk [vmem:[%s2 + $0x1d0] sm:$0xff] %vm843, %v1161
    %1226 = vst.msk [vmem:[%s2 + $0x1d8] sm:$0xff] %vm843, %v1162
    %1227 = vst.msk [vmem:[%s2 + $0x1e0] sm:$0xff] %vm843, %v1163
    %1228 = vst.msk [vmem:[%s2 + $0x1e8] sm:$0xff] %vm843, %v1164
    %1229 = vst.msk [vmem:[%s2 + $0x1f0] sm:$0xff] %vm843, %v1165
    %1230 = vst.msk [vmem:[%s2 + $0x1f8] sm:$0xff] %vm843, %v1166
  $region17: #{_lambda_.5} parent=0 // pred_fallthru
    _
  // Predicated region
  $region18: #{_lambda_.5} parent=0 // pred_check
    _
  $region19: #{_lambda_.5} parent=0 // pred_check_branch
    %1232 = sbr.rel (0) target = $region21
  $region20: #{_lambda_.5} parent=0 // pred_region
    _
  $region21: #{_lambda_.5} parent=0 // pred_fallthru
    _
  // Predicated region
  $region22: #{_lambda_.5} parent=0 // pred_check
    _
  $region23: #{_lambda_.5} parent=0 // pred_check_branch
    %1234 = sbr.rel (0) target = $region25
  $region24: #{_lambda_.5} parent=0 // pred_region
    _
  $region25: #{_lambda_.5} parent=0 // pred_fallthru
    _

// kernel: _lambda_.6
$region0: #{_lambda_.6}
  #allocation0 [shape = 'u32[]', space=smem, size = 0x4, offset = 0x4, fixed_abs, tag = 'smem constant byte address 0x4 - core index']
  #allocation1 [shape = 'u32[144,128]{1,0:T(1,128)}', space=vmem, size = 0x12000, scoped, tag = 'internal scratch']
  #allocation2 [shape = 'f32[128,128]{1,0:T(8,128)}', space=vmem, size = 0x10000, scoped, tag = 'scratch operand']
  %s0 = inlined_call_operand.vmem [shape: bf16[128,1024], index: 0, kind: input, shape index: {}]
  %s1 = inlined_call_operand.vmem [shape: bf16[1024,128], index: 1, kind: input, shape index: {}]
  %s2 = inlined_call_operand.vmem [shape: f32[128,128], index: 2, kind: output, shape index: {}]
  %s3 = sld [smem:[#allocation0]]
  $region26: #{_lambda_.6} parent=0
    _
  %s5 = ssub.s32 1, %s3
  %s6 = scalar_select 0, %s5, %s3
  // Predicated region
  $region2: #{_lambda_.6} parent=0 // pred_check
    _
  $region3: #{_lambda_.6} parent=0 // pred_check_branch
    %8 = sbr.rel (0) target = $region5
  $region4: #{_lambda_.6} parent=0 // pred_region
    _
  $region5: #{_lambda_.6} parent=0 // pred_fallthru
    _
  // Predicated region
  $region6: #{_lambda_.6} parent=0 // pred_check
    _
  $region7: #{_lambda_.6} parent=0 // pred_check_branch
    %10 = sbr.rel (0) target = $region9
  $region8: #{_lambda_.6} parent=0 // pred_region
    _
  $region9: #{_lambda_.6} parent=0 // pred_fallthru
    _
  %p12 = scmp.eq.s32.totalorder 0, 0
  // Predicated region
  $region10: #{_lambda_.6} parent=0 // pred_check
    %p13 = pneg %p12
  $region11: #{_lambda_.6} parent=0 // pred_check_branch
    %15 = sbr.rel (%p13) target = $region13
  $region12: #{_lambda_.6} parent=0 // pred_region
    %16 = vst [vmem:[#allocation2] sm:$0xff] 0.0
    %17 = vst [vmem:[#allocation2 + $0x8] sm:$0xff] 0.0
    %18 = vst [vmem:[#allocation2 + $0x10] sm:$0xff] 0.0
    %19 = vst [vmem:[#allocation2 + $0x18] sm:$0xff] 0.0
    %20 = vst [vmem:[#allocation2 + $0x20] sm:$0xff] 0.0
    %21 = vst [vmem:[#allocation2 + $0x28] sm:$0xff] 0.0
    %22 = vst [vmem:[#allocation2 + $0x30] sm:$0xff] 0.0
    %23 = vst [vmem:[#allocation2 + $0x38] sm:$0xff] 0.0
    %24 = vst [vmem:[#allocation2 + $0x40] sm:$0xff] 0.0
    %25 = vst [vmem:[#allocation2 + $0x48] sm:$0xff] 0.0
    %26 = vst [vmem:[#allocation2 + $0x50] sm:$0xff] 0.0
    %27 = vst [vmem:[#allocation2 + $0x58] sm:$0xff] 0.0
    %28 = vst [vmem:[#allocation2 + $0x60] sm:$0xff] 0.0
    %29 = vst [vmem:[#allocation2 + $0x68] sm:$0xff] 0.0
    %30 = vst [vmem:[#allocation2 + $0x70] sm:$0xff] 0.0
    %31 = vst [vmem:[#allocation2 + $0x78] sm:$0xff] 0.0
  $region13: #{_lambda_.6} parent=0 // pred_fallthru
    _
  %v32 = vld [vmem:[#allocation2] sm:$0xff]
  %v33 = vld [vmem:[#allocation2 + $0x8] sm:$0xff]
  %v34 = vld [vmem:[#allocation2 + $0x10] sm:$0xff]
  %v35 = vld [vmem:[#allocation2 + $0x18] sm:$0xff]
  %v36 = vld [vmem:[#allocation2 + $0x20] sm:$0xff]
  %v37 = vld [vmem:[#allocation2 + $0x28] sm:$0xff]
  %v38 = vld [vmem:[#allocation2 + $0x30] sm:$0xff]
  %v39 = vld [vmem:[#allocation2 + $0x38] sm:$0xff]
  %v40 = vld [vmem:[#allocation2 + $0x40] sm:$0xff]
  %v41 = vld [vmem:[#allocation2 + $0x48] sm:$0xff]
  %v42 = vld [vmem:[#allocation2 + $0x50] sm:$0xff]
  %v43 = vld [vmem:[#allocation2 + $0x58] sm:$0xff]
  %v44 = vld [vmem:[#allocation2 + $0x60] sm:$0xff]
  %v45 = vld [vmem:[#allocation2 + $0x68] sm:$0xff]
  %v46 = vld [vmem:[#allocation2 + $0x70] sm:$0xff]
  %v47 = vld [vmem:[#allocation2 + $0x78] sm:$0xff]
  %v48 = vld [vmem:[%s0] sm:$0xff]
  %v49 = vld [vmem:[%s0 + $0x8] sm:$0xff]
  %v50 = vld [vmem:[%s0 + $0x10] sm:$0xff]
  %v51 = vld [vmem:[%s0 + $0x18] sm:$0xff]
  %v52 = vld [vmem:[%s0 + $0x20] sm:$0xff]
  %v53 = vld [vmem:[%s0 + $0x28] sm:$0xff]
  %v54 = vld [vmem:[%s0 + $0x30] sm:$0xff]
  %v55 = vld [vmem:[%s0 + $0x38] sm:$0xff]
  %v56 = vld [vmem:[%s0 + $0x40] sm:$0xff]
  %v57 = vld [vmem:[%s0 + $0x48] sm:$0xff]
  %v58 = vld [vmem:[%s0 + $0x50] sm:$0xff]
  %v59 = vld [vmem:[%s0 + $0x58] sm:$0xff]
  %v60 = vld [vmem:[%s0 + $0x60] sm:$0xff]
  %v61 = vld [vmem:[%s0 + $0x68] sm:$0xff]
  %v62 = vld [vmem:[%s0 + $0x70] sm:$0xff]
  %v63 = vld [vmem:[%s0 + $0x78] sm:$0xff]
  %v64 = vld [vmem:[%s0 + $0x80] sm:$0xff]
  %v65 = vld [vmem:[%s0 + $0x88] sm:$0xff]
  %v66 = vld [vmem:[%s0 + $0x90] sm:$0xff]
  %v67 = vld [vmem:[%s0 + $0x98] sm:$0xff]
  %v68 = vld [vmem:[%s0 + $0xa0] sm:$0xff]
  %v69 = vld [vmem:[%s0 + $0xa8] sm:$0xff]
  %v70 = vld [vmem:[%s0 + $0xb0] sm:$0xff]
  %v71 = vld [vmem:[%s0 + $0xb8] sm:$0xff]
  %v72 = vld [vmem:[%s0 + $0xc0] sm:$0xff]
  %v73 = vld [vmem:[%s0 + $0xc8] sm:$0xff]
  %v74 = vld [vmem:[%s0 + $0xd0] sm:$0xff]
  %v75 = vld [vmem:[%s0 + $0xd8] sm:$0xff]
  %v76 = vld [vmem:[%s0 + $0xe0] sm:$0xff]
  %v77 = vld [vmem:[%s0 + $0xe8] sm:$0xff]
  %v78 = vld [vmem:[%s0 + $0xf0] sm:$0xff]
  %v79 = vld [vmem:[%s0 + $0xf8] sm:$0xff]
  %v80 = vld [vmem:[%s0 + $0x100] sm:$0xff]
  %v81 = vld [vmem:[%s0 + $0x108] sm:$0xff]
  %v82 = vld [vmem:[%s0 + $0x110] sm:$0xff]
  %v83 = vld [vmem:[%s0 + $0x118] sm:$0xff]
  %v84 = vld [vmem:[%s0 + $0x120] sm:$0xff]
  %v85 = vld [vmem:[%s0 + $0x128] sm:$0xff]
  %v86 = vld [vmem:[%s0 + $0x130] sm:$0xff]
  %v87 = vld [vmem:[%s0 + $0x138] sm:$0xff]
  %v88 = vld [vmem:[%s0 + $0x140] sm:$0xff]
  %v89 = vld [vmem:[%s0 + $0x148] sm:$0xff]
  %v90 = vld [vmem:[%s0 + $0x150] sm:$0xff]
  %v91 = vld [vmem:[%s0 + $0x158] sm:$0xff]
  %v92 = vld [vmem:[%s0 + $0x160] sm:$0xff]
  %v93 = vld [vmem:[%s0 + $0x168] sm:$0xff]
  %v94 = vld [vmem:[%s0 + $0x170] sm:$0xff]
  %v95 = vld [vmem:[%s0 + $0x178] sm:$0xff]
  %v96 = vld [vmem:[%s0 + $0x180] sm:$0xff]
  %v97 = vld [vmem:[%s0 + $0x188] sm:$0xff]
  %v98 = vld [vmem:[%s0 + $0x190] sm:$0xff]
  %v99 = vld [vmem:[%s0 + $0x198] sm:$0xff]
  %v100 = vld [vmem:[%s0 + $0x1a0] sm:$0xff]
  %v101 = vld [vmem:[%s0 + $0x1a8] sm:$0xff]
  %v102 = vld [vmem:[%s0 + $0x1b0] sm:$0xff]
  %v103 = vld [vmem:[%s0 + $0x1b8] sm:$0xff]
  %v104 = vld [vmem:[%s0 + $0x1c0] sm:$0xff]
  %v105 = vld [vmem:[%s0 + $0x1c8] sm:$0xff]
  %v106 = vld [vmem:[%s0 + $0x1d0] sm:$0xff]
  %v107 = vld [vmem:[%s0 + $0x1d8] sm:$0xff]
  %v108 = vld [vmem:[%s0 + $0x1e0] sm:$0xff]
  %v109 = vld [vmem:[%s0 + $0x1e8] sm:$0xff]
  %v110 = vld [vmem:[%s0 + $0x1f0] sm:$0xff]
  %v111 = vld [vmem:[%s0 + $0x1f8] sm:$0xff]
  %v112 = vld [vmem:[%s1] sm:$0xf]
  %v113 = vld [vmem:[%s1 + $0x4] sm:$0xf]
  %v114 = vld [vmem:[%s1 + $0x8] sm:$0xf]
  %v115 = vld [vmem:[%s1 + $0xc] sm:$0xf]
  %v116 = vld [vmem:[%s1 + $0x10] sm:$0xf]
  %v117 = vld [vmem:[%s1 + $0x14] sm:$0xf]
  %v118 = vld [vmem:[%s1 + $0x18] sm:$0xf]
  %v119 = vld [vmem:[%s1 + $0x1c] sm:$0xf]
  %v120 = vld [vmem:[%s1 + $0x20] sm:$0xf]
  %v121 = vld [vmem:[%s1 + $0x24] sm:$0xf]
  %v122 = vld [vmem:[%s1 + $0x28] sm:$0xf]
  %v123 = vld [vmem:[%s1 + $0x2c] sm:$0xf]
  %v124 = vld [vmem:[%s1 + $0x30] sm:$0xf]
  %v125 = vld [vmem:[%s1 + $0x34] sm:$0xf]
  %v126 = vld [vmem:[%s1 + $0x38] sm:$0xf]
  %v127 = vld [vmem:[%s1 + $0x3c] sm:$0xf]
  %v128 = vld [vmem:[%s1 + $0x40] sm:$0xf]
  %v129 = vld [vmem:[%s1 + $0x44] sm:$0xf]
  %v130 = vld [vmem:[%s1 + $0x48] sm:$0xf]
  %v131 = vld [vmem:[%s1 + $0x4c] sm:$0xf]
  %v132 = vld [vmem:[%s1 + $0x50] sm:$0xf]
  %v133 = vld [vmem:[%s1 + $0x54] sm:$0xf]
  %v134 = vld [vmem:[%s1 + $0x58] sm:$0xf]
  %v135 = vld [vmem:[%s1 + $0x5c] sm:$0xf]
  %v136 = vld [vmem:[%s1 + $0x60] sm:$0xf]
  %v137 = vld [vmem:[%s1 + $0x64] sm:$0xf]
  %v138 = vld [vmem:[%s1 + $0x68] sm:$0xf]
  %v139 = vld [vmem:[%s1 + $0x6c] sm:$0xf]
  %v140 = vld [vmem:[%s1 + $0x70] sm:$0xf]
  %v141 = vld [vmem:[%s1 + $0x74] sm:$0xf]
  %v142 = vld [vmem:[%s1 + $0x78] sm:$0xf]
  %v143 = vld [vmem:[%s1 + $0x7c] sm:$0xf]
  %v144 = vld [vmem:[%s1 + $0x80] sm:$0xf]
  %v145 = vld [vmem:[%s1 + $0x84] sm:$0xf]
  %v146 = vld [vmem:[%s1 + $0x88] sm:$0xf]
  %v147 = vld [vmem:[%s1 + $0x8c] sm:$0xf]
  %v148 = vld [vmem:[%s1 + $0x90] sm:$0xf]
  %v149 = vld [vmem:[%s1 + $0x94] sm:$0xf]
  %v150 = vld [vmem:[%s1 + $0x98] sm:$0xf]
  %v151 = vld [vmem:[%s1 + $0x9c] sm:$0xf]
  %v152 = vld [vmem:[%s1 + $0xa0] sm:$0xf]
  %v153 = vld [vmem:[%s1 + $0xa4] sm:$0xf]
  %v154 = vld [vmem:[%s1 + $0xa8] sm:$0xf]
  %v155 = vld [vmem:[%s1 + $0xac] sm:$0xf]
  %v156 = vld [vmem:[%s1 + $0xb0] sm:$0xf]
  %v157 = vld [vmem:[%s1 + $0xb4] sm:$0xf]
  %v158 = vld [vmem:[%s1 + $0xb8] sm:$0xf]
  %v159 = vld [vmem:[%s1 + $0xbc] sm:$0xf]
  %v160 = vld [vmem:[%s1 + $0xc0] sm:$0xf]
  %v161 = vld [vmem:[%s1 + $0xc4] sm:$0xf]
  %v162 = vld [vmem:[%s1 + $0xc8] sm:$0xf]
  %v163 = vld [vmem:[%s1 + $0xcc] sm:$0xf]
  %v164 = vld [vmem:[%s1 + $0xd0] sm:$0xf]
  %v165 = vld [vmem:[%s1 + $0xd4] sm:$0xf]
  %v166 = vld [vmem:[%s1 + $0xd8] sm:$0xf]
  %v167 = vld [vmem:[%s1 + $0xdc] sm:$0xf]
  %v168 = vld [vmem:[%s1 + $0xe0] sm:$0xf]
  %v169 = vld [vmem:[%s1 + $0xe4] sm:$0xf]
  %v170 = vld [vmem:[%s1 + $0xe8] sm:$0xf]
  %v171 = vld [vmem:[%s1 + $0xec] sm:$0xf]
  %v172 = vld [vmem:[%s1 + $0xf0] sm:$0xf]
  %v173 = vld [vmem:[%s1 + $0xf4] sm:$0xf]
  %v174 = vld [vmem:[%s1 + $0xf8] sm:$0xf]
  %v175 = vld [vmem:[%s1 + $0xfc] sm:$0xf]
  %v176 = vld [vmem:[%s1 + $0x100] sm:$0xf]
  %v177 = vld [vmem:[%s1 + $0x104] sm:$0xf]
  %v178 = vld [vmem:[%s1 + $0x108] sm:$0xf]
  %v179 = vld [vmem:[%s1 + $0x10c] sm:$0xf]
  %v180 = vld [vmem:[%s1 + $0x110] sm:$0xf]
  %v181 = vld [vmem:[%s1 + $0x114] sm:$0xf]
  %v182 = vld [vmem:[%s1 + $0x118] sm:$0xf]
  %v183 = vld [vmem:[%s1 + $0x11c] sm:$0xf]
  %v184 = vld [vmem:[%s1 + $0x120] sm:$0xf]
  %v185 = vld [vmem:[%s1 + $0x124] sm:$0xf]
  %v186 = vld [vmem:[%s1 + $0x128] sm:$0xf]
  %v187 = vld [vmem:[%s1 + $0x12c] sm:$0xf]
  %v188 = vld [vmem:[%s1 + $0x130] sm:$0xf]
  %v189 = vld [vmem:[%s1 + $0x134] sm:$0xf]
  %v190 = vld [vmem:[%s1 + $0x138] sm:$0xf]
  %v191 = vld [vmem:[%s1 + $0x13c] sm:$0xf]
  %v192 = vld [vmem:[%s1 + $0x140] sm:$0xf]
  %v193 = vld [vmem:[%s1 + $0x144] sm:$0xf]
  %v194 = vld [vmem:[%s1 + $0x148] sm:$0xf]
  %v195 = vld [vmem:[%s1 + $0x14c] sm:$0xf]
  %v196 = vld [vmem:[%s1 + $0x150] sm:$0xf]
  %v197 = vld [vmem:[%s1 + $0x154] sm:$0xf]
  %v198 = vld [vmem:[%s1 + $0x158] sm:$0xf]
  %v199 = vld [vmem:[%s1 + $0x15c] sm:$0xf]
  %v200 = vld [vmem:[%s1 + $0x160] sm:$0xf]
  %v201 = vld [vmem:[%s1 + $0x164] sm:$0xf]
  %v202 = vld [vmem:[%s1 + $0x168] sm:$0xf]
  %v203 = vld [vmem:[%s1 + $0x16c] sm:$0xf]
  %v204 = vld [vmem:[%s1 + $0x170] sm:$0xf]
  %v205 = vld [vmem:[%s1 + $0x174] sm:$0xf]
  %v206 = vld [vmem:[%s1 + $0x178] sm:$0xf]
  %v207 = vld [vmem:[%s1 + $0x17c] sm:$0xf]
  %v208 = vld [vmem:[%s1 + $0x180] sm:$0xf]
  %v209 = vld [vmem:[%s1 + $0x184] sm:$0xf]
  %v210 = vld [vmem:[%s1 + $0x188] sm:$0xf]
  %v211 = vld [vmem:[%s1 + $0x18c] sm:$0xf]
  %v212 = vld [vmem:[%s1 + $0x190] sm:$0xf]
  %v213 = vld [vmem:[%s1 + $0x194] sm:$0xf]
  %v214 = vld [vmem:[%s1 + $0x198] sm:$0xf]
  %v215 = vld [vmem:[%s1 + $0x19c] sm:$0xf]
  %v216 = vld [vmem:[%s1 + $0x1a0] sm:$0xf]
  %v217 = vld [vmem:[%s1 + $0x1a4] sm:$0xf]
  %v218 = vld [vmem:[%s1 + $0x1a8] sm:$0xf]
  %v219 = vld [vmem:[%s1 + $0x1ac] sm:$0xf]
  %v220 = vld [vmem:[%s1 + $0x1b0] sm:$0xf]
  %v221 = vld [vmem:[%s1 + $0x1b4] sm:$0xf]
  %v222 = vld [vmem:[%s1 + $0x1b8] sm:$0xf]
  %v223 = vld [vmem:[%s1 + $0x1bc] sm:$0xf]
  %v224 = vld [vmem:[%s1 + $0x1c0] sm:$0xf]
  %v225 = vld [vmem:[%s1 + $0x1c4] sm:$0xf]
  %v226 = vld [vmem:[%s1 + $0x1c8] sm:$0xf]
  %v227 = vld [vmem:[%s1 + $0x1cc] sm:$0xf]
  %v228 = vld [vmem:[%s1 + $0x1d0] sm:$0xf]
  %v229 = vld [vmem:[%s1 + $0x1d4] sm:$0xf]
  %v230 = vld [vmem:[%s1 + $0x1d8] sm:$0xf]
  %v231 = vld [vmem:[%s1 + $0x1dc] sm:$0xf]
  %v232 = vld [vmem:[%s1 + $0x1e0] sm:$0xf]
  %v233 = vld [vmem:[%s1 + $0x1e4] sm:$0xf]
  %v234 = vld [vmem:[%s1 + $0x1e8] sm:$0xf]
  %v235 = vld [vmem:[%s1 + $0x1ec] sm:$0xf]
  %v236 = vld [vmem:[%s1 + $0x1f0] sm:$0xf]
  %v237 = vld [vmem:[%s1 + $0x1f4] sm:$0xf]
  %v238 = vld [vmem:[%s1 + $0x1f8] sm:$0xf]
  %v239 = vld [vmem:[%s1 + $0x1fc] sm:$0xf]
  %v304 = vunpack.c.l.b16 %v48
  %v305 = vunpack.c.h.b16 %v48
  %v306 = vunpack.c.l.b16 %v49
  %v307 = vunpack.c.h.b16 %v49
  %v308 = vunpack.c.l.b16 %v50
  %v309 = vunpack.c.h.b16 %v50
  %v310 = vunpack.c.l.b16 %v51
  %v311 = vunpack.c.h.b16 %v51
  %v312 = vunpack.c.l.b16 %v52
  %v313 = vunpack.c.h.b16 %v52
  %v314 = vunpack.c.l.b16 %v53
  %v315 = vunpack.c.h.b16 %v53
  %v316 = vunpack.c.l.b16 %v54
  %v317 = vunpack.c.h.b16 %v54
  %v318 = vunpack.c.l.b16 %v55
  %v319 = vunpack.c.h.b16 %v55
  %v320 = vunpack.c.l.b16 %v56
  %v321 = vunpack.c.h.b16 %v56
  %v322 = vunpack.c.l.b16 %v57
  %v323 = vunpack.c.h.b16 %v57
  %v324 = vunpack.c.l.b16 %v58
  %v325 = vunpack.c.h.b16 %v58
  %v326 = vunpack.c.l.b16 %v59
  %v327 = vunpack.c.h.b16 %v59
  %v328 = vunpack.c.l.b16 %v60
  %v329 = vunpack.c.h.b16 %v60
  %v330 = vunpack.c.l.b16 %v61
  %v331 = vunpack.c.h.b16 %v61
  %v332 = vunpack.c.l.b16 %v62
  %v333 = vunpack.c.h.b16 %v62
  %v334 = vunpack.c.l.b16 %v63
  %v335 = vunpack.c.h.b16 %v63
  %v336 = vunpack.c.l.b16 %v64
  %v337 = vunpack.c.h.b16 %v64
  %v338 = vunpack.c.l.b16 %v65
  %v339 = vunpack.c.h.b16 %v65
  %v340 = vunpack.c.l.b16 %v66
  %v341 = vunpack.c.h.b16 %v66
  %v342 = vunpack.c.l.b16 %v67
  %v343 = vunpack.c.h.b16 %v67
  %v344 = vunpack.c.l.b16 %v68
  %v345 = vunpack.c.h.b16 %v68
  %v346 = vunpack.c.l.b16 %v69
  %v347 = vunpack.c.h.b16 %v69
  %v348 = vunpack.c.l.b16 %v70
  %v349 = vunpack.c.h.b16 %v70
  %v350 = vunpack.c.l.b16 %v71
  %v351 = vunpack.c.h.b16 %v71
  %v352 = vunpack.c.l.b16 %v72
  %v353 = vunpack.c.h.b16 %v72
  %v354 = vunpack.c.l.b16 %v73
  %v355 = vunpack.c.h.b16 %v73
  %v356 = vunpack.c.l.b16 %v74
  %v357 = vunpack.c.h.b16 %v74
  %v358 = vunpack.c.l.b16 %v75
  %v359 = vunpack.c.h.b16 %v75
  %v360 = vunpack.c.l.b16 %v76
  %v361 = vunpack.c.h.b16 %v76
  %v362 = vunpack.c.l.b16 %v77
  %v363 = vunpack.c.h.b16 %v77
  %v364 = vunpack.c.l.b16 %v78
  %v365 = vunpack.c.h.b16 %v78
  %v366 = vunpack.c.l.b16 %v79
  %v367 = vunpack.c.h.b16 %v79
  %v368 = vunpack.c.l.b16 %v80
  %v369 = vunpack.c.h.b16 %v80
  %v370 = vunpack.c.l.b16 %v81
  %v371 = vunpack.c.h.b16 %v81
  %v372 = vunpack.c.l.b16 %v82
  %v373 = vunpack.c.h.b16 %v82
  %v374 = vunpack.c.l.b16 %v83
  %v375 = vunpack.c.h.b16 %v83
  %v376 = vunpack.c.l.b16 %v84
  %v377 = vunpack.c.h.b16 %v84
  %v378 = vunpack.c.l.b16 %v85
  %v379 = vunpack.c.h.b16 %v85
  %v380 = vunpack.c.l.b16 %v86
  %v381 = vunpack.c.h.b16 %v86
  %v382 = vunpack.c.l.b16 %v87
  %v383 = vunpack.c.h.b16 %v87
  %v384 = vunpack.c.l.b16 %v88
  %v385 = vunpack.c.h.b16 %v88
  %v386 = vunpack.c.l.b16 %v89
  %v387 = vunpack.c.h.b16 %v89
  %v388 = vunpack.c.l.b16 %v90
  %v389 = vunpack.c.h.b16 %v90
  %v390 = vunpack.c.l.b16 %v91
  %v391 = vunpack.c.h.b16 %v91
  %v392 = vunpack.c.l.b16 %v92
  %v393 = vunpack.c.h.b16 %v92
  %v394 = vunpack.c.l.b16 %v93
  %v395 = vunpack.c.h.b16 %v93
  %v396 = vunpack.c.l.b16 %v94
  %v397 = vunpack.c.h.b16 %v94
  %v398 = vunpack.c.l.b16 %v95
  %v399 = vunpack.c.h.b16 %v95
  %v400 = vunpack.c.l.b16 %v96
  %v401 = vunpack.c.h.b16 %v96
  %v402 = vunpack.c.l.b16 %v97
  %v403 = vunpack.c.h.b16 %v97
  %v404 = vunpack.c.l.b16 %v98
  %v405 = vunpack.c.h.b16 %v98
  %v406 = vunpack.c.l.b16 %v99
  %v407 = vunpack.c.h.b16 %v99
  %v408 = vunpack.c.l.b16 %v100
  %v409 = vunpack.c.h.b16 %v100
  %v410 = vunpack.c.l.b16 %v101
  %v411 = vunpack.c.h.b16 %v101
  %v412 = vunpack.c.l.b16 %v102
  %v413 = vunpack.c.h.b16 %v102
  %v414 = vunpack.c.l.b16 %v103
  %v415 = vunpack.c.h.b16 %v103
  %v416 = vunpack.c.l.b16 %v104
  %v417 = vunpack.c.h.b16 %v104
  %v418 = vunpack.c.l.b16 %v105
  %v419 = vunpack.c.h.b16 %v105
  %v420 = vunpack.c.l.b16 %v106
  %v421 = vunpack.c.h.b16 %v106
  %v422 = vunpack.c.l.b16 %v107
  %v423 = vunpack.c.h.b16 %v107
  %v424 = vunpack.c.l.b16 %v108
  %v425 = vunpack.c.h.b16 %v108
  %v426 = vunpack.c.l.b16 %v109
  %v427 = vunpack.c.h.b16 %v109
  %v428 = vunpack.c.l.b16 %v110
  %v429 = vunpack.c.h.b16 %v110
  %v430 = vunpack.c.l.b16 %v111
  %v431 = vunpack.c.h.b16 %v111
  %v432 = vpack.c.b16 %v312, %v304
  %v433 = vpack.c.b16 %v313, %v305
  %v434 = vpack.c.b16 %v314, %v306
  %v435 = vpack.c.b16 %v315, %v307
  %v436 = vpack.c.b16 %v316, %v308
  %v437 = vpack.c.b16 %v317, %v309
  %v438 = vpack.c.b16 %v318, %v310
  %v439 = vpack.c.b16 %v319, %v311
  %v440 = vpack.c.b16 %v328, %v320
  %v441 = vpack.c.b16 %v329, %v321
  %v442 = vpack.c.b16 %v330, %v322
  %v443 = vpack.c.b16 %v331, %v323
  %v444 = vpack.c.b16 %v332, %v324
  %v445 = vpack.c.b16 %v333, %v325
  %v446 = vpack.c.b16 %v334, %v326
  %v447 = vpack.c.b16 %v335, %v327
  %v448 = vpack.c.b16 %v344, %v336
  %v449 = vpack.c.b16 %v345, %v337
  %v450 = vpack.c.b16 %v346, %v338
  %v451 = vpack.c.b16 %v347, %v339
  %v452 = vpack.c.b16 %v348, %v340
  %v453 = vpack.c.b16 %v349, %v341
  %v454 = vpack.c.b16 %v350, %v342
  %v455 = vpack.c.b16 %v351, %v343
  %v456 = vpack.c.b16 %v360, %v352
  %v457 = vpack.c.b16 %v361, %v353
  %v458 = vpack.c.b16 %v362, %v354
  %v459 = vpack.c.b16 %v363, %v355
  %v460 = vpack.c.b16 %v364, %v356
  %v461 = vpack.c.b16 %v365, %v357
  %v462 = vpack.c.b16 %v366, %v358
  %v463 = vpack.c.b16 %v367, %v359
  %v464 = vpack.c.b16 %v376, %v368
  %v465 = vpack.c.b16 %v377, %v369
  %v466 = vpack.c.b16 %v378, %v370
  %v467 = vpack.c.b16 %v379, %v371
  %v468 = vpack.c.b16 %v380, %v372
  %v469 = vpack.c.b16 %v381, %v373
  %v470 = vpack.c.b16 %v382, %v374
  %v471 = vpack.c.b16 %v383, %v375
  %v472 = vpack.c.b16 %v392, %v384
  %v473 = vpack.c.b16 %v393, %v385
  %v474 = vpack.c.b16 %v394, %v386
  %v475 = vpack.c.b16 %v395, %v387
  %v476 = vpack.c.b16 %v396, %v388
  %v477 = vpack.c.b16 %v397, %v389
  %v478 = vpack.c.b16 %v398, %v390
  %v479 = vpack.c.b16 %v399, %v391
  %v480 = vpack.c.b16 %v408, %v400
  %v481 = vpack.c.b16 %v409, %v401
  %v482 = vpack.c.b16 %v410, %v402
  %v483 = vpack.c.b16 %v411, %v403
  %v484 = vpack.c.b16 %v412, %v404
  %v485 = vpack.c.b16 %v413, %v405
  %v486 = vpack.c.b16 %v414, %v406
  %v487 = vpack.c.b16 %v415, %v407
  %v488 = vpack.c.b16 %v424, %v416
  %v489 = vpack.c.b16 %v425, %v417
  %v490 = vpack.c.b16 %v426, %v418
  %v491 = vpack.c.b16 %v427, %v419
  %v492 = vpack.c.b16 %v428, %v420
  %v493 = vpack.c.b16 %v429, %v421
  %v494 = vpack.c.b16 %v430, %v422
  %v495 = vpack.c.b16 %v431, %v423
  %v688 = vunpack.c.l.b16 %v112
  %v689 = vunpack.c.l.b16 %v113
  %v690 = vunpack.c.l.b16 %v114
  %v691 = vunpack.c.l.b16 %v115
  %v692 = vunpack.c.l.b16 %v116
  %v693 = vunpack.c.l.b16 %v117
  %v694 = vunpack.c.l.b16 %v118
  %v695 = vunpack.c.l.b16 %v119
  %v696 = vunpack.c.l.b16 %v120
  %v697 = vunpack.c.l.b16 %v121
  %v698 = vunpack.c.l.b16 %v122
  %v699 = vunpack.c.l.b16 %v123
  %v700 = vunpack.c.l.b16 %v124
  %v701 = vunpack.c.l.b16 %v125
  %v702 = vunpack.c.l.b16 %v126
  %v703 = vunpack.c.l.b16 %v127
  %v704 = vunpack.c.l.b16 %v128
  %v705 = vunpack.c.l.b16 %v129
  %v706 = vunpack.c.l.b16 %v130
  %v707 = vunpack.c.l.b16 %v131
  %v708 = vunpack.c.l.b16 %v132
  %v709 = vunpack.c.l.b16 %v133
  %v710 = vunpack.c.l.b16 %v134
  %v711 = vunpack.c.l.b16 %v135
  %v712 = vunpack.c.l.b16 %v136
  %v713 = vunpack.c.l.b16 %v137
  %v714 = vunpack.c.l.b16 %v138
  %v715 = vunpack.c.l.b16 %v139
  %v716 = vunpack.c.l.b16 %v140
  %v717 = vunpack.c.l.b16 %v141
  %v718 = vunpack.c.l.b16 %v142
  %v719 = vunpack.c.l.b16 %v143
  %v720 = vunpack.c.l.b16 %v144
  %v721 = vunpack.c.l.b16 %v145
  %v722 = vunpack.c.l.b16 %v146
  %v723 = vunpack.c.l.b16 %v147
  %v724 = vunpack.c.l.b16 %v148
  %v725 = vunpack.c.l.b16 %v149
  %v726 = vunpack.c.l.b16 %v150
  %v727 = vunpack.c.l.b16 %v151
  %v728 = vunpack.c.l.b16 %v152
  %v729 = vunpack.c.l.b16 %v153
  %v730 = vunpack.c.l.b16 %v154
  %v731 = vunpack.c.l.b16 %v155
  %v732 = vunpack.c.l.b16 %v156
  %v733 = vunpack.c.l.b16 %v157
  %v734 = vunpack.c.l.b16 %v158
  %v735 = vunpack.c.l.b16 %v159
  %v736 = vunpack.c.l.b16 %v160
  %v737 = vunpack.c.l.b16 %v161
  %v738 = vunpack.c.l.b16 %v162
  %v739 = vunpack.c.l.b16 %v163
  %v740 = vunpack.c.l.b16 %v164
  %v741 = vunpack.c.l.b16 %v165
  %v742 = vunpack.c.l.b16 %v166
  %v743 = vunpack.c.l.b16 %v167
  %v744 = vunpack.c.l.b16 %v168
  %v745 = vunpack.c.l.b16 %v169
  %v746 = vunpack.c.l.b16 %v170
  %v747 = vunpack.c.l.b16 %v171
  %v748 = vunpack.c.l.b16 %v172
  %v749 = vunpack.c.l.b16 %v173
  %v750 = vunpack.c.l.b16 %v174
  %v751 = vunpack.c.l.b16 %v175
  %v752 = vunpack.c.l.b16 %v176
  %v753 = vunpack.c.l.b16 %v177
  %v754 = vunpack.c.l.b16 %v178
  %v755 = vunpack.c.l.b16 %v179
  %v756 = vunpack.c.l.b16 %v180
  %v757 = vunpack.c.l.b16 %v181
  %v758 = vunpack.c.l.b16 %v182
  %v759 = vunpack.c.l.b16 %v183
  %v760 = vunpack.c.l.b16 %v184
  %v761 = vunpack.c.l.b16 %v185
  %v762 = vunpack.c.l.b16 %v186
  %v763 = vunpack.c.l.b16 %v187
  %v764 = vunpack.c.l.b16 %v188
  %v765 = vunpack.c.l.b16 %v189
  %v766 = vunpack.c.l.b16 %v190
  %v767 = vunpack.c.l.b16 %v191
  %v768 = vunpack.c.l.b16 %v192
  %v769 = vunpack.c.l.b16 %v193
  %v770 = vunpack.c.l.b16 %v194
  %v771 = vunpack.c.l.b16 %v195
  %v772 = vunpack.c.l.b16 %v196
  %v773 = vunpack.c.l.b16 %v197
  %v774 = vunpack.c.l.b16 %v198
  %v775 = vunpack.c.l.b16 %v199
  %v776 = vunpack.c.l.b16 %v200
  %v777 = vunpack.c.l.b16 %v201
  %v778 = vunpack.c.l.b16 %v202
  %v779 = vunpack.c.l.b16 %v203
  %v780 = vunpack.c.l.b16 %v204
  %v781 = vunpack.c.l.b16 %v205
  %v782 = vunpack.c.l.b16 %v206
  %v783 = vunpack.c.l.b16 %v207
  %v784 = vunpack.c.l.b16 %v208
  %v785 = vunpack.c.l.b16 %v209
  %v786 = vunpack.c.l.b16 %v210
  %v787 = vunpack.c.l.b16 %v211
  %v788 = vunpack.c.l.b16 %v212
  %v789 = vunpack.c.l.b16 %v213
  %v790 = vunpack.c.l.b16 %v214
  %v791 = vunpack.c.l.b16 %v215
  %v792 = vunpack.c.l.b16 %v216
  %v793 = vunpack.c.l.b16 %v217
  %v794 = vunpack.c.l.b16 %v218
  %v795 = vunpack.c.l.b16 %v219
  %v796 = vunpack.c.l.b16 %v220
  %v797 = vunpack.c.l.b16 %v221
  %v798 = vunpack.c.l.b16 %v222
  %v799 = vunpack.c.l.b16 %v223
  %v800 = vunpack.c.l.b16 %v224
  %v801 = vunpack.c.l.b16 %v225
  %v802 = vunpack.c.l.b16 %v226
  %v803 = vunpack.c.l.b16 %v227
  %v804 = vunpack.c.l.b16 %v228
  %v805 = vunpack.c.l.b16 %v229
  %v806 = vunpack.c.l.b16 %v230
  %v807 = vunpack.c.l.b16 %v231
  %v808 = vunpack.c.l.b16 %v232
  %v809 = vunpack.c.l.b16 %v233
  %v810 = vunpack.c.l.b16 %v234
  %v811 = vunpack.c.l.b16 %v235
  %v812 = vunpack.c.l.b16 %v236
  %v813 = vunpack.c.l.b16 %v237
  %v814 = vunpack.c.l.b16 %v238
  %v815 = vunpack.c.l.b16 %v239
  %v816 = vpack.c.b16 %v689, %v688
  %v817 = vpack.c.b16 %v691, %v690
  %v818 = vpack.c.b16 %v693, %v692
  %v819 = vpack.c.b16 %v695, %v694
  %v820 = vpack.c.b16 %v697, %v696
  %v821 = vpack.c.b16 %v699, %v698
  %v822 = vpack.c.b16 %v701, %v700
  %v823 = vpack.c.b16 %v703, %v702
  %v824 = vpack.c.b16 %v705, %v704
  %v825 = vpack.c.b16 %v707, %v706
  %v826 = vpack.c.b16 %v709, %v708
  %v827 = vpack.c.b16 %v711, %v710
  %v828 = vpack.c.b16 %v713, %v712
  %v829 = vpack.c.b16 %v715, %v714
  %v830 = vpack.c.b16 %v717, %v716
  %v831 = vpack.c.b16 %v719, %v718
  %v832 = vpack.c.b16 %v721, %v720
  %v833 = vpack.c.b16 %v723, %v722
  %v834 = vpack.c.b16 %v725, %v724
  %v835 = vpack.c.b16 %v727, %v726
  %v836 = vpack.c.b16 %v729, %v728
  %v837 = vpack.c.b16 %v731, %v730
  %v838 = vpack.c.b16 %v733, %v732
  %v839 = vpack.c.b16 %v735, %v734
  %v840 = vpack.c.b16 %v737, %v736
  %v841 = vpack.c.b16 %v739, %v738
  %v842 = vpack.c.b16 %v741, %v740
  %v843 = vpack.c.b16 %v743, %v742
  %v844 = vpack.c.b16 %v745, %v744
  %v845 = vpack.c.b16 %v747, %v746
  %v846 = vpack.c.b16 %v749, %v748
  %v847 = vpack.c.b16 %v751, %v750
  %v848 = vpack.c.b16 %v753, %v752
  %v849 = vpack.c.b16 %v755, %v754
  %v850 = vpack.c.b16 %v757, %v756
  %v851 = vpack.c.b16 %v759, %v758
  %v852 = vpack.c.b16 %v761, %v760
  %v853 = vpack.c.b16 %v763, %v762
  %v854 = vpack.c.b16 %v765, %v764
  %v855 = vpack.c.b16 %v767, %v766
  %v856 = vpack.c.b16 %v769, %v768
  %v857 = vpack.c.b16 %v771, %v770
  %v858 = vpack.c.b16 %v773, %v772
  %v859 = vpack.c.b16 %v775, %v774
  %v860 = vpack.c.b16 %v777, %v776
  %v861 = vpack.c.b16 %v779, %v778
  %v862 = vpack.c.b16 %v781, %v780
  %v863 = vpack.c.b16 %v783, %v782
  %v864 = vpack.c.b16 %v785, %v784
  %v865 = vpack.c.b16 %v787, %v786
  %v866 = vpack.c.b16 %v789, %v788
  %v867 = vpack.c.b16 %v791, %v790
  %v868 = vpack.c.b16 %v793, %v792
  %v869 = vpack.c.b16 %v795, %v794
  %v870 = vpack.c.b16 %v797, %v796
  %v871 = vpack.c.b16 %v799, %v798
  %v872 = vpack.c.b16 %v801, %v800
  %v873 = vpack.c.b16 %v803, %v802
  %v874 = vpack.c.b16 %v805, %v804
  %v875 = vpack.c.b16 %v807, %v806
  %v876 = vpack.c.b16 %v809, %v808
  %v877 = vpack.c.b16 %v811, %v810
  %v878 = vpack.c.b16 %v813, %v812
  %v879 = vpack.c.b16 %v815, %v814
  %944 = vmatprep.subr.bf16.mxu0 0
  %945 = vmatpush1.bf16.msra.mxu0 %v816
  %946 = vmatprep.subr.bf16.mxu0 0
  %947 = vmatpush1.bf16.msra.mxu0 %v817
  %948 = vmatprep.subr.bf16.mxu0 0
  %949 = vmatpush1.bf16.msra.mxu0 %v818
  %950 = vmatprep.subr.bf16.mxu0 0
  %951 = vmatpush1.bf16.msra.mxu0 %v819
  %952 = vmatprep.subr.bf16.mxu0 0
  %953 = vmatpush1.bf16.msra.mxu0 %v820
  %954 = vmatprep.subr.bf16.mxu0 0
  %955 = vmatpush1.bf16.msra.mxu0 %v821
  %956 = vmatprep.subr.bf16.mxu0 0
  %957 = vmatpush1.bf16.msra.mxu0 %v822
  %958 = vmatprep.subr.bf16.mxu0 0
  %959 = vmatpush1.bf16.msra.mxu0 %v823
  %960 = vmatprep.subr.bf16.mxu0 0
  %961 = vmatpush1.bf16.msra.mxu0 %v824
  %962 = vmatprep.subr.bf16.mxu0 0
  %963 = vmatpush1.bf16.msra.mxu0 %v825
  %964 = vmatprep.subr.bf16.mxu0 0
  %965 = vmatpush1.bf16.msra.mxu0 %v826
  %966 = vmatprep.subr.bf16.mxu0 0
  %967 = vmatpush1.bf16.msra.mxu0 %v827
  %968 = vmatprep.subr.bf16.mxu0 0
  %969 = vmatpush1.bf16.msra.mxu0 %v828
  %970 = vmatprep.subr.bf16.mxu0 0
  %971 = vmatpush1.bf16.msra.mxu0 %v829
  %972 = vmatprep.subr.bf16.mxu0 0
  %973 = vmatpush1.bf16.msra.mxu0 %v830
  %974 = vmatprep.subr.bf16.mxu0 0
  %975 = vmatpush1.bf16.msra.mxu0 %v831
  %976 = vmatprep.mubr.bf16.mxu0 %v433
  %977 = vmatmul.mubr.bf16.gmra.mrb[0].mxu0 %v432
  %v978 = vpop.f32.mrb[0].mxu0
  %v979 = vadd.f32 0.0, %v978
  %v980 = vpop.f32.mrb[0].mxu0
  %v981 = vpop.f32.mrb[0].mxu0
  %v982 = vadd.f32 0.0, %v981
  %v983 = vpop.f32.mrb[0].mxu0
  %984 = vmatprep.mubr.bf16.mxu0 %v441
  %985 = vmatmul.mubr.bf16.gmra.mrb[0].mxu0 %v440
  %v986 = vpop.f32.mrb[0].mxu0
  %v987 = vadd.f32 0.0, %v986
  %v988 = vpop.f32.mrb[0].mxu0
  %v989 = vpop.f32.mrb[0].mxu0
  %v990 = vadd.f32 0.0, %v989
  %v991 = vpop.f32.mrb[0].mxu0
  %992 = vmatprep.mubr.bf16.mxu0 %v449
  %993 = vmatmul.mubr.bf16.gmra.mrb[0].mxu0 %v448
  %v994 = vpop.f32.mrb[0].mxu0
  %v995 = vadd.f32 0.0, %v994
  %v996 = vpop.f32.mrb[0].mxu0
  %v997 = vpop.f32.mrb[0].mxu0
  %v998 = vadd.f32 0.0, %v997
  %v999 = vpop.f32.mrb[0].mxu0
  %1000 = vmatprep.mubr.bf16.mxu0 %v457
  %1001 = vmatmul.mubr.bf16.gmra.mrb[0].mxu0 %v456
  %v1002 = vpop.f32.mrb[0].mxu0
  %v1003 = vadd.f32 0.0, %v1002
  %v1004 = vpop.f32.mrb[0].mxu0
  %v1005 = vpop.f32.mrb[0].mxu0
  %v1006 = vadd.f32 0.0, %v1005
  %v1007 = vpop.f32.mrb[0].mxu0
  %1008 = vmatprep.mubr.bf16.mxu0 %v465
  %1009 = vmatmul.mubr.bf16.gmra.mrb[0].mxu0 %v464
  %v1010 = vpop.f32.mrb[0].mxu0
  %v1011 = vadd.f32 0.0, %v1010
  %v1012 = vpop.f32.mrb[0].mxu0
  %v1013 = vpop.f32.mrb[0].mxu0
  %v1014 = vadd.f32 0.0, %v1013
  %v1015 = vpop.f32.mrb[0].mxu0
  %1016 = vmatprep.mubr.bf16.mxu0 %v473
  %1017 = vmatmul.mubr.bf16.gmra.mrb[0].mxu0 %v472
  %v1018 = vpop.f32.mrb[0].mxu0
  %v1019 = vadd.f32 0.0, %v1018
  %v1020 = vpop.f32.mrb[0].mxu0
  %v1021 = vpop.f32.mrb[0].mxu0
  %v1022 = vadd.f32 0.0, %v1021
  %v1023 = vpop.f32.mrb[0].mxu0
  %1024 = vmatprep.mubr.bf16.mxu0 %v481
  %1025 = vmatmul.mubr.bf16.gmra.mrb[0].mxu0 %v480
  %v1026 = vpop.f32.mrb[0].mxu0
  %v1027 = vadd.f32 0.0, %v1026
  %v1028 = vpop.f32.mrb[0].mxu0
  %v1029 = vpop.f32.mrb[0].mxu0
  %v1030 = vadd.f32 0.0, %v1029
  %v1031 = vpop.f32.mrb[0].mxu0
  %1032 = vmatprep.mubr.bf16.mxu0 %v489
  %1033 = vmatmul.mubr.bf16.gmra.mrb[0].mxu0 %v488
  %v1034 = vpop.f32.mrb[0].mxu0
  %v1035 = vadd.f32 0.0, %v1034
  %v1036 = vpop.f32.mrb[0].mxu0
  %v1037 = vpop.f32.mrb[0].mxu0
  %v1038 = vadd.f32 0.0, %v1037
  %v1039 = vpop.f32.mrb[0].mxu0
  %1040 = vdwg.mxu0
  %1041 = vmatprep.subr.bf16.mxu0 0
  %1042 = vmatpush1.bf16.msra.mxu0 %v832
  %1043 = vmatprep.subr.bf16.mxu0 0
  %1044 = vmatpush1.bf16.msra.mxu0 %v833
  %1045 = vmatprep.subr.bf16.mxu0 0
  %1046 = vmatpush1.bf16.msra.mxu0 %v834
  %1047 = vmatprep.subr.bf16.mxu0 0
  %1048 = vmatpush1.bf16.msra.mxu0 %v835
  %1049 = vmatprep.subr.bf16.mxu0 0
  %1050 = vmatpush1.bf16.msra.mxu0 %v836
  %1051 = vmatprep.subr.bf16.mxu0 0
  %1052 = vmatpush1.bf16.msra.mxu0 %v837
  %1053 = vmatprep.subr.bf16.mxu0 0
  %1054 = vmatpush1.bf16.msra.mxu0 %v838
  %1055 = vmatprep.subr.bf16.mxu0 0
  %1056 = vmatpush1.bf16.msra.mxu0 %v839
  %1057 = vmatprep.subr.bf16.mxu0 0
  %1058 = vmatpush1.bf16.msra.mxu0 %v840
  %1059 = vmatprep.subr.bf16.mxu0 0
  %1060 = vmatpush1.bf16.msra.mxu0 %v841
  %1061 = vmatprep.subr.bf16.mxu0 0
  %1062 = vmatpush1.bf16.msra.mxu0 %v842
  %1063 = vmatprep.subr.bf16.mxu0 0
  %1064 = vmatpush1.bf16.msra.mxu0 %v843
  %1065 = vmatprep.subr.bf16.mxu0 0
  %1066 = vmatpush1.bf16.msra.mxu0 %v844
  %1067 = vmatprep.subr.bf16.mxu0 0
  %1068 = vmatpush1.bf16.msra.mxu0 %v845
  %1069 = vmatprep.subr.bf16.mxu0 0
  %1070 = vmatpush1.bf16.msra.mxu0 %v846
  %1071 = vmatprep.subr.bf16.mxu0 0
  %1072 = vmatpush1.bf16.msra.mxu0 %v847
  %1073 = vmatprep.mubr.bf16.mxu0 %v435
  %1074 = vmatmul.mubr.bf16.gmra.mrb[0].mxu0 %v434
  %v1075 = vpop.f32.mrb[0].mxu0
  %v1076 = vadd.f32 %v979, %v1075
  %v1077 = vpop.f32.mrb[0].mxu0
  %v1078 = vpop.f32.mrb[0].mxu0
  %v1079 = vadd.f32 %v982, %v1078
  %v1080 = vpop.f32.mrb[0].mxu0
  %1081 = vmatprep.mubr.bf16.mxu0 %v443
  %1082 = vmatmul.mubr.bf16.gmra.mrb[0].mxu0 %v442
  %v1083 = vpop.f32.mrb[0].mxu0
  %v1084 = vadd.f32 %v987, %v1083
  %v1085 = vpop.f32.mrb[0].mxu0
  %v1086 = vpop.f32.mrb[0].mxu0
  %v1087 = vadd.f32 %v990, %v1086
  %v1088 = vpop.f32.mrb[0].mxu0
  %1089 = vmatprep.mubr.bf16.mxu0 %v451
  %1090 = vmatmul.mubr.bf16.gmra.mrb[0].mxu0 %v450
  %v1091 = vpop.f32.mrb[0].mxu0
  %v1092 = vadd.f32 %v995, %v1091
  %v1093 = vpop.f32.mrb[0].mxu0
  %v1094 = vpop.f32.mrb[0].mxu0
  %v1095 = vadd.f32 %v998, %v1094
  %v1096 = vpop.f32.mrb[0].mxu0
  %1097 = vmatprep.mubr.bf16.mxu0 %v459
  %1098 = vmatmul.mubr.bf16.gmra.mrb[0].mxu0 %v458
  %v1099 = vpop.f32.mrb[0].mxu0
  %v1100 = vadd.f32 %v1003, %v1099
  %v1101 = vpop.f32.mrb[0].mxu0
  %v1102 = vpop.f32.mrb[0].mxu0
  %v1103 = vadd.f32 %v1006, %v1102
  %v1104 = vpop.f32.mrb[0].mxu0
  %1105 = vmatprep.mubr.bf16.mxu0 %v467
  %1106 = vmatmul.mubr.bf16.gmra.mrb[0].mxu0 %v466
  %v1107 = vpop.f32.mrb[0].mxu0
  %v1108 = vadd.f32 %v1011, %v1107
  %v1109 = vpop.f32.mrb[0].mxu0
  %v1110 = vpop.f32.mrb[0].mxu0
  %v1111 = vadd.f32 %v1014, %v1110
  %v1112 = vpop.f32.mrb[0].mxu0
  %1113 = vmatprep.mubr.bf16.mxu0 %v475
  %1114 = vmatmul.mubr.bf16.gmra.mrb[0].mxu0 %v474
  %v1115 = vpop.f32.mrb[0].mxu0
  %v1116 = vadd.f32 %v1019, %v1115
  %v1117 = vpop.f32.mrb[0].mxu0
  %v1118 = vpop.f32.mrb[0].mxu0
  %v1119 = vadd.f32 %v1022, %v1118
  %v1120 = vpop.f32.mrb[0].mxu0
  %1121 = vmatprep.mubr.bf16.mxu0 %v483
  %1122 = vmatmul.mubr.bf16.gmra.mrb[0].mxu0 %v482
  %v1123 = vpop.f32.mrb[0].mxu0
  %v1124 = vadd.f32 %v1027, %v1123
  %v1125 = vpop.f32.mrb[0].mxu0
  %v1126 = vpop.f32.mrb[0].mxu0
  %v1127 = vadd.f32 %v1030, %v1126
  %v1128 = vpop.f32.mrb[0].mxu0
  %1129 = vmatprep.mubr.bf16.mxu0 %v491
  %1130 = vmatmul.mubr.bf16.gmra.mrb[0].mxu0 %v490
  %v1131 = vpop.f32.mrb[0].mxu0
  %v1132 = vadd.f32 %v1035, %v1131
  %v1133 = vpop.f32.mrb[0].mxu0
  %v1134 = vpop.f32.mrb[0].mxu0
  %v1135 = vadd.f32 %v1038, %v1134
  %v1136 = vpop.f32.mrb[0].mxu0
  %1137 = vdwg.mxu0
  %1138 = vmatprep.subr.bf16.mxu0 0
  %1139 = vmatpush1.bf16.msra.mxu0 %v848
  %1140 = vmatprep.subr.bf16.mxu0 0
  %1141 = vmatpush1.bf16.msra.mxu0 %v849
  %1142 = vmatprep.subr.bf16.mxu0 0
  %1143 = vmatpush1.bf16.msra.mxu0 %v850
  %1144 = vmatprep.subr.bf16.mxu0 0
  %1145 = vmatpush1.bf16.msra.mxu0 %v851
  %1146 = vmatprep.subr.bf16.mxu0 0
  %1147 = vmatpush1.bf16.msra.mxu0 %v852
  %1148 = vmatprep.subr.bf16.mxu0 0
  %1149 = vmatpush1.bf16.msra.mxu0 %v853
  %1150 = vmatprep.subr.bf16.mxu0 0
  %1151 = vmatpush1.bf16.msra.mxu0 %v854
  %1152 = vmatprep.subr.bf16.mxu0 0
  %1153 = vmatpush1.bf16.msra.mxu0 %v855
  %1154 = vmatprep.subr.bf16.mxu0 0
  %1155 = vmatpush1.bf16.msra.mxu0 %v856
  %1156 = vmatprep.subr.bf16.mxu0 0
  %1157 = vmatpush1.bf16.msra.mxu0 %v857
  %1158 = vmatprep.subr.bf16.mxu0 0
  %1159 = vmatpush1.bf16.msra.mxu0 %v858
  %1160 = vmatprep.subr.bf16.mxu0 0
  %1161 = vmatpush1.bf16.msra.mxu0 %v859
  %1162 = vmatprep.subr.bf16.mxu0 0
  %1163 = vmatpush1.bf16.msra.mxu0 %v860
  %1164 = vmatprep.subr.bf16.mxu0 0
  %1165 = vmatpush1.bf16.msra.mxu0 %v861
  %1166 = vmatprep.subr.bf16.mxu0 0
  %1167 = vmatpush1.bf16.msra.mxu0 %v862
  %1168 = vmatprep.subr.bf16.mxu0 0
  %1169 = vmatpush1.bf16.msra.mxu0 %v863
  %1170 = vmatprep.mubr.bf16.mxu0 %v437
  %1171 = vmatmul.mubr.bf16.gmra.mrb[0].mxu0 %v436
  %v1172 = vpop.f32.mrb[0].mxu0
  %v1173 = vadd.f32 %v1076, %v1172
  %v1174 = vpop.f32.mrb[0].mxu0
  %v1175 = vpop.f32.mrb[0].mxu0
  %v1176 = vadd.f32 %v1079, %v1175
  %v1177 = vpop.f32.mrb[0].mxu0
  %1178 = vmatprep.mubr.bf16.mxu0 %v445
  %1179 = vmatmul.mubr.bf16.gmra.mrb[0].mxu0 %v444
  %v1180 = vpop.f32.mrb[0].mxu0
  %v1181 = vadd.f32 %v1084, %v1180
  %v1182 = vpop.f32.mrb[0].mxu0
  %v1183 = vpop.f32.mrb[0].mxu0
  %v1184 = vadd.f32 %v1087, %v1183
  %v1185 = vpop.f32.mrb[0].mxu0
  %1186 = vmatprep.mubr.bf16.mxu0 %v453
  %1187 = vmatmul.mubr.bf16.gmra.mrb[0].mxu0 %v452
  %v1188 = vpop.f32.mrb[0].mxu0
  %v1189 = vadd.f32 %v1092, %v1188
  %v1190 = vpop.f32.mrb[0].mxu0
  %v1191 = vpop.f32.mrb[0].mxu0
  %v1192 = vadd.f32 %v1095, %v1191
  %v1193 = vpop.f32.mrb[0].mxu0
  %1194 = vmatprep.mubr.bf16.mxu0 %v461
  %1195 = vmatmul.mubr.bf16.gmra.mrb[0].mxu0 %v460
  %v1196 = vpop.f32.mrb[0].mxu0
  %v1197 = vadd.f32 %v1100, %v1196
  %v1198 = vpop.f32.mrb[0].mxu0
  %v1199 = vpop.f32.mrb[0].mxu0
  %v1200 = vadd.f32 %v1103, %v1199
  %v1201 = vpop.f32.mrb[0].mxu0
  %1202 = vmatprep.mubr.bf16.mxu0 %v469
  %1203 = vmatmul.mubr.bf16.gmra.mrb[0].mxu0 %v468
  %v1204 = vpop.f32.mrb[0].mxu0
  %v1205 = vadd.f32 %v1108, %v1204
  %v1206 = vpop.f32.mrb[0].mxu0
  %v1207 = vpop.f32.mrb[0].mxu0
  %v1208 = vadd.f32 %v1111, %v1207
  %v1209 = vpop.f32.mrb[0].mxu0
  %1210 = vmatprep.mubr.bf16.mxu0 %v477
  %1211 = vmatmul.mubr.bf16.gmra.mrb[0].mxu0 %v476
  %v1212 = vpop.f32.mrb[0].mxu0
  %v1213 = vadd.f32 %v1116, %v1212
  %v1214 = vpop.f32.mrb[0].mxu0
  %v1215 = vpop.f32.mrb[0].mxu0
  %v1216 = vadd.f32 %v1119, %v1215
  %v1217 = vpop.f32.mrb[0].mxu0
  %1218 = vmatprep.mubr.bf16.mxu0 %v485
  %1219 = vmatmul.mubr.bf16.gmra.mrb[0].mxu0 %v484
  %v1220 = vpop.f32.mrb[0].mxu0
  %v1221 = vadd.f32 %v1124, %v1220
  %v1222 = vpop.f32.mrb[0].mxu0
  %v1223 = vpop.f32.mrb[0].mxu0
  %v1224 = vadd.f32 %v1127, %v1223
  %v1225 = vpop.f32.mrb[0].mxu0
  %1226 = vmatprep.mubr.bf16.mxu0 %v493
  %1227 = vmatmul.mubr.bf16.gmra.mrb[0].mxu0 %v492
  %v1228 = vpop.f32.mrb[0].mxu0
  %v1229 = vadd.f32 %v1132, %v1228
  %v1230 = vpop.f32.mrb[0].mxu0
  %v1231 = vpop.f32.mrb[0].mxu0
  %v1232 = vadd.f32 %v1135, %v1231
  %v1233 = vpop.f32.mrb[0].mxu0
  %1234 = vdwg.mxu0
  %1235 = vmatprep.subr.bf16.mxu0 0
  %1236 = vmatpush1.bf16.msra.mxu0 %v864
  %1237 = vmatprep.subr.bf16.mxu0 0
  %1238 = vmatpush1.bf16.msra.mxu0 %v865
  %1239 = vmatprep.subr.bf16.mxu0 0
  %1240 = vmatpush1.bf16.msra.mxu0 %v866
  %1241 = vmatprep.subr.bf16.mxu0 0
  %1242 = vmatpush1.bf16.msra.mxu0 %v867
  %1243 = vmatprep.subr.bf16.mxu0 0
  %1244 = vmatpush1.bf16.msra.mxu0 %v868
  %1245 = vmatprep.subr.bf16.mxu0 0
  %1246 = vmatpush1.bf16.msra.mxu0 %v869
  %1247 = vmatprep.subr.bf16.mxu0 0
  %1248 = vmatpush1.bf16.msra.mxu0 %v870
  %1249 = vmatprep.subr.bf16.mxu0 0
  %1250 = vmatpush1.bf16.msra.mxu0 %v871
  %1251 = vmatprep.subr.bf16.mxu0 0
  %1252 = vmatpush1.bf16.msra.mxu0 %v872
  %1253 = vmatprep.subr.bf16.mxu0 0
  %1254 = vmatpush1.bf16.msra.mxu0 %v873
  %1255 = vmatprep.subr.bf16.mxu0 0
  %1256 = vmatpush1.bf16.msra.mxu0 %v874
  %1257 = vmatprep.subr.bf16.mxu0 0
  %1258 = vmatpush1.bf16.msra.mxu0 %v875
  %1259 = vmatprep.subr.bf16.mxu0 0
  %1260 = vmatpush1.bf16.msra.mxu0 %v876
  %1261 = vmatprep.subr.bf16.mxu0 0
  %1262 = vmatpush1.bf16.msra.mxu0 %v877
  %1263 = vmatprep.subr.bf16.mxu0 0
  %1264 = vmatpush1.bf16.msra.mxu0 %v878
  %1265 = vmatprep.subr.bf16.mxu0 0
  %1266 = vmatpush1.bf16.msra.mxu0 %v879
  %1267 = vmatprep.mubr.bf16.mxu0 %v439
  %1268 = vmatmul.mubr.bf16.gmra.mrb[0].mxu0 %v438
  %v1269 = vpop.f32.mrb[0].mxu0
  %v1270 = vadd.f32 %v1173, %v1269
  %v1271 = vpop.f32.mrb[0].mxu0
  %v1272 = vpop.f32.mrb[0].mxu0
  %v1273 = vadd.f32 %v1176, %v1272
  %v1274 = vpop.f32.mrb[0].mxu0
  %1275 = vmatprep.mubr.bf16.mxu0 %v447
  %1276 = vmatmul.mubr.bf16.gmra.mrb[0].mxu0 %v446
  %v1277 = vpop.f32.mrb[0].mxu0
  %v1278 = vadd.f32 %v1181, %v1277
  %v1279 = vpop.f32.mrb[0].mxu0
  %v1280 = vpop.f32.mrb[0].mxu0
  %v1281 = vadd.f32 %v1184, %v1280
  %v1282 = vpop.f32.mrb[0].mxu0
  %1283 = vmatprep.mubr.bf16.mxu0 %v455
  %1284 = vmatmul.mubr.bf16.gmra.mrb[0].mxu0 %v454
  %v1285 = vpop.f32.mrb[0].mxu0
  %v1286 = vadd.f32 %v1189, %v1285
  %v1287 = vpop.f32.mrb[0].mxu0
  %v1288 = vpop.f32.mrb[0].mxu0
  %v1289 = vadd.f32 %v1192, %v1288
  %v1290 = vpop.f32.mrb[0].mxu0
  %1291 = vmatprep.mubr.bf16.mxu0 %v463
  %1292 = vmatmul.mubr.bf16.gmra.mrb[0].mxu0 %v462
  %v1293 = vpop.f32.mrb[0].mxu0
  %v1294 = vadd.f32 %v1197, %v1293
  %v1295 = vpop.f32.mrb[0].mxu0
  %v1296 = vpop.f32.mrb[0].mxu0
  %v1297 = vadd.f32 %v1200, %v1296
  %v1298 = vpop.f32.mrb[0].mxu0
  %1299 = vmatprep.mubr.bf16.mxu0 %v471
  %1300 = vmatmul.mubr.bf16.gmra.mrb[0].mxu0 %v470
  %v1301 = vpop.f32.mrb[0].mxu0
  %v1302 = vadd.f32 %v1205, %v1301
  %v1303 = vpop.f32.mrb[0].mxu0
  %v1304 = vpop.f32.mrb[0].mxu0
  %v1305 = vadd.f32 %v1208, %v1304
  %v1306 = vpop.f32.mrb[0].mxu0
  %1307 = vmatprep.mubr.bf16.mxu0 %v479
  %1308 = vmatmul.mubr.bf16.gmra.mrb[0].mxu0 %v478
  %v1309 = vpop.f32.mrb[0].mxu0
  %v1310 = vadd.f32 %v1213, %v1309
  %v1311 = vpop.f32.mrb[0].mxu0
  %v1312 = vpop.f32.mrb[0].mxu0
  %v1313 = vadd.f32 %v1216, %v1312
  %v1314 = vpop.f32.mrb[0].mxu0
  %1315 = vmatprep.mubr.bf16.mxu0 %v487
  %1316 = vmatmul.mubr.bf16.gmra.mrb[0].mxu0 %v486
  %v1317 = vpop.f32.mrb[0].mxu0
  %v1318 = vadd.f32 %v1221, %v1317
  %v1319 = vpop.f32.mrb[0].mxu0
  %v1320 = vpop.f32.mrb[0].mxu0
  %v1321 = vadd.f32 %v1224, %v1320
  %v1322 = vpop.f32.mrb[0].mxu0
  %1323 = vmatprep.mubr.bf16.mxu0 %v495
  %1324 = vmatmul.mubr.bf16.gmra.mrb[0].mxu0 %v494
  %v1325 = vpop.f32.mrb[0].mxu0
  %v1326 = vadd.f32 %v1229, %v1325
  %v1327 = vpop.f32.mrb[0].mxu0
  %v1328 = vpop.f32.mrb[0].mxu0
  %v1329 = vadd.f32 %v1232, %v1328
  %v1330 = vpop.f32.mrb[0].mxu0
  %1331 = vdwg.mxu0
  %v1332 = vadd.f32 %v32, %v1270
  %v1333 = vadd.f32 %v33, %v1273
  %v1334 = vadd.f32 %v34, %v1278
  %v1335 = vadd.f32 %v35, %v1281
  %v1336 = vadd.f32 %v36, %v1286
  %v1337 = vadd.f32 %v37, %v1289
  %v1338 = vadd.f32 %v38, %v1294
  %v1339 = vadd.f32 %v39, %v1297
  %v1340 = vadd.f32 %v40, %v1302
  %v1341 = vadd.f32 %v41, %v1305
  %v1342 = vadd.f32 %v42, %v1310
  %v1343 = vadd.f32 %v43, %v1313
  %v1344 = vadd.f32 %v44, %v1318
  %v1345 = vadd.f32 %v45, %v1321
  %v1346 = vadd.f32 %v46, %v1326
  %v1347 = vadd.f32 %v47, %v1329
  %1348 = vst [vmem:[#allocation2] sm:$0xff] %v1332
  %1349 = vst [vmem:[#allocation2 + $0x8] sm:$0xff] %v1333
  %1350 = vst [vmem:[#allocation2 + $0x10] sm:$0xff] %v1334
  %1351 = vst [vmem:[#allocation2 + $0x18] sm:$0xff] %v1335
  %1352 = vst [vmem:[#allocation2 + $0x20] sm:$0xff] %v1336
  %1353 = vst [vmem:[#allocation2 + $0x28] sm:$0xff] %v1337
  %1354 = vst [vmem:[#allocation2 + $0x30] sm:$0xff] %v1338
  %1355 = vst [vmem:[#allocation2 + $0x38] sm:$0xff] %v1339
  %1356 = vst [vmem:[#allocation2 + $0x40] sm:$0xff] %v1340
  %1357 = vst [vmem:[#allocation2 + $0x48] sm:$0xff] %v1341
  %1358 = vst [vmem:[#allocation2 + $0x50] sm:$0xff] %v1342
  %1359 = vst [vmem:[#allocation2 + $0x58] sm:$0xff] %v1343
  %1360 = vst [vmem:[#allocation2 + $0x60] sm:$0xff] %v1344
  %1361 = vst [vmem:[#allocation2 + $0x68] sm:$0xff] %v1345
  %1362 = vst [vmem:[#allocation2 + $0x70] sm:$0xff] %v1346
  %1363 = vst [vmem:[#allocation2 + $0x78] sm:$0xff] %v1347
  // Predicated region
  $region14: #{_lambda_.6} parent=0 // pred_check
    %p1364 = pneg %p12
  $region15: #{_lambda_.6} parent=0 // pred_check_branch
    %1366 = sbr.rel (%p1364) target = $region17
  $region16: #{_lambda_.6} parent=0 // pred_region
    %v1367 = vld [vmem:[#allocation2] sm:$0xff]
    %v1368 = vld [vmem:[#allocation2 + $0x8] sm:$0xff]
    %v1369 = vld [vmem:[#allocation2 + $0x10] sm:$0xff]
    %v1370 = vld [vmem:[#allocation2 + $0x18] sm:$0xff]
    %v1371 = vld [vmem:[#allocation2 + $0x20] sm:$0xff]
    %v1372 = vld [vmem:[#allocation2 + $0x28] sm:$0xff]
    %v1373 = vld [vmem:[#allocation2 + $0x30] sm:$0xff]
    %v1374 = vld [vmem:[#allocation2 + $0x38] sm:$0xff]
    %v1375 = vld [vmem:[#allocation2 + $0x40] sm:$0xff]
    %v1376 = vld [vmem:[#allocation2 + $0x48] sm:$0xff]
    %v1377 = vld [vmem:[#allocation2 + $0x50] sm:$0xff]
    %v1378 = vld [vmem:[#allocation2 + $0x58] sm:$0xff]
    %v1379 = vld [vmem:[#allocation2 + $0x60] sm:$0xff]
    %v1380 = vld [vmem:[#allocation2 + $0x68] sm:$0xff]
    %v1381 = vld [vmem:[#allocation2 + $0x70] sm:$0xff]
    %v1382 = vld [vmem:[#allocation2 + $0x78] sm:$0xff]
    %vm1383 = vcmp.ge.f32.partialorder %v1367, 0.0
    %vm1384 = vcmp.ge.f32.partialorder %v1368, 0.0
    %vm1385 = vcmp.ge.f32.partialorder %v1369, 0.0
    %vm1386 = vcmp.ge.f32.partialorder %v1370, 0.0
    %vm1387 = vcmp.ge.f32.partialorder %v1371, 0.0
    %vm1388 = vcmp.ge.f32.partialorder %v1372, 0.0
    %vm1389 = vcmp.ge.f32.partialorder %v1373, 0.0
    %vm1390 = vcmp.ge.f32.partialorder %v1374, 0.0
    %vm1391 = vcmp.ge.f32.partialorder %v1375, 0.0
    %vm1392 = vcmp.ge.f32.partialorder %v1376, 0.0
    %vm1393 = vcmp.ge.f32.partialorder %v1377, 0.0
    %vm1394 = vcmp.ge.f32.partialorder %v1378, 0.0
    %vm1395 = vcmp.ge.f32.partialorder %v1379, 0.0
    %vm1396 = vcmp.ge.f32.partialorder %v1380, 0.0
    %vm1397 = vcmp.ge.f32.partialorder %v1381, 0.0
    %vm1398 = vcmp.ge.f32.partialorder %v1382, 0.0
    %v1399 = vmul.f32 %v1367, 0.2
    %v1400 = vmul.f32 %v1368, 0.2
    %v1401 = vmul.f32 %v1369, 0.2
    %v1402 = vmul.f32 %v1370, 0.2
    %v1403 = vmul.f32 %v1371, 0.2
    %v1404 = vmul.f32 %v1372, 0.2
    %v1405 = vmul.f32 %v1373, 0.2
    %v1406 = vmul.f32 %v1374, 0.2
    %v1407 = vmul.f32 %v1375, 0.2
    %v1408 = vmul.f32 %v1376, 0.2
    %v1409 = vmul.f32 %v1377, 0.2
    %v1410 = vmul.f32 %v1378, 0.2
    %v1411 = vmul.f32 %v1379, 0.2
    %v1412 = vmul.f32 %v1380, 0.2
    %v1413 = vmul.f32 %v1381, 0.2
    %v1414 = vmul.f32 %v1382, 0.2
    %v1415 = vsel %vm1383, %v1367, %v1399
    %v1416 = vsel %vm1384, %v1368, %v1400
    %v1417 = vsel %vm1385, %v1369, %v1401
    %v1418 = vsel %vm1386, %v1370, %v1402
    %v1419 = vsel %vm1387, %v1371, %v1403
    %v1420 = vsel %vm1388, %v1372, %v1404
    %v1421 = vsel %vm1389, %v1373, %v1405
    %v1422 = vsel %vm1390, %v1374, %v1406
    %v1423 = vsel %vm1391, %v1375, %v1407
    %v1424 = vsel %vm1392, %v1376, %v1408
    %v1425 = vsel %vm1393, %v1377, %v1409
    %v1426 = vsel %vm1394, %v1378, %v1410
    %v1427 = vsel %vm1395, %v1379, %v1411
    %v1428 = vsel %vm1396, %v1380, %v1412
    %v1429 = vsel %vm1397, %v1381, %v1413
    %v1430 = vsel %vm1398, %v1382, %v1414
    %1431 = vst [vmem:[%s2] sm:$0xff] %v1415
    %1432 = vst [vmem:[%s2 + $0x8] sm:$0xff] %v1416
    %1433 = vst [vmem:[%s2 + $0x10] sm:$0xff] %v1417
    %1434 = vst [vmem:[%s2 + $0x18] sm:$0xff] %v1418
    %1435 = vst [vmem:[%s2 + $0x20] sm:$0xff] %v1419
    %1436 = vst [vmem:[%s2 + $0x28] sm:$0xff] %v1420
    %1437 = vst [vmem:[%s2 + $0x30] sm:$0xff] %v1421
    %1438 = vst [vmem:[%s2 + $0x38] sm:$0xff] %v1422
    %1439 = vst [vmem:[%s2 + $0x40] sm:$0xff] %v1423
    %1440 = vst [vmem:[%s2 + $0x48] sm:$0xff] %v1424
    %1441 = vst [vmem:[%s2 + $0x50] sm:$0xff] %v1425
    %1442 = vst [vmem:[%s2 + $0x58] sm:$0xff] %v1426
    %1443 = vst [vmem:[%s2 + $0x60] sm:$0xff] %v1427
    %1444 = vst [vmem:[%s2 + $0x68] sm:$0xff] %v1428
    %1445 = vst [vmem:[%s2 + $0x70] sm:$0xff] %v1429
    %1446 = vst [vmem:[%s2 + $0x78] sm:$0xff] %v1430
  $region17: #{_lambda_.6} parent=0 // pred_fallthru
    _
  // Predicated region
  $region18: #{_lambda_.6} parent=0 // pred_check
    _
  $region19: #{_lambda_.6} parent=0 // pred_check_branch
    %1448 = sbr.rel (0) target = $region21
  $region20: #{_lambda_.6} parent=0 // pred_region
    _
  $region21: #{_lambda_.6} parent=0 // pred_fallthru
    _
  // Predicated region
  $region22: #{_lambda_.6} parent=0 // pred_check
    _
  $region23: #{_lambda_.6} parent=0 // pred_check_branch
    %1450 = sbr.rel (0) target = $region25
  $region24: #{_lambda_.6} parent=0 // pred_region
    _
  $region25: #{_lambda_.6} parent=0 // pred_fallthru
    _

// kernel: _lambda_.7
$region0: #{_lambda_.7}
  #allocation0 [shape = 'u32[]', space=smem, size = 0x4, offset = 0x4, fixed_abs, tag = 'smem constant byte address 0x4 - core index']
  #allocation1 [shape = 'u32[144,128]{1,0:T(1,128)}', space=vmem, size = 0x12000, scoped, tag = 'internal scratch']
  #allocation2 [shape = 'f32[32,256]{1,0:T(8,128)}', space=vmem, size = 0x8000, scoped, tag = 'scratch operand']
  %s0 = inlined_call_operand.vmem [shape: bf16[32,2048], index: 0, kind: input, shape index: {}]
  %s1 = inlined_call_operand.vmem [shape: bf16[2048,256], index: 1, kind: input, shape index: {}]
  %s2 = inlined_call_operand.vmem [shape: f32[32,256], index: 2, kind: output, shape index: {}]
  %s3 = sld [smem:[#allocation0]]
  $region26: #{_lambda_.7} parent=0
    _
  %s5 = ssub.s32 1, %s3
  %s6 = scalar_select 0, %s5, %s3
  // Predicated region
  $region2: #{_lambda_.7} parent=0 // pred_check
    _
  $region3: #{_lambda_.7} parent=0 // pred_check_branch
    %8 = sbr.rel (0) target = $region5
  $region4: #{_lambda_.7} parent=0 // pred_region
    _
  $region5: #{_lambda_.7} parent=0 // pred_fallthru
    _
  // Predicated region
  $region6: #{_lambda_.7} parent=0 // pred_check
    _
  $region7: #{_lambda_.7} parent=0 // pred_check_branch
    %10 = sbr.rel (0) target = $region9
  $region8: #{_lambda_.7} parent=0 // pred_region
    _
  $region9: #{_lambda_.7} parent=0 // pred_fallthru
    _
  %p11 = scmp.eq.s32.totalorder 0, 0
  // Predicated region
  $region10: #{_lambda_.7} parent=0 // pred_check
    %p12 = pneg %p11
  $region11: #{_lambda_.7} parent=0 // pred_check_branch
    %14 = sbr.rel (%p12) target = $region13
  $region12: #{_lambda_.7} parent=0 // pred_region
    %15 = vst [vmem:[#allocation2] sm:$0xff] 0.0
    %16 = vst [vmem:[#allocation2 + $0x8] sm:$0xff] 0.0
    %17 = vst [vmem:[#allocation2 + $0x10] sm:$0xff] 0.0
    %18 = vst [vmem:[#allocation2 + $0x18] sm:$0xff] 0.0
    %19 = vst [vmem:[#allocation2 + $0x20] sm:$0xff] 0.0
    %20 = vst [vmem:[#allocation2 + $0x28] sm:$0xff] 0.0
    %21 = vst [vmem:[#allocation2 + $0x30] sm:$0xff] 0.0
    %22 = vst [vmem:[#allocation2 + $0x38] sm:$0xff] 0.0
  $region13: #{_lambda_.7} parent=0 // pred_fallthru
    _
  %v23 = vld [vmem:[#allocation2] sm:$0xff]
  %v24 = vld [vmem:[#allocation2 + $0x8] sm:$0xff]
  %v25 = vld [vmem:[#allocation2 + $0x10] sm:$0xff]
  %v26 = vld [vmem:[#allocation2 + $0x18] sm:$0xff]
  %v27 = vld [vmem:[#allocation2 + $0x20] sm:$0xff]
  %v28 = vld [vmem:[#allocation2 + $0x28] sm:$0xff]
  %v29 = vld [vmem:[#allocation2 + $0x30] sm:$0xff]
  %v30 = vld [vmem:[#allocation2 + $0x38] sm:$0xff]
  %v31 = vld [vmem:[%s0] sm:$0xff]
  %v32 = vld [vmem:[%s0 + $0x8] sm:$0xff]
  %v33 = vld [vmem:[%s0 + $0x10] sm:$0xff]
  %v34 = vld [vmem:[%s0 + $0x18] sm:$0xff]
  %v35 = vld [vmem:[%s0 + $0x20] sm:$0xff]
  %v36 = vld [vmem:[%s0 + $0x28] sm:$0xff]
  %v37 = vld [vmem:[%s0 + $0x30] sm:$0xff]
  %v38 = vld [vmem:[%s0 + $0x38] sm:$0xff]
  %v39 = vld [vmem:[%s0 + $0x40] sm:$0xff]
  %v40 = vld [vmem:[%s0 + $0x48] sm:$0xff]
  %v41 = vld [vmem:[%s0 + $0x50] sm:$0xff]
  %v42 = vld [vmem:[%s0 + $0x58] sm:$0xff]
  %v43 = vld [vmem:[%s0 + $0x60] sm:$0xff]
  %v44 = vld [vmem:[%s0 + $0x68] sm:$0xff]
  %v45 = vld [vmem:[%s0 + $0x70] sm:$0xff]
  %v46 = vld [vmem:[%s0 + $0x78] sm:$0xff]
  %v47 = vld [vmem:[%s0 + $0x80] sm:$0xff]
  %v48 = vld [vmem:[%s0 + $0x88] sm:$0xff]
  %v49 = vld [vmem:[%s0 + $0x90] sm:$0xff]
  %v50 = vld [vmem:[%s0 + $0x98] sm:$0xff]
  %v51 = vld [vmem:[%s0 + $0xa0] sm:$0xff]
  %v52 = vld [vmem:[%s0 + $0xa8] sm:$0xff]
  %v53 = vld [vmem:[%s0 + $0xb0] sm:$0xff]
  %v54 = vld [vmem:[%s0 + $0xb8] sm:$0xff]
  %v55 = vld [vmem:[%s0 + $0xc0] sm:$0xff]
  %v56 = vld [vmem:[%s0 + $0xc8] sm:$0xff]
  %v57 = vld [vmem:[%s0 + $0xd0] sm:$0xff]
  %v58 = vld [vmem:[%s0 + $0xd8] sm:$0xff]
  %v59 = vld [vmem:[%s0 + $0xe0] sm:$0xff]
  %v60 = vld [vmem:[%s0 + $0xe8] sm:$0xff]
  %v61 = vld [vmem:[%s0 + $0xf0] sm:$0xff]
  %v62 = vld [vmem:[%s0 + $0xf8] sm:$0xff]
  %v63 = vld [vmem:[%s1] sm:$0xff]
  %v64 = vld [vmem:[%s1 + $0x8] sm:$0xff]
  %v65 = vld [vmem:[%s1 + $0x10] sm:$0xff]
  %v66 = vld [vmem:[%s1 + $0x18] sm:$0xff]
  %v67 = vld [vmem:[%s1 + $0x20] sm:$0xff]
  %v68 = vld [vmem:[%s1 + $0x28] sm:$0xff]
  %v69 = vld [vmem:[%s1 + $0x30] sm:$0xff]
  %v70 = vld [vmem:[%s1 + $0x38] sm:$0xff]
  %v71 = vld [vmem:[%s1 + $0x40] sm:$0xff]
  %v72 = vld [vmem:[%s1 + $0x48] sm:$0xff]
  %v73 = vld [vmem:[%s1 + $0x50] sm:$0xff]
  %v74 = vld [vmem:[%s1 + $0x58] sm:$0xff]
  %v75 = vld [vmem:[%s1 + $0x60] sm:$0xff]
  %v76 = vld [vmem:[%s1 + $0x68] sm:$0xff]
  %v77 = vld [vmem:[%s1 + $0x70] sm:$0xff]
  %v78 = vld [vmem:[%s1 + $0x78] sm:$0xff]
  %v79 = vld [vmem:[%s1 + $0x80] sm:$0xff]
  %v80 = vld [vmem:[%s1 + $0x88] sm:$0xff]
  %v81 = vld [vmem:[%s1 + $0x90] sm:$0xff]
  %v82 = vld [vmem:[%s1 + $0x98] sm:$0xff]
  %v83 = vld [vmem:[%s1 + $0xa0] sm:$0xff]
  %v84 = vld [vmem:[%s1 + $0xa8] sm:$0xff]
  %v85 = vld [vmem:[%s1 + $0xb0] sm:$0xff]
  %v86 = vld [vmem:[%s1 + $0xb8] sm:$0xff]
  %v87 = vld [vmem:[%s1 + $0xc0] sm:$0xff]
  %v88 = vld [vmem:[%s1 + $0xc8] sm:$0xff]
  %v89 = vld [vmem:[%s1 + $0xd0] sm:$0xff]
  %v90 = vld [vmem:[%s1 + $0xd8] sm:$0xff]
  %v91 = vld [vmem:[%s1 + $0xe0] sm:$0xff]
  %v92 = vld [vmem:[%s1 + $0xe8] sm:$0xff]
  %v93 = vld [vmem:[%s1 + $0xf0] sm:$0xff]
  %v94 = vld [vmem:[%s1 + $0xf8] sm:$0xff]
  %v95 = vld [vmem:[%s1 + $0x100] sm:$0xff]
  %v96 = vld [vmem:[%s1 + $0x108] sm:$0xff]
  %v97 = vld [vmem:[%s1 + $0x110] sm:$0xff]
  %v98 = vld [vmem:[%s1 + $0x118] sm:$0xff]
  %v99 = vld [vmem:[%s1 + $0x120] sm:$0xff]
  %v100 = vld [vmem:[%s1 + $0x128] sm:$0xff]
  %v101 = vld [vmem:[%s1 + $0x130] sm:$0xff]
  %v102 = vld [vmem:[%s1 + $0x138] sm:$0xff]
  %v103 = vld [vmem:[%s1 + $0x140] sm:$0xff]
  %v104 = vld [vmem:[%s1 + $0x148] sm:$0xff]
  %v105 = vld [vmem:[%s1 + $0x150] sm:$0xff]
  %v106 = vld [vmem:[%s1 + $0x158] sm:$0xff]
  %v107 = vld [vmem:[%s1 + $0x160] sm:$0xff]
  %v108 = vld [vmem:[%s1 + $0x168] sm:$0xff]
  %v109 = vld [vmem:[%s1 + $0x170] sm:$0xff]
  %v110 = vld [vmem:[%s1 + $0x178] sm:$0xff]
  %v111 = vld [vmem:[%s1 + $0x180] sm:$0xff]
  %v112 = vld [vmem:[%s1 + $0x188] sm:$0xff]
  %v113 = vld [vmem:[%s1 + $0x190] sm:$0xff]
  %v114 = vld [vmem:[%s1 + $0x198] sm:$0xff]
  %v115 = vld [vmem:[%s1 + $0x1a0] sm:$0xff]
  %v116 = vld [vmem:[%s1 + $0x1a8] sm:$0xff]
  %v117 = vld [vmem:[%s1 + $0x1b0] sm:$0xff]
  %v118 = vld [vmem:[%s1 + $0x1b8] sm:$0xff]
  %v119 = vld [vmem:[%s1 + $0x1c0] sm:$0xff]
  %v120 = vld [vmem:[%s1 + $0x1c8] sm:$0xff]
  %v121 = vld [vmem:[%s1 + $0x1d0] sm:$0xff]
  %v122 = vld [vmem:[%s1 + $0x1d8] sm:$0xff]
  %v123 = vld [vmem:[%s1 + $0x1e0] sm:$0xff]
  %v124 = vld [vmem:[%s1 + $0x1e8] sm:$0xff]
  %v125 = vld [vmem:[%s1 + $0x1f0] sm:$0xff]
  %v126 = vld [vmem:[%s1 + $0x1f8] sm:$0xff]
  %v127 = vld [vmem:[%s1 + $0x200] sm:$0xff]
  %v128 = vld [vmem:[%s1 + $0x208] sm:$0xff]
  %v129 = vld [vmem:[%s1 + $0x210] sm:$0xff]
  %v130 = vld [vmem:[%s1 + $0x218] sm:$0xff]
  %v131 = vld [vmem:[%s1 + $0x220] sm:$0xff]
  %v132 = vld [vmem:[%s1 + $0x228] sm:$0xff]
  %v133 = vld [vmem:[%s1 + $0x230] sm:$0xff]
  %v134 = vld [vmem:[%s1 + $0x238] sm:$0xff]
  %v135 = vld [vmem:[%s1 + $0x240] sm:$0xff]
  %v136 = vld [vmem:[%s1 + $0x248] sm:$0xff]
  %v137 = vld [vmem:[%s1 + $0x250] sm:$0xff]
  %v138 = vld [vmem:[%s1 + $0x258] sm:$0xff]
  %v139 = vld [vmem:[%s1 + $0x260] sm:$0xff]
  %v140 = vld [vmem:[%s1 + $0x268] sm:$0xff]
  %v141 = vld [vmem:[%s1 + $0x270] sm:$0xff]
  %v142 = vld [vmem:[%s1 + $0x278] sm:$0xff]
  %v143 = vld [vmem:[%s1 + $0x280] sm:$0xff]
  %v144 = vld [vmem:[%s1 + $0x288] sm:$0xff]
  %v145 = vld [vmem:[%s1 + $0x290] sm:$0xff]
  %v146 = vld [vmem:[%s1 + $0x298] sm:$0xff]
  %v147 = vld [vmem:[%s1 + $0x2a0] sm:$0xff]
  %v148 = vld [vmem:[%s1 + $0x2a8] sm:$0xff]
  %v149 = vld [vmem:[%s1 + $0x2b0] sm:$0xff]
  %v150 = vld [vmem:[%s1 + $0x2b8] sm:$0xff]
  %v151 = vld [vmem:[%s1 + $0x2c0] sm:$0xff]
  %v152 = vld [vmem:[%s1 + $0x2c8] sm:$0xff]
  %v153 = vld [vmem:[%s1 + $0x2d0] sm:$0xff]
  %v154 = vld [vmem:[%s1 + $0x2d8] sm:$0xff]
  %v155 = vld [vmem:[%s1 + $0x2e0] sm:$0xff]
  %v156 = vld [vmem:[%s1 + $0x2e8] sm:$0xff]
  %v157 = vld [vmem:[%s1 + $0x2f0] sm:$0xff]
  %v158 = vld [vmem:[%s1 + $0x2f8] sm:$0xff]
  %v159 = vld [vmem:[%s1 + $0x300] sm:$0xff]
  %v160 = vld [vmem:[%s1 + $0x308] sm:$0xff]
  %v161 = vld [vmem:[%s1 + $0x310] sm:$0xff]
  %v162 = vld [vmem:[%s1 + $0x318] sm:$0xff]
  %v163 = vld [vmem:[%s1 + $0x320] sm:$0xff]
  %v164 = vld [vmem:[%s1 + $0x328] sm:$0xff]
  %v165 = vld [vmem:[%s1 + $0x330] sm:$0xff]
  %v166 = vld [vmem:[%s1 + $0x338] sm:$0xff]
  %v167 = vld [vmem:[%s1 + $0x340] sm:$0xff]
  %v168 = vld [vmem:[%s1 + $0x348] sm:$0xff]
  %v169 = vld [vmem:[%s1 + $0x350] sm:$0xff]
  %v170 = vld [vmem:[%s1 + $0x358] sm:$0xff]
  %v171 = vld [vmem:[%s1 + $0x360] sm:$0xff]
  %v172 = vld [vmem:[%s1 + $0x368] sm:$0xff]
  %v173 = vld [vmem:[%s1 + $0x370] sm:$0xff]
  %v174 = vld [vmem:[%s1 + $0x378] sm:$0xff]
  %v175 = vld [vmem:[%s1 + $0x380] sm:$0xff]
  %v176 = vld [vmem:[%s1 + $0x388] sm:$0xff]
  %v177 = vld [vmem:[%s1 + $0x390] sm:$0xff]
  %v178 = vld [vmem:[%s1 + $0x398] sm:$0xff]
  %v179 = vld [vmem:[%s1 + $0x3a0] sm:$0xff]
  %v180 = vld [vmem:[%s1 + $0x3a8] sm:$0xff]
  %v181 = vld [vmem:[%s1 + $0x3b0] sm:$0xff]
  %v182 = vld [vmem:[%s1 + $0x3b8] sm:$0xff]
  %v183 = vld [vmem:[%s1 + $0x3c0] sm:$0xff]
  %v184 = vld [vmem:[%s1 + $0x3c8] sm:$0xff]
  %v185 = vld [vmem:[%s1 + $0x3d0] sm:$0xff]
  %v186 = vld [vmem:[%s1 + $0x3d8] sm:$0xff]
  %v187 = vld [vmem:[%s1 + $0x3e0] sm:$0xff]
  %v188 = vld [vmem:[%s1 + $0x3e8] sm:$0xff]
  %v189 = vld [vmem:[%s1 + $0x3f0] sm:$0xff]
  %v190 = vld [vmem:[%s1 + $0x3f8] sm:$0xff]
  %v191 = vld [vmem:[%s1 + $0x400] sm:$0xff]
  %v192 = vld [vmem:[%s1 + $0x408] sm:$0xff]
  %v193 = vld [vmem:[%s1 + $0x410] sm:$0xff]
  %v194 = vld [vmem:[%s1 + $0x418] sm:$0xff]
  %v195 = vld [vmem:[%s1 + $0x420] sm:$0xff]
  %v196 = vld [vmem:[%s1 + $0x428] sm:$0xff]
  %v197 = vld [vmem:[%s1 + $0x430] sm:$0xff]
  %v198 = vld [vmem:[%s1 + $0x438] sm:$0xff]
  %v199 = vld [vmem:[%s1 + $0x440] sm:$0xff]
  %v200 = vld [vmem:[%s1 + $0x448] sm:$0xff]
  %v201 = vld [vmem:[%s1 + $0x450] sm:$0xff]
  %v202 = vld [vmem:[%s1 + $0x458] sm:$0xff]
  %v203 = vld [vmem:[%s1 + $0x460] sm:$0xff]
  %v204 = vld [vmem:[%s1 + $0x468] sm:$0xff]
  %v205 = vld [vmem:[%s1 + $0x470] sm:$0xff]
  %v206 = vld [vmem:[%s1 + $0x478] sm:$0xff]
  %v207 = vld [vmem:[%s1 + $0x480] sm:$0xff]
  %v208 = vld [vmem:[%s1 + $0x488] sm:$0xff]
  %v209 = vld [vmem:[%s1 + $0x490] sm:$0xff]
  %v210 = vld [vmem:[%s1 + $0x498] sm:$0xff]
  %v211 = vld [vmem:[%s1 + $0x4a0] sm:$0xff]
  %v212 = vld [vmem:[%s1 + $0x4a8] sm:$0xff]
  %v213 = vld [vmem:[%s1 + $0x4b0] sm:$0xff]
  %v214 = vld [vmem:[%s1 + $0x4b8] sm:$0xff]
  %v215 = vld [vmem:[%s1 + $0x4c0] sm:$0xff]
  %v216 = vld [vmem:[%s1 + $0x4c8] sm:$0xff]
  %v217 = vld [vmem:[%s1 + $0x4d0] sm:$0xff]
  %v218 = vld [vmem:[%s1 + $0x4d8] sm:$0xff]
  %v219 = vld [vmem:[%s1 + $0x4e0] sm:$0xff]
  %v220 = vld [vmem:[%s1 + $0x4e8] sm:$0xff]
  %v221 = vld [vmem:[%s1 + $0x4f0] sm:$0xff]
  %v222 = vld [vmem:[%s1 + $0x4f8] sm:$0xff]
  %v223 = vld [vmem:[%s1 + $0x500] sm:$0xff]
  %v224 = vld [vmem:[%s1 + $0x508] sm:$0xff]
  %v225 = vld [vmem:[%s1 + $0x510] sm:$0xff]
  %v226 = vld [vmem:[%s1 + $0x518] sm:$0xff]
  %v227 = vld [vmem:[%s1 + $0x520] sm:$0xff]
  %v228 = vld [vmem:[%s1 + $0x528] sm:$0xff]
  %v229 = vld [vmem:[%s1 + $0x530] sm:$0xff]
  %v230 = vld [vmem:[%s1 + $0x538] sm:$0xff]
  %v231 = vld [vmem:[%s1 + $0x540] sm:$0xff]
  %v232 = vld [vmem:[%s1 + $0x548] sm:$0xff]
  %v233 = vld [vmem:[%s1 + $0x550] sm:$0xff]
  %v234 = vld [vmem:[%s1 + $0x558] sm:$0xff]
  %v235 = vld [vmem:[%s1 + $0x560] sm:$0xff]
  %v236 = vld [vmem:[%s1 + $0x568] sm:$0xff]
  %v237 = vld [vmem:[%s1 + $0x570] sm:$0xff]
  %v238 = vld [vmem:[%s1 + $0x578] sm:$0xff]
  %v239 = vld [vmem:[%s1 + $0x580] sm:$0xff]
  %v240 = vld [vmem:[%s1 + $0x588] sm:$0xff]
  %v241 = vld [vmem:[%s1 + $0x590] sm:$0xff]
  %v242 = vld [vmem:[%s1 + $0x598] sm:$0xff]
  %v243 = vld [vmem:[%s1 + $0x5a0] sm:$0xff]
  %v244 = vld [vmem:[%s1 + $0x5a8] sm:$0xff]
  %v245 = vld [vmem:[%s1 + $0x5b0] sm:$0xff]
  %v246 = vld [vmem:[%s1 + $0x5b8] sm:$0xff]
  %v247 = vld [vmem:[%s1 + $0x5c0] sm:$0xff]
  %v248 = vld [vmem:[%s1 + $0x5c8] sm:$0xff]
  %v249 = vld [vmem:[%s1 + $0x5d0] sm:$0xff]
  %v250 = vld [vmem:[%s1 + $0x5d8] sm:$0xff]
  %v251 = vld [vmem:[%s1 + $0x5e0] sm:$0xff]
  %v252 = vld [vmem:[%s1 + $0x5e8] sm:$0xff]
  %v253 = vld [vmem:[%s1 + $0x5f0] sm:$0xff]
  %v254 = vld [vmem:[%s1 + $0x5f8] sm:$0xff]
  %v255 = vld [vmem:[%s1 + $0x600] sm:$0xff]
  %v256 = vld [vmem:[%s1 + $0x608] sm:$0xff]
  %v257 = vld [vmem:[%s1 + $0x610] sm:$0xff]
  %v258 = vld [vmem:[%s1 + $0x618] sm:$0xff]
  %v259 = vld [vmem:[%s1 + $0x620] sm:$0xff]
  %v260 = vld [vmem:[%s1 + $0x628] sm:$0xff]
  %v261 = vld [vmem:[%s1 + $0x630] sm:$0xff]
  %v262 = vld [vmem:[%s1 + $0x638] sm:$0xff]
  %v263 = vld [vmem:[%s1 + $0x640] sm:$0xff]
  %v264 = vld [vmem:[%s1 + $0x648] sm:$0xff]
  %v265 = vld [vmem:[%s1 + $0x650] sm:$0xff]
  %v266 = vld [vmem:[%s1 + $0x658] sm:$0xff]
  %v267 = vld [vmem:[%s1 + $0x660] sm:$0xff]
  %v268 = vld [vmem:[%s1 + $0x668] sm:$0xff]
  %v269 = vld [vmem:[%s1 + $0x670] sm:$0xff]
  %v270 = vld [vmem:[%s1 + $0x678] sm:$0xff]
  %v271 = vld [vmem:[%s1 + $0x680] sm:$0xff]
  %v272 = vld [vmem:[%s1 + $0x688] sm:$0xff]
  %v273 = vld [vmem:[%s1 + $0x690] sm:$0xff]
  %v274 = vld [vmem:[%s1 + $0x698] sm:$0xff]
  %v275 = vld [vmem:[%s1 + $0x6a0] sm:$0xff]
  %v276 = vld [vmem:[%s1 + $0x6a8] sm:$0xff]
  %v277 = vld [vmem:[%s1 + $0x6b0] sm:$0xff]
  %v278 = vld [vmem:[%s1 + $0x6b8] sm:$0xff]
  %v279 = vld [vmem:[%s1 + $0x6c0] sm:$0xff]
  %v280 = vld [vmem:[%s1 + $0x6c8] sm:$0xff]
  %v281 = vld [vmem:[%s1 + $0x6d0] sm:$0xff]
  %v282 = vld [vmem:[%s1 + $0x6d8] sm:$0xff]
  %v283 = vld [vmem:[%s1 + $0x6e0] sm:$0xff]
  %v284 = vld [vmem:[%s1 + $0x6e8] sm:$0xff]
  %v285 = vld [vmem:[%s1 + $0x6f0] sm:$0xff]
  %v286 = vld [vmem:[%s1 + $0x6f8] sm:$0xff]
  %v287 = vld [vmem:[%s1 + $0x700] sm:$0xff]
  %v288 = vld [vmem:[%s1 + $0x708] sm:$0xff]
  %v289 = vld [vmem:[%s1 + $0x710] sm:$0xff]
  %v290 = vld [vmem:[%s1 + $0x718] sm:$0xff]
  %v291 = vld [vmem:[%s1 + $0x720] sm:$0xff]
  %v292 = vld [vmem:[%s1 + $0x728] sm:$0xff]
  %v293 = vld [vmem:[%s1 + $0x730] sm:$0xff]
  %v294 = vld [vmem:[%s1 + $0x738] sm:$0xff]
  %v295 = vld [vmem:[%s1 + $0x740] sm:$0xff]
  %v296 = vld [vmem:[%s1 + $0x748] sm:$0xff]
  %v297 = vld [vmem:[%s1 + $0x750] sm:$0xff]
  %v298 = vld [vmem:[%s1 + $0x758] sm:$0xff]
  %v299 = vld [vmem:[%s1 + $0x760] sm:$0xff]
  %v300 = vld [vmem:[%s1 + $0x768] sm:$0xff]
  %v301 = vld [vmem:[%s1 + $0x770] sm:$0xff]
  %v302 = vld [vmem:[%s1 + $0x778] sm:$0xff]
  %v303 = vld [vmem:[%s1 + $0x780] sm:$0xff]
  %v304 = vld [vmem:[%s1 + $0x788] sm:$0xff]
  %v305 = vld [vmem:[%s1 + $0x790] sm:$0xff]
  %v306 = vld [vmem:[%s1 + $0x798] sm:$0xff]
  %v307 = vld [vmem:[%s1 + $0x7a0] sm:$0xff]
  %v308 = vld [vmem:[%s1 + $0x7a8] sm:$0xff]
  %v309 = vld [vmem:[%s1 + $0x7b0] sm:$0xff]
  %v310 = vld [vmem:[%s1 + $0x7b8] sm:$0xff]
  %v311 = vld [vmem:[%s1 + $0x7c0] sm:$0xff]
  %v312 = vld [vmem:[%s1 + $0x7c8] sm:$0xff]
  %v313 = vld [vmem:[%s1 + $0x7d0] sm:$0xff]
  %v314 = vld [vmem:[%s1 + $0x7d8] sm:$0xff]
  %v315 = vld [vmem:[%s1 + $0x7e0] sm:$0xff]
  %v316 = vld [vmem:[%s1 + $0x7e8] sm:$0xff]
  %v317 = vld [vmem:[%s1 + $0x7f0] sm:$0xff]
  %v318 = vld [vmem:[%s1 + $0x7f8] sm:$0xff]
  %v351 = vunpack.c.l.b16 %v31
  %v352 = vunpack.c.h.b16 %v31
  %v353 = vunpack.c.l.b16 %v32
  %v354 = vunpack.c.h.b16 %v32
  %v355 = vunpack.c.l.b16 %v33
  %v356 = vunpack.c.h.b16 %v33
  %v357 = vunpack.c.l.b16 %v34
  %v358 = vunpack.c.h.b16 %v34
  %v359 = vunpack.c.l.b16 %v35
  %v360 = vunpack.c.h.b16 %v35
  %v361 = vunpack.c.l.b16 %v36
  %v362 = vunpack.c.h.b16 %v36
  %v363 = vunpack.c.l.b16 %v37
  %v364 = vunpack.c.h.b16 %v37
  %v365 = vunpack.c.l.b16 %v38
  %v366 = vunpack.c.h.b16 %v38
  %v367 = vunpack.c.l.b16 %v39
  %v368 = vunpack.c.h.b16 %v39
  %v369 = vunpack.c.l.b16 %v40
  %v370 = vunpack.c.h.b16 %v40
  %v371 = vunpack.c.l.b16 %v41
  %v372 = vunpack.c.h.b16 %v41
  %v373 = vunpack.c.l.b16 %v42
  %v374 = vunpack.c.h.b16 %v42
  %v375 = vunpack.c.l.b16 %v43
  %v376 = vunpack.c.h.b16 %v43
  %v377 = vunpack.c.l.b16 %v44
  %v378 = vunpack.c.h.b16 %v44
  %v379 = vunpack.c.l.b16 %v45
  %v380 = vunpack.c.h.b16 %v45
  %v381 = vunpack.c.l.b16 %v46
  %v382 = vunpack.c.h.b16 %v46
  %v383 = vunpack.c.l.b16 %v47
  %v384 = vunpack.c.h.b16 %v47
  %v385 = vunpack.c.l.b16 %v48
  %v386 = vunpack.c.h.b16 %v48
  %v387 = vunpack.c.l.b16 %v49
  %v388 = vunpack.c.h.b16 %v49
  %v389 = vunpack.c.l.b16 %v50
  %v390 = vunpack.c.h.b16 %v50
  %v391 = vunpack.c.l.b16 %v51
  %v392 = vunpack.c.h.b16 %v51
  %v393 = vunpack.c.l.b16 %v52
  %v394 = vunpack.c.h.b16 %v52
  %v395 = vunpack.c.l.b16 %v53
  %v396 = vunpack.c.h.b16 %v53
  %v397 = vunpack.c.l.b16 %v54
  %v398 = vunpack.c.h.b16 %v54
  %v399 = vunpack.c.l.b16 %v55
  %v400 = vunpack.c.h.b16 %v55
  %v401 = vunpack.c.l.b16 %v56
  %v402 = vunpack.c.h.b16 %v56
  %v403 = vunpack.c.l.b16 %v57
  %v404 = vunpack.c.h.b16 %v57
  %v405 = vunpack.c.l.b16 %v58
  %v406 = vunpack.c.h.b16 %v58
  %v407 = vunpack.c.l.b16 %v59
  %v408 = vunpack.c.h.b16 %v59
  %v409 = vunpack.c.l.b16 %v60
  %v410 = vunpack.c.h.b16 %v60
  %v411 = vunpack.c.l.b16 %v61
  %v412 = vunpack.c.h.b16 %v61
  %v413 = vunpack.c.l.b16 %v62
  %v414 = vunpack.c.h.b16 %v62
  %v415 = vpack.c.b16 %v367, %v351
  %v416 = vpack.c.b16 %v368, %v352
  %v417 = vpack.c.b16 %v369, %v353
  %v418 = vpack.c.b16 %v370, %v354
  %v419 = vpack.c.b16 %v371, %v355
  %v420 = vpack.c.b16 %v372, %v356
  %v421 = vpack.c.b16 %v373, %v357
  %v422 = vpack.c.b16 %v374, %v358
  %v423 = vpack.c.b16 %v375, %v359
  %v424 = vpack.c.b16 %v376, %v360
  %v425 = vpack.c.b16 %v377, %v361
  %v426 = vpack.c.b16 %v378, %v362
  %v427 = vpack.c.b16 %v379, %v363
  %v428 = vpack.c.b16 %v380, %v364
  %v429 = vpack.c.b16 %v381, %v365
  %v430 = vpack.c.b16 %v382, %v366
  %v431 = vpack.c.b16 %v399, %v383
  %v432 = vpack.c.b16 %v400, %v384
  %v433 = vpack.c.b16 %v401, %v385
  %v434 = vpack.c.b16 %v402, %v386
  %v435 = vpack.c.b16 %v403, %v387
  %v436 = vpack.c.b16 %v404, %v388
  %v437 = vpack.c.b16 %v405, %v389
  %v438 = vpack.c.b16 %v406, %v390
  %v439 = vpack.c.b16 %v407, %v391
  %v440 = vpack.c.b16 %v408, %v392
  %v441 = vpack.c.b16 %v409, %v393
  %v442 = vpack.c.b16 %v410, %v394
  %v443 = vpack.c.b16 %v411, %v395
  %v444 = vpack.c.b16 %v412, %v396
  %v445 = vpack.c.b16 %v413, %v397
  %v446 = vpack.c.b16 %v414, %v398
  %v735 = vunpack.c.l.b16 %v63
  %v736 = vunpack.c.h.b16 %v63
  %v737 = vunpack.c.l.b16 %v64
  %v738 = vunpack.c.h.b16 %v64
  %v739 = vunpack.c.l.b16 %v65
  %v740 = vunpack.c.h.b16 %v65
  %v741 = vunpack.c.l.b16 %v66
  %v742 = vunpack.c.h.b16 %v66
  %v743 = vunpack.c.l.b16 %v67
  %v744 = vunpack.c.h.b16 %v67
  %v745 = vunpack.c.l.b16 %v68
  %v746 = vunpack.c.h.b16 %v68
  %v747 = vunpack.c.l.b16 %v69
  %v748 = vunpack.c.h.b16 %v69
  %v749 = vunpack.c.l.b16 %v70
  %v750 = vunpack.c.h.b16 %v70
  %v751 = vunpack.c.l.b16 %v71
  %v752 = vunpack.c.h.b16 %v71
  %v753 = vunpack.c.l.b16 %v72
  %v754 = vunpack.c.h.b16 %v72
  %v755 = vunpack.c.l.b16 %v73
  %v756 = vunpack.c.h.b16 %v73
  %v757 = vunpack.c.l.b16 %v74
  %v758 = vunpack.c.h.b16 %v74
  %v759 = vunpack.c.l.b16 %v75
  %v760 = vunpack.c.h.b16 %v75
  %v761 = vunpack.c.l.b16 %v76
  %v762 = vunpack.c.h.b16 %v76
  %v763 = vunpack.c.l.b16 %v77
  %v764 = vunpack.c.h.b16 %v77
  %v765 = vunpack.c.l.b16 %v78
  %v766 = vunpack.c.h.b16 %v78
  %v767 = vunpack.c.l.b16 %v79
  %v768 = vunpack.c.h.b16 %v79
  %v769 = vunpack.c.l.b16 %v80
  %v770 = vunpack.c.h.b16 %v80
  %v771 = vunpack.c.l.b16 %v81
  %v772 = vunpack.c.h.b16 %v81
  %v773 = vunpack.c.l.b16 %v82
  %v774 = vunpack.c.h.b16 %v82
  %v775 = vunpack.c.l.b16 %v83
  %v776 = vunpack.c.h.b16 %v83
  %v777 = vunpack.c.l.b16 %v84
  %v778 = vunpack.c.h.b16 %v84
  %v779 = vunpack.c.l.b16 %v85
  %v780 = vunpack.c.h.b16 %v85
  %v781 = vunpack.c.l.b16 %v86
  %v782 = vunpack.c.h.b16 %v86
  %v783 = vunpack.c.l.b16 %v87
  %v784 = vunpack.c.h.b16 %v87
  %v785 = vunpack.c.l.b16 %v88
  %v786 = vunpack.c.h.b16 %v88
  %v787 = vunpack.c.l.b16 %v89
  %v788 = vunpack.c.h.b16 %v89
  %v789 = vunpack.c.l.b16 %v90
  %v790 = vunpack.c.h.b16 %v90
  %v791 = vunpack.c.l.b16 %v91
  %v792 = vunpack.c.h.b16 %v91
  %v793 = vunpack.c.l.b16 %v92
  %v794 = vunpack.c.h.b16 %v92
  %v795 = vunpack.c.l.b16 %v93
  %v796 = vunpack.c.h.b16 %v93
  %v797 = vunpack.c.l.b16 %v94
  %v798 = vunpack.c.h.b16 %v94
  %v799 = vunpack.c.l.b16 %v95
  %v800 = vunpack.c.h.b16 %v95
  %v801 = vunpack.c.l.b16 %v96
  %v802 = vunpack.c.h.b16 %v96
  %v803 = vunpack.c.l.b16 %v97
  %v804 = vunpack.c.h.b16 %v97
  %v805 = vunpack.c.l.b16 %v98
  %v806 = vunpack.c.h.b16 %v98
  %v807 = vunpack.c.l.b16 %v99
  %v808 = vunpack.c.h.b16 %v99
  %v809 = vunpack.c.l.b16 %v100
  %v810 = vunpack.c.h.b16 %v100
  %v811 = vunpack.c.l.b16 %v101
  %v812 = vunpack.c.h.b16 %v101
  %v813 = vunpack.c.l.b16 %v102
  %v814 = vunpack.c.h.b16 %v102
  %v815 = vunpack.c.l.b16 %v103
  %v816 = vunpack.c.h.b16 %v103
  %v817 = vunpack.c.l.b16 %v104
  %v818 = vunpack.c.h.b16 %v104
  %v819 = vunpack.c.l.b16 %v105
  %v820 = vunpack.c.h.b16 %v105
  %v821 = vunpack.c.l.b16 %v106
  %v822 = vunpack.c.h.b16 %v106
  %v823 = vunpack.c.l.b16 %v107
  %v824 = vunpack.c.h.b16 %v107
  %v825 = vunpack.c.l.b16 %v108
  %v826 = vunpack.c.h.b16 %v108
  %v827 = vunpack.c.l.b16 %v109
  %v828 = vunpack.c.h.b16 %v109
  %v829 = vunpack.c.l.b16 %v110
  %v830 = vunpack.c.h.b16 %v110
  %v831 = vunpack.c.l.b16 %v111
  %v832 = vunpack.c.h.b16 %v111
  %v833 = vunpack.c.l.b16 %v112
  %v834 = vunpack.c.h.b16 %v112
  %v835 = vunpack.c.l.b16 %v113
  %v836 = vunpack.c.h.b16 %v113
  %v837 = vunpack.c.l.b16 %v114
  %v838 = vunpack.c.h.b16 %v114
  %v839 = vunpack.c.l.b16 %v115
  %v840 = vunpack.c.h.b16 %v115
  %v841 = vunpack.c.l.b16 %v116
  %v842 = vunpack.c.h.b16 %v116
  %v843 = vunpack.c.l.b16 %v117
  %v844 = vunpack.c.h.b16 %v117
  %v845 = vunpack.c.l.b16 %v118
  %v846 = vunpack.c.h.b16 %v118
  %v847 = vunpack.c.l.b16 %v119
  %v848 = vunpack.c.h.b16 %v119
  %v849 = vunpack.c.l.b16 %v120
  %v850 = vunpack.c.h.b16 %v120
  %v851 = vunpack.c.l.b16 %v121
  %v852 = vunpack.c.h.b16 %v121
  %v853 = vunpack.c.l.b16 %v122
  %v854 = vunpack.c.h.b16 %v122
  %v855 = vunpack.c.l.b16 %v123
  %v856 = vunpack.c.h.b16 %v123
  %v857 = vunpack.c.l.b16 %v124
  %v858 = vunpack.c.h.b16 %v124
  %v859 = vunpack.c.l.b16 %v125
  %v860 = vunpack.c.h.b16 %v125
  %v861 = vunpack.c.l.b16 %v126
  %v862 = vunpack.c.h.b16 %v126
  %v863 = vunpack.c.l.b16 %v127
  %v864 = vunpack.c.h.b16 %v127
  %v865 = vunpack.c.l.b16 %v128
  %v866 = vunpack.c.h.b16 %v128
  %v867 = vunpack.c.l.b16 %v129
  %v868 = vunpack.c.h.b16 %v129
  %v869 = vunpack.c.l.b16 %v130
  %v870 = vunpack.c.h.b16 %v130
  %v871 = vunpack.c.l.b16 %v131
  %v872 = vunpack.c.h.b16 %v131
  %v873 = vunpack.c.l.b16 %v132
  %v874 = vunpack.c.h.b16 %v132
  %v875 = vunpack.c.l.b16 %v133
  %v876 = vunpack.c.h.b16 %v133
  %v877 = vunpack.c.l.b16 %v134
  %v878 = vunpack.c.h.b16 %v134
  %v879 = vunpack.c.l.b16 %v135
  %v880 = vunpack.c.h.b16 %v135
  %v881 = vunpack.c.l.b16 %v136
  %v882 = vunpack.c.h.b16 %v136
  %v883 = vunpack.c.l.b16 %v137
  %v884 = vunpack.c.h.b16 %v137
  %v885 = vunpack.c.l.b16 %v138
  %v886 = vunpack.c.h.b16 %v138
  %v887 = vunpack.c.l.b16 %v139
  %v888 = vunpack.c.h.b16 %v139
  %v889 = vunpack.c.l.b16 %v140
  %v890 = vunpack.c.h.b16 %v140
  %v891 = vunpack.c.l.b16 %v141
  %v892 = vunpack.c.h.b16 %v141
  %v893 = vunpack.c.l.b16 %v142
  %v894 = vunpack.c.h.b16 %v142
  %v895 = vunpack.c.l.b16 %v143
  %v896 = vunpack.c.h.b16 %v143
  %v897 = vunpack.c.l.b16 %v144
  %v898 = vunpack.c.h.b16 %v144
  %v899 = vunpack.c.l.b16 %v145
  %v900 = vunpack.c.h.b16 %v145
  %v901 = vunpack.c.l.b16 %v146
  %v902 = vunpack.c.h.b16 %v146
  %v903 = vunpack.c.l.b16 %v147
  %v904 = vunpack.c.h.b16 %v147
  %v905 = vunpack.c.l.b16 %v148
  %v906 = vunpack.c.h.b16 %v148
  %v907 = vunpack.c.l.b16 %v149
  %v908 = vunpack.c.h.b16 %v149
  %v909 = vunpack.c.l.b16 %v150
  %v910 = vunpack.c.h.b16 %v150
  %v911 = vunpack.c.l.b16 %v151
  %v912 = vunpack.c.h.b16 %v151
  %v913 = vunpack.c.l.b16 %v152
  %v914 = vunpack.c.h.b16 %v152
  %v915 = vunpack.c.l.b16 %v153
  %v916 = vunpack.c.h.b16 %v153
  %v917 = vunpack.c.l.b16 %v154
  %v918 = vunpack.c.h.b16 %v154
  %v919 = vunpack.c.l.b16 %v155
  %v920 = vunpack.c.h.b16 %v155
  %v921 = vunpack.c.l.b16 %v156
  %v922 = vunpack.c.h.b16 %v156
  %v923 = vunpack.c.l.b16 %v157
  %v924 = vunpack.c.h.b16 %v157
  %v925 = vunpack.c.l.b16 %v158
  %v926 = vunpack.c.h.b16 %v158
  %v927 = vunpack.c.l.b16 %v159
  %v928 = vunpack.c.h.b16 %v159
  %v929 = vunpack.c.l.b16 %v160
  %v930 = vunpack.c.h.b16 %v160
  %v931 = vunpack.c.l.b16 %v161
  %v932 = vunpack.c.h.b16 %v161
  %v933 = vunpack.c.l.b16 %v162
  %v934 = vunpack.c.h.b16 %v162
  %v935 = vunpack.c.l.b16 %v163
  %v936 = vunpack.c.h.b16 %v163
  %v937 = vunpack.c.l.b16 %v164
  %v938 = vunpack.c.h.b16 %v164
  %v939 = vunpack.c.l.b16 %v165
  %v940 = vunpack.c.h.b16 %v165
  %v941 = vunpack.c.l.b16 %v166
  %v942 = vunpack.c.h.b16 %v166
  %v943 = vunpack.c.l.b16 %v167
  %v944 = vunpack.c.h.b16 %v167
  %v945 = vunpack.c.l.b16 %v168
  %v946 = vunpack.c.h.b16 %v168
  %v947 = vunpack.c.l.b16 %v169
  %v948 = vunpack.c.h.b16 %v169
  %v949 = vunpack.c.l.b16 %v170
  %v950 = vunpack.c.h.b16 %v170
  %v951 = vunpack.c.l.b16 %v171
  %v952 = vunpack.c.h.b16 %v171
  %v953 = vunpack.c.l.b16 %v172
  %v954 = vunpack.c.h.b16 %v172
  %v955 = vunpack.c.l.b16 %v173
  %v956 = vunpack.c.h.b16 %v173
  %v957 = vunpack.c.l.b16 %v174
  %v958 = vunpack.c.h.b16 %v174
  %v959 = vunpack.c.l.b16 %v175
  %v960 = vunpack.c.h.b16 %v175
  %v961 = vunpack.c.l.b16 %v176
  %v962 = vunpack.c.h.b16 %v176
  %v963 = vunpack.c.l.b16 %v177
  %v964 = vunpack.c.h.b16 %v177
  %v965 = vunpack.c.l.b16 %v178
  %v966 = vunpack.c.h.b16 %v178
  %v967 = vunpack.c.l.b16 %v179
  %v968 = vunpack.c.h.b16 %v179
  %v969 = vunpack.c.l.b16 %v180
  %v970 = vunpack.c.h.b16 %v180
  %v971 = vunpack.c.l.b16 %v181
  %v972 = vunpack.c.h.b16 %v181
  %v973 = vunpack.c.l.b16 %v182
  %v974 = vunpack.c.h.b16 %v182
  %v975 = vunpack.c.l.b16 %v183
  %v976 = vunpack.c.h.b16 %v183
  %v977 = vunpack.c.l.b16 %v184
  %v978 = vunpack.c.h.b16 %v184
  %v979 = vunpack.c.l.b16 %v185
  %v980 = vunpack.c.h.b16 %v185
  %v981 = vunpack.c.l.b16 %v186
  %v982 = vunpack.c.h.b16 %v186
  %v983 = vunpack.c.l.b16 %v187
  %v984 = vunpack.c.h.b16 %v187
  %v985 = vunpack.c.l.b16 %v188
  %v986 = vunpack.c.h.b16 %v188
  %v987 = vunpack.c.l.b16 %v189
  %v988 = vunpack.c.h.b16 %v189
  %v989 = vunpack.c.l.b16 %v190
  %v990 = vunpack.c.h.b16 %v190
  %v991 = vunpack.c.l.b16 %v191
  %v992 = vunpack.c.h.b16 %v191
  %v993 = vunpack.c.l.b16 %v192
  %v994 = vunpack.c.h.b16 %v192
  %v995 = vunpack.c.l.b16 %v193
  %v996 = vunpack.c.h.b16 %v193
  %v997 = vunpack.c.l.b16 %v194
  %v998 = vunpack.c.h.b16 %v194
  %v999 = vunpack.c.l.b16 %v195
  %v1000 = vunpack.c.h.b16 %v195
  %v1001 = vunpack.c.l.b16 %v196
  %v1002 = vunpack.c.h.b16 %v196
  %v1003 = vunpack.c.l.b16 %v197
  %v1004 = vunpack.c.h.b16 %v197
  %v1005 = vunpack.c.l.b16 %v198
  %v1006 = vunpack.c.h.b16 %v198
  %v1007 = vunpack.c.l.b16 %v199
  %v1008 = vunpack.c.h.b16 %v199
  %v1009 = vunpack.c.l.b16 %v200
  %v1010 = vunpack.c.h.b16 %v200
  %v1011 = vunpack.c.l.b16 %v201
  %v1012 = vunpack.c.h.b16 %v201
  %v1013 = vunpack.c.l.b16 %v202
  %v1014 = vunpack.c.h.b16 %v202
  %v1015 = vunpack.c.l.b16 %v203
  %v1016 = vunpack.c.h.b16 %v203
  %v1017 = vunpack.c.l.b16 %v204
  %v1018 = vunpack.c.h.b16 %v204
  %v1019 = vunpack.c.l.b16 %v205
  %v1020 = vunpack.c.h.b16 %v205
  %v1021 = vunpack.c.l.b16 %v206
  %v1022 = vunpack.c.h.b16 %v206
  %v1023 = vunpack.c.l.b16 %v207
  %v1024 = vunpack.c.h.b16 %v207
  %v1025 = vunpack.c.l.b16 %v208
  %v1026 = vunpack.c.h.b16 %v208
  %v1027 = vunpack.c.l.b16 %v209
  %v1028 = vunpack.c.h.b16 %v209
  %v1029 = vunpack.c.l.b16 %v210
  %v1030 = vunpack.c.h.b16 %v210
  %v1031 = vunpack.c.l.b16 %v211
  %v1032 = vunpack.c.h.b16 %v211
  %v1033 = vunpack.c.l.b16 %v212
  %v1034 = vunpack.c.h.b16 %v212
  %v1035 = vunpack.c.l.b16 %v213
  %v1036 = vunpack.c.h.b16 %v213
  %v1037 = vunpack.c.l.b16 %v214
  %v1038 = vunpack.c.h.b16 %v214
  %v1039 = vunpack.c.l.b16 %v215
  %v1040 = vunpack.c.h.b16 %v215
  %v1041 = vunpack.c.l.b16 %v216
  %v1042 = vunpack.c.h.b16 %v216
  %v1043 = vunpack.c.l.b16 %v217
  %v1044 = vunpack.c.h.b16 %v217
  %v1045 = vunpack.c.l.b16 %v218
  %v1046 = vunpack.c.h.b16 %v218
  %v1047 = vunpack.c.l.b16 %v219
  %v1048 = vunpack.c.h.b16 %v219
  %v1049 = vunpack.c.l.b16 %v220
  %v1050 = vunpack.c.h.b16 %v220
  %v1051 = vunpack.c.l.b16 %v221
  %v1052 = vunpack.c.h.b16 %v221
  %v1053 = vunpack.c.l.b16 %v222
  %v1054 = vunpack.c.h.b16 %v222
  %v1055 = vunpack.c.l.b16 %v223
  %v1056 = vunpack.c.h.b16 %v223
  %v1057 = vunpack.c.l.b16 %v224
  %v1058 = vunpack.c.h.b16 %v224
  %v1059 = vunpack.c.l.b16 %v225
  %v1060 = vunpack.c.h.b16 %v225
  %v1061 = vunpack.c.l.b16 %v226
  %v1062 = vunpack.c.h.b16 %v226
  %v1063 = vunpack.c.l.b16 %v227
  %v1064 = vunpack.c.h.b16 %v227
  %v1065 = vunpack.c.l.b16 %v228
  %v1066 = vunpack.c.h.b16 %v228
  %v1067 = vunpack.c.l.b16 %v229
  %v1068 = vunpack.c.h.b16 %v229
  %v1069 = vunpack.c.l.b16 %v230
  %v1070 = vunpack.c.h.b16 %v230
  %v1071 = vunpack.c.l.b16 %v231
  %v1072 = vunpack.c.h.b16 %v231
  %v1073 = vunpack.c.l.b16 %v232
  %v1074 = vunpack.c.h.b16 %v232
  %v1075 = vunpack.c.l.b16 %v233
  %v1076 = vunpack.c.h.b16 %v233
  %v1077 = vunpack.c.l.b16 %v234
  %v1078 = vunpack.c.h.b16 %v234
  %v1079 = vunpack.c.l.b16 %v235
  %v1080 = vunpack.c.h.b16 %v235
  %v1081 = vunpack.c.l.b16 %v236
  %v1082 = vunpack.c.h.b16 %v236
  %v1083 = vunpack.c.l.b16 %v237
  %v1084 = vunpack.c.h.b16 %v237
  %v1085 = vunpack.c.l.b16 %v238
  %v1086 = vunpack.c.h.b16 %v238
  %v1087 = vunpack.c.l.b16 %v239
  %v1088 = vunpack.c.h.b16 %v239
  %v1089 = vunpack.c.l.b16 %v240
  %v1090 = vunpack.c.h.b16 %v240
  %v1091 = vunpack.c.l.b16 %v241
  %v1092 = vunpack.c.h.b16 %v241
  %v1093 = vunpack.c.l.b16 %v242
  %v1094 = vunpack.c.h.b16 %v242
  %v1095 = vunpack.c.l.b16 %v243
  %v1096 = vunpack.c.h.b16 %v243
  %v1097 = vunpack.c.l.b16 %v244
  %v1098 = vunpack.c.h.b16 %v244
  %v1099 = vunpack.c.l.b16 %v245
  %v1100 = vunpack.c.h.b16 %v245
  %v1101 = vunpack.c.l.b16 %v246
  %v1102 = vunpack.c.h.b16 %v246
  %v1103 = vunpack.c.l.b16 %v247
  %v1104 = vunpack.c.h.b16 %v247
  %v1105 = vunpack.c.l.b16 %v248
  %v1106 = vunpack.c.h.b16 %v248
  %v1107 = vunpack.c.l.b16 %v249
  %v1108 = vunpack.c.h.b16 %v249
  %v1109 = vunpack.c.l.b16 %v250
  %v1110 = vunpack.c.h.b16 %v250
  %v1111 = vunpack.c.l.b16 %v251
  %v1112 = vunpack.c.h.b16 %v251
  %v1113 = vunpack.c.l.b16 %v252
  %v1114 = vunpack.c.h.b16 %v252
  %v1115 = vunpack.c.l.b16 %v253
  %v1116 = vunpack.c.h.b16 %v253
  %v1117 = vunpack.c.l.b16 %v254
  %v1118 = vunpack.c.h.b16 %v254
  %v1119 = vunpack.c.l.b16 %v255
  %v1120 = vunpack.c.h.b16 %v255
  %v1121 = vunpack.c.l.b16 %v256
  %v1122 = vunpack.c.h.b16 %v256
  %v1123 = vunpack.c.l.b16 %v257
  %v1124 = vunpack.c.h.b16 %v257
  %v1125 = vunpack.c.l.b16 %v258
  %v1126 = vunpack.c.h.b16 %v258
  %v1127 = vunpack.c.l.b16 %v259
  %v1128 = vunpack.c.h.b16 %v259
  %v1129 = vunpack.c.l.b16 %v260
  %v1130 = vunpack.c.h.b16 %v260
  %v1131 = vunpack.c.l.b16 %v261
  %v1132 = vunpack.c.h.b16 %v261
  %v1133 = vunpack.c.l.b16 %v262
  %v1134 = vunpack.c.h.b16 %v262
  %v1135 = vunpack.c.l.b16 %v263
  %v1136 = vunpack.c.h.b16 %v263
  %v1137 = vunpack.c.l.b16 %v264
  %v1138 = vunpack.c.h.b16 %v264
  %v1139 = vunpack.c.l.b16 %v265
  %v1140 = vunpack.c.h.b16 %v265
  %v1141 = vunpack.c.l.b16 %v266
  %v1142 = vunpack.c.h.b16 %v266
  %v1143 = vunpack.c.l.b16 %v267
  %v1144 = vunpack.c.h.b16 %v267
  %v1145 = vunpack.c.l.b16 %v268
  %v1146 = vunpack.c.h.b16 %v268
  %v1147 = vunpack.c.l.b16 %v269
  %v1148 = vunpack.c.h.b16 %v269
  %v1149 = vunpack.c.l.b16 %v270
  %v1150 = vunpack.c.h.b16 %v270
  %v1151 = vunpack.c.l.b16 %v271
  %v1152 = vunpack.c.h.b16 %v271
  %v1153 = vunpack.c.l.b16 %v272
  %v1154 = vunpack.c.h.b16 %v272
  %v1155 = vunpack.c.l.b16 %v273
  %v1156 = vunpack.c.h.b16 %v273
  %v1157 = vunpack.c.l.b16 %v274
  %v1158 = vunpack.c.h.b16 %v274
  %v1159 = vunpack.c.l.b16 %v275
  %v1160 = vunpack.c.h.b16 %v275
  %v1161 = vunpack.c.l.b16 %v276
  %v1162 = vunpack.c.h.b16 %v276
  %v1163 = vunpack.c.l.b16 %v277
  %v1164 = vunpack.c.h.b16 %v277
  %v1165 = vunpack.c.l.b16 %v278
  %v1166 = vunpack.c.h.b16 %v278
  %v1167 = vunpack.c.l.b16 %v279
  %v1168 = vunpack.c.h.b16 %v279
  %v1169 = vunpack.c.l.b16 %v280
  %v1170 = vunpack.c.h.b16 %v280
  %v1171 = vunpack.c.l.b16 %v281
  %v1172 = vunpack.c.h.b16 %v281
  %v1173 = vunpack.c.l.b16 %v282
  %v1174 = vunpack.c.h.b16 %v282
  %v1175 = vunpack.c.l.b16 %v283
  %v1176 = vunpack.c.h.b16 %v283
  %v1177 = vunpack.c.l.b16 %v284
  %v1178 = vunpack.c.h.b16 %v284
  %v1179 = vunpack.c.l.b16 %v285
  %v1180 = vunpack.c.h.b16 %v285
  %v1181 = vunpack.c.l.b16 %v286
  %v1182 = vunpack.c.h.b16 %v286
  %v1183 = vunpack.c.l.b16 %v287
  %v1184 = vunpack.c.h.b16 %v287
  %v1185 = vunpack.c.l.b16 %v288
  %v1186 = vunpack.c.h.b16 %v288
  %v1187 = vunpack.c.l.b16 %v289
  %v1188 = vunpack.c.h.b16 %v289
  %v1189 = vunpack.c.l.b16 %v290
  %v1190 = vunpack.c.h.b16 %v290
  %v1191 = vunpack.c.l.b16 %v291
  %v1192 = vunpack.c.h.b16 %v291
  %v1193 = vunpack.c.l.b16 %v292
  %v1194 = vunpack.c.h.b16 %v292
  %v1195 = vunpack.c.l.b16 %v293
  %v1196 = vunpack.c.h.b16 %v293
  %v1197 = vunpack.c.l.b16 %v294
  %v1198 = vunpack.c.h.b16 %v294
  %v1199 = vunpack.c.l.b16 %v295
  %v1200 = vunpack.c.h.b16 %v295
  %v1201 = vunpack.c.l.b16 %v296
  %v1202 = vunpack.c.h.b16 %v296
  %v1203 = vunpack.c.l.b16 %v297
  %v1204 = vunpack.c.h.b16 %v297
  %v1205 = vunpack.c.l.b16 %v298
  %v1206 = vunpack.c.h.b16 %v298
  %v1207 = vunpack.c.l.b16 %v299
  %v1208 = vunpack.c.h.b16 %v299
  %v1209 = vunpack.c.l.b16 %v300
  %v1210 = vunpack.c.h.b16 %v300
  %v1211 = vunpack.c.l.b16 %v301
  %v1212 = vunpack.c.h.b16 %v301
  %v1213 = vunpack.c.l.b16 %v302
  %v1214 = vunpack.c.h.b16 %v302
  %v1215 = vunpack.c.l.b16 %v303
  %v1216 = vunpack.c.h.b16 %v303
  %v1217 = vunpack.c.l.b16 %v304
  %v1218 = vunpack.c.h.b16 %v304
  %v1219 = vunpack.c.l.b16 %v305
  %v1220 = vunpack.c.h.b16 %v305
  %v1221 = vunpack.c.l.b16 %v306
  %v1222 = vunpack.c.h.b16 %v306
  %v1223 = vunpack.c.l.b16 %v307
  %v1224 = vunpack.c.h.b16 %v307
  %v1225 = vunpack.c.l.b16 %v308
  %v1226 = vunpack.c.h.b16 %v308
  %v1227 = vunpack.c.l.b16 %v309
  %v1228 = vunpack.c.h.b16 %v309
  %v1229 = vunpack.c.l.b16 %v310
  %v1230 = vunpack.c.h.b16 %v310
  %v1231 = vunpack.c.l.b16 %v311
  %v1232 = vunpack.c.h.b16 %v311
  %v1233 = vunpack.c.l.b16 %v312
  %v1234 = vunpack.c.h.b16 %v312
  %v1235 = vunpack.c.l.b16 %v313
  %v1236 = vunpack.c.h.b16 %v313
  %v1237 = vunpack.c.l.b16 %v314
  %v1238 = vunpack.c.h.b16 %v314
  %v1239 = vunpack.c.l.b16 %v315
  %v1240 = vunpack.c.h.b16 %v315
  %v1241 = vunpack.c.l.b16 %v316
  %v1242 = vunpack.c.h.b16 %v316
  %v1243 = vunpack.c.l.b16 %v317
  %v1244 = vunpack.c.h.b16 %v317
  %v1245 = vunpack.c.l.b16 %v318
  %v1246 = vunpack.c.h.b16 %v318
  %v1247 = vpack.c.b16 %v737, %v735
  %v1248 = vpack.c.b16 %v738, %v736
  %v1249 = vpack.c.b16 %v741, %v739
  %v1250 = vpack.c.b16 %v742, %v740
  %v1251 = vpack.c.b16 %v745, %v743
  %v1252 = vpack.c.b16 %v746, %v744
  %v1253 = vpack.c.b16 %v749, %v747
  %v1254 = vpack.c.b16 %v750, %v748
  %v1255 = vpack.c.b16 %v753, %v751
  %v1256 = vpack.c.b16 %v754, %v752
  %v1257 = vpack.c.b16 %v757, %v755
  %v1258 = vpack.c.b16 %v758, %v756
  %v1259 = vpack.c.b16 %v761, %v759
  %v1260 = vpack.c.b16 %v762, %v760
  %v1261 = vpack.c.b16 %v765, %v763
  %v1262 = vpack.c.b16 %v766, %v764
  %v1263 = vpack.c.b16 %v769, %v767
  %v1264 = vpack.c.b16 %v770, %v768
  %v1265 = vpack.c.b16 %v773, %v771
  %v1266 = vpack.c.b16 %v774, %v772
  %v1267 = vpack.c.b16 %v777, %v775
  %v1268 = vpack.c.b16 %v778, %v776
  %v1269 = vpack.c.b16 %v781, %v779
  %v1270 = vpack.c.b16 %v782, %v780
  %v1271 = vpack.c.b16 %v785, %v783
  %v1272 = vpack.c.b16 %v786, %v784
  %v1273 = vpack.c.b16 %v789, %v787
  %v1274 = vpack.c.b16 %v790, %v788
  %v1275 = vpack.c.b16 %v793, %v791
  %v1276 = vpack.c.b16 %v794, %v792
  %v1277 = vpack.c.b16 %v797, %v795
  %v1278 = vpack.c.b16 %v798, %v796
  %v1279 = vpack.c.b16 %v801, %v799
  %v1280 = vpack.c.b16 %v802, %v800
  %v1281 = vpack.c.b16 %v805, %v803
  %v1282 = vpack.c.b16 %v806, %v804
  %v1283 = vpack.c.b16 %v809, %v807
  %v1284 = vpack.c.b16 %v810, %v808
  %v1285 = vpack.c.b16 %v813, %v811
  %v1286 = vpack.c.b16 %v814, %v812
  %v1287 = vpack.c.b16 %v817, %v815
  %v1288 = vpack.c.b16 %v818, %v816
  %v1289 = vpack.c.b16 %v821, %v819
  %v1290 = vpack.c.b16 %v822, %v820
  %v1291 = vpack.c.b16 %v825, %v823
  %v1292 = vpack.c.b16 %v826, %v824
  %v1293 = vpack.c.b16 %v829, %v827
  %v1294 = vpack.c.b16 %v830, %v828
  %v1295 = vpack.c.b16 %v833, %v831
  %v1296 = vpack.c.b16 %v834, %v832
  %v1297 = vpack.c.b16 %v837, %v835
  %v1298 = vpack.c.b16 %v838, %v836
  %v1299 = vpack.c.b16 %v841, %v839
  %v1300 = vpack.c.b16 %v842, %v840
  %v1301 = vpack.c.b16 %v845, %v843
  %v1302 = vpack.c.b16 %v846, %v844
  %v1303 = vpack.c.b16 %v849, %v847
  %v1304 = vpack.c.b16 %v850, %v848
  %v1305 = vpack.c.b16 %v853, %v851
  %v1306 = vpack.c.b16 %v854, %v852
  %v1307 = vpack.c.b16 %v857, %v855
  %v1308 = vpack.c.b16 %v858, %v856
  %v1309 = vpack.c.b16 %v861, %v859
  %v1310 = vpack.c.b16 %v862, %v860
  %v1311 = vpack.c.b16 %v865, %v863
  %v1312 = vpack.c.b16 %v866, %v864
  %v1313 = vpack.c.b16 %v869, %v867
  %v1314 = vpack.c.b16 %v870, %v868
  %v1315 = vpack.c.b16 %v873, %v871
  %v1316 = vpack.c.b16 %v874, %v872
  %v1317 = vpack.c.b16 %v877, %v875
  %v1318 = vpack.c.b16 %v878, %v876
  %v1319 = vpack.c.b16 %v881, %v879
  %v1320 = vpack.c.b16 %v882, %v880
  %v1321 = vpack.c.b16 %v885, %v883
  %v1322 = vpack.c.b16 %v886, %v884
  %v1323 = vpack.c.b16 %v889, %v887
  %v1324 = vpack.c.b16 %v890, %v888
  %v1325 = vpack.c.b16 %v893, %v891
  %v1326 = vpack.c.b16 %v894, %v892
  %v1327 = vpack.c.b16 %v897, %v895
  %v1328 = vpack.c.b16 %v898, %v896
  %v1329 = vpack.c.b16 %v901, %v899
  %v1330 = vpack.c.b16 %v902, %v900
  %v1331 = vpack.c.b16 %v905, %v903
  %v1332 = vpack.c.b16 %v906, %v904
  %v1333 = vpack.c.b16 %v909, %v907
  %v1334 = vpack.c.b16 %v910, %v908
  %v1335 = vpack.c.b16 %v913, %v911
  %v1336 = vpack.c.b16 %v914, %v912
  %v1337 = vpack.c.b16 %v917, %v915
  %v1338 = vpack.c.b16 %v918, %v916
  %v1339 = vpack.c.b16 %v921, %v919
  %v1340 = vpack.c.b16 %v922, %v920
  %v1341 = vpack.c.b16 %v925, %v923
  %v1342 = vpack.c.b16 %v926, %v924
  %v1343 = vpack.c.b16 %v929, %v927
  %v1344 = vpack.c.b16 %v930, %v928
  %v1345 = vpack.c.b16 %v933, %v931
  %v1346 = vpack.c.b16 %v934, %v932
  %v1347 = vpack.c.b16 %v937, %v935
  %v1348 = vpack.c.b16 %v938, %v936
  %v1349 = vpack.c.b16 %v941, %v939
  %v1350 = vpack.c.b16 %v942, %v940
  %v1351 = vpack.c.b16 %v945, %v943
  %v1352 = vpack.c.b16 %v946, %v944
  %v1353 = vpack.c.b16 %v949, %v947
  %v1354 = vpack.c.b16 %v950, %v948
  %v1355 = vpack.c.b16 %v953, %v951
  %v1356 = vpack.c.b16 %v954, %v952
  %v1357 = vpack.c.b16 %v957, %v955
  %v1358 = vpack.c.b16 %v958, %v956
  %v1359 = vpack.c.b16 %v961, %v959
  %v1360 = vpack.c.b16 %v962, %v960
  %v1361 = vpack.c.b16 %v965, %v963
  %v1362 = vpack.c.b16 %v966, %v964
  %v1363 = vpack.c.b16 %v969, %v967
  %v1364 = vpack.c.b16 %v970, %v968
  %v1365 = vpack.c.b16 %v973, %v971
  %v1366 = vpack.c.b16 %v974, %v972
  %v1367 = vpack.c.b16 %v977, %v975
  %v1368 = vpack.c.b16 %v978, %v976
  %v1369 = vpack.c.b16 %v981, %v979
  %v1370 = vpack.c.b16 %v982, %v980
  %v1371 = vpack.c.b16 %v985, %v983
  %v1372 = vpack.c.b16 %v986, %v984
  %v1373 = vpack.c.b16 %v989, %v987
  %v1374 = vpack.c.b16 %v990, %v988
  %v1375 = vpack.c.b16 %v993, %v991
  %v1376 = vpack.c.b16 %v994, %v992
  %v1377 = vpack.c.b16 %v997, %v995
  %v1378 = vpack.c.b16 %v998, %v996
  %v1379 = vpack.c.b16 %v1001, %v999
  %v1380 = vpack.c.b16 %v1002, %v1000
  %v1381 = vpack.c.b16 %v1005, %v1003
  %v1382 = vpack.c.b16 %v1006, %v1004
  %v1383 = vpack.c.b16 %v1009, %v1007
  %v1384 = vpack.c.b16 %v1010, %v1008
  %v1385 = vpack.c.b16 %v1013, %v1011
  %v1386 = vpack.c.b16 %v1014, %v1012
  %v1387 = vpack.c.b16 %v1017, %v1015
  %v1388 = vpack.c.b16 %v1018, %v1016
  %v1389 = vpack.c.b16 %v1021, %v1019
  %v1390 = vpack.c.b16 %v1022, %v1020
  %v1391 = vpack.c.b16 %v1025, %v1023
  %v1392 = vpack.c.b16 %v1026, %v1024
  %v1393 = vpack.c.b16 %v1029, %v1027
  %v1394 = vpack.c.b16 %v1030, %v1028
  %v1395 = vpack.c.b16 %v1033, %v1031
  %v1396 = vpack.c.b16 %v1034, %v1032
  %v1397 = vpack.c.b16 %v1037, %v1035
  %v1398 = vpack.c.b16 %v1038, %v1036
  %v1399 = vpack.c.b16 %v1041, %v1039
  %v1400 = vpack.c.b16 %v1042, %v1040
  %v1401 = vpack.c.b16 %v1045, %v1043
  %v1402 = vpack.c.b16 %v1046, %v1044
  %v1403 = vpack.c.b16 %v1049, %v1047
  %v1404 = vpack.c.b16 %v1050, %v1048
  %v1405 = vpack.c.b16 %v1053, %v1051
  %v1406 = vpack.c.b16 %v1054, %v1052
  %v1407 = vpack.c.b16 %v1057, %v1055
  %v1408 = vpack.c.b16 %v1058, %v1056
  %v1409 = vpack.c.b16 %v1061, %v1059
  %v1410 = vpack.c.b16 %v1062, %v1060
  %v1411 = vpack.c.b16 %v1065, %v1063
  %v1412 = vpack.c.b16 %v1066, %v1064
  %v1413 = vpack.c.b16 %v1069, %v1067
  %v1414 = vpack.c.b16 %v1070, %v1068
  %v1415 = vpack.c.b16 %v1073, %v1071
  %v1416 = vpack.c.b16 %v1074, %v1072
  %v1417 = vpack.c.b16 %v1077, %v1075
  %v1418 = vpack.c.b16 %v1078, %v1076
  %v1419 = vpack.c.b16 %v1081, %v1079
  %v1420 = vpack.c.b16 %v1082, %v1080
  %v1421 = vpack.c.b16 %v1085, %v1083
  %v1422 = vpack.c.b16 %v1086, %v1084
  %v1423 = vpack.c.b16 %v1089, %v1087
  %v1424 = vpack.c.b16 %v1090, %v1088
  %v1425 = vpack.c.b16 %v1093, %v1091
  %v1426 = vpack.c.b16 %v1094, %v1092
  %v1427 = vpack.c.b16 %v1097, %v1095
  %v1428 = vpack.c.b16 %v1098, %v1096
  %v1429 = vpack.c.b16 %v1101, %v1099
  %v1430 = vpack.c.b16 %v1102, %v1100
  %v1431 = vpack.c.b16 %v1105, %v1103
  %v1432 = vpack.c.b16 %v1106, %v1104
  %v1433 = vpack.c.b16 %v1109, %v1107
  %v1434 = vpack.c.b16 %v1110, %v1108
  %v1435 = vpack.c.b16 %v1113, %v1111
  %v1436 = vpack.c.b16 %v1114, %v1112
  %v1437 = vpack.c.b16 %v1117, %v1115
  %v1438 = vpack.c.b16 %v1118, %v1116
  %v1439 = vpack.c.b16 %v1121, %v1119
  %v1440 = vpack.c.b16 %v1122, %v1120
  %v1441 = vpack.c.b16 %v1125, %v1123
  %v1442 = vpack.c.b16 %v1126, %v1124
  %v1443 = vpack.c.b16 %v1129, %v1127
  %v1444 = vpack.c.b16 %v1130, %v1128
  %v1445 = vpack.c.b16 %v1133, %v1131
  %v1446 = vpack.c.b16 %v1134, %v1132
  %v1447 = vpack.c.b16 %v1137, %v1135
  %v1448 = vpack.c.b16 %v1138, %v1136
  %v1449 = vpack.c.b16 %v1141, %v1139
  %v1450 = vpack.c.b16 %v1142, %v1140
  %v1451 = vpack.c.b16 %v1145, %v1143
  %v1452 = vpack.c.b16 %v1146, %v1144
  %v1453 = vpack.c.b16 %v1149, %v1147
  %v1454 = vpack.c.b16 %v1150, %v1148
  %v1455 = vpack.c.b16 %v1153, %v1151
  %v1456 = vpack.c.b16 %v1154, %v1152
  %v1457 = vpack.c.b16 %v1157, %v1155
  %v1458 = vpack.c.b16 %v1158, %v1156
  %v1459 = vpack.c.b16 %v1161, %v1159
  %v1460 = vpack.c.b16 %v1162, %v1160
  %v1461 = vpack.c.b16 %v1165, %v1163
  %v1462 = vpack.c.b16 %v1166, %v1164
  %v1463 = vpack.c.b16 %v1169, %v1167
  %v1464 = vpack.c.b16 %v1170, %v1168
  %v1465 = vpack.c.b16 %v1173, %v1171
  %v1466 = vpack.c.b16 %v1174, %v1172
  %v1467 = vpack.c.b16 %v1177, %v1175
  %v1468 = vpack.c.b16 %v1178, %v1176
  %v1469 = vpack.c.b16 %v1181, %v1179
  %v1470 = vpack.c.b16 %v1182, %v1180
  %v1471 = vpack.c.b16 %v1185, %v1183
  %v1472 = vpack.c.b16 %v1186, %v1184
  %v1473 = vpack.c.b16 %v1189, %v1187
  %v1474 = vpack.c.b16 %v1190, %v1188
  %v1475 = vpack.c.b16 %v1193, %v1191
  %v1476 = vpack.c.b16 %v1194, %v1192
  %v1477 = vpack.c.b16 %v1197, %v1195
  %v1478 = vpack.c.b16 %v1198, %v1196
  %v1479 = vpack.c.b16 %v1201, %v1199
  %v1480 = vpack.c.b16 %v1202, %v1200
  %v1481 = vpack.c.b16 %v1205, %v1203
  %v1482 = vpack.c.b16 %v1206, %v1204
  %v1483 = vpack.c.b16 %v1209, %v1207
  %v1484 = vpack.c.b16 %v1210, %v1208
  %v1485 = vpack.c.b16 %v1213, %v1211
  %v1486 = vpack.c.b16 %v1214, %v1212
  %v1487 = vpack.c.b16 %v1217, %v1215
  %v1488 = vpack.c.b16 %v1218, %v1216
  %v1489 = vpack.c.b16 %v1221, %v1219
  %v1490 = vpack.c.b16 %v1222, %v1220
  %v1491 = vpack.c.b16 %v1225, %v1223
  %v1492 = vpack.c.b16 %v1226, %v1224
  %v1493 = vpack.c.b16 %v1229, %v1227
  %v1494 = vpack.c.b16 %v1230, %v1228
  %v1495 = vpack.c.b16 %v1233, %v1231
  %v1496 = vpack.c.b16 %v1234, %v1232
  %v1497 = vpack.c.b16 %v1237, %v1235
  %v1498 = vpack.c.b16 %v1238, %v1236
  %v1499 = vpack.c.b16 %v1241, %v1239
  %v1500 = vpack.c.b16 %v1242, %v1240
  %v1501 = vpack.c.b16 %v1245, %v1243
  %v1502 = vpack.c.b16 %v1246, %v1244
  %1759 = vmatprep.subr.bf16.mxu0 %v1248
  %1760 = vmatpush1.bf16.msra.mxu0 %v1247
  %1761 = vmatprep.subr.bf16.mxu0 %v1250
  %1762 = vmatpush1.bf16.msra.mxu0 %v1249
  %1763 = vmatprep.subr.bf16.mxu0 %v1252
  %1764 = vmatpush1.bf16.msra.mxu0 %v1251
  %1765 = vmatprep.subr.bf16.mxu0 %v1254
  %1766 = vmatpush1.bf16.msra.mxu0 %v1253
  %1767 = vmatprep.subr.bf16.mxu0 %v1256
  %1768 = vmatpush1.bf16.msra.mxu0 %v1255
  %1769 = vmatprep.subr.bf16.mxu0 %v1258
  %1770 = vmatpush1.bf16.msra.mxu0 %v1257
  %1771 = vmatprep.subr.bf16.mxu0 %v1260
  %1772 = vmatpush1.bf16.msra.mxu0 %v1259
  %1773 = vmatprep.subr.bf16.mxu0 %v1262
  %1774 = vmatpush1.bf16.msra.mxu0 %v1261
  %1775 = vmatprep.subr.bf16.mxu0 %v1264
  %1776 = vmatpush1.bf16.msra.mxu0 %v1263
  %1777 = vmatprep.subr.bf16.mxu0 %v1266
  %1778 = vmatpush1.bf16.msra.mxu0 %v1265
  %1779 = vmatprep.subr.bf16.mxu0 %v1268
  %1780 = vmatpush1.bf16.msra.mxu0 %v1267
  %1781 = vmatprep.subr.bf16.mxu0 %v1270
  %1782 = vmatpush1.bf16.msra.mxu0 %v1269
  %1783 = vmatprep.subr.bf16.mxu0 %v1272
  %1784 = vmatpush1.bf16.msra.mxu0 %v1271
  %1785 = vmatprep.subr.bf16.mxu0 %v1274
  %1786 = vmatpush1.bf16.msra.mxu0 %v1273
  %1787 = vmatprep.subr.bf16.mxu0 %v1276
  %1788 = vmatpush1.bf16.msra.mxu0 %v1275
  %1789 = vmatprep.subr.bf16.mxu0 %v1278
  %1790 = vmatpush1.bf16.msra.mxu0 %v1277
  %1791 = vmatprep.mubr.bf16.mxu0 %v416
  %1792 = vmatmul.mubr.bf16.gmra.mrb[0].mxu0 %v415
  %v1793 = vpop.f32.mrb[0].mxu0
  %v1794 = vadd.f32 0.0, %v1793
  %v1795 = vpop.f32.mrb[0].mxu0
  %v1796 = vadd.f32 0.0, %v1795
  %v1797 = vpop.f32.mrb[0].mxu0
  %v1798 = vadd.f32 0.0, %v1797
  %v1799 = vpop.f32.mrb[0].mxu0
  %v1800 = vadd.f32 0.0, %v1799
  %1801 = vmatprep.mubr.bf16.mxu0 %v432
  %1802 = vmatmul.mubr.bf16.gmra.mrb[0].mxu0 %v431
  %v1803 = vpop.f32.mrb[0].mxu0
  %v1804 = vadd.f32 0.0, %v1803
  %v1805 = vpop.f32.mrb[0].mxu0
  %v1806 = vadd.f32 0.0, %v1805
  %v1807 = vpop.f32.mrb[0].mxu0
  %v1808 = vadd.f32 0.0, %v1807
  %v1809 = vpop.f32.mrb[0].mxu0
  %v1810 = vadd.f32 0.0, %v1809
  %1811 = vdwg.mxu0
  %1812 = vmatprep.subr.bf16.mxu0 %v1280
  %1813 = vmatpush1.bf16.msra.mxu0 %v1279
  %1814 = vmatprep.subr.bf16.mxu0 %v1282
  %1815 = vmatpush1.bf16.msra.mxu0 %v1281
  %1816 = vmatprep.subr.bf16.mxu0 %v1284
  %1817 = vmatpush1.bf16.msra.mxu0 %v1283
  %1818 = vmatprep.subr.bf16.mxu0 %v1286
  %1819 = vmatpush1.bf16.msra.mxu0 %v1285
  %1820 = vmatprep.subr.bf16.mxu0 %v1288
  %1821 = vmatpush1.bf16.msra.mxu0 %v1287
  %1822 = vmatprep.subr.bf16.mxu0 %v1290
  %1823 = vmatpush1.bf16.msra.mxu0 %v1289
  %1824 = vmatprep.subr.bf16.mxu0 %v1292
  %1825 = vmatpush1.bf16.msra.mxu0 %v1291
  %1826 = vmatprep.subr.bf16.mxu0 %v1294
  %1827 = vmatpush1.bf16.msra.mxu0 %v1293
  %1828 = vmatprep.subr.bf16.mxu0 %v1296
  %1829 = vmatpush1.bf16.msra.mxu0 %v1295
  %1830 = vmatprep.subr.bf16.mxu0 %v1298
  %1831 = vmatpush1.bf16.msra.mxu0 %v1297
  %1832 = vmatprep.subr.bf16.mxu0 %v1300
  %1833 = vmatpush1.bf16.msra.mxu0 %v1299
  %1834 = vmatprep.subr.bf16.mxu0 %v1302
  %1835 = vmatpush1.bf16.msra.mxu0 %v1301
  %1836 = vmatprep.subr.bf16.mxu0 %v1304
  %1837 = vmatpush1.bf16.msra.mxu0 %v1303
  %1838 = vmatprep.subr.bf16.mxu0 %v1306
  %1839 = vmatpush1.bf16.msra.mxu0 %v1305
  %1840 = vmatprep.subr.bf16.mxu0 %v1308
  %1841 = vmatpush1.bf16.msra.mxu0 %v1307
  %1842 = vmatprep.subr.bf16.mxu0 %v1310
  %1843 = vmatpush1.bf16.msra.mxu0 %v1309
  %1844 = vmatprep.mubr.bf16.mxu0 %v418
  %1845 = vmatmul.mubr.bf16.gmra.mrb[0].mxu0 %v417
  %v1846 = vpop.f32.mrb[0].mxu0
  %v1847 = vadd.f32 %v1794, %v1846
  %v1848 = vpop.f32.mrb[0].mxu0
  %v1849 = vadd.f32 %v1796, %v1848
  %v1850 = vpop.f32.mrb[0].mxu0
  %v1851 = vadd.f32 %v1798, %v1850
  %v1852 = vpop.f32.mrb[0].mxu0
  %v1853 = vadd.f32 %v1800, %v1852
  %1854 = vmatprep.mubr.bf16.mxu0 %v434
  %1855 = vmatmul.mubr.bf16.gmra.mrb[0].mxu0 %v433
  %v1856 = vpop.f32.mrb[0].mxu0
  %v1857 = vadd.f32 %v1804, %v1856
  %v1858 = vpop.f32.mrb[0].mxu0
  %v1859 = vadd.f32 %v1806, %v1858
  %v1860 = vpop.f32.mrb[0].mxu0
  %v1861 = vadd.f32 %v1808, %v1860
  %v1862 = vpop.f32.mrb[0].mxu0
  %v1863 = vadd.f32 %v1810, %v1862
  %1864 = vdwg.mxu0
  %1865 = vmatprep.subr.bf16.mxu0 %v1312
  %1866 = vmatpush1.bf16.msra.mxu0 %v1311
  %1867 = vmatprep.subr.bf16.mxu0 %v1314
  %1868 = vmatpush1.bf16.msra.mxu0 %v1313
  %1869 = vmatprep.subr.bf16.mxu0 %v1316
  %1870 = vmatpush1.bf16.msra.mxu0 %v1315
  %1871 = vmatprep.subr.bf16.mxu0 %v1318
  %1872 = vmatpush1.bf16.msra.mxu0 %v1317
  %1873 = vmatprep.subr.bf16.mxu0 %v1320
  %1874 = vmatpush1.bf16.msra.mxu0 %v1319
  %1875 = vmatprep.subr.bf16.mxu0 %v1322
  %1876 = vmatpush1.bf16.msra.mxu0 %v1321
  %1877 = vmatprep.subr.bf16.mxu0 %v1324
  %1878 = vmatpush1.bf16.msra.mxu0 %v1323
  %1879 = vmatprep.subr.bf16.mxu0 %v1326
  %1880 = vmatpush1.bf16.msra.mxu0 %v1325
  %1881 = vmatprep.subr.bf16.mxu0 %v1328
  %1882 = vmatpush1.bf16.msra.mxu0 %v1327
  %1883 = vmatprep.subr.bf16.mxu0 %v1330
  %1884 = vmatpush1.bf16.msra.mxu0 %v1329
  %1885 = vmatprep.subr.bf16.mxu0 %v1332
  %1886 = vmatpush1.bf16.msra.mxu0 %v1331
  %1887 = vmatprep.subr.bf16.mxu0 %v1334
  %1888 = vmatpush1.bf16.msra.mxu0 %v1333
  %1889 = vmatprep.subr.bf16.mxu0 %v1336
  %1890 = vmatpush1.bf16.msra.mxu0 %v1335
  %1891 = vmatprep.subr.bf16.mxu0 %v1338
  %1892 = vmatpush1.bf16.msra.mxu0 %v1337
  %1893 = vmatprep.subr.bf16.mxu0 %v1340
  %1894 = vmatpush1.bf16.msra.mxu0 %v1339
  %1895 = vmatprep.subr.bf16.mxu0 %v1342
  %1896 = vmatpush1.bf16.msra.mxu0 %v1341
  %1897 = vmatprep.mubr.bf16.mxu0 %v420
  %1898 = vmatmul.mubr.bf16.gmra.mrb[0].mxu0 %v419
  %v1899 = vpop.f32.mrb[0].mxu0
  %v1900 = vadd.f32 %v1847, %v1899
  %v1901 = vpop.f32.mrb[0].mxu0
  %v1902 = vadd.f32 %v1849, %v1901
  %v1903 = vpop.f32.mrb[0].mxu0
  %v1904 = vadd.f32 %v1851, %v1903
  %v1905 = vpop.f32.mrb[0].mxu0
  %v1906 = vadd.f32 %v1853, %v1905
  %1907 = vmatprep.mubr.bf16.mxu0 %v436
  %1908 = vmatmul.mubr.bf16.gmra.mrb[0].mxu0 %v435
  %v1909 = vpop.f32.mrb[0].mxu0
  %v1910 = vadd.f32 %v1857, %v1909
  %v1911 = vpop.f32.mrb[0].mxu0
  %v1912 = vadd.f32 %v1859, %v1911
  %v1913 = vpop.f32.mrb[0].mxu0
  %v1914 = vadd.f32 %v1861, %v1913
  %v1915 = vpop.f32.mrb[0].mxu0
  %v1916 = vadd.f32 %v1863, %v1915
  %1917 = vdwg.mxu0
  %1918 = vmatprep.subr.bf16.mxu0 %v1344
  %1919 = vmatpush1.bf16.msra.mxu0 %v1343
  %1920 = vmatprep.subr.bf16.mxu0 %v1346
  %1921 = vmatpush1.bf16.msra.mxu0 %v1345
  %1922 = vmatprep.subr.bf16.mxu0 %v1348
  %1923 = vmatpush1.bf16.msra.mxu0 %v1347
  %1924 = vmatprep.subr.bf16.mxu0 %v1350
  %1925 = vmatpush1.bf16.msra.mxu0 %v1349
  %1926 = vmatprep.subr.bf16.mxu0 %v1352
  %1927 = vmatpush1.bf16.msra.mxu0 %v1351
  %1928 = vmatprep.subr.bf16.mxu0 %v1354
  %1929 = vmatpush1.bf16.msra.mxu0 %v1353
  %1930 = vmatprep.subr.bf16.mxu0 %v1356
  %1931 = vmatpush1.bf16.msra.mxu0 %v1355
  %1932 = vmatprep.subr.bf16.mxu0 %v1358
  %1933 = vmatpush1.bf16.msra.mxu0 %v1357
  %1934 = vmatprep.subr.bf16.mxu0 %v1360
  %1935 = vmatpush1.bf16.msra.mxu0 %v1359
  %1936 = vmatprep.subr.bf16.mxu0 %v1362
  %1937 = vmatpush1.bf16.msra.mxu0 %v1361
  %1938 = vmatprep.subr.bf16.mxu0 %v1364
  %1939 = vmatpush1.bf16.msra.mxu0 %v1363
  %1940 = vmatprep.subr.bf16.mxu0 %v1366
  %1941 = vmatpush1.bf16.msra.mxu0 %v1365
  %1942 = vmatprep.subr.bf16.mxu0 %v1368
  %1943 = vmatpush1.bf16.msra.mxu0 %v1367
  %1944 = vmatprep.subr.bf16.mxu0 %v1370
  %1945 = vmatpush1.bf16.msra.mxu0 %v1369
  %1946 = vmatprep.subr.bf16.mxu0 %v1372
  %1947 = vmatpush1.bf16.msra.mxu0 %v1371
  %1948 = vmatprep.subr.bf16.mxu0 %v1374
  %1949 = vmatpush1.bf16.msra.mxu0 %v1373
  %1950 = vmatprep.mubr.bf16.mxu0 %v422
  %1951 = vmatmul.mubr.bf16.gmra.mrb[0].mxu0 %v421
  %v1952 = vpop.f32.mrb[0].mxu0
  %v1953 = vadd.f32 %v1900, %v1952
  %v1954 = vpop.f32.mrb[0].mxu0
  %v1955 = vadd.f32 %v1902, %v1954
  %v1956 = vpop.f32.mrb[0].mxu0
  %v1957 = vadd.f32 %v1904, %v1956
  %v1958 = vpop.f32.mrb[0].mxu0
  %v1959 = vadd.f32 %v1906, %v1958
  %1960 = vmatprep.mubr.bf16.mxu0 %v438
  %1961 = vmatmul.mubr.bf16.gmra.mrb[0].mxu0 %v437
  %v1962 = vpop.f32.mrb[0].mxu0
  %v1963 = vadd.f32 %v1910, %v1962
  %v1964 = vpop.f32.mrb[0].mxu0
  %v1965 = vadd.f32 %v1912, %v1964
  %v1966 = vpop.f32.mrb[0].mxu0
  %v1967 = vadd.f32 %v1914, %v1966
  %v1968 = vpop.f32.mrb[0].mxu0
  %v1969 = vadd.f32 %v1916, %v1968
  %1970 = vdwg.mxu0
  %1971 = vmatprep.subr.bf16.mxu0 %v1376
  %1972 = vmatpush1.bf16.msra.mxu0 %v1375
  %1973 = vmatprep.subr.bf16.mxu0 %v1378
  %1974 = vmatpush1.bf16.msra.mxu0 %v1377
  %1975 = vmatprep.subr.bf16.mxu0 %v1380
  %1976 = vmatpush1.bf16.msra.mxu0 %v1379
  %1977 = vmatprep.subr.bf16.mxu0 %v1382
  %1978 = vmatpush1.bf16.msra.mxu0 %v1381
  %1979 = vmatprep.subr.bf16.mxu0 %v1384
  %1980 = vmatpush1.bf16.msra.mxu0 %v1383
  %1981 = vmatprep.subr.bf16.mxu0 %v1386
  %1982 = vmatpush1.bf16.msra.mxu0 %v1385
  %1983 = vmatprep.subr.bf16.mxu0 %v1388
  %1984 = vmatpush1.bf16.msra.mxu0 %v1387
  %1985 = vmatprep.subr.bf16.mxu0 %v1390
  %1986 = vmatpush1.bf16.msra.mxu0 %v1389
  %1987 = vmatprep.subr.bf16.mxu0 %v1392
  %1988 = vmatpush1.bf16.msra.mxu0 %v1391
  %1989 = vmatprep.subr.bf16.mxu0 %v1394
  %1990 = vmatpush1.bf16.msra.mxu0 %v1393
  %1991 = vmatprep.subr.bf16.mxu0 %v1396
  %1992 = vmatpush1.bf16.msra.mxu0 %v1395
  %1993 = vmatprep.subr.bf16.mxu0 %v1398
  %1994 = vmatpush1.bf16.msra.mxu0 %v1397
  %1995 = vmatprep.subr.bf16.mxu0 %v1400
  %1996 = vmatpush1.bf16.msra.mxu0 %v1399
  %1997 = vmatprep.subr.bf16.mxu0 %v1402
  %1998 = vmatpush1.bf16.msra.mxu0 %v1401
  %1999 = vmatprep.subr.bf16.mxu0 %v1404
  %2000 = vmatpush1.bf16.msra.mxu0 %v1403
  %2001 = vmatprep.subr.bf16.mxu0 %v1406
  %2002 = vmatpush1.bf16.msra.mxu0 %v1405
  %2003 = vmatprep.mubr.bf16.mxu0 %v424
  %2004 = vmatmul.mubr.bf16.gmra.mrb[0].mxu0 %v423
  %v2005 = vpop.f32.mrb[0].mxu0
  %v2006 = vadd.f32 %v1953, %v2005
  %v2007 = vpop.f32.mrb[0].mxu0
  %v2008 = vadd.f32 %v1955, %v2007
  %v2009 = vpop.f32.mrb[0].mxu0
  %v2010 = vadd.f32 %v1957, %v2009
  %v2011 = vpop.f32.mrb[0].mxu0
  %v2012 = vadd.f32 %v1959, %v2011
  %2013 = vmatprep.mubr.bf16.mxu0 %v440
  %2014 = vmatmul.mubr.bf16.gmra.mrb[0].mxu0 %v439
  %v2015 = vpop.f32.mrb[0].mxu0
  %v2016 = vadd.f32 %v1963, %v2015
  %v2017 = vpop.f32.mrb[0].mxu0
  %v2018 = vadd.f32 %v1965, %v2017
  %v2019 = vpop.f32.mrb[0].mxu0
  %v2020 = vadd.f32 %v1967, %v2019
  %v2021 = vpop.f32.mrb[0].mxu0
  %v2022 = vadd.f32 %v1969, %v2021
  %2023 = vdwg.mxu0
  %2024 = vmatprep.subr.bf16.mxu0 %v1408
  %2025 = vmatpush1.bf16.msra.mxu0 %v1407
  %2026 = vmatprep.subr.bf16.mxu0 %v1410
  %2027 = vmatpush1.bf16.msra.mxu0 %v1409
  %2028 = vmatprep.subr.bf16.mxu0 %v1412
  %2029 = vmatpush1.bf16.msra.mxu0 %v1411
  %2030 = vmatprep.subr.bf16.mxu0 %v1414
  %2031 = vmatpush1.bf16.msra.mxu0 %v1413
  %2032 = vmatprep.subr.bf16.mxu0 %v1416
  %2033 = vmatpush1.bf16.msra.mxu0 %v1415
  %2034 = vmatprep.subr.bf16.mxu0 %v1418
  %2035 = vmatpush1.bf16.msra.mxu0 %v1417
  %2036 = vmatprep.subr.bf16.mxu0 %v1420
  %2037 = vmatpush1.bf16.msra.mxu0 %v1419
  %2038 = vmatprep.subr.bf16.mxu0 %v1422
  %2039 = vmatpush1.bf16.msra.mxu0 %v1421
  %2040 = vmatprep.subr.bf16.mxu0 %v1424
  %2041 = vmatpush1.bf16.msra.mxu0 %v1423
  %2042 = vmatprep.subr.bf16.mxu0 %v1426
  %2043 = vmatpush1.bf16.msra.mxu0 %v1425
  %2044 = vmatprep.subr.bf16.mxu0 %v1428
  %2045 = vmatpush1.bf16.msra.mxu0 %v1427
  %2046 = vmatprep.subr.bf16.mxu0 %v1430
  %2047 = vmatpush1.bf16.msra.mxu0 %v1429
  %2048 = vmatprep.subr.bf16.mxu0 %v1432
  %2049 = vmatpush1.bf16.msra.mxu0 %v1431
  %2050 = vmatprep.subr.bf16.mxu0 %v1434
  %2051 = vmatpush1.bf16.msra.mxu0 %v1433
  %2052 = vmatprep.subr.bf16.mxu0 %v1436
  %2053 = vmatpush1.bf16.msra.mxu0 %v1435
  %2054 = vmatprep.subr.bf16.mxu0 %v1438
  %2055 = vmatpush1.bf16.msra.mxu0 %v1437
  %2056 = vmatprep.mubr.bf16.mxu0 %v426
  %2057 = vmatmul.mubr.bf16.gmra.mrb[0].mxu0 %v425
  %v2058 = vpop.f32.mrb[0].mxu0
  %v2059 = vadd.f32 %v2006, %v2058
  %v2060 = vpop.f32.mrb[0].mxu0
  %v2061 = vadd.f32 %v2008, %v2060
  %v2062 = vpop.f32.mrb[0].mxu0
  %v2063 = vadd.f32 %v2010, %v2062
  %v2064 = vpop.f32.mrb[0].mxu0
  %v2065 = vadd.f32 %v2012, %v2064
  %2066 = vmatprep.mubr.bf16.mxu0 %v442
  %2067 = vmatmul.mubr.bf16.gmra.mrb[0].mxu0 %v441
  %v2068 = vpop.f32.mrb[0].mxu0
  %v2069 = vadd.f32 %v2016, %v2068
  %v2070 = vpop.f32.mrb[0].mxu0
  %v2071 = vadd.f32 %v2018, %v2070
  %v2072 = vpop.f32.mrb[0].mxu0
  %v2073 = vadd.f32 %v2020, %v2072
  %v2074 = vpop.f32.mrb[0].mxu0
  %v2075 = vadd.f32 %v2022, %v2074
  %2076 = vdwg.mxu0
  %2077 = vmatprep.subr.bf16.mxu0 %v1440
  %2078 = vmatpush1.bf16.msra.mxu0 %v1439
  %2079 = vmatprep.subr.bf16.mxu0 %v1442
  %2080 = vmatpush1.bf16.msra.mxu0 %v1441
  %2081 = vmatprep.subr.bf16.mxu0 %v1444
  %2082 = vmatpush1.bf16.msra.mxu0 %v1443
  %2083 = vmatprep.subr.bf16.mxu0 %v1446
  %2084 = vmatpush1.bf16.msra.mxu0 %v1445
  %2085 = vmatprep.subr.bf16.mxu0 %v1448
  %2086 = vmatpush1.bf16.msra.mxu0 %v1447
  %2087 = vmatprep.subr.bf16.mxu0 %v1450
  %2088 = vmatpush1.bf16.msra.mxu0 %v1449
  %2089 = vmatprep.subr.bf16.mxu0 %v1452
  %2090 = vmatpush1.bf16.msra.mxu0 %v1451
  %2091 = vmatprep.subr.bf16.mxu0 %v1454
  %2092 = vmatpush1.bf16.msra.mxu0 %v1453
  %2093 = vmatprep.subr.bf16.mxu0 %v1456
  %2094 = vmatpush1.bf16.msra.mxu0 %v1455
  %2095 = vmatprep.subr.bf16.mxu0 %v1458
  %2096 = vmatpush1.bf16.msra.mxu0 %v1457
  %2097 = vmatprep.subr.bf16.mxu0 %v1460
  %2098 = vmatpush1.bf16.msra.mxu0 %v1459
  %2099 = vmatprep.subr.bf16.mxu0 %v1462
  %2100 = vmatpush1.bf16.msra.mxu0 %v1461
  %2101 = vmatprep.subr.bf16.mxu0 %v1464
  %2102 = vmatpush1.bf16.msra.mxu0 %v1463
  %2103 = vmatprep.subr.bf16.mxu0 %v1466
  %2104 = vmatpush1.bf16.msra.mxu0 %v1465
  %2105 = vmatprep.subr.bf16.mxu0 %v1468
  %2106 = vmatpush1.bf16.msra.mxu0 %v1467
  %2107 = vmatprep.subr.bf16.mxu0 %v1470
  %2108 = vmatpush1.bf16.msra.mxu0 %v1469
  %2109 = vmatprep.mubr.bf16.mxu0 %v428
  %2110 = vmatmul.mubr.bf16.gmra.mrb[0].mxu0 %v427
  %v2111 = vpop.f32.mrb[0].mxu0
  %v2112 = vadd.f32 %v2059, %v2111
  %v2113 = vpop.f32.mrb[0].mxu0
  %v2114 = vadd.f32 %v2061, %v2113
  %v2115 = vpop.f32.mrb[0].mxu0
  %v2116 = vadd.f32 %v2063, %v2115
  %v2117 = vpop.f32.mrb[0].mxu0
  %v2118 = vadd.f32 %v2065, %v2117
  %2119 = vmatprep.mubr.bf16.mxu0 %v444
  %2120 = vmatmul.mubr.bf16.gmra.mrb[0].mxu0 %v443
  %v2121 = vpop.f32.mrb[0].mxu0
  %v2122 = vadd.f32 %v2069, %v2121
  %v2123 = vpop.f32.mrb[0].mxu0
  %v2124 = vadd.f32 %v2071, %v2123
  %v2125 = vpop.f32.mrb[0].mxu0
  %v2126 = vadd.f32 %v2073, %v2125
  %v2127 = vpop.f32.mrb[0].mxu0
  %v2128 = vadd.f32 %v2075, %v2127
  %2129 = vdwg.mxu0
  %2130 = vmatprep.subr.bf16.mxu0 %v1472
  %2131 = vmatpush1.bf16.msra.mxu0 %v1471
  %2132 = vmatprep.subr.bf16.mxu0 %v1474
  %2133 = vmatpush1.bf16.msra.mxu0 %v1473
  %2134 = vmatprep.subr.bf16.mxu0 %v1476
  %2135 = vmatpush1.bf16.msra.mxu0 %v1475
  %2136 = vmatprep.subr.bf16.mxu0 %v1478
  %2137 = vmatpush1.bf16.msra.mxu0 %v1477
  %2138 = vmatprep.subr.bf16.mxu0 %v1480
  %2139 = vmatpush1.bf16.msra.mxu0 %v1479
  %2140 = vmatprep.subr.bf16.mxu0 %v1482
  %2141 = vmatpush1.bf16.msra.mxu0 %v1481
  %2142 = vmatprep.subr.bf16.mxu0 %v1484
  %2143 = vmatpush1.bf16.msra.mxu0 %v1483
  %2144 = vmatprep.subr.bf16.mxu0 %v1486
  %2145 = vmatpush1.bf16.msra.mxu0 %v1485
  %2146 = vmatprep.subr.bf16.mxu0 %v1488
  %2147 = vmatpush1.bf16.msra.mxu0 %v1487
  %2148 = vmatprep.subr.bf16.mxu0 %v1490
  %2149 = vmatpush1.bf16.msra.mxu0 %v1489
  %2150 = vmatprep.subr.bf16.mxu0 %v1492
  %2151 = vmatpush1.bf16.msra.mxu0 %v1491
  %2152 = vmatprep.subr.bf16.mxu0 %v1494
  %2153 = vmatpush1.bf16.msra.mxu0 %v1493
  %2154 = vmatprep.subr.bf16.mxu0 %v1496
  %2155 = vmatpush1.bf16.msra.mxu0 %v1495
  %2156 = vmatprep.subr.bf16.mxu0 %v1498
  %2157 = vmatpush1.bf16.msra.mxu0 %v1497
  %2158 = vmatprep.subr.bf16.mxu0 %v1500
  %2159 = vmatpush1.bf16.msra.mxu0 %v1499
  %2160 = vmatprep.subr.bf16.mxu0 %v1502
  %2161 = vmatpush1.bf16.msra.mxu0 %v1501
  %2162 = vmatprep.mubr.bf16.mxu0 %v430
  %2163 = vmatmul.mubr.bf16.gmra.mrb[0].mxu0 %v429
  %v2164 = vpop.f32.mrb[0].mxu0
  %v2165 = vadd.f32 %v2112, %v2164
  %v2166 = vpop.f32.mrb[0].mxu0
  %v2167 = vadd.f32 %v2114, %v2166
  %v2168 = vpop.f32.mrb[0].mxu0
  %v2169 = vadd.f32 %v2116, %v2168
  %v2170 = vpop.f32.mrb[0].mxu0
  %v2171 = vadd.f32 %v2118, %v2170
  %2172 = vmatprep.mubr.bf16.mxu0 %v446
  %2173 = vmatmul.mubr.bf16.gmra.mrb[0].mxu0 %v445
  %v2174 = vpop.f32.mrb[0].mxu0
  %v2175 = vadd.f32 %v2122, %v2174
  %v2176 = vpop.f32.mrb[0].mxu0
  %v2177 = vadd.f32 %v2124, %v2176
  %v2178 = vpop.f32.mrb[0].mxu0
  %v2179 = vadd.f32 %v2126, %v2178
  %v2180 = vpop.f32.mrb[0].mxu0
  %v2181 = vadd.f32 %v2128, %v2180
  %2182 = vdwg.mxu0
  %v2183 = vadd.f32 %v23, %v2165
  %v2184 = vadd.f32 %v24, %v2167
  %v2185 = vadd.f32 %v25, %v2169
  %v2186 = vadd.f32 %v26, %v2171
  %v2187 = vadd.f32 %v27, %v2175
  %v2188 = vadd.f32 %v28, %v2177
  %v2189 = vadd.f32 %v29, %v2179
  %v2190 = vadd.f32 %v30, %v2181
  %2191 = vst [vmem:[#allocation2] sm:$0xff] %v2183
  %2192 = vst [vmem:[#allocation2 + $0x8] sm:$0xff] %v2184
  %2193 = vst [vmem:[#allocation2 + $0x10] sm:$0xff] %v2185
  %2194 = vst [vmem:[#allocation2 + $0x18] sm:$0xff] %v2186
  %2195 = vst [vmem:[#allocation2 + $0x20] sm:$0xff] %v2187
  %2196 = vst [vmem:[#allocation2 + $0x28] sm:$0xff] %v2188
  %2197 = vst [vmem:[#allocation2 + $0x30] sm:$0xff] %v2189
  %2198 = vst [vmem:[#allocation2 + $0x38] sm:$0xff] %v2190
  // Predicated region
  $region14: #{_lambda_.7} parent=0 // pred_check
    %p2199 = pneg %p11
  $region15: #{_lambda_.7} parent=0 // pred_check_branch
    %2201 = sbr.rel (%p2199) target = $region17
  $region16: #{_lambda_.7} parent=0 // pred_region
    %v2202 = vld [vmem:[#allocation2] sm:$0xff]
    %v2203 = vld [vmem:[#allocation2 + $0x8] sm:$0xff]
    %v2204 = vld [vmem:[#allocation2 + $0x10] sm:$0xff]
    %v2205 = vld [vmem:[#allocation2 + $0x18] sm:$0xff]
    %v2206 = vld [vmem:[#allocation2 + $0x20] sm:$0xff]
    %v2207 = vld [vmem:[#allocation2 + $0x28] sm:$0xff]
    %v2208 = vld [vmem:[#allocation2 + $0x30] sm:$0xff]
    %v2209 = vld [vmem:[#allocation2 + $0x38] sm:$0xff]
    %vm2210 = vcmp.ge.f32.partialorder %v2202, 0.0
    %vm2211 = vcmp.ge.f32.partialorder %v2203, 0.0
    %vm2212 = vcmp.ge.f32.partialorder %v2204, 0.0
    %vm2213 = vcmp.ge.f32.partialorder %v2205, 0.0
    %vm2214 = vcmp.ge.f32.partialorder %v2206, 0.0
    %vm2215 = vcmp.ge.f32.partialorder %v2207, 0.0
    %vm2216 = vcmp.ge.f32.partialorder %v2208, 0.0
    %vm2217 = vcmp.ge.f32.partialorder %v2209, 0.0
    %v2218 = vmul.f32 %v2202, 0.2
    %v2219 = vmul.f32 %v2203, 0.2
    %v2220 = vmul.f32 %v2204, 0.2
    %v2221 = vmul.f32 %v2205, 0.2
    %v2222 = vmul.f32 %v2206, 0.2
    %v2223 = vmul.f32 %v2207, 0.2
    %v2224 = vmul.f32 %v2208, 0.2
    %v2225 = vmul.f32 %v2209, 0.2
    %v2226 = vsel %vm2210, %v2202, %v2218
    %v2227 = vsel %vm2211, %v2203, %v2219
    %v2228 = vsel %vm2212, %v2204, %v2220
    %v2229 = vsel %vm2213, %v2205, %v2221
    %v2230 = vsel %vm2214, %v2206, %v2222
    %v2231 = vsel %vm2215, %v2207, %v2223
    %v2232 = vsel %vm2216, %v2208, %v2224
    %v2233 = vsel %vm2217, %v2209, %v2225
    %2234 = vst [vmem:[%s2] sm:$0xff] %v2226
    %2235 = vst [vmem:[%s2 + $0x8] sm:$0xff] %v2227
    %2236 = vst [vmem:[%s2 + $0x10] sm:$0xff] %v2228
    %2237 = vst [vmem:[%s2 + $0x18] sm:$0xff] %v2229
    %2238 = vst [vmem:[%s2 + $0x20] sm:$0xff] %v2230
    %2239 = vst [vmem:[%s2 + $0x28] sm:$0xff] %v2231
    %2240 = vst [vmem:[%s2 + $0x30] sm:$0xff] %v2232
    %2241 = vst [vmem:[%s2 + $0x38] sm:$0xff] %v2233
  $region17: #{_lambda_.7} parent=0 // pred_fallthru
    _
  // Predicated region
  $region18: #{_lambda_.7} parent=0 // pred_check
    _
  $region19: #{_lambda_.7} parent=0 // pred_check_branch
    %2243 = sbr.rel (0) target = $region21
  $region20: #{_lambda_.7} parent=0 // pred_region
    _
  $region21: #{_lambda_.7} parent=0 // pred_fallthru
    _
  // Predicated region
  $region22: #{_lambda_.7} parent=0 // pred_check
    _
  $region23: #{_lambda_.7} parent=0 // pred_check_branch
    %2245 = sbr.rel (0) target = $region25
  $region24: #{_lambda_.7} parent=0 // pred_region
    _
  $region25: #{_lambda_.7} parent=0 // pred_fallthru
    _

// kernel: _lambda_.8
$region0: #{_lambda_.8}
  #allocation0 [shape = 'u32[]', space=smem, size = 0x4, offset = 0x4, fixed_abs, tag = 'smem constant byte address 0x4 - core index']
  #allocation1 [shape = 'u32[144,128]{1,0:T(1,128)}', space=vmem, size = 0x12000, scoped, tag = 'internal scratch']
  #allocation2 [shape = 'f32[24,512]{1,0:T(8,128)}', space=vmem, size = 0xc000, scoped, tag = 'scratch operand']
  %s0 = inlined_call_operand.vmem [shape: bf16[24,4096], index: 0, kind: input, shape index: {}]
  %s1 = inlined_call_operand.vmem [shape: bf16[4096,512], index: 1, kind: input, shape index: {}]
  %s2 = inlined_call_operand.vmem [shape: f32[24,512], index: 2, kind: output, shape index: {}]
  %s3 = sld [smem:[#allocation0]]
  $region72: #{_lambda_.8} parent=0
    _
  %s5 = ssub.s32 1, %s3
  %s6 = scalar_select 0, %s5, %s3
  $region1: #{_lambda_.8} parent=0
    #allocation3 [shape = 'u8[196608]{0}', space=vmem, size = 0x30000, scoped, tag = 'input window, operand 0']
    loop: start=0, step=1, limit=4
    $region2: #{_lambda_.8} parent=1 // loop_pre_header
      _
    $region3: #{_lambda_.8} parent=1 // loop_header
      %s8 = sphi 0, %s12
      %p9 = scmp.ge.s32.totalorder %s8, 4
      %s15 = sphi 0, %s27
      %s16 = sphi 0, %s23
      %s17 = sphi 0, %s15
      %s18 = sphi 0, %s16
      %s19 = sphi 0, %s17
      %s20 = sphi 0, %s18
      %s32 = sphi 0, %s34
      %s35 = sphi 0, %s32
      %s36 = sphi 0, %s35
      %s52 = sphi 0, %s36
      %s58 = sphi 0, %s60
      %s61 = sphi 0, %s58
      %s62 = sphi 0, %s61
      %s78 = sphi 0, %s62
      %s84 = sphi 0, %s86
      %s87 = sphi 0, %s84
      %s88 = sphi 0, %s87
      %s104 = sphi 0, %s88
    $region4: #{_lambda_.8} parent=1 // loop_header_branch
      %11 = sbr.rel (%p9) target = $region8
    $region5: #{_lambda_.8} parent=1 // loop_body
      %s13 = ssub.s32 %s8, 1
      %s14 = ssub.s32 %s8, 2
      %s21 = sadd.s32 1, %s16
      %p22 = scmp.ge.s32.totalorder %s21, 2
      %s23 = scalar_select %p22, 0, %s21
      %s24 = sadd.s32 1, %s15
      %s25 = scalar_select %p22, %s24, %s15
      %p26 = scmp.ge.s32.totalorder %s25, 1
      %s27 = scalar_select %p26, 0, %s25
      %s28 = ssub.s32 %s15, %s27
      %s29 = ssub.s32 %s16, %s23
      %s30 = sor.u32 %s28, %s29
      %p31 = scmp.eq.s32.totalorder %s30, 0
      %s33 = sadd.s32 %s32, 1
      %s34 = scalar_select %p31, %s32, %s33
      %p37 = pneg %p31
      %p38 = scmp.eq.s32.totalorder %s8, 1
      %p39 = por %p37, %p38
      %p40 = scmp.ne.s32.totalorder %s32, %s35
      %p41 = scmp.eq.s32.totalorder %s8, 0
      %p42 = por %p40, %p41
      %p43 = scmp.ne.s32.totalorder %s32, %s35
      %p44 = scmp.eq.s32.totalorder %s13, 1
      %p45 = por %p43, %p44
      %p46 = scmp.ne.s32.totalorder %s35, %s36
      %p47 = scmp.eq.s32.totalorder %s13, 0
      %p48 = por %p46, %p47
      %p49 = scmp.ne.s32.totalorder %s35, %s36
      %p50 = scmp.eq.s32.totalorder %s14, 1
      %p51 = por %p49, %p50
      %p53 = scmp.ne.s32.totalorder %s36, %s52
      %p54 = scmp.eq.s32.totalorder %s14, 0
      %p55 = por %p53, %p54
      %s56 = ssub.s32 %s16, %s23
      %p57 = scmp.eq.s32.totalorder %s56, 0
      %s59 = sadd.s32 %s58, 1
      %s60 = scalar_select %p57, %s58, %s59
      %p63 = pneg %p57
      %p64 = scmp.eq.s32.totalorder %s8, 1
      %p65 = por %p63, %p64
      %p66 = scmp.ne.s32.totalorder %s58, %s61
      %p67 = scmp.eq.s32.totalorder %s8, 0
      %p68 = por %p66, %p67
      %p69 = scmp.ne.s32.totalorder %s58, %s61
      %p70 = scmp.eq.s32.totalorder %s13, 1
      %p71 = por %p69, %p70
      %p72 = scmp.ne.s32.totalorder %s61, %s62
      %p73 = scmp.eq.s32.totalorder %s13, 0
      %p74 = por %p72, %p73
      %p75 = scmp.ne.s32.totalorder %s61, %s62
      %p76 = scmp.eq.s32.totalorder %s14, 1
      %p77 = por %p75, %p76
      %p79 = scmp.ne.s32.totalorder %s62, %s78
      %p80 = scmp.eq.s32.totalorder %s14, 0
      %p81 = por %p79, %p80
      %s82 = ssub.s32 %s15, %s27
      %p83 = scmp.eq.s32.totalorder %s82, 0
      %s85 = sadd.s32 %s84, 1
      %s86 = scalar_select %p83, %s84, %s85
      %p89 = pneg %p83
      %p90 = scmp.eq.s32.totalorder %s8, 1
      %p91 = por %p89, %p90
      %p92 = scmp.ne.s32.totalorder %s84, %s87
      %p93 = scmp.eq.s32.totalorder %s8, 0
      %p94 = por %p92, %p93
      %p95 = scmp.ne.s32.totalorder %s84, %s87
      %p96 = scmp.eq.s32.totalorder %s13, 1
      %p97 = por %p95, %p96
      %p98 = scmp.ne.s32.totalorder %s87, %s88
      %p99 = scmp.eq.s32.totalorder %s13, 0
      %p100 = por %p98, %p99
      %p101 = scmp.ne.s32.totalorder %s87, %s88
      %p102 = scmp.eq.s32.totalorder %s14, 1
      %p103 = por %p101, %p102
      %p105 = scmp.ne.s32.totalorder %s88, %s104
      %p106 = scmp.eq.s32.totalorder %s14, 0
      %p107 = por %p105, %p106
      %p108 = scmp.le.s32.totalorder 1, %s8
      %p109 = scmp.lt.s32.totalorder %s8, 3
      %p110 = pnand %p108, %p109
      %p111 = pneg %p110
      // Predicated region
      $region9: #{_lambda_.8} parent=5 // pred_check
        _
      $region10: #{_lambda_.8} parent=5 // pred_check_branch
        %113 = sbr.rel (%p110) target = $region12
      $region11: #{_lambda_.8} parent=5 // pred_region
        %s114 = ssub.s32 %s8, 1
      $region12: #{_lambda_.8} parent=5 // pred_fallthru
        _
      %p115 = scmp.lt.s32.totalorder %s8, 2
      // Predicated region
      $region13: #{_lambda_.8} parent=5 // pred_check
        %p116 = pneg %p115
      $region14: #{_lambda_.8} parent=5 // pred_check_branch
        %118 = sbr.rel (%p116) target = $region16
      $region15: #{_lambda_.8} parent=5 // pred_region
        // Predicated region
        $region17: #{_lambda_.8} parent=15 // pred_check
          %p119 = pneg %p42
        $region18: #{_lambda_.8} parent=15 // pred_check_branch
          %121 = sbr.rel (%p119) target = $region20
        $region19: #{_lambda_.8} parent=15 // pred_region
          %s122 = sand.u32 %s32, 1
          %s123 = sand.u32 %s32, 1
          %s124 = smul.addr %s123, 192
          %s125 = scalar_lea.vmem [#allocation3], %s124
          %s126 = smul.u32 3, %s15
          %s127 = smul.u32 16, %s16
          %s128 = smul.addr %s126, 32
          %s129 = sadd.s32 %s127, %s128
          %s130 = smul.addr %s129, 4
          %s131 = scalar_lea.vmem %s0, %s130
          // Predicated region
          $region21: #{_lambda_.8} parent=19 // pred_check
            _
          $region22: #{_lambda_.8} parent=19 // pred_check_branch
            %133 = sbr.rel (0) target = $region24
          $region23: #{_lambda_.8} parent=19 // pred_region
            // Predicated region
            $region25: #{_lambda_.8} parent=23 // pred_check
              _
            $region26: #{_lambda_.8} parent=23 // pred_check_branch
              %135 = sbr.rel (0) target = $region28
            $region27: #{_lambda_.8} parent=23 // pred_region
              loop: start=0, step=1, limit=1
              $region29: #{_lambda_.8} parent=27 // loop_pre_header
                _
              $region30: #{_lambda_.8} parent=27 // loop_header
                %s137 = sphi 0, %s141
                %p138 = scmp.ge.s32.totalorder %s137, 1
                %s142 = sphi %s131, %s131
                %s143 = sphi %s125, %s125
              $region31: #{_lambda_.8} parent=27 // loop_header_branch
                %140 = sbr.rel (%p138) target = $region35
              $region32: #{_lambda_.8} parent=27 // loop_body
                %v144 = vld [vmem:[%s142] sm:$0xff]
                %145 = vst [vmem:[%s143] sm:$0xff] %v144
                %v146 = vld [vmem:[%s142 + $0x8] sm:$0xff]
                %147 = vst [vmem:[%s143 + $0x8] sm:$0xff] %v146
                %v148 = vld [vmem:[%s142 + $0x10] sm:$0xff]
                %149 = vst [vmem:[%s143 + $0x10] sm:$0xff] %v148
                %v150 = vld [vmem:[%s142 + $0x18] sm:$0xff]
                %151 = vst [vmem:[%s143 + $0x18] sm:$0xff] %v150
                %v152 = vld [vmem:[%s142 + $0x20] sm:$0xff]
                %153 = vst [vmem:[%s143 + $0x20] sm:$0xff] %v152
                %v154 = vld [vmem:[%s142 + $0x28] sm:$0xff]
                %155 = vst [vmem:[%s143 + $0x28] sm:$0xff] %v154
                %v156 = vld [vmem:[%s142 + $0x30] sm:$0xff]
                %157 = vst [vmem:[%s143 + $0x30] sm:$0xff] %v156
                %v158 = vld [vmem:[%s142 + $0x38] sm:$0xff]
                %159 = vst [vmem:[%s143 + $0x38] sm:$0xff] %v158
                %v160 = vld [vmem:[%s142 + $0x80] sm:$0xff]
                %161 = vst [vmem:[%s143 + $0x40] sm:$0xff] %v160
                %v162 = vld [vmem:[%s142 + $0x88] sm:$0xff]
                %163 = vst [vmem:[%s143 + $0x48] sm:$0xff] %v162
                %v164 = vld [vmem:[%s142 + $0x90] sm:$0xff]
                %165 = vst [vmem:[%s143 + $0x50] sm:$0xff] %v164
                %v166 = vld [vmem:[%s142 + $0x98] sm:$0xff]
                %167 = vst [vmem:[%s143 + $0x58] sm:$0xff] %v166
                %v168 = vld [vmem:[%s142 + $0xa0] sm:$0xff]
                %169 = vst [vmem:[%s143 + $0x60] sm:$0xff] %v168
                %v170 = vld [vmem:[%s142 + $0xa8] sm:$0xff]
                %171 = vst [vmem:[%s143 + $0x68] sm:$0xff] %v170
                %v172 = vld [vmem:[%s142 + $0xb0] sm:$0xff]
                %173 = vst [vmem:[%s143 + $0x70] sm:$0xff] %v172
                %v174 = vld [vmem:[%s142 + $0xb8] sm:$0xff]
                %175 = vst [vmem:[%s143 + $0x78] sm:$0xff] %v174
                %v176 = vld [vmem:[%s142 + $0x100] sm:$0xff]
                %177 = vst [vmem:[%s143 + $0x80] sm:$0xff] %v176
                %v178 = vld [vmem:[%s142 + $0x108] sm:$0xff]
                %179 = vst [vmem:[%s143 + $0x88] sm:$0xff] %v178
                %v180 = vld [vmem:[%s142 + $0x110] sm:$0xff]
                %181 = vst [vmem:[%s143 + $0x90] sm:$0xff] %v180
                %v182 = vld [vmem:[%s142 + $0x118] sm:$0xff]
                %183 = vst [vmem:[%s143 + $0x98] sm:$0xff] %v182
                %v184 = vld [vmem:[%s142 + $0x120] sm:$0xff]
                %185 = vst [vmem:[%s143 + $0xa0] sm:$0xff] %v184
                %v186 = vld [vmem:[%s142 + $0x128] sm:$0xff]
                %187 = vst [vmem:[%s143 + $0xa8] sm:$0xff] %v186
                %v188 = vld [vmem:[%s142 + $0x130] sm:$0xff]
                %189 = vst [vmem:[%s143 + $0xb0] sm:$0xff] %v188
                %v190 = vld [vmem:[%s142 + $0x138] sm:$0xff]
                %191 = vst [vmem:[%s143 + $0xb8] sm:$0xff] %v190
              $region33: #{_lambda_.8} parent=27 // loop_footer
                %s141 = sadd.s32 1, %s137
              $region34: #{_lambda_.8} parent=27 // loop_footer_branch
                %136 = sbr.rel target = $region30
              $region35: #{_lambda_.8} parent=27 // loop_exit
                _
            $region28: #{_lambda_.8} parent=23 // pred_fallthru
              _
            // Predicated region
            $region36: #{_lambda_.8} parent=23 // pred_check
              _
            $region37: #{_lambda_.8} parent=23 // pred_check_branch
              %193 = sbr.rel target = $region39
            $region38: #{_lambda_.8} parent=23 // pred_region
              _
            $region39: #{_lambda_.8} parent=23 // pred_fallthru
              _
          $region24: #{_lambda_.8} parent=19 // pred_fallthru
            _
          %194 = vnop
        $region20: #{_lambda_.8} parent=15 // pred_fallthru
          _
        // Predicated region
        $region40: #{_lambda_.8} parent=15 // pred_check
          %p195 = pneg %p68
        $region41: #{_lambda_.8} parent=15 // pred_check_branch
          %197 = sbr.rel (%p195) target = $region43
        $region42: #{_lambda_.8} parent=15 // pred_region
          %s198 = smul.u32 256, %s16
          %p199 = scmp.lt.s32.totalorder %s198, 511
          %s200 = scalar_select %p199, %s198, 511
          %s201 = smul.addr %s200, 4
          %s202 = smul.addr %s201, 4
          %s203 = scalar_lea.vmem %s1, %s202
          %s204 = smul.u32 256, %s16
        $region43: #{_lambda_.8} parent=15 // pred_fallthru
          _
      $region16: #{_lambda_.8} parent=5 // pred_fallthru
        _
      %p205 = scmp.le.s32.totalorder 1, %s8
      %p206 = scmp.lt.s32.totalorder %s8, 3
      %p207 = pnand %p205, %p206
      %p208 = pneg %p207
      // Predicated region
      $region44: #{_lambda_.8} parent=5 // pred_check
        _
      $region45: #{_lambda_.8} parent=5 // pred_check_branch
        %210 = sbr.rel (%p207) target = $region47
      $region46: #{_lambda_.8} parent=5 // pred_region
        %s211 = ssub.s32 %s8, 1
        %s212 = sand.u32 %s35, 1
        %s213 = sand.u32 %s35, 1
        %s214 = smul.addr %s213, 192
        %s215 = scalar_lea.vmem [#allocation3], %s214
        // Predicated region
        $region48: #{_lambda_.8} parent=46 // pred_check
          %p216 = pneg %p48
        $region49: #{_lambda_.8} parent=46 // pred_check_branch
          %218 = sbr.rel (%p216) target = $region51
        $region50: #{_lambda_.8} parent=46 // pred_region
          _
        $region51: #{_lambda_.8} parent=46 // pred_fallthru
          _
        %s219 = sand.u32 %s35, 1
        %s220 = sand.u32 %s35, 1
        %s221 = smul.addr %s220, 192
        %s222 = scalar_lea.vmem [#allocation3], %s221
        %p223 = pneg %p48
        %p224 = pneg %p45
        %s225 = smul.u32 256, %s18
        %p226 = scmp.lt.s32.totalorder %s225, 511
        %s227 = scalar_select %p226, %s225, 511
        %s228 = smul.addr %s227, 4
        %s229 = smul.addr %s228, 4
        %s230 = scalar_lea.vmem %s1, %s229
        %p231 = pneg %p74
        %p232 = pneg %p71
        %p233 = pneg %p100
        %p234 = pneg %p97
        %s235 = smul.u32 3, %s17
        %p236 = scmp.lt.s32.totalorder %s235, 2
        %s237 = scalar_select %p236, %s235, 2
        %s238 = smul.addr %s237, 4
        %s239 = smul.addr %s238, 8
        %s240 = scalar_lea.vmem %s2, %s239
        %s241 = smul.u32 3, %s17
        %s242 = smul.u32 16, %s18
        %s243 = smul.u32 256, %s18
        %p244 = scmp.lt.s32.totalorder %s243, 511
        %s245 = scalar_select %p244, %s243, 511
        %s246 = smul.addr %s245, 4
        %s247 = smul.addr %s246, 4
        %s248 = scalar_lea.vmem %s1, %s247
        %s249 = smul.u32 256, %s18
        %s250 = smul.u32 3, %s17
        %p251 = scmp.lt.s32.totalorder %s250, 2
        %s252 = scalar_select %p251, %s250, 2
        %s253 = smul.addr %s252, 4
        %s254 = smul.addr %s253, 8
        %s255 = scalar_lea.vmem %s2, %s254
        %s256 = smul.u32 3, %s17
        %p257 = scmp.eq.s32.totalorder %s18, 0
        // Predicated region
        $region52: #{_lambda_.8} parent=46 // pred_check
          %p258 = pneg %p257
        $region53: #{_lambda_.8} parent=46 // pred_check_branch
          %260 = sbr.rel (%p258) target = $region55
        $region54: #{_lambda_.8} parent=46 // pred_region
          %261 = vst [vmem:[#allocation2] sm:$0xff] 0.0
          %262 = vst [vmem:[#allocation2 + $0x8] sm:$0xff] 0.0
          %263 = vst [vmem:[#allocation2 + $0x10] sm:$0xff] 0.0
          %264 = vst [vmem:[#allocation2 + $0x18] sm:$0xff] 0.0
          %265 = vst [vmem:[#allocation2 + $0x20] sm:$0xff] 0.0
          %266 = vst [vmem:[#allocation2 + $0x28] sm:$0xff] 0.0
          %267 = vst [vmem:[#allocation2 + $0x30] sm:$0xff] 0.0
          %268 = vst [vmem:[#allocation2 + $0x38] sm:$0xff] 0.0
          %269 = vst [vmem:[#allocation2 + $0x40] sm:$0xff] 0.0
          %270 = vst [vmem:[#allocation2 + $0x48] sm:$0xff] 0.0
          %271 = vst [vmem:[#allocation2 + $0x50] sm:$0xff] 0.0
          %272 = vst [vmem:[#allocation2 + $0x58] sm:$0xff] 0.0
        $region55: #{_lambda_.8} parent=46 // pred_fallthru
          _
        %v273 = vld [vmem:[#allocation2] sm:$0xff]
        %v274 = vld [vmem:[#allocation2 + $0x8] sm:$0xff]
        %v275 = vld [vmem:[#allocation2 + $0x10] sm:$0xff]
        %v276 = vld [vmem:[#allocation2 + $0x18] sm:$0xff]
        %v277 = vld [vmem:[#allocation2 + $0x20] sm:$0xff]
        %v278 = vld [vmem:[#allocation2 + $0x28] sm:$0xff]
        %v279 = vld [vmem:[#allocation2 + $0x30] sm:$0xff]
        %v280 = vld [vmem:[#allocation2 + $0x38] sm:$0xff]
        %v281 = vld [vmem:[#allocation2 + $0x40] sm:$0xff]
        %v282 = vld [vmem:[#allocation2 + $0x48] sm:$0xff]
        %v283 = vld [vmem:[#allocation2 + $0x50] sm:$0xff]
        %v284 = vld [vmem:[#allocation2 + $0x58] sm:$0xff]
        %v285 = vld [vmem:[%s215] sm:$0xff]
        %v286 = vld [vmem:[%s215 + $0x8] sm:$0xff]
        %v287 = vld [vmem:[%s215 + $0x10] sm:$0xff]
        %v288 = vld [vmem:[%s215 + $0x18] sm:$0xff]
        %v289 = vld [vmem:[%s215 + $0x20] sm:$0xff]
        %v290 = vld [vmem:[%s215 + $0x28] sm:$0xff]
        %v291 = vld [vmem:[%s215 + $0x30] sm:$0xff]
        %v292 = vld [vmem:[%s215 + $0x38] sm:$0xff]
        %v293 = vld [vmem:[%s215 + $0x40] sm:$0xff]
        %v294 = vld [vmem:[%s215 + $0x48] sm:$0xff]
        %v295 = vld [vmem:[%s215 + $0x50] sm:$0xff]
        %v296 = vld [vmem:[%s215 + $0x58] sm:$0xff]
        %v297 = vld [vmem:[%s215 + $0x60] sm:$0xff]
        %v298 = vld [vmem:[%s215 + $0x68] sm:$0xff]
        %v299 = vld [vmem:[%s215 + $0x70] sm:$0xff]
        %v300 = vld [vmem:[%s215 + $0x78] sm:$0xff]
        %v301 = vld [vmem:[%s215 + $0x80] sm:$0xff]
        %v302 = vld [vmem:[%s215 + $0x88] sm:$0xff]
        %v303 = vld [vmem:[%s215 + $0x90] sm:$0xff]
        %v304 = vld [vmem:[%s215 + $0x98] sm:$0xff]
        %v305 = vld [vmem:[%s215 + $0xa0] sm:$0xff]
        %v306 = vld [vmem:[%s215 + $0xa8] sm:$0xff]
        %v307 = vld [vmem:[%s215 + $0xb0] sm:$0xff]
        %v308 = vld [vmem:[%s215 + $0xb8] sm:$0xff]
        %v309 = vld [vmem:[%s248] sm:$0xff]
        %v310 = vld [vmem:[%s248 + $0x8] sm:$0xff]
        %v311 = vld [vmem:[%s248 + $0x10] sm:$0xff]
        %v312 = vld [vmem:[%s248 + $0x18] sm:$0xff]
        %v313 = vld [vmem:[%s248 + $0x20] sm:$0xff]
        %v314 = vld [vmem:[%s248 + $0x28] sm:$0xff]
        %v315 = vld [vmem:[%s248 + $0x30] sm:$0xff]
        %v316 = vld [vmem:[%s248 + $0x38] sm:$0xff]
        %v317 = vld [vmem:[%s248 + $0x40] sm:$0xff]
        %v318 = vld [vmem:[%s248 + $0x48] sm:$0xff]
        %v319 = vld [vmem:[%s248 + $0x50] sm:$0xff]
        %v320 = vld [vmem:[%s248 + $0x58] sm:$0xff]
        %v321 = vld [vmem:[%s248 + $0x60] sm:$0xff]
        %v322 = vld [vmem:[%s248 + $0x68] sm:$0xff]
        %v323 = vld [vmem:[%s248 + $0x70] sm:$0xff]
        %v324 = vld [vmem:[%s248 + $0x78] sm:$0xff]
        %v325 = vld [vmem:[%s248 + $0x80] sm:$0xff]
        %v326 = vld [vmem:[%s248 + $0x88] sm:$0xff]
        %v327 = vld [vmem:[%s248 + $0x90] sm:$0xff]
        %v328 = vld [vmem:[%s248 + $0x98] sm:$0xff]
        %v329 = vld [vmem:[%s248 + $0xa0] sm:$0xff]
        %v330 = vld [vmem:[%s248 + $0xa8] sm:$0xff]
        %v331 = vld [vmem:[%s248 + $0xb0] sm:$0xff]
        %v332 = vld [vmem:[%s248 + $0xb8] sm:$0xff]
        %v333 = vld [vmem:[%s248 + $0xc0] sm:$0xff]
        %v334 = vld [vmem:[%s248 + $0xc8] sm:$0xff]
        %v335 = vld [vmem:[%s248 + $0xd0] sm:$0xff]
        %v336 = vld [vmem:[%s248 + $0xd8] sm:$0xff]
        %v337 = vld [vmem:[%s248 + $0xe0] sm:$0xff]
        %v338 = vld [vmem:[%s248 + $0xe8] sm:$0xff]
        %v339 = vld [vmem:[%s248 + $0xf0] sm:$0xff]
        %v340 = vld [vmem:[%s248 + $0xf8] sm:$0xff]
        %v341 = vld [vmem:[%s248 + $0x100] sm:$0xff]
        %v342 = vld [vmem:[%s248 + $0x108] sm:$0xff]
        %v343 = vld [vmem:[%s248 + $0x110] sm:$0xff]
        %v344 = vld [vmem:[%s248 + $0x118] sm:$0xff]
        %v345 = vld [vmem:[%s248 + $0x120] sm:$0xff]
        %v346 = vld [vmem:[%s248 + $0x128] sm:$0xff]
        %v347 = vld [vmem:[%s248 + $0x130] sm:$0xff]
        %v348 = vld [vmem:[%s248 + $0x138] sm:$0xff]
        %v349 = vld [vmem:[%s248 + $0x140] sm:$0xff]
        %v350 = vld [vmem:[%s248 + $0x148] sm:$0xff]
        %v351 = vld [vmem:[%s248 + $0x150] sm:$0xff]
        %v352 = vld [vmem:[%s248 + $0x158] sm:$0xff]
        %v353 = vld [vmem:[%s248 + $0x160] sm:$0xff]
        %v354 = vld [vmem:[%s248 + $0x168] sm:$0xff]
        %v355 = vld [vmem:[%s248 + $0x170] sm:$0xff]
        %v356 = vld [vmem:[%s248 + $0x178] sm:$0xff]
        %v357 = vld [vmem:[%s248 + $0x180] sm:$0xff]
        %v358 = vld [vmem:[%s248 + $0x188] sm:$0xff]
        %v359 = vld [vmem:[%s248 + $0x190] sm:$0xff]
        %v360 = vld [vmem:[%s248 + $0x198] sm:$0xff]
        %v361 = vld [vmem:[%s248 + $0x1a0] sm:$0xff]
        %v362 = vld [vmem:[%s248 + $0x1a8] sm:$0xff]
        %v363 = vld [vmem:[%s248 + $0x1b0] sm:$0xff]
        %v364 = vld [vmem:[%s248 + $0x1b8] sm:$0xff]
        %v365 = vld [vmem:[%s248 + $0x1c0] sm:$0xff]
        %v366 = vld [vmem:[%s248 + $0x1c8] sm:$0xff]
        %v367 = vld [vmem:[%s248 + $0x1d0] sm:$0xff]
        %v368 = vld [vmem:[%s248 + $0x1d8] sm:$0xff]
        %v369 = vld [vmem:[%s248 + $0x1e0] sm:$0xff]
        %v370 = vld [vmem:[%s248 + $0x1e8] sm:$0xff]
        %v371 = vld [vmem:[%s248 + $0x1f0] sm:$0xff]
        %v372 = vld [vmem:[%s248 + $0x1f8] sm:$0xff]
        %v373 = vld [vmem:[%s248 + $0x200] sm:$0xff]
        %v374 = vld [vmem:[%s248 + $0x208] sm:$0xff]
        %v375 = vld [vmem:[%s248 + $0x210] sm:$0xff]
        %v376 = vld [vmem:[%s248 + $0x218] sm:$0xff]
        %v377 = vld [vmem:[%s248 + $0x220] sm:$0xff]
        %v378 = vld [vmem:[%s248 + $0x228] sm:$0xff]
        %v379 = vld [vmem:[%s248 + $0x230] sm:$0xff]
        %v380 = vld [vmem:[%s248 + $0x238] sm:$0xff]
        %v381 = vld [vmem:[%s248 + $0x240] sm:$0xff]
        %v382 = vld [vmem:[%s248 + $0x248] sm:$0xff]
        %v383 = vld [vmem:[%s248 + $0x250] sm:$0xff]
        %v384 = vld [vmem:[%s248 + $0x258] sm:$0xff]
        %v385 = vld [vmem:[%s248 + $0x260] sm:$0xff]
        %v386 = vld [vmem:[%s248 + $0x268] sm:$0xff]
        %v387 = vld [vmem:[%s248 + $0x270] sm:$0xff]
        %v388 = vld [vmem:[%s248 + $0x278] sm:$0xff]
        %v389 = vld [vmem:[%s248 + $0x280] sm:$0xff]
        %v390 = vld [vmem:[%s248 + $0x288] sm:$0xff]
        %v391 = vld [vmem:[%s248 + $0x290] sm:$0xff]
        %v392 = vld [vmem:[%s248 + $0x298] sm:$0xff]
        %v393 = vld [vmem:[%s248 + $0x2a0] sm:$0xff]
        %v394 = vld [vmem:[%s248 + $0x2a8] sm:$0xff]
        %v395 = vld [vmem:[%s248 + $0x2b0] sm:$0xff]
        %v396 = vld [vmem:[%s248 + $0x2b8] sm:$0xff]
        %v397 = vld [vmem:[%s248 + $0x2c0] sm:$0xff]
        %v398 = vld [vmem:[%s248 + $0x2c8] sm:$0xff]
        %v399 = vld [vmem:[%s248 + $0x2d0] sm:$0xff]
        %v400 = vld [vmem:[%s248 + $0x2d8] sm:$0xff]
        %v401 = vld [vmem:[%s248 + $0x2e0] sm:$0xff]
        %v402 = vld [vmem:[%s248 + $0x2e8] sm:$0xff]
        %v403 = vld [vmem:[%s248 + $0x2f0] sm:$0xff]
        %v404 = vld [vmem:[%s248 + $0x2f8] sm:$0xff]
        %v405 = vld [vmem:[%s248 + $0x300] sm:$0xff]
        %v406 = vld [vmem:[%s248 + $0x308] sm:$0xff]
        %v407 = vld [vmem:[%s248 + $0x310] sm:$0xff]
        %v408 = vld [vmem:[%s248 + $0x318] sm:$0xff]
        %v409 = vld [vmem:[%s248 + $0x320] sm:$0xff]
        %v410 = vld [vmem:[%s248 + $0x328] sm:$0xff]
        %v411 = vld [vmem:[%s248 + $0x330] sm:$0xff]
        %v412 = vld [vmem:[%s248 + $0x338] sm:$0xff]
        %v413 = vld [vmem:[%s248 + $0x340] sm:$0xff]
        %v414 = vld [vmem:[%s248 + $0x348] sm:$0xff]
        %v415 = vld [vmem:[%s248 + $0x350] sm:$0xff]
        %v416 = vld [vmem:[%s248 + $0x358] sm:$0xff]
        %v417 = vld [vmem:[%s248 + $0x360] sm:$0xff]
        %v418 = vld [vmem:[%s248 + $0x368] sm:$0xff]
        %v419 = vld [vmem:[%s248 + $0x370] sm:$0xff]
        %v420 = vld [vmem:[%s248 + $0x378] sm:$0xff]
        %v421 = vld [vmem:[%s248 + $0x380] sm:$0xff]
        %v422 = vld [vmem:[%s248 + $0x388] sm:$0xff]
        %v423 = vld [vmem:[%s248 + $0x390] sm:$0xff]
        %v424 = vld [vmem:[%s248 + $0x398] sm:$0xff]
        %v425 = vld [vmem:[%s248 + $0x3a0] sm:$0xff]
        %v426 = vld [vmem:[%s248 + $0x3a8] sm:$0xff]
        %v427 = vld [vmem:[%s248 + $0x3b0] sm:$0xff]
        %v428 = vld [vmem:[%s248 + $0x3b8] sm:$0xff]
        %v429 = vld [vmem:[%s248 + $0x3c0] sm:$0xff]
        %v430 = vld [vmem:[%s248 + $0x3c8] sm:$0xff]
        %v431 = vld [vmem:[%s248 + $0x3d0] sm:$0xff]
        %v432 = vld [vmem:[%s248 + $0x3d8] sm:$0xff]
        %v433 = vld [vmem:[%s248 + $0x3e0] sm:$0xff]
        %v434 = vld [vmem:[%s248 + $0x3e8] sm:$0xff]
        %v435 = vld [vmem:[%s248 + $0x3f0] sm:$0xff]
        %v436 = vld [vmem:[%s248 + $0x3f8] sm:$0xff]
        %v437 = vld [vmem:[%s248 + $0x400] sm:$0xff]
        %v438 = vld [vmem:[%s248 + $0x408] sm:$0xff]
        %v439 = vld [vmem:[%s248 + $0x410] sm:$0xff]
        %v440 = vld [vmem:[%s248 + $0x418] sm:$0xff]
        %v441 = vld [vmem:[%s248 + $0x420] sm:$0xff]
        %v442 = vld [vmem:[%s248 + $0x428] sm:$0xff]
        %v443 = vld [vmem:[%s248 + $0x430] sm:$0xff]
        %v444 = vld [vmem:[%s248 + $0x438] sm:$0xff]
        %v445 = vld [vmem:[%s248 + $0x440] sm:$0xff]
        %v446 = vld [vmem:[%s248 + $0x448] sm:$0xff]
        %v447 = vld [vmem:[%s248 + $0x450] sm:$0xff]
        %v448 = vld [vmem:[%s248 + $0x458] sm:$0xff]
        %v449 = vld [vmem:[%s248 + $0x460] sm:$0xff]
        %v450 = vld [vmem:[%s248 + $0x468] sm:$0xff]
        %v451 = vld [vmem:[%s248 + $0x470] sm:$0xff]
        %v452 = vld [vmem:[%s248 + $0x478] sm:$0xff]
        %v453 = vld [vmem:[%s248 + $0x480] sm:$0xff]
        %v454 = vld [vmem:[%s248 + $0x488] sm:$0xff]
        %v455 = vld [vmem:[%s248 + $0x490] sm:$0xff]
        %v456 = vld [vmem:[%s248 + $0x498] sm:$0xff]
        %v457 = vld [vmem:[%s248 + $0x4a0] sm:$0xff]
        %v458 = vld [vmem:[%s248 + $0x4a8] sm:$0xff]
        %v459 = vld [vmem:[%s248 + $0x4b0] sm:$0xff]
        %v460 = vld [vmem:[%s248 + $0x4b8] sm:$0xff]
        %v461 = vld [vmem:[%s248 + $0x4c0] sm:$0xff]
        %v462 = vld [vmem:[%s248 + $0x4c8] sm:$0xff]
        %v463 = vld [vmem:[%s248 + $0x4d0] sm:$0xff]
        %v464 = vld [vmem:[%s248 + $0x4d8] sm:$0xff]
        %v465 = vld [vmem:[%s248 + $0x4e0] sm:$0xff]
        %v466 = vld [vmem:[%s248 + $0x4e8] sm:$0xff]
        %v467 = vld [vmem:[%s248 + $0x4f0] sm:$0xff]
        %v468 = vld [vmem:[%s248 + $0x4f8] sm:$0xff]
        %v469 = vld [vmem:[%s248 + $0x500] sm:$0xff]
        %v470 = vld [vmem:[%s248 + $0x508] sm:$0xff]
        %v471 = vld [vmem:[%s248 + $0x510] sm:$0xff]
        %v472 = vld [vmem:[%s248 + $0x518] sm:$0xff]
        %v473 = vld [vmem:[%s248 + $0x520] sm:$0xff]
        %v474 = vld [vmem:[%s248 + $0x528] sm:$0xff]
        %v475 = vld [vmem:[%s248 + $0x530] sm:$0xff]
        %v476 = vld [vmem:[%s248 + $0x538] sm:$0xff]
        %v477 = vld [vmem:[%s248 + $0x540] sm:$0xff]
        %v478 = vld [vmem:[%s248 + $0x548] sm:$0xff]
        %v479 = vld [vmem:[%s248 + $0x550] sm:$0xff]
        %v480 = vld [vmem:[%s248 + $0x558] sm:$0xff]
        %v481 = vld [vmem:[%s248 + $0x560] sm:$0xff]
        %v482 = vld [vmem:[%s248 + $0x568] sm:$0xff]
        %v483 = vld [vmem:[%s248 + $0x570] sm:$0xff]
        %v484 = vld [vmem:[%s248 + $0x578] sm:$0xff]
        %v485 = vld [vmem:[%s248 + $0x580] sm:$0xff]
        %v486 = vld [vmem:[%s248 + $0x588] sm:$0xff]
        %v487 = vld [vmem:[%s248 + $0x590] sm:$0xff]
        %v488 = vld [vmem:[%s248 + $0x598] sm:$0xff]
        %v489 = vld [vmem:[%s248 + $0x5a0] sm:$0xff]
        %v490 = vld [vmem:[%s248 + $0x5a8] sm:$0xff]
        %v491 = vld [vmem:[%s248 + $0x5b0] sm:$0xff]
        %v492 = vld [vmem:[%s248 + $0x5b8] sm:$0xff]
        %v493 = vld [vmem:[%s248 + $0x5c0] sm:$0xff]
        %v494 = vld [vmem:[%s248 + $0x5c8] sm:$0xff]
        %v495 = vld [vmem:[%s248 + $0x5d0] sm:$0xff]
        %v496 = vld [vmem:[%s248 + $0x5d8] sm:$0xff]
        %v497 = vld [vmem:[%s248 + $0x5e0] sm:$0xff]
        %v498 = vld [vmem:[%s248 + $0x5e8] sm:$0xff]
        %v499 = vld [vmem:[%s248 + $0x5f0] sm:$0xff]
        %v500 = vld [vmem:[%s248 + $0x5f8] sm:$0xff]
        %v501 = vld [vmem:[%s248 + $0x600] sm:$0xff]
        %v502 = vld [vmem:[%s248 + $0x608] sm:$0xff]
        %v503 = vld [vmem:[%s248 + $0x610] sm:$0xff]
        %v504 = vld [vmem:[%s248 + $0x618] sm:$0xff]
        %v505 = vld [vmem:[%s248 + $0x620] sm:$0xff]
        %v506 = vld [vmem:[%s248 + $0x628] sm:$0xff]
        %v507 = vld [vmem:[%s248 + $0x630] sm:$0xff]
        %v508 = vld [vmem:[%s248 + $0x638] sm:$0xff]
        %v509 = vld [vmem:[%s248 + $0x640] sm:$0xff]
        %v510 = vld [vmem:[%s248 + $0x648] sm:$0xff]
        %v511 = vld [vmem:[%s248 + $0x650] sm:$0xff]
        %v512 = vld [vmem:[%s248 + $0x658] sm:$0xff]
        %v513 = vld [vmem:[%s248 + $0x660] sm:$0xff]
        %v514 = vld [vmem:[%s248 + $0x668] sm:$0xff]
        %v515 = vld [vmem:[%s248 + $0x670] sm:$0xff]
        %v516 = vld [vmem:[%s248 + $0x678] sm:$0xff]
        %v517 = vld [vmem:[%s248 + $0x680] sm:$0xff]
        %v518 = vld [vmem:[%s248 + $0x688] sm:$0xff]
        %v519 = vld [vmem:[%s248 + $0x690] sm:$0xff]
        %v520 = vld [vmem:[%s248 + $0x698] sm:$0xff]
        %v521 = vld [vmem:[%s248 + $0x6a0] sm:$0xff]
        %v522 = vld [vmem:[%s248 + $0x6a8] sm:$0xff]
        %v523 = vld [vmem:[%s248 + $0x6b0] sm:$0xff]
        %v524 = vld [vmem:[%s248 + $0x6b8] sm:$0xff]
        %v525 = vld [vmem:[%s248 + $0x6c0] sm:$0xff]
        %v526 = vld [vmem:[%s248 + $0x6c8] sm:$0xff]
        %v527 = vld [vmem:[%s248 + $0x6d0] sm:$0xff]
        %v528 = vld [vmem:[%s248 + $0x6d8] sm:$0xff]
        %v529 = vld [vmem:[%s248 + $0x6e0] sm:$0xff]
        %v530 = vld [vmem:[%s248 + $0x6e8] sm:$0xff]
        %v531 = vld [vmem:[%s248 + $0x6f0] sm:$0xff]
        %v532 = vld [vmem:[%s248 + $0x6f8] sm:$0xff]
        %v533 = vld [vmem:[%s248 + $0x700] sm:$0xff]
        %v534 = vld [vmem:[%s248 + $0x708] sm:$0xff]
        %v535 = vld [vmem:[%s248 + $0x710] sm:$0xff]
        %v536 = vld [vmem:[%s248 + $0x718] sm:$0xff]
        %v537 = vld [vmem:[%s248 + $0x720] sm:$0xff]
        %v538 = vld [vmem:[%s248 + $0x728] sm:$0xff]
        %v539 = vld [vmem:[%s248 + $0x730] sm:$0xff]
        %v540 = vld [vmem:[%s248 + $0x738] sm:$0xff]
        %v541 = vld [vmem:[%s248 + $0x740] sm:$0xff]
        %v542 = vld [vmem:[%s248 + $0x748] sm:$0xff]
        %v543 = vld [vmem:[%s248 + $0x750] sm:$0xff]
        %v544 = vld [vmem:[%s248 + $0x758] sm:$0xff]
        %v545 = vld [vmem:[%s248 + $0x760] sm:$0xff]
        %v546 = vld [vmem:[%s248 + $0x768] sm:$0xff]
        %v547 = vld [vmem:[%s248 + $0x770] sm:$0xff]
        %v548 = vld [vmem:[%s248 + $0x778] sm:$0xff]
        %v549 = vld [vmem:[%s248 + $0x780] sm:$0xff]
        %v550 = vld [vmem:[%s248 + $0x788] sm:$0xff]
        %v551 = vld [vmem:[%s248 + $0x790] sm:$0xff]
        %v552 = vld [vmem:[%s248 + $0x798] sm:$0xff]
        %v553 = vld [vmem:[%s248 + $0x7a0] sm:$0xff]
        %v554 = vld [vmem:[%s248 + $0x7a8] sm:$0xff]
        %v555 = vld [vmem:[%s248 + $0x7b0] sm:$0xff]
        %v556 = vld [vmem:[%s248 + $0x7b8] sm:$0xff]
        %v557 = vld [vmem:[%s248 + $0x7c0] sm:$0xff]
        %v558 = vld [vmem:[%s248 + $0x7c8] sm:$0xff]
        %v559 = vld [vmem:[%s248 + $0x7d0] sm:$0xff]
        %v560 = vld [vmem:[%s248 + $0x7d8] sm:$0xff]
        %v561 = vld [vmem:[%s248 + $0x7e0] sm:$0xff]
        %v562 = vld [vmem:[%s248 + $0x7e8] sm:$0xff]
        %v563 = vld [vmem:[%s248 + $0x7f0] sm:$0xff]
        %v564 = vld [vmem:[%s248 + $0x7f8] sm:$0xff]
        %v565 = vld [vmem:[%s248 + $0x800] sm:$0xff]
        %v566 = vld [vmem:[%s248 + $0x808] sm:$0xff]
        %v567 = vld [vmem:[%s248 + $0x810] sm:$0xff]
        %v568 = vld [vmem:[%s248 + $0x818] sm:$0xff]
        %v569 = vld [vmem:[%s248 + $0x820] sm:$0xff]
        %v570 = vld [vmem:[%s248 + $0x828] sm:$0xff]
        %v571 = vld [vmem:[%s248 + $0x830] sm:$0xff]
        %v572 = vld [vmem:[%s248 + $0x838] sm:$0xff]
        %v573 = vld [vmem:[%s248 + $0x840] sm:$0xff]
        %v574 = vld [vmem:[%s248 + $0x848] sm:$0xff]
        %v575 = vld [vmem:[%s248 + $0x850] sm:$0xff]
        %v576 = vld [vmem:[%s248 + $0x858] sm:$0xff]
        %v577 = vld [vmem:[%s248 + $0x860] sm:$0xff]
        %v578 = vld [vmem:[%s248 + $0x868] sm:$0xff]
        %v579 = vld [vmem:[%s248 + $0x870] sm:$0xff]
        %v580 = vld [vmem:[%s248 + $0x878] sm:$0xff]
        %v581 = vld [vmem:[%s248 + $0x880] sm:$0xff]
        %v582 = vld [vmem:[%s248 + $0x888] sm:$0xff]
        %v583 = vld [vmem:[%s248 + $0x890] sm:$0xff]
        %v584 = vld [vmem:[%s248 + $0x898] sm:$0xff]
        %v585 = vld [vmem:[%s248 + $0x8a0] sm:$0xff]
        %v586 = vld [vmem:[%s248 + $0x8a8] sm:$0xff]
        %v587 = vld [vmem:[%s248 + $0x8b0] sm:$0xff]
        %v588 = vld [vmem:[%s248 + $0x8b8] sm:$0xff]
        %v589 = vld [vmem:[%s248 + $0x8c0] sm:$0xff]
        %v590 = vld [vmem:[%s248 + $0x8c8] sm:$0xff]
        %v591 = vld [vmem:[%s248 + $0x8d0] sm:$0xff]
        %v592 = vld [vmem:[%s248 + $0x8d8] sm:$0xff]
        %v593 = vld [vmem:[%s248 + $0x8e0] sm:$0xff]
        %v594 = vld [vmem:[%s248 + $0x8e8] sm:$0xff]
        %v595 = vld [vmem:[%s248 + $0x8f0] sm:$0xff]
        %v596 = vld [vmem:[%s248 + $0x8f8] sm:$0xff]
        %v597 = vld [vmem:[%s248 + $0x900] sm:$0xff]
        %v598 = vld [vmem:[%s248 + $0x908] sm:$0xff]
        %v599 = vld [vmem:[%s248 + $0x910] sm:$0xff]
        %v600 = vld [vmem:[%s248 + $0x918] sm:$0xff]
        %v601 = vld [vmem:[%s248 + $0x920] sm:$0xff]
        %v602 = vld [vmem:[%s248 + $0x928] sm:$0xff]
        %v603 = vld [vmem:[%s248 + $0x930] sm:$0xff]
        %v604 = vld [vmem:[%s248 + $0x938] sm:$0xff]
        %v605 = vld [vmem:[%s248 + $0x940] sm:$0xff]
        %v606 = vld [vmem:[%s248 + $0x948] sm:$0xff]
        %v607 = vld [vmem:[%s248 + $0x950] sm:$0xff]
        %v608 = vld [vmem:[%s248 + $0x958] sm:$0xff]
        %v609 = vld [vmem:[%s248 + $0x960] sm:$0xff]
        %v610 = vld [vmem:[%s248 + $0x968] sm:$0xff]
        %v611 = vld [vmem:[%s248 + $0x970] sm:$0xff]
        %v612 = vld [vmem:[%s248 + $0x978] sm:$0xff]
        %v613 = vld [vmem:[%s248 + $0x980] sm:$0xff]
        %v614 = vld [vmem:[%s248 + $0x988] sm:$0xff]
        %v615 = vld [vmem:[%s248 + $0x990] sm:$0xff]
        %v616 = vld [vmem:[%s248 + $0x998] sm:$0xff]
        %v617 = vld [vmem:[%s248 + $0x9a0] sm:$0xff]
        %v618 = vld [vmem:[%s248 + $0x9a8] sm:$0xff]
        %v619 = vld [vmem:[%s248 + $0x9b0] sm:$0xff]
        %v620 = vld [vmem:[%s248 + $0x9b8] sm:$0xff]
        %v621 = vld [vmem:[%s248 + $0x9c0] sm:$0xff]
        %v622 = vld [vmem:[%s248 + $0x9c8] sm:$0xff]
        %v623 = vld [vmem:[%s248 + $0x9d0] sm:$0xff]
        %v624 = vld [vmem:[%s248 + $0x9d8] sm:$0xff]
        %v625 = vld [vmem:[%s248 + $0x9e0] sm:$0xff]
        %v626 = vld [vmem:[%s248 + $0x9e8] sm:$0xff]
        %v627 = vld [vmem:[%s248 + $0x9f0] sm:$0xff]
        %v628 = vld [vmem:[%s248 + $0x9f8] sm:$0xff]
        %v629 = vld [vmem:[%s248 + $0xa00] sm:$0xff]
        %v630 = vld [vmem:[%s248 + $0xa08] sm:$0xff]
        %v631 = vld [vmem:[%s248 + $0xa10] sm:$0xff]
        %v632 = vld [vmem:[%s248 + $0xa18] sm:$0xff]
        %v633 = vld [vmem:[%s248 + $0xa20] sm:$0xff]
        %v634 = vld [vmem:[%s248 + $0xa28] sm:$0xff]
        %v635 = vld [vmem:[%s248 + $0xa30] sm:$0xff]
        %v636 = vld [vmem:[%s248 + $0xa38] sm:$0xff]
        %v637 = vld [vmem:[%s248 + $0xa40] sm:$0xff]
        %v638 = vld [vmem:[%s248 + $0xa48] sm:$0xff]
        %v639 = vld [vmem:[%s248 + $0xa50] sm:$0xff]
        %v640 = vld [vmem:[%s248 + $0xa58] sm:$0xff]
        %v641 = vld [vmem:[%s248 + $0xa60] sm:$0xff]
        %v642 = vld [vmem:[%s248 + $0xa68] sm:$0xff]
        %v643 = vld [vmem:[%s248 + $0xa70] sm:$0xff]
        %v644 = vld [vmem:[%s248 + $0xa78] sm:$0xff]
        %v645 = vld [vmem:[%s248 + $0xa80] sm:$0xff]
        %v646 = vld [vmem:[%s248 + $0xa88] sm:$0xff]
        %v647 = vld [vmem:[%s248 + $0xa90] sm:$0xff]
        %v648 = vld [vmem:[%s248 + $0xa98] sm:$0xff]
        %v649 = vld [vmem:[%s248 + $0xaa0] sm:$0xff]
        %v650 = vld [vmem:[%s248 + $0xaa8] sm:$0xff]
        %v651 = vld [vmem:[%s248 + $0xab0] sm:$0xff]
        %v652 = vld [vmem:[%s248 + $0xab8] sm:$0xff]
        %v653 = vld [vmem:[%s248 + $0xac0] sm:$0xff]
        %v654 = vld [vmem:[%s248 + $0xac8] sm:$0xff]
        %v655 = vld [vmem:[%s248 + $0xad0] sm:$0xff]
        %v656 = vld [vmem:[%s248 + $0xad8] sm:$0xff]
        %v657 = vld [vmem:[%s248 + $0xae0] sm:$0xff]
        %v658 = vld [vmem:[%s248 + $0xae8] sm:$0xff]
        %v659 = vld [vmem:[%s248 + $0xaf0] sm:$0xff]
        %v660 = vld [vmem:[%s248 + $0xaf8] sm:$0xff]
        %v661 = vld [vmem:[%s248 + $0xb00] sm:$0xff]
        %v662 = vld [vmem:[%s248 + $0xb08] sm:$0xff]
        %v663 = vld [vmem:[%s248 + $0xb10] sm:$0xff]
        %v664 = vld [vmem:[%s248 + $0xb18] sm:$0xff]
        %v665 = vld [vmem:[%s248 + $0xb20] sm:$0xff]
        %v666 = vld [vmem:[%s248 + $0xb28] sm:$0xff]
        %v667 = vld [vmem:[%s248 + $0xb30] sm:$0xff]
        %v668 = vld [vmem:[%s248 + $0xb38] sm:$0xff]
        %v669 = vld [vmem:[%s248 + $0xb40] sm:$0xff]
        %v670 = vld [vmem:[%s248 + $0xb48] sm:$0xff]
        %v671 = vld [vmem:[%s248 + $0xb50] sm:$0xff]
        %v672 = vld [vmem:[%s248 + $0xb58] sm:$0xff]
        %v673 = vld [vmem:[%s248 + $0xb60] sm:$0xff]
        %v674 = vld [vmem:[%s248 + $0xb68] sm:$0xff]
        %v675 = vld [vmem:[%s248 + $0xb70] sm:$0xff]
        %v676 = vld [vmem:[%s248 + $0xb78] sm:$0xff]
        %v677 = vld [vmem:[%s248 + $0xb80] sm:$0xff]
        %v678 = vld [vmem:[%s248 + $0xb88] sm:$0xff]
        %v679 = vld [vmem:[%s248 + $0xb90] sm:$0xff]
        %v680 = vld [vmem:[%s248 + $0xb98] sm:$0xff]
        %v681 = vld [vmem:[%s248 + $0xba0] sm:$0xff]
        %v682 = vld [vmem:[%s248 + $0xba8] sm:$0xff]
        %v683 = vld [vmem:[%s248 + $0xbb0] sm:$0xff]
        %v684 = vld [vmem:[%s248 + $0xbb8] sm:$0xff]
        %v685 = vld [vmem:[%s248 + $0xbc0] sm:$0xff]
        %v686 = vld [vmem:[%s248 + $0xbc8] sm:$0xff]
        %v687 = vld [vmem:[%s248 + $0xbd0] sm:$0xff]
        %v688 = vld [vmem:[%s248 + $0xbd8] sm:$0xff]
        %v689 = vld [vmem:[%s248 + $0xbe0] sm:$0xff]
        %v690 = vld [vmem:[%s248 + $0xbe8] sm:$0xff]
        %v691 = vld [vmem:[%s248 + $0xbf0] sm:$0xff]
        %v692 = vld [vmem:[%s248 + $0xbf8] sm:$0xff]
        %v693 = vld [vmem:[%s248 + $0xc00] sm:$0xff]
        %v694 = vld [vmem:[%s248 + $0xc08] sm:$0xff]
        %v695 = vld [vmem:[%s248 + $0xc10] sm:$0xff]
        %v696 = vld [vmem:[%s248 + $0xc18] sm:$0xff]
        %v697 = vld [vmem:[%s248 + $0xc20] sm:$0xff]
        %v698 = vld [vmem:[%s248 + $0xc28] sm:$0xff]
        %v699 = vld [vmem:[%s248 + $0xc30] sm:$0xff]
        %v700 = vld [vmem:[%s248 + $0xc38] sm:$0xff]
        %v701 = vld [vmem:[%s248 + $0xc40] sm:$0xff]
        %v702 = vld [vmem:[%s248 + $0xc48] sm:$0xff]
        %v703 = vld [vmem:[%s248 + $0xc50] sm:$0xff]
        %v704 = vld [vmem:[%s248 + $0xc58] sm:$0xff]
        %v705 = vld [vmem:[%s248 + $0xc60] sm:$0xff]
        %v706 = vld [vmem:[%s248 + $0xc68] sm:$0xff]
        %v707 = vld [vmem:[%s248 + $0xc70] sm:$0xff]
        %v708 = vld [vmem:[%s248 + $0xc78] sm:$0xff]
        %v709 = vld [vmem:[%s248 + $0xc80] sm:$0xff]
        %v710 = vld [vmem:[%s248 + $0xc88] sm:$0xff]
        %v711 = vld [vmem:[%s248 + $0xc90] sm:$0xff]
        %v712 = vld [vmem:[%s248 + $0xc98] sm:$0xff]
        %v713 = vld [vmem:[%s248 + $0xca0] sm:$0xff]
        %v714 = vld [vmem:[%s248 + $0xca8] sm:$0xff]
        %v715 = vld [vmem:[%s248 + $0xcb0] sm:$0xff]
        %v716 = vld [vmem:[%s248 + $0xcb8] sm:$0xff]
        %v717 = vld [vmem:[%s248 + $0xcc0] sm:$0xff]
        %v718 = vld [vmem:[%s248 + $0xcc8] sm:$0xff]
        %v719 = vld [vmem:[%s248 + $0xcd0] sm:$0xff]
        %v720 = vld [vmem:[%s248 + $0xcd8] sm:$0xff]
        %v721 = vld [vmem:[%s248 + $0xce0] sm:$0xff]
        %v722 = vld [vmem:[%s248 + $0xce8] sm:$0xff]
        %v723 = vld [vmem:[%s248 + $0xcf0] sm:$0xff]
        %v724 = vld [vmem:[%s248 + $0xcf8] sm:$0xff]
        %v725 = vld [vmem:[%s248 + $0xd00] sm:$0xff]
        %v726 = vld [vmem:[%s248 + $0xd08] sm:$0xff]
        %v727 = vld [vmem:[%s248 + $0xd10] sm:$0xff]
        %v728 = vld [vmem:[%s248 + $0xd18] sm:$0xff]
        %v729 = vld [vmem:[%s248 + $0xd20] sm:$0xff]
        %v730 = vld [vmem:[%s248 + $0xd28] sm:$0xff]
        %v731 = vld [vmem:[%s248 + $0xd30] sm:$0xff]
        %v732 = vld [vmem:[%s248 + $0xd38] sm:$0xff]
        %v733 = vld [vmem:[%s248 + $0xd40] sm:$0xff]
        %v734 = vld [vmem:[%s248 + $0xd48] sm:$0xff]
        %v735 = vld [vmem:[%s248 + $0xd50] sm:$0xff]
        %v736 = vld [vmem:[%s248 + $0xd58] sm:$0xff]
        %v737 = vld [vmem:[%s248 + $0xd60] sm:$0xff]
        %v738 = vld [vmem:[%s248 + $0xd68] sm:$0xff]
        %v739 = vld [vmem:[%s248 + $0xd70] sm:$0xff]
        %v740 = vld [vmem:[%s248 + $0xd78] sm:$0xff]
        %v741 = vld [vmem:[%s248 + $0xd80] sm:$0xff]
        %v742 = vld [vmem:[%s248 + $0xd88] sm:$0xff]
        %v743 = vld [vmem:[%s248 + $0xd90] sm:$0xff]
        %v744 = vld [vmem:[%s248 + $0xd98] sm:$0xff]
        %v745 = vld [vmem:[%s248 + $0xda0] sm:$0xff]
        %v746 = vld [vmem:[%s248 + $0xda8] sm:$0xff]
        %v747 = vld [vmem:[%s248 + $0xdb0] sm:$0xff]
        %v748 = vld [vmem:[%s248 + $0xdb8] sm:$0xff]
        %v749 = vld [vmem:[%s248 + $0xdc0] sm:$0xff]
        %v750 = vld [vmem:[%s248 + $0xdc8] sm:$0xff]
        %v751 = vld [vmem:[%s248 + $0xdd0] sm:$0xff]
        %v752 = vld [vmem:[%s248 + $0xdd8] sm:$0xff]
        %v753 = vld [vmem:[%s248 + $0xde0] sm:$0xff]
        %v754 = vld [vmem:[%s248 + $0xde8] sm:$0xff]
        %v755 = vld [vmem:[%s248 + $0xdf0] sm:$0xff]
        %v756 = vld [vmem:[%s248 + $0xdf8] sm:$0xff]
        %v757 = vld [vmem:[%s248 + $0xe00] sm:$0xff]
        %v758 = vld [vmem:[%s248 + $0xe08] sm:$0xff]
        %v759 = vld [vmem:[%s248 + $0xe10] sm:$0xff]
        %v760 = vld [vmem:[%s248 + $0xe18] sm:$0xff]
        %v761 = vld [vmem:[%s248 + $0xe20] sm:$0xff]
        %v762 = vld [vmem:[%s248 + $0xe28] sm:$0xff]
        %v763 = vld [vmem:[%s248 + $0xe30] sm:$0xff]
        %v764 = vld [vmem:[%s248 + $0xe38] sm:$0xff]
        %v765 = vld [vmem:[%s248 + $0xe40] sm:$0xff]
        %v766 = vld [vmem:[%s248 + $0xe48] sm:$0xff]
        %v767 = vld [vmem:[%s248 + $0xe50] sm:$0xff]
        %v768 = vld [vmem:[%s248 + $0xe58] sm:$0xff]
        %v769 = vld [vmem:[%s248 + $0xe60] sm:$0xff]
        %v770 = vld [vmem:[%s248 + $0xe68] sm:$0xff]
        %v771 = vld [vmem:[%s248 + $0xe70] sm:$0xff]
        %v772 = vld [vmem:[%s248 + $0xe78] sm:$0xff]
        %v773 = vld [vmem:[%s248 + $0xe80] sm:$0xff]
        %v774 = vld [vmem:[%s248 + $0xe88] sm:$0xff]
        %v775 = vld [vmem:[%s248 + $0xe90] sm:$0xff]
        %v776 = vld [vmem:[%s248 + $0xe98] sm:$0xff]
        %v777 = vld [vmem:[%s248 + $0xea0] sm:$0xff]
        %v778 = vld [vmem:[%s248 + $0xea8] sm:$0xff]
        %v779 = vld [vmem:[%s248 + $0xeb0] sm:$0xff]
        %v780 = vld [vmem:[%s248 + $0xeb8] sm:$0xff]
        %v781 = vld [vmem:[%s248 + $0xec0] sm:$0xff]
        %v782 = vld [vmem:[%s248 + $0xec8] sm:$0xff]
        %v783 = vld [vmem:[%s248 + $0xed0] sm:$0xff]
        %v784 = vld [vmem:[%s248 + $0xed8] sm:$0xff]
        %v785 = vld [vmem:[%s248 + $0xee0] sm:$0xff]
        %v786 = vld [vmem:[%s248 + $0xee8] sm:$0xff]
        %v787 = vld [vmem:[%s248 + $0xef0] sm:$0xff]
        %v788 = vld [vmem:[%s248 + $0xef8] sm:$0xff]
        %v789 = vld [vmem:[%s248 + $0xf00] sm:$0xff]
        %v790 = vld [vmem:[%s248 + $0xf08] sm:$0xff]
        %v791 = vld [vmem:[%s248 + $0xf10] sm:$0xff]
        %v792 = vld [vmem:[%s248 + $0xf18] sm:$0xff]
        %v793 = vld [vmem:[%s248 + $0xf20] sm:$0xff]
        %v794 = vld [vmem:[%s248 + $0xf28] sm:$0xff]
        %v795 = vld [vmem:[%s248 + $0xf30] sm:$0xff]
        %v796 = vld [vmem:[%s248 + $0xf38] sm:$0xff]
        %v797 = vld [vmem:[%s248 + $0xf40] sm:$0xff]
        %v798 = vld [vmem:[%s248 + $0xf48] sm:$0xff]
        %v799 = vld [vmem:[%s248 + $0xf50] sm:$0xff]
        %v800 = vld [vmem:[%s248 + $0xf58] sm:$0xff]
        %v801 = vld [vmem:[%s248 + $0xf60] sm:$0xff]
        %v802 = vld [vmem:[%s248 + $0xf68] sm:$0xff]
        %v803 = vld [vmem:[%s248 + $0xf70] sm:$0xff]
        %v804 = vld [vmem:[%s248 + $0xf78] sm:$0xff]
        %v805 = vld [vmem:[%s248 + $0xf80] sm:$0xff]
        %v806 = vld [vmem:[%s248 + $0xf88] sm:$0xff]
        %v807 = vld [vmem:[%s248 + $0xf90] sm:$0xff]
        %v808 = vld [vmem:[%s248 + $0xf98] sm:$0xff]
        %v809 = vld [vmem:[%s248 + $0xfa0] sm:$0xff]
        %v810 = vld [vmem:[%s248 + $0xfa8] sm:$0xff]
        %v811 = vld [vmem:[%s248 + $0xfb0] sm:$0xff]
        %v812 = vld [vmem:[%s248 + $0xfb8] sm:$0xff]
        %v813 = vld [vmem:[%s248 + $0xfc0] sm:$0xff]
        %v814 = vld [vmem:[%s248 + $0xfc8] sm:$0xff]
        %v815 = vld [vmem:[%s248 + $0xfd0] sm:$0xff]
        %v816 = vld [vmem:[%s248 + $0xfd8] sm:$0xff]
        %v817 = vld [vmem:[%s248 + $0xfe0] sm:$0xff]
        %v818 = vld [vmem:[%s248 + $0xfe8] sm:$0xff]
        %v819 = vld [vmem:[%s248 + $0xff0] sm:$0xff]
        %v820 = vld [vmem:[%s248 + $0xff8] sm:$0xff]
        %v845 = vunpack.c.l.b16 %v285
        %v846 = vunpack.c.h.b16 %v285
        %v847 = vunpack.c.l.b16 %v286
        %v848 = vunpack.c.h.b16 %v286
        %v849 = vunpack.c.l.b16 %v287
        %v850 = vunpack.c.h.b16 %v287
        %v851 = vunpack.c.l.b16 %v288
        %v852 = vunpack.c.h.b16 %v288
        %v853 = vunpack.c.l.b16 %v289
        %v854 = vunpack.c.h.b16 %v289
        %v855 = vunpack.c.l.b16 %v290
        %v856 = vunpack.c.h.b16 %v290
        %v857 = vunpack.c.l.b16 %v291
        %v858 = vunpack.c.h.b16 %v291
        %v859 = vunpack.c.l.b16 %v292
        %v860 = vunpack.c.h.b16 %v292
        %v861 = vunpack.c.l.b16 %v293
        %v862 = vunpack.c.h.b16 %v293
        %v863 = vunpack.c.l.b16 %v294
        %v864 = vunpack.c.h.b16 %v294
        %v865 = vunpack.c.l.b16 %v295
        %v866 = vunpack.c.h.b16 %v295
        %v867 = vunpack.c.l.b16 %v296
        %v868 = vunpack.c.h.b16 %v296
        %v869 = vunpack.c.l.b16 %v297
        %v870 = vunpack.c.h.b16 %v297
        %v871 = vunpack.c.l.b16 %v298
        %v872 = vunpack.c.h.b16 %v298
        %v873 = vunpack.c.l.b16 %v299
        %v874 = vunpack.c.h.b16 %v299
        %v875 = vunpack.c.l.b16 %v300
        %v876 = vunpack.c.h.b16 %v300
        %v877 = vunpack.c.l.b16 %v301
        %v878 = vunpack.c.h.b16 %v301
        %v879 = vunpack.c.l.b16 %v302
        %v880 = vunpack.c.h.b16 %v302
        %v881 = vunpack.c.l.b16 %v303
        %v882 = vunpack.c.h.b16 %v303
        %v883 = vunpack.c.l.b16 %v304
        %v884 = vunpack.c.h.b16 %v304
        %v885 = vunpack.c.l.b16 %v305
        %v886 = vunpack.c.h.b16 %v305
        %v887 = vunpack.c.l.b16 %v306
        %v888 = vunpack.c.h.b16 %v306
        %v889 = vunpack.c.l.b16 %v307
        %v890 = vunpack.c.h.b16 %v307
        %v891 = vunpack.c.l.b16 %v308
        %v892 = vunpack.c.h.b16 %v308
        %v893 = vpack.c.b16 %v861, %v845
        %v894 = vpack.c.b16 %v862, %v846
        %v895 = vpack.c.b16 %v863, %v847
        %v896 = vpack.c.b16 %v864, %v848
        %v897 = vpack.c.b16 %v865, %v849
        %v898 = vpack.c.b16 %v866, %v850
        %v899 = vpack.c.b16 %v867, %v851
        %v900 = vpack.c.b16 %v868, %v852
        %v901 = vpack.c.b16 %v869, %v853
        %v902 = vpack.c.b16 %v870, %v854
        %v903 = vpack.c.b16 %v871, %v855
        %v904 = vpack.c.b16 %v872, %v856
        %v905 = vpack.c.b16 %v873, %v857
        %v906 = vpack.c.b16 %v874, %v858
        %v907 = vpack.c.b16 %v875, %v859
        %v908 = vpack.c.b16 %v876, %v860
        %v909 = vpack.c.b16 %v877, %v877
        %v910 = vpack.c.b16 %v878, %v878
        %v911 = vpack.c.b16 %v879, %v879
        %v912 = vpack.c.b16 %v880, %v880
        %v913 = vpack.c.b16 %v881, %v881
        %v914 = vpack.c.b16 %v882, %v882
        %v915 = vpack.c.b16 %v883, %v883
        %v916 = vpack.c.b16 %v884, %v884
        %v917 = vpack.c.b16 %v885, %v885
        %v918 = vpack.c.b16 %v886, %v886
        %v919 = vpack.c.b16 %v887, %v887
        %v920 = vpack.c.b16 %v888, %v888
        %v921 = vpack.c.b16 %v889, %v889
        %v922 = vpack.c.b16 %v890, %v890
        %v923 = vpack.c.b16 %v891, %v891
        %v924 = vpack.c.b16 %v892, %v892
        %v1469 = vunpack.c.l.b16 %v309
        %v1470 = vunpack.c.h.b16 %v309
        %v1471 = vunpack.c.l.b16 %v310
        %v1472 = vunpack.c.h.b16 %v310
        %v1473 = vunpack.c.l.b16 %v311
        %v1474 = vunpack.c.h.b16 %v311
        %v1475 = vunpack.c.l.b16 %v312
        %v1476 = vunpack.c.h.b16 %v312
        %v1477 = vunpack.c.l.b16 %v313
        %v1478 = vunpack.c.h.b16 %v313
        %v1479 = vunpack.c.l.b16 %v314
        %v1480 = vunpack.c.h.b16 %v314
        %v1481 = vunpack.c.l.b16 %v315
        %v1482 = vunpack.c.h.b16 %v315
        %v1483 = vunpack.c.l.b16 %v316
        %v1484 = vunpack.c.h.b16 %v316
        %v1485 = vunpack.c.l.b16 %v317
        %v1486 = vunpack.c.h.b16 %v317
        %v1487 = vunpack.c.l.b16 %v318
        %v1488 = vunpack.c.h.b16 %v318
        %v1489 = vunpack.c.l.b16 %v319
        %v1490 = vunpack.c.h.b16 %v319
        %v1491 = vunpack.c.l.b16 %v320
        %v1492 = vunpack.c.h.b16 %v320
        %v1493 = vunpack.c.l.b16 %v321
        %v1494 = vunpack.c.h.b16 %v321
        %v1495 = vunpack.c.l.b16 %v322
        %v1496 = vunpack.c.h.b16 %v322
        %v1497 = vunpack.c.l.b16 %v323
        %v1498 = vunpack.c.h.b16 %v323
        %v1499 = vunpack.c.l.b16 %v324
        %v1500 = vunpack.c.h.b16 %v324
        %v1501 = vunpack.c.l.b16 %v325
        %v1502 = vunpack.c.h.b16 %v325
        %v1503 = vunpack.c.l.b16 %v326
        %v1504 = vunpack.c.h.b16 %v326
        %v1505 = vunpack.c.l.b16 %v327
        %v1506 = vunpack.c.h.b16 %v327
        %v1507 = vunpack.c.l.b16 %v328
        %v1508 = vunpack.c.h.b16 %v328
        %v1509 = vunpack.c.l.b16 %v329
        %v1510 = vunpack.c.h.b16 %v329
        %v1511 = vunpack.c.l.b16 %v330
        %v1512 = vunpack.c.h.b16 %v330
        %v1513 = vunpack.c.l.b16 %v331
        %v1514 = vunpack.c.h.b16 %v331
        %v1515 = vunpack.c.l.b16 %v332
        %v1516 = vunpack.c.h.b16 %v332
        %v1517 = vunpack.c.l.b16 %v333
        %v1518 = vunpack.c.h.b16 %v333
        %v1519 = vunpack.c.l.b16 %v334
        %v1520 = vunpack.c.h.b16 %v334
        %v1521 = vunpack.c.l.b16 %v335
        %v1522 = vunpack.c.h.b16 %v335
        %v1523 = vunpack.c.l.b16 %v336
        %v1524 = vunpack.c.h.b16 %v336
        %v1525 = vunpack.c.l.b16 %v337
        %v1526 = vunpack.c.h.b16 %v337
        %v1527 = vunpack.c.l.b16 %v338
        %v1528 = vunpack.c.h.b16 %v338
        %v1529 = vunpack.c.l.b16 %v339
        %v1530 = vunpack.c.h.b16 %v339
        %v1531 = vunpack.c.l.b16 %v340
        %v1532 = vunpack.c.h.b16 %v340
        %v1533 = vunpack.c.l.b16 %v341
        %v1534 = vunpack.c.h.b16 %v341
        %v1535 = vunpack.c.l.b16 %v342
        %v1536 = vunpack.c.h.b16 %v342
        %v1537 = vunpack.c.l.b16 %v343
        %v1538 = vunpack.c.h.b16 %v343
        %v1539 = vunpack.c.l.b16 %v344
        %v1540 = vunpack.c.h.b16 %v344
        %v1541 = vunpack.c.l.b16 %v345
        %v1542 = vunpack.c.h.b16 %v345
        %v1543 = vunpack.c.l.b16 %v346
        %v1544 = vunpack.c.h.b16 %v346
        %v1545 = vunpack.c.l.b16 %v347
        %v1546 = vunpack.c.h.b16 %v347
        %v1547 = vunpack.c.l.b16 %v348
        %v1548 = vunpack.c.h.b16 %v348
        %v1549 = vunpack.c.l.b16 %v349
        %v1550 = vunpack.c.h.b16 %v349
        %v1551 = vunpack.c.l.b16 %v350
        %v1552 = vunpack.c.h.b16 %v350
        %v1553 = vunpack.c.l.b16 %v351
        %v1554 = vunpack.c.h.b16 %v351
        %v1555 = vunpack.c.l.b16 %v352
        %v1556 = vunpack.c.h.b16 %v352
        %v1557 = vunpack.c.l.b16 %v353
        %v1558 = vunpack.c.h.b16 %v353
        %v1559 = vunpack.c.l.b16 %v354
        %v1560 = vunpack.c.h.b16 %v354
        %v1561 = vunpack.c.l.b16 %v355
        %v1562 = vunpack.c.h.b16 %v355
        %v1563 = vunpack.c.l.b16 %v356
        %v1564 = vunpack.c.h.b16 %v356
        %v1565 = vunpack.c.l.b16 %v357
        %v1566 = vunpack.c.h.b16 %v357
        %v1567 = vunpack.c.l.b16 %v358
        %v1568 = vunpack.c.h.b16 %v358
        %v1569 = vunpack.c.l.b16 %v359
        %v1570 = vunpack.c.h.b16 %v359
        %v1571 = vunpack.c.l.b16 %v360
        %v1572 = vunpack.c.h.b16 %v360
        %v1573 = vunpack.c.l.b16 %v361
        %v1574 = vunpack.c.h.b16 %v361
        %v1575 = vunpack.c.l.b16 %v362
        %v1576 = vunpack.c.h.b16 %v362
        %v1577 = vunpack.c.l.b16 %v363
        %v1578 = vunpack.c.h.b16 %v363
        %v1579 = vunpack.c.l.b16 %v364
        %v1580 = vunpack.c.h.b16 %v364
        %v1581 = vunpack.c.l.b16 %v365
        %v1582 = vunpack.c.h.b16 %v365
        %v1583 = vunpack.c.l.b16 %v366
        %v1584 = vunpack.c.h.b16 %v366
        %v1585 = vunpack.c.l.b16 %v367
        %v1586 = vunpack.c.h.b16 %v367
        %v1587 = vunpack.c.l.b16 %v368
        %v1588 = vunpack.c.h.b16 %v368
        %v1589 = vunpack.c.l.b16 %v369
        %v1590 = vunpack.c.h.b16 %v369
        %v1591 = vunpack.c.l.b16 %v370
        %v1592 = vunpack.c.h.b16 %v370
        %v1593 = vunpack.c.l.b16 %v371
        %v1594 = vunpack.c.h.b16 %v371
        %v1595 = vunpack.c.l.b16 %v372
        %v1596 = vunpack.c.h.b16 %v372
        %v1597 = vunpack.c.l.b16 %v373
        %v1598 = vunpack.c.h.b16 %v373
        %v1599 = vunpack.c.l.b16 %v374
        %v1600 = vunpack.c.h.b16 %v374
        %v1601 = vunpack.c.l.b16 %v375
        %v1602 = vunpack.c.h.b16 %v375
        %v1603 = vunpack.c.l.b16 %v376
        %v1604 = vunpack.c.h.b16 %v376
        %v1605 = vunpack.c.l.b16 %v377
        %v1606 = vunpack.c.h.b16 %v377
        %v1607 = vunpack.c.l.b16 %v378
        %v1608 = vunpack.c.h.b16 %v378
        %v1609 = vunpack.c.l.b16 %v379
        %v1610 = vunpack.c.h.b16 %v379
        %v1611 = vunpack.c.l.b16 %v380
        %v1612 = vunpack.c.h.b16 %v380
        %v1613 = vunpack.c.l.b16 %v381
        %v1614 = vunpack.c.h.b16 %v381
        %v1615 = vunpack.c.l.b16 %v382
        %v1616 = vunpack.c.h.b16 %v382
        %v1617 = vunpack.c.l.b16 %v383
        %v1618 = vunpack.c.h.b16 %v383
        %v1619 = vunpack.c.l.b16 %v384
        %v1620 = vunpack.c.h.b16 %v384
        %v1621 = vunpack.c.l.b16 %v385
        %v1622 = vunpack.c.h.b16 %v385
        %v1623 = vunpack.c.l.b16 %v386
        %v1624 = vunpack.c.h.b16 %v386
        %v1625 = vunpack.c.l.b16 %v387
        %v1626 = vunpack.c.h.b16 %v387
        %v1627 = vunpack.c.l.b16 %v388
        %v1628 = vunpack.c.h.b16 %v388
        %v1629 = vunpack.c.l.b16 %v389
        %v1630 = vunpack.c.h.b16 %v389
        %v1631 = vunpack.c.l.b16 %v390
        %v1632 = vunpack.c.h.b16 %v390
        %v1633 = vunpack.c.l.b16 %v391
        %v1634 = vunpack.c.h.b16 %v391
        %v1635 = vunpack.c.l.b16 %v392
        %v1636 = vunpack.c.h.b16 %v392
        %v1637 = vunpack.c.l.b16 %v393
        %v1638 = vunpack.c.h.b16 %v393
        %v1639 = vunpack.c.l.b16 %v394
        %v1640 = vunpack.c.h.b16 %v394
        %v1641 = vunpack.c.l.b16 %v395
        %v1642 = vunpack.c.h.b16 %v395
        %v1643 = vunpack.c.l.b16 %v396
        %v1644 = vunpack.c.h.b16 %v396
        %v1645 = vunpack.c.l.b16 %v397
        %v1646 = vunpack.c.h.b16 %v397
        %v1647 = vunpack.c.l.b16 %v398
        %v1648 = vunpack.c.h.b16 %v398
        %v1649 = vunpack.c.l.b16 %v399
        %v1650 = vunpack.c.h.b16 %v399
        %v1651 = vunpack.c.l.b16 %v400
        %v1652 = vunpack.c.h.b16 %v400
        %v1653 = vunpack.c.l.b16 %v401
        %v1654 = vunpack.c.h.b16 %v401
        %v1655 = vunpack.c.l.b16 %v402
        %v1656 = vunpack.c.h.b16 %v402
        %v1657 = vunpack.c.l.b16 %v403
        %v1658 = vunpack.c.h.b16 %v403
        %v1659 = vunpack.c.l.b16 %v404
        %v1660 = vunpack.c.h.b16 %v404
        %v1661 = vunpack.c.l.b16 %v405
        %v1662 = vunpack.c.h.b16 %v405
        %v1663 = vunpack.c.l.b16 %v406
        %v1664 = vunpack.c.h.b16 %v406
        %v1665 = vunpack.c.l.b16 %v407
        %v1666 = vunpack.c.h.b16 %v407
        %v1667 = vunpack.c.l.b16 %v408
        %v1668 = vunpack.c.h.b16 %v408
        %v1669 = vunpack.c.l.b16 %v409
        %v1670 = vunpack.c.h.b16 %v409
        %v1671 = vunpack.c.l.b16 %v410
        %v1672 = vunpack.c.h.b16 %v410
        %v1673 = vunpack.c.l.b16 %v411
        %v1674 = vunpack.c.h.b16 %v411
        %v1675 = vunpack.c.l.b16 %v412
        %v1676 = vunpack.c.h.b16 %v412
        %v1677 = vunpack.c.l.b16 %v413
        %v1678 = vunpack.c.h.b16 %v413
        %v1679 = vunpack.c.l.b16 %v414
        %v1680 = vunpack.c.h.b16 %v414
        %v1681 = vunpack.c.l.b16 %v415
        %v1682 = vunpack.c.h.b16 %v415
        %v1683 = vunpack.c.l.b16 %v416
        %v1684 = vunpack.c.h.b16 %v416
        %v1685 = vunpack.c.l.b16 %v417
        %v1686 = vunpack.c.h.b16 %v417
        %v1687 = vunpack.c.l.b16 %v418
        %v1688 = vunpack.c.h.b16 %v418
        %v1689 = vunpack.c.l.b16 %v419
        %v1690 = vunpack.c.h.b16 %v419
        %v1691 = vunpack.c.l.b16 %v420
        %v1692 = vunpack.c.h.b16 %v420
        %v1693 = vunpack.c.l.b16 %v421
        %v1694 = vunpack.c.h.b16 %v421
        %v1695 = vunpack.c.l.b16 %v422
        %v1696 = vunpack.c.h.b16 %v422
        %v1697 = vunpack.c.l.b16 %v423
        %v1698 = vunpack.c.h.b16 %v423
        %v1699 = vunpack.c.l.b16 %v424
        %v1700 = vunpack.c.h.b16 %v424
        %v1701 = vunpack.c.l.b16 %v425
        %v1702 = vunpack.c.h.b16 %v425
        %v1703 = vunpack.c.l.b16 %v426
        %v1704 = vunpack.c.h.b16 %v426
        %v1705 = vunpack.c.l.b16 %v427
        %v1706 = vunpack.c.h.b16 %v427
        %v1707 = vunpack.c.l.b16 %v428
        %v1708 = vunpack.c.h.b16 %v428
        %v1709 = vunpack.c.l.b16 %v429
        %v1710 = vunpack.c.h.b16 %v429
        %v1711 = vunpack.c.l.b16 %v430
        %v1712 = vunpack.c.h.b16 %v430
        %v1713 = vunpack.c.l.b16 %v431
        %v1714 = vunpack.c.h.b16 %v431
        %v1715 = vunpack.c.l.b16 %v432
        %v1716 = vunpack.c.h.b16 %v432
        %v1717 = vunpack.c.l.b16 %v433
        %v1718 = vunpack.c.h.b16 %v433
        %v1719 = vunpack.c.l.b16 %v434
        %v1720 = vunpack.c.h.b16 %v434
        %v1721 = vunpack.c.l.b16 %v435
        %v1722 = vunpack.c.h.b16 %v435
        %v1723 = vunpack.c.l.b16 %v436
        %v1724 = vunpack.c.h.b16 %v436
        %v1725 = vunpack.c.l.b16 %v437
        %v1726 = vunpack.c.h.b16 %v437
        %v1727 = vunpack.c.l.b16 %v438
        %v1728 = vunpack.c.h.b16 %v438
        %v1729 = vunpack.c.l.b16 %v439
        %v1730 = vunpack.c.h.b16 %v439
        %v1731 = vunpack.c.l.b16 %v440
        %v1732 = vunpack.c.h.b16 %v440
        %v1733 = vunpack.c.l.b16 %v441
        %v1734 = vunpack.c.h.b16 %v441
        %v1735 = vunpack.c.l.b16 %v442
        %v1736 = vunpack.c.h.b16 %v442
        %v1737 = vunpack.c.l.b16 %v443
        %v1738 = vunpack.c.h.b16 %v443
        %v1739 = vunpack.c.l.b16 %v444
        %v1740 = vunpack.c.h.b16 %v444
        %v1741 = vunpack.c.l.b16 %v445
        %v1742 = vunpack.c.h.b16 %v445
        %v1743 = vunpack.c.l.b16 %v446
        %v1744 = vunpack.c.h.b16 %v446
        %v1745 = vunpack.c.l.b16 %v447
        %v1746 = vunpack.c.h.b16 %v447
        %v1747 = vunpack.c.l.b16 %v448
        %v1748 = vunpack.c.h.b16 %v448
        %v1749 = vunpack.c.l.b16 %v449
        %v1750 = vunpack.c.h.b16 %v449
        %v1751 = vunpack.c.l.b16 %v450
        %v1752 = vunpack.c.h.b16 %v450
        %v1753 = vunpack.c.l.b16 %v451
        %v1754 = vunpack.c.h.b16 %v451
        %v1755 = vunpack.c.l.b16 %v452
        %v1756 = vunpack.c.h.b16 %v452
        %v1757 = vunpack.c.l.b16 %v453
        %v1758 = vunpack.c.h.b16 %v453
        %v1759 = vunpack.c.l.b16 %v454
        %v1760 = vunpack.c.h.b16 %v454
        %v1761 = vunpack.c.l.b16 %v455
        %v1762 = vunpack.c.h.b16 %v455
        %v1763 = vunpack.c.l.b16 %v456
        %v1764 = vunpack.c.h.b16 %v456
        %v1765 = vunpack.c.l.b16 %v457
        %v1766 = vunpack.c.h.b16 %v457
        %v1767 = vunpack.c.l.b16 %v458
        %v1768 = vunpack.c.h.b16 %v458
        %v1769 = vunpack.c.l.b16 %v459
        %v1770 = vunpack.c.h.b16 %v459
        %v1771 = vunpack.c.l.b16 %v460
        %v1772 = vunpack.c.h.b16 %v460
        %v1773 = vunpack.c.l.b16 %v461
        %v1774 = vunpack.c.h.b16 %v461
        %v1775 = vunpack.c.l.b16 %v462
        %v1776 = vunpack.c.h.b16 %v462
        %v1777 = vunpack.c.l.b16 %v463
        %v1778 = vunpack.c.h.b16 %v463
        %v1779 = vunpack.c.l.b16 %v464
        %v1780 = vunpack.c.h.b16 %v464
        %v1781 = vunpack.c.l.b16 %v465
        %v1782 = vunpack.c.h.b16 %v465
        %v1783 = vunpack.c.l.b16 %v466
        %v1784 = vunpack.c.h.b16 %v466
        %v1785 = vunpack.c.l.b16 %v467
        %v1786 = vunpack.c.h.b16 %v467
        %v1787 = vunpack.c.l.b16 %v468
        %v1788 = vunpack.c.h.b16 %v468
        %v1789 = vunpack.c.l.b16 %v469
        %v1790 = vunpack.c.h.b16 %v469
        %v1791 = vunpack.c.l.b16 %v470
        %v1792 = vunpack.c.h.b16 %v470
        %v1793 = vunpack.c.l.b16 %v471
        %v1794 = vunpack.c.h.b16 %v471
        %v1795 = vunpack.c.l.b16 %v472
        %v1796 = vunpack.c.h.b16 %v472
        %v1797 = vunpack.c.l.b16 %v473
        %v1798 = vunpack.c.h.b16 %v473
        %v1799 = vunpack.c.l.b16 %v474
        %v1800 = vunpack.c.h.b16 %v474
        %v1801 = vunpack.c.l.b16 %v475
        %v1802 = vunpack.c.h.b16 %v475
        %v1803 = vunpack.c.l.b16 %v476
        %v1804 = vunpack.c.h.b16 %v476
        %v1805 = vunpack.c.l.b16 %v477
        %v1806 = vunpack.c.h.b16 %v477
        %v1807 = vunpack.c.l.b16 %v478
        %v1808 = vunpack.c.h.b16 %v478
        %v1809 = vunpack.c.l.b16 %v479
        %v1810 = vunpack.c.h.b16 %v479
        %v1811 = vunpack.c.l.b16 %v480
        %v1812 = vunpack.c.h.b16 %v480
        %v1813 = vunpack.c.l.b16 %v481
        %v1814 = vunpack.c.h.b16 %v481
        %v1815 = vunpack.c.l.b16 %v482
        %v1816 = vunpack.c.h.b16 %v482
        %v1817 = vunpack.c.l.b16 %v483
        %v1818 = vunpack.c.h.b16 %v483
        %v1819 = vunpack.c.l.b16 %v484
        %v1820 = vunpack.c.h.b16 %v484
        %v1821 = vunpack.c.l.b16 %v485
        %v1822 = vunpack.c.h.b16 %v485
        %v1823 = vunpack.c.l.b16 %v486
        %v1824 = vunpack.c.h.b16 %v486
        %v1825 = vunpack.c.l.b16 %v487
        %v1826 = vunpack.c.h.b16 %v487
        %v1827 = vunpack.c.l.b16 %v488
        %v1828 = vunpack.c.h.b16 %v488
        %v1829 = vunpack.c.l.b16 %v489
        %v1830 = vunpack.c.h.b16 %v489
        %v1831 = vunpack.c.l.b16 %v490
        %v1832 = vunpack.c.h.b16 %v490
        %v1833 = vunpack.c.l.b16 %v491
        %v1834 = vunpack.c.h.b16 %v491
        %v1835 = vunpack.c.l.b16 %v492
        %v1836 = vunpack.c.h.b16 %v492
        %v1837 = vunpack.c.l.b16 %v493
        %v1838 = vunpack.c.h.b16 %v493
        %v1839 = vunpack.c.l.b16 %v494
        %v1840 = vunpack.c.h.b16 %v494
        %v1841 = vunpack.c.l.b16 %v495
        %v1842 = vunpack.c.h.b16 %v495
        %v1843 = vunpack.c.l.b16 %v496
        %v1844 = vunpack.c.h.b16 %v496
        %v1845 = vunpack.c.l.b16 %v497
        %v1846 = vunpack.c.h.b16 %v497
        %v1847 = vunpack.c.l.b16 %v498
        %v1848 = vunpack.c.h.b16 %v498
        %v1849 = vunpack.c.l.b16 %v499
        %v1850 = vunpack.c.h.b16 %v499
        %v1851 = vunpack.c.l.b16 %v500
        %v1852 = vunpack.c.h.b16 %v500
        %v1853 = vunpack.c.l.b16 %v501
        %v1854 = vunpack.c.h.b16 %v501
        %v1855 = vunpack.c.l.b16 %v502
        %v1856 = vunpack.c.h.b16 %v502
        %v1857 = vunpack.c.l.b16 %v503
        %v1858 = vunpack.c.h.b16 %v503
        %v1859 = vunpack.c.l.b16 %v504
        %v1860 = vunpack.c.h.b16 %v504
        %v1861 = vunpack.c.l.b16 %v505
        %v1862 = vunpack.c.h.b16 %v505
        %v1863 = vunpack.c.l.b16 %v506
        %v1864 = vunpack.c.h.b16 %v506
        %v1865 = vunpack.c.l.b16 %v507
        %v1866 = vunpack.c.h.b16 %v507
        %v1867 = vunpack.c.l.b16 %v508
        %v1868 = vunpack.c.h.b16 %v508
        %v1869 = vunpack.c.l.b16 %v509
        %v1870 = vunpack.c.h.b16 %v509
        %v1871 = vunpack.c.l.b16 %v510
        %v1872 = vunpack.c.h.b16 %v510
        %v1873 = vunpack.c.l.b16 %v511
        %v1874 = vunpack.c.h.b16 %v511
        %v1875 = vunpack.c.l.b16 %v512
        %v1876 = vunpack.c.h.b16 %v512
        %v1877 = vunpack.c.l.b16 %v513
        %v1878 = vunpack.c.h.b16 %v513
        %v1879 = vunpack.c.l.b16 %v514
        %v1880 = vunpack.c.h.b16 %v514
        %v1881 = vunpack.c.l.b16 %v515
        %v1882 = vunpack.c.h.b16 %v515
        %v1883 = vunpack.c.l.b16 %v516
        %v1884 = vunpack.c.h.b16 %v516
        %v1885 = vunpack.c.l.b16 %v517
        %v1886 = vunpack.c.h.b16 %v517
        %v1887 = vunpack.c.l.b16 %v518
        %v1888 = vunpack.c.h.b16 %v518
        %v1889 = vunpack.c.l.b16 %v519
        %v1890 = vunpack.c.h.b16 %v519
        %v1891 = vunpack.c.l.b16 %v520
        %v1892 = vunpack.c.h.b16 %v520
        %v1893 = vunpack.c.l.b16 %v521
        %v1894 = vunpack.c.h.b16 %v521
        %v1895 = vunpack.c.l.b16 %v522
        %v1896 = vunpack.c.h.b16 %v522
        %v1897 = vunpack.c.l.b16 %v523
        %v1898 = vunpack.c.h.b16 %v523
        %v1899 = vunpack.c.l.b16 %v524
        %v1900 = vunpack.c.h.b16 %v524
        %v1901 = vunpack.c.l.b16 %v525
        %v1902 = vunpack.c.h.b16 %v525
        %v1903 = vunpack.c.l.b16 %v526
        %v1904 = vunpack.c.h.b16 %v526
        %v1905 = vunpack.c.l.b16 %v527
        %v1906 = vunpack.c.h.b16 %v527
        %v1907 = vunpack.c.l.b16 %v528
        %v1908 = vunpack.c.h.b16 %v528
        %v1909 = vunpack.c.l.b16 %v529
        %v1910 = vunpack.c.h.b16 %v529
        %v1911 = vunpack.c.l.b16 %v530
        %v1912 = vunpack.c.h.b16 %v530
        %v1913 = vunpack.c.l.b16 %v531
        %v1914 = vunpack.c.h.b16 %v531
        %v1915 = vunpack.c.l.b16 %v532
        %v1916 = vunpack.c.h.b16 %v532
        %v1917 = vunpack.c.l.b16 %v533
        %v1918 = vunpack.c.h.b16 %v533
        %v1919 = vunpack.c.l.b16 %v534
        %v1920 = vunpack.c.h.b16 %v534
        %v1921 = vunpack.c.l.b16 %v535
        %v1922 = vunpack.c.h.b16 %v535
        %v1923 = vunpack.c.l.b16 %v536
        %v1924 = vunpack.c.h.b16 %v536
        %v1925 = vunpack.c.l.b16 %v537
        %v1926 = vunpack.c.h.b16 %v537
        %v1927 = vunpack.c.l.b16 %v538
        %v1928 = vunpack.c.h.b16 %v538
        %v1929 = vunpack.c.l.b16 %v539
        %v1930 = vunpack.c.h.b16 %v539
        %v1931 = vunpack.c.l.b16 %v540
        %v1932 = vunpack.c.h.b16 %v540
        %v1933 = vunpack.c.l.b16 %v541
        %v1934 = vunpack.c.h.b16 %v541
        %v1935 = vunpack.c.l.b16 %v542
        %v1936 = vunpack.c.h.b16 %v542
        %v1937 = vunpack.c.l.b16 %v543
        %v1938 = vunpack.c.h.b16 %v543
        %v1939 = vunpack.c.l.b16 %v544
        %v1940 = vunpack.c.h.b16 %v544
        %v1941 = vunpack.c.l.b16 %v545
        %v1942 = vunpack.c.h.b16 %v545
        %v1943 = vunpack.c.l.b16 %v546
        %v1944 = vunpack.c.h.b16 %v546
        %v1945 = vunpack.c.l.b16 %v547
        %v1946 = vunpack.c.h.b16 %v547
        %v1947 = vunpack.c.l.b16 %v548
        %v1948 = vunpack.c.h.b16 %v548
        %v1949 = vunpack.c.l.b16 %v549
        %v1950 = vunpack.c.h.b16 %v549
        %v1951 = vunpack.c.l.b16 %v550
        %v1952 = vunpack.c.h.b16 %v550
        %v1953 = vunpack.c.l.b16 %v551
        %v1954 = vunpack.c.h.b16 %v551
        %v1955 = vunpack.c.l.b16 %v552
        %v1956 = vunpack.c.h.b16 %v552
        %v1957 = vunpack.c.l.b16 %v553
        %v1958 = vunpack.c.h.b16 %v553
        %v1959 = vunpack.c.l.b16 %v554
        %v1960 = vunpack.c.h.b16 %v554
        %v1961 = vunpack.c.l.b16 %v555
        %v1962 = vunpack.c.h.b16 %v555
        %v1963 = vunpack.c.l.b16 %v556
        %v1964 = vunpack.c.h.b16 %v556
        %v1965 = vunpack.c.l.b16 %v557
        %v1966 = vunpack.c.h.b16 %v557
        %v1967 = vunpack.c.l.b16 %v558
        %v1968 = vunpack.c.h.b16 %v558
        %v1969 = vunpack.c.l.b16 %v559
        %v1970 = vunpack.c.h.b16 %v559
        %v1971 = vunpack.c.l.b16 %v560
        %v1972 = vunpack.c.h.b16 %v560
        %v1973 = vunpack.c.l.b16 %v561
        %v1974 = vunpack.c.h.b16 %v561
        %v1975 = vunpack.c.l.b16 %v562
        %v1976 = vunpack.c.h.b16 %v562
        %v1977 = vunpack.c.l.b16 %v563
        %v1978 = vunpack.c.h.b16 %v563
        %v1979 = vunpack.c.l.b16 %v564
        %v1980 = vunpack.c.h.b16 %v564
        %v1981 = vunpack.c.l.b16 %v565
        %v1982 = vunpack.c.h.b16 %v565
        %v1983 = vunpack.c.l.b16 %v566
        %v1984 = vunpack.c.h.b16 %v566
        %v1985 = vunpack.c.l.b16 %v567
        %v1986 = vunpack.c.h.b16 %v567
        %v1987 = vunpack.c.l.b16 %v568
        %v1988 = vunpack.c.h.b16 %v568
        %v1989 = vunpack.c.l.b16 %v569
        %v1990 = vunpack.c.h.b16 %v569
        %v1991 = vunpack.c.l.b16 %v570
        %v1992 = vunpack.c.h.b16 %v570
        %v1993 = vunpack.c.l.b16 %v571
        %v1994 = vunpack.c.h.b16 %v571
        %v1995 = vunpack.c.l.b16 %v572
        %v1996 = vunpack.c.h.b16 %v572
        %v1997 = vunpack.c.l.b16 %v573
        %v1998 = vunpack.c.h.b16 %v573
        %v1999 = vunpack.c.l.b16 %v574
        %v2000 = vunpack.c.h.b16 %v574
        %v2001 = vunpack.c.l.b16 %v575
        %v2002 = vunpack.c.h.b16 %v575
        %v2003 = vunpack.c.l.b16 %v576
        %v2004 = vunpack.c.h.b16 %v576
        %v2005 = vunpack.c.l.b16 %v577
        %v2006 = vunpack.c.h.b16 %v577
        %v2007 = vunpack.c.l.b16 %v578
        %v2008 = vunpack.c.h.b16 %v578
        %v2009 = vunpack.c.l.b16 %v579
        %v2010 = vunpack.c.h.b16 %v579
        %v2011 = vunpack.c.l.b16 %v580
        %v2012 = vunpack.c.h.b16 %v580
        %v2013 = vunpack.c.l.b16 %v581
        %v2014 = vunpack.c.h.b16 %v581
        %v2015 = vunpack.c.l.b16 %v582
        %v2016 = vunpack.c.h.b16 %v582
        %v2017 = vunpack.c.l.b16 %v583
        %v2018 = vunpack.c.h.b16 %v583
        %v2019 = vunpack.c.l.b16 %v584
        %v2020 = vunpack.c.h.b16 %v584
        %v2021 = vunpack.c.l.b16 %v585
        %v2022 = vunpack.c.h.b16 %v585
        %v2023 = vunpack.c.l.b16 %v586
        %v2024 = vunpack.c.h.b16 %v586
        %v2025 = vunpack.c.l.b16 %v587
        %v2026 = vunpack.c.h.b16 %v587
        %v2027 = vunpack.c.l.b16 %v588
        %v2028 = vunpack.c.h.b16 %v588
        %v2029 = vunpack.c.l.b16 %v589
        %v2030 = vunpack.c.h.b16 %v589
        %v2031 = vunpack.c.l.b16 %v590
        %v2032 = vunpack.c.h.b16 %v590
        %v2033 = vunpack.c.l.b16 %v591
        %v2034 = vunpack.c.h.b16 %v591
        %v2035 = vunpack.c.l.b16 %v592
        %v2036 = vunpack.c.h.b16 %v592
        %v2037 = vunpack.c.l.b16 %v593
        %v2038 = vunpack.c.h.b16 %v593
        %v2039 = vunpack.c.l.b16 %v594
        %v2040 = vunpack.c.h.b16 %v594
        %v2041 = vunpack.c.l.b16 %v595
        %v2042 = vunpack.c.h.b16 %v595
        %v2043 = vunpack.c.l.b16 %v596
        %v2044 = vunpack.c.h.b16 %v596
        %v2045 = vunpack.c.l.b16 %v597
        %v2046 = vunpack.c.h.b16 %v597
        %v2047 = vunpack.c.l.b16 %v598
        %v2048 = vunpack.c.h.b16 %v598
        %v2049 = vunpack.c.l.b16 %v599
        %v2050 = vunpack.c.h.b16 %v599
        %v2051 = vunpack.c.l.b16 %v600
        %v2052 = vunpack.c.h.b16 %v600
        %v2053 = vunpack.c.l.b16 %v601
        %v2054 = vunpack.c.h.b16 %v601
        %v2055 = vunpack.c.l.b16 %v602
        %v2056 = vunpack.c.h.b16 %v602
        %v2057 = vunpack.c.l.b16 %v603
        %v2058 = vunpack.c.h.b16 %v603
        %v2059 = vunpack.c.l.b16 %v604
        %v2060 = vunpack.c.h.b16 %v604
        %v2061 = vunpack.c.l.b16 %v605
        %v2062 = vunpack.c.h.b16 %v605
        %v2063 = vunpack.c.l.b16 %v606
        %v2064 = vunpack.c.h.b16 %v606
        %v2065 = vunpack.c.l.b16 %v607
        %v2066 = vunpack.c.h.b16 %v607
        %v2067 = vunpack.c.l.b16 %v608
        %v2068 = vunpack.c.h.b16 %v608
        %v2069 = vunpack.c.l.b16 %v609
        %v2070 = vunpack.c.h.b16 %v609
        %v2071 = vunpack.c.l.b16 %v610
        %v2072 = vunpack.c.h.b16 %v610
        %v2073 = vunpack.c.l.b16 %v611
        %v2074 = vunpack.c.h.b16 %v611
        %v2075 = vunpack.c.l.b16 %v612
        %v2076 = vunpack.c.h.b16 %v612
        %v2077 = vunpack.c.l.b16 %v613
        %v2078 = vunpack.c.h.b16 %v613
        %v2079 = vunpack.c.l.b16 %v614
        %v2080 = vunpack.c.h.b16 %v614
        %v2081 = vunpack.c.l.b16 %v615
        %v2082 = vunpack.c.h.b16 %v615
        %v2083 = vunpack.c.l.b16 %v616
        %v2084 = vunpack.c.h.b16 %v616
        %v2085 = vunpack.c.l.b16 %v617
        %v2086 = vunpack.c.h.b16 %v617
        %v2087 = vunpack.c.l.b16 %v618
        %v2088 = vunpack.c.h.b16 %v618
        %v2089 = vunpack.c.l.b16 %v619
        %v2090 = vunpack.c.h.b16 %v619
        %v2091 = vunpack.c.l.b16 %v620
        %v2092 = vunpack.c.h.b16 %v620
        %v2093 = vunpack.c.l.b16 %v621
        %v2094 = vunpack.c.h.b16 %v621
        %v2095 = vunpack.c.l.b16 %v622
        %v2096 = vunpack.c.h.b16 %v622
        %v2097 = vunpack.c.l.b16 %v623
        %v2098 = vunpack.c.h.b16 %v623
        %v2099 = vunpack.c.l.b16 %v624
        %v2100 = vunpack.c.h.b16 %v624
        %v2101 = vunpack.c.l.b16 %v625
        %v2102 = vunpack.c.h.b16 %v625
        %v2103 = vunpack.c.l.b16 %v626
        %v2104 = vunpack.c.h.b16 %v626
        %v2105 = vunpack.c.l.b16 %v627
        %v2106 = vunpack.c.h.b16 %v627
        %v2107 = vunpack.c.l.b16 %v628
        %v2108 = vunpack.c.h.b16 %v628
        %v2109 = vunpack.c.l.b16 %v629
        %v2110 = vunpack.c.h.b16 %v629
        %v2111 = vunpack.c.l.b16 %v630
        %v2112 = vunpack.c.h.b16 %v630
        %v2113 = vunpack.c.l.b16 %v631
        %v2114 = vunpack.c.h.b16 %v631
        %v2115 = vunpack.c.l.b16 %v632
        %v2116 = vunpack.c.h.b16 %v632
        %v2117 = vunpack.c.l.b16 %v633
        %v2118 = vunpack.c.h.b16 %v633
        %v2119 = vunpack.c.l.b16 %v634
        %v2120 = vunpack.c.h.b16 %v634
        %v2121 = vunpack.c.l.b16 %v635
        %v2122 = vunpack.c.h.b16 %v635
        %v2123 = vunpack.c.l.b16 %v636
        %v2124 = vunpack.c.h.b16 %v636
        %v2125 = vunpack.c.l.b16 %v637
        %v2126 = vunpack.c.h.b16 %v637
        %v2127 = vunpack.c.l.b16 %v638
        %v2128 = vunpack.c.h.b16 %v638
        %v2129 = vunpack.c.l.b16 %v639
        %v2130 = vunpack.c.h.b16 %v639
        %v2131 = vunpack.c.l.b16 %v640
        %v2132 = vunpack.c.h.b16 %v640
        %v2133 = vunpack.c.l.b16 %v641
        %v2134 = vunpack.c.h.b16 %v641
        %v2135 = vunpack.c.l.b16 %v642
        %v2136 = vunpack.c.h.b16 %v642
        %v2137 = vunpack.c.l.b16 %v643
        %v2138 = vunpack.c.h.b16 %v643
        %v2139 = vunpack.c.l.b16 %v644
        %v2140 = vunpack.c.h.b16 %v644
        %v2141 = vunpack.c.l.b16 %v645
        %v2142 = vunpack.c.h.b16 %v645
        %v2143 = vunpack.c.l.b16 %v646
        %v2144 = vunpack.c.h.b16 %v646
        %v2145 = vunpack.c.l.b16 %v647
        %v2146 = vunpack.c.h.b16 %v647
        %v2147 = vunpack.c.l.b16 %v648
        %v2148 = vunpack.c.h.b16 %v648
        %v2149 = vunpack.c.l.b16 %v649
        %v2150 = vunpack.c.h.b16 %v649
        %v2151 = vunpack.c.l.b16 %v650
        %v2152 = vunpack.c.h.b16 %v650
        %v2153 = vunpack.c.l.b16 %v651
        %v2154 = vunpack.c.h.b16 %v651
        %v2155 = vunpack.c.l.b16 %v652
        %v2156 = vunpack.c.h.b16 %v652
        %v2157 = vunpack.c.l.b16 %v653
        %v2158 = vunpack.c.h.b16 %v653
        %v2159 = vunpack.c.l.b16 %v654
        %v2160 = vunpack.c.h.b16 %v654
        %v2161 = vunpack.c.l.b16 %v655
        %v2162 = vunpack.c.h.b16 %v655
        %v2163 = vunpack.c.l.b16 %v656
        %v2164 = vunpack.c.h.b16 %v656
        %v2165 = vunpack.c.l.b16 %v657
        %v2166 = vunpack.c.h.b16 %v657
        %v2167 = vunpack.c.l.b16 %v658
        %v2168 = vunpack.c.h.b16 %v658
        %v2169 = vunpack.c.l.b16 %v659
        %v2170 = vunpack.c.h.b16 %v659
        %v2171 = vunpack.c.l.b16 %v660
        %v2172 = vunpack.c.h.b16 %v660
        %v2173 = vunpack.c.l.b16 %v661
        %v2174 = vunpack.c.h.b16 %v661
        %v2175 = vunpack.c.l.b16 %v662
        %v2176 = vunpack.c.h.b16 %v662
        %v2177 = vunpack.c.l.b16 %v663
        %v2178 = vunpack.c.h.b16 %v663
        %v2179 = vunpack.c.l.b16 %v664
        %v2180 = vunpack.c.h.b16 %v664
        %v2181 = vunpack.c.l.b16 %v665
        %v2182 = vunpack.c.h.b16 %v665
        %v2183 = vunpack.c.l.b16 %v666
        %v2184 = vunpack.c.h.b16 %v666
        %v2185 = vunpack.c.l.b16 %v667
        %v2186 = vunpack.c.h.b16 %v667
        %v2187 = vunpack.c.l.b16 %v668
        %v2188 = vunpack.c.h.b16 %v668
        %v2189 = vunpack.c.l.b16 %v669
        %v2190 = vunpack.c.h.b16 %v669
        %v2191 = vunpack.c.l.b16 %v670
        %v2192 = vunpack.c.h.b16 %v670
        %v2193 = vunpack.c.l.b16 %v671
        %v2194 = vunpack.c.h.b16 %v671
        %v2195 = vunpack.c.l.b16 %v672
        %v2196 = vunpack.c.h.b16 %v672
        %v2197 = vunpack.c.l.b16 %v673
        %v2198 = vunpack.c.h.b16 %v673
        %v2199 = vunpack.c.l.b16 %v674
        %v2200 = vunpack.c.h.b16 %v674
        %v2201 = vunpack.c.l.b16 %v675
        %v2202 = vunpack.c.h.b16 %v675
        %v2203 = vunpack.c.l.b16 %v676
        %v2204 = vunpack.c.h.b16 %v676
        %v2205 = vunpack.c.l.b16 %v677
        %v2206 = vunpack.c.h.b16 %v677
        %v2207 = vunpack.c.l.b16 %v678
        %v2208 = vunpack.c.h.b16 %v678
        %v2209 = vunpack.c.l.b16 %v679
        %v2210 = vunpack.c.h.b16 %v679
        %v2211 = vunpack.c.l.b16 %v680
        %v2212 = vunpack.c.h.b16 %v680
        %v2213 = vunpack.c.l.b16 %v681
        %v2214 = vunpack.c.h.b16 %v681
        %v2215 = vunpack.c.l.b16 %v682
        %v2216 = vunpack.c.h.b16 %v682
        %v2217 = vunpack.c.l.b16 %v683
        %v2218 = vunpack.c.h.b16 %v683
        %v2219 = vunpack.c.l.b16 %v684
        %v2220 = vunpack.c.h.b16 %v684
        %v2221 = vunpack.c.l.b16 %v685
        %v2222 = vunpack.c.h.b16 %v685
        %v2223 = vunpack.c.l.b16 %v686
        %v2224 = vunpack.c.h.b16 %v686
        %v2225 = vunpack.c.l.b16 %v687
        %v2226 = vunpack.c.h.b16 %v687
        %v2227 = vunpack.c.l.b16 %v688
        %v2228 = vunpack.c.h.b16 %v688
        %v2229 = vunpack.c.l.b16 %v689
        %v2230 = vunpack.c.h.b16 %v689
        %v2231 = vunpack.c.l.b16 %v690
        %v2232 = vunpack.c.h.b16 %v690
        %v2233 = vunpack.c.l.b16 %v691
        %v2234 = vunpack.c.h.b16 %v691
        %v2235 = vunpack.c.l.b16 %v692
        %v2236 = vunpack.c.h.b16 %v692
        %v2237 = vunpack.c.l.b16 %v693
        %v2238 = vunpack.c.h.b16 %v693
        %v2239 = vunpack.c.l.b16 %v694
        %v2240 = vunpack.c.h.b16 %v694
        %v2241 = vunpack.c.l.b16 %v695
        %v2242 = vunpack.c.h.b16 %v695
        %v2243 = vunpack.c.l.b16 %v696
        %v2244 = vunpack.c.h.b16 %v696
        %v2245 = vunpack.c.l.b16 %v697
        %v2246 = vunpack.c.h.b16 %v697
        %v2247 = vunpack.c.l.b16 %v698
        %v2248 = vunpack.c.h.b16 %v698
        %v2249 = vunpack.c.l.b16 %v699
        %v2250 = vunpack.c.h.b16 %v699
        %v2251 = vunpack.c.l.b16 %v700
        %v2252 = vunpack.c.h.b16 %v700
        %v2253 = vunpack.c.l.b16 %v701
        %v2254 = vunpack.c.h.b16 %v701
        %v2255 = vunpack.c.l.b16 %v702
        %v2256 = vunpack.c.h.b16 %v702
        %v2257 = vunpack.c.l.b16 %v703
        %v2258 = vunpack.c.h.b16 %v703
        %v2259 = vunpack.c.l.b16 %v704
        %v2260 = vunpack.c.h.b16 %v704
        %v2261 = vunpack.c.l.b16 %v705
        %v2262 = vunpack.c.h.b16 %v705
        %v2263 = vunpack.c.l.b16 %v706
        %v2264 = vunpack.c.h.b16 %v706
        %v2265 = vunpack.c.l.b16 %v707
        %v2266 = vunpack.c.h.b16 %v707
        %v2267 = vunpack.c.l.b16 %v708
        %v2268 = vunpack.c.h.b16 %v708
        %v2269 = vunpack.c.l.b16 %v709
        %v2270 = vunpack.c.h.b16 %v709
        %v2271 = vunpack.c.l.b16 %v710
        %v2272 = vunpack.c.h.b16 %v710
        %v2273 = vunpack.c.l.b16 %v711
        %v2274 = vunpack.c.h.b16 %v711
        %v2275 = vunpack.c.l.b16 %v712
        %v2276 = vunpack.c.h.b16 %v712
        %v2277 = vunpack.c.l.b16 %v713
        %v2278 = vunpack.c.h.b16 %v713
        %v2279 = vunpack.c.l.b16 %v714
        %v2280 = vunpack.c.h.b16 %v714
        %v2281 = vunpack.c.l.b16 %v715
        %v2282 = vunpack.c.h.b16 %v715
        %v2283 = vunpack.c.l.b16 %v716
        %v2284 = vunpack.c.h.b16 %v716
        %v2285 = vunpack.c.l.b16 %v717
        %v2286 = vunpack.c.h.b16 %v717
        %v2287 = vunpack.c.l.b16 %v718
        %v2288 = vunpack.c.h.b16 %v718
        %v2289 = vunpack.c.l.b16 %v719
        %v2290 = vunpack.c.h.b16 %v719
        %v2291 = vunpack.c.l.b16 %v720
        %v2292 = vunpack.c.h.b16 %v720
        %v2293 = vunpack.c.l.b16 %v721
        %v2294 = vunpack.c.h.b16 %v721
        %v2295 = vunpack.c.l.b16 %v722
        %v2296 = vunpack.c.h.b16 %v722
        %v2297 = vunpack.c.l.b16 %v723
        %v2298 = vunpack.c.h.b16 %v723
        %v2299 = vunpack.c.l.b16 %v724
        %v2300 = vunpack.c.h.b16 %v724
        %v2301 = vunpack.c.l.b16 %v725
        %v2302 = vunpack.c.h.b16 %v725
        %v2303 = vunpack.c.l.b16 %v726
        %v2304 = vunpack.c.h.b16 %v726
        %v2305 = vunpack.c.l.b16 %v727
        %v2306 = vunpack.c.h.b16 %v727
        %v2307 = vunpack.c.l.b16 %v728
        %v2308 = vunpack.c.h.b16 %v728
        %v2309 = vunpack.c.l.b16 %v729
        %v2310 = vunpack.c.h.b16 %v729
        %v2311 = vunpack.c.l.b16 %v730
        %v2312 = vunpack.c.h.b16 %v730
        %v2313 = vunpack.c.l.b16 %v731
        %v2314 = vunpack.c.h.b16 %v731
        %v2315 = vunpack.c.l.b16 %v732
        %v2316 = vunpack.c.h.b16 %v732
        %v2317 = vunpack.c.l.b16 %v733
        %v2318 = vunpack.c.h.b16 %v733
        %v2319 = vunpack.c.l.b16 %v734
        %v2320 = vunpack.c.h.b16 %v734
        %v2321 = vunpack.c.l.b16 %v735
        %v2322 = vunpack.c.h.b16 %v735
        %v2323 = vunpack.c.l.b16 %v736
        %v2324 = vunpack.c.h.b16 %v736
        %v2325 = vunpack.c.l.b16 %v737
        %v2326 = vunpack.c.h.b16 %v737
        %v2327 = vunpack.c.l.b16 %v738
        %v2328 = vunpack.c.h.b16 %v738
        %v2329 = vunpack.c.l.b16 %v739
        %v2330 = vunpack.c.h.b16 %v739
        %v2331 = vunpack.c.l.b16 %v740
        %v2332 = vunpack.c.h.b16 %v740
        %v2333 = vunpack.c.l.b16 %v741
        %v2334 = vunpack.c.h.b16 %v741
        %v2335 = vunpack.c.l.b16 %v742
        %v2336 = vunpack.c.h.b16 %v742
        %v2337 = vunpack.c.l.b16 %v743
        %v2338 = vunpack.c.h.b16 %v743
        %v2339 = vunpack.c.l.b16 %v744
        %v2340 = vunpack.c.h.b16 %v744
        %v2341 = vunpack.c.l.b16 %v745
        %v2342 = vunpack.c.h.b16 %v745
        %v2343 = vunpack.c.l.b16 %v746
        %v2344 = vunpack.c.h.b16 %v746
        %v2345 = vunpack.c.l.b16 %v747
        %v2346 = vunpack.c.h.b16 %v747
        %v2347 = vunpack.c.l.b16 %v748
        %v2348 = vunpack.c.h.b16 %v748
        %v2349 = vunpack.c.l.b16 %v749
        %v2350 = vunpack.c.h.b16 %v749
        %v2351 = vunpack.c.l.b16 %v750
        %v2352 = vunpack.c.h.b16 %v750
        %v2353 = vunpack.c.l.b16 %v751
        %v2354 = vunpack.c.h.b16 %v751
        %v2355 = vunpack.c.l.b16 %v752
        %v2356 = vunpack.c.h.b16 %v752
        %v2357 = vunpack.c.l.b16 %v753
        %v2358 = vunpack.c.h.b16 %v753
        %v2359 = vunpack.c.l.b16 %v754
        %v2360 = vunpack.c.h.b16 %v754
        %v2361 = vunpack.c.l.b16 %v755
        %v2362 = vunpack.c.h.b16 %v755
        %v2363 = vunpack.c.l.b16 %v756
        %v2364 = vunpack.c.h.b16 %v756
        %v2365 = vunpack.c.l.b16 %v757
        %v2366 = vunpack.c.h.b16 %v757
        %v2367 = vunpack.c.l.b16 %v758
        %v2368 = vunpack.c.h.b16 %v758
        %v2369 = vunpack.c.l.b16 %v759
        %v2370 = vunpack.c.h.b16 %v759
        %v2371 = vunpack.c.l.b16 %v760
        %v2372 = vunpack.c.h.b16 %v760
        %v2373 = vunpack.c.l.b16 %v761
        %v2374 = vunpack.c.h.b16 %v761
        %v2375 = vunpack.c.l.b16 %v762
        %v2376 = vunpack.c.h.b16 %v762
        %v2377 = vunpack.c.l.b16 %v763
        %v2378 = vunpack.c.h.b16 %v763
        %v2379 = vunpack.c.l.b16 %v764
        %v2380 = vunpack.c.h.b16 %v764
        %v2381 = vunpack.c.l.b16 %v765
        %v2382 = vunpack.c.h.b16 %v765
        %v2383 = vunpack.c.l.b16 %v766
        %v2384 = vunpack.c.h.b16 %v766
        %v2385 = vunpack.c.l.b16 %v767
        %v2386 = vunpack.c.h.b16 %v767
        %v2387 = vunpack.c.l.b16 %v768
        %v2388 = vunpack.c.h.b16 %v768
        %v2389 = vunpack.c.l.b16 %v769
        %v2390 = vunpack.c.h.b16 %v769
        %v2391 = vunpack.c.l.b16 %v770
        %v2392 = vunpack.c.h.b16 %v770
        %v2393 = vunpack.c.l.b16 %v771
        %v2394 = vunpack.c.h.b16 %v771
        %v2395 = vunpack.c.l.b16 %v772
        %v2396 = vunpack.c.h.b16 %v772
        %v2397 = vunpack.c.l.b16 %v773
        %v2398 = vunpack.c.h.b16 %v773
        %v2399 = vunpack.c.l.b16 %v774
        %v2400 = vunpack.c.h.b16 %v774
        %v2401 = vunpack.c.l.b16 %v775
        %v2402 = vunpack.c.h.b16 %v775
        %v2403 = vunpack.c.l.b16 %v776
        %v2404 = vunpack.c.h.b16 %v776
        %v2405 = vunpack.c.l.b16 %v777
        %v2406 = vunpack.c.h.b16 %v777
        %v2407 = vunpack.c.l.b16 %v778
        %v2408 = vunpack.c.h.b16 %v778
        %v2409 = vunpack.c.l.b16 %v779
        %v2410 = vunpack.c.h.b16 %v779
        %v2411 = vunpack.c.l.b16 %v780
        %v2412 = vunpack.c.h.b16 %v780
        %v2413 = vunpack.c.l.b16 %v781
        %v2414 = vunpack.c.h.b16 %v781
        %v2415 = vunpack.c.l.b16 %v782
        %v2416 = vunpack.c.h.b16 %v782
        %v2417 = vunpack.c.l.b16 %v783
        %v2418 = vunpack.c.h.b16 %v783
        %v2419 = vunpack.c.l.b16 %v784
        %v2420 = vunpack.c.h.b16 %v784
        %v2421 = vunpack.c.l.b16 %v785
        %v2422 = vunpack.c.h.b16 %v785
        %v2423 = vunpack.c.l.b16 %v786
        %v2424 = vunpack.c.h.b16 %v786
        %v2425 = vunpack.c.l.b16 %v787
        %v2426 = vunpack.c.h.b16 %v787
        %v2427 = vunpack.c.l.b16 %v788
        %v2428 = vunpack.c.h.b16 %v788
        %v2429 = vunpack.c.l.b16 %v789
        %v2430 = vunpack.c.h.b16 %v789
        %v2431 = vunpack.c.l.b16 %v790
        %v2432 = vunpack.c.h.b16 %v790
        %v2433 = vunpack.c.l.b16 %v791
        %v2434 = vunpack.c.h.b16 %v791
        %v2435 = vunpack.c.l.b16 %v792
        %v2436 = vunpack.c.h.b16 %v792
        %v2437 = vunpack.c.l.b16 %v793
        %v2438 = vunpack.c.h.b16 %v793
        %v2439 = vunpack.c.l.b16 %v794
        %v2440 = vunpack.c.h.b16 %v794
        %v2441 = vunpack.c.l.b16 %v795
        %v2442 = vunpack.c.h.b16 %v795
        %v2443 = vunpack.c.l.b16 %v796
        %v2444 = vunpack.c.h.b16 %v796
        %v2445 = vunpack.c.l.b16 %v797
        %v2446 = vunpack.c.h.b16 %v797
        %v2447 = vunpack.c.l.b16 %v798
        %v2448 = vunpack.c.h.b16 %v798
        %v2449 = vunpack.c.l.b16 %v799
        %v2450 = vunpack.c.h.b16 %v799
        %v2451 = vunpack.c.l.b16 %v800
        %v2452 = vunpack.c.h.b16 %v800
        %v2453 = vunpack.c.l.b16 %v801
        %v2454 = vunpack.c.h.b16 %v801
        %v2455 = vunpack.c.l.b16 %v802
        %v2456 = vunpack.c.h.b16 %v802
        %v2457 = vunpack.c.l.b16 %v803
        %v2458 = vunpack.c.h.b16 %v803
        %v2459 = vunpack.c.l.b16 %v804
        %v2460 = vunpack.c.h.b16 %v804
        %v2461 = vunpack.c.l.b16 %v805
        %v2462 = vunpack.c.h.b16 %v805
        %v2463 = vunpack.c.l.b16 %v806
        %v2464 = vunpack.c.h.b16 %v806
        %v2465 = vunpack.c.l.b16 %v807
        %v2466 = vunpack.c.h.b16 %v807
        %v2467 = vunpack.c.l.b16 %v808
        %v2468 = vunpack.c.h.b16 %v808
        %v2469 = vunpack.c.l.b16 %v809
        %v2470 = vunpack.c.h.b16 %v809
        %v2471 = vunpack.c.l.b16 %v810
        %v2472 = vunpack.c.h.b16 %v810
        %v2473 = vunpack.c.l.b16 %v811
        %v2474 = vunpack.c.h.b16 %v811
        %v2475 = vunpack.c.l.b16 %v812
        %v2476 = vunpack.c.h.b16 %v812
        %v2477 = vunpack.c.l.b16 %v813
        %v2478 = vunpack.c.h.b16 %v813
        %v2479 = vunpack.c.l.b16 %v814
        %v2480 = vunpack.c.h.b16 %v814
        %v2481 = vunpack.c.l.b16 %v815
        %v2482 = vunpack.c.h.b16 %v815
        %v2483 = vunpack.c.l.b16 %v816
        %v2484 = vunpack.c.h.b16 %v816
        %v2485 = vunpack.c.l.b16 %v817
        %v2486 = vunpack.c.h.b16 %v817
        %v2487 = vunpack.c.l.b16 %v818
        %v2488 = vunpack.c.h.b16 %v818
        %v2489 = vunpack.c.l.b16 %v819
        %v2490 = vunpack.c.h.b16 %v819
        %v2491 = vunpack.c.l.b16 %v820
        %v2492 = vunpack.c.h.b16 %v820
        %v2493 = vpack.c.b16 %v1473, %v1469
        %v2494 = vpack.c.b16 %v1474, %v1470
        %v2495 = vpack.c.b16 %v1475, %v1471
        %v2496 = vpack.c.b16 %v1476, %v1472
        %v2497 = vpack.c.b16 %v1481, %v1477
        %v2498 = vpack.c.b16 %v1482, %v1478
        %v2499 = vpack.c.b16 %v1483, %v1479
        %v2500 = vpack.c.b16 %v1484, %v1480
        %v2501 = vpack.c.b16 %v1489, %v1485
        %v2502 = vpack.c.b16 %v1490, %v1486
        %v2503 = vpack.c.b16 %v1491, %v1487
        %v2504 = vpack.c.b16 %v1492, %v1488
        %v2505 = vpack.c.b16 %v1497, %v1493
        %v2506 = vpack.c.b16 %v1498, %v1494
        %v2507 = vpack.c.b16 %v1499, %v1495
        %v2508 = vpack.c.b16 %v1500, %v1496
        %v2509 = vpack.c.b16 %v1505, %v1501
        %v2510 = vpack.c.b16 %v1506, %v1502
        %v2511 = vpack.c.b16 %v1507, %v1503
        %v2512 = vpack.c.b16 %v1508, %v1504
        %v2513 = vpack.c.b16 %v1513, %v1509
        %v2514 = vpack.c.b16 %v1514, %v1510
        %v2515 = vpack.c.b16 %v1515, %v1511
        %v2516 = vpack.c.b16 %v1516, %v1512
        %v2517 = vpack.c.b16 %v1521, %v1517
        %v2518 = vpack.c.b16 %v1522, %v1518
        %v2519 = vpack.c.b16 %v1523, %v1519
        %v2520 = vpack.c.b16 %v1524, %v1520
        %v2521 = vpack.c.b16 %v1529, %v1525
        %v2522 = vpack.c.b16 %v1530, %v1526
        %v2523 = vpack.c.b16 %v1531, %v1527
        %v2524 = vpack.c.b16 %v1532, %v1528
        %v2525 = vpack.c.b16 %v1537, %v1533
        %v2526 = vpack.c.b16 %v1538, %v1534
        %v2527 = vpack.c.b16 %v1539, %v1535
        %v2528 = vpack.c.b16 %v1540, %v1536
        %v2529 = vpack.c.b16 %v1545, %v1541
        %v2530 = vpack.c.b16 %v1546, %v1542
        %v2531 = vpack.c.b16 %v1547, %v1543
        %v2532 = vpack.c.b16 %v1548, %v1544
        %v2533 = vpack.c.b16 %v1553, %v1549
        %v2534 = vpack.c.b16 %v1554, %v1550
        %v2535 = vpack.c.b16 %v1555, %v1551
        %v2536 = vpack.c.b16 %v1556, %v1552
        %v2537 = vpack.c.b16 %v1561, %v1557
        %v2538 = vpack.c.b16 %v1562, %v1558
        %v2539 = vpack.c.b16 %v1563, %v1559
        %v2540 = vpack.c.b16 %v1564, %v1560
        %v2541 = vpack.c.b16 %v1569, %v1565
        %v2542 = vpack.c.b16 %v1570, %v1566
        %v2543 = vpack.c.b16 %v1571, %v1567
        %v2544 = vpack.c.b16 %v1572, %v1568
        %v2545 = vpack.c.b16 %v1577, %v1573
        %v2546 = vpack.c.b16 %v1578, %v1574
        %v2547 = vpack.c.b16 %v1579, %v1575
        %v2548 = vpack.c.b16 %v1580, %v1576
        %v2549 = vpack.c.b16 %v1585, %v1581
        %v2550 = vpack.c.b16 %v1586, %v1582
        %v2551 = vpack.c.b16 %v1587, %v1583
        %v2552 = vpack.c.b16 %v1588, %v1584
        %v2553 = vpack.c.b16 %v1593, %v1589
        %v2554 = vpack.c.b16 %v1594, %v1590
        %v2555 = vpack.c.b16 %v1595, %v1591
        %v2556 = vpack.c.b16 %v1596, %v1592
        %v2557 = vpack.c.b16 %v1601, %v1597
        %v2558 = vpack.c.b16 %v1602, %v1598
        %v2559 = vpack.c.b16 %v1603, %v1599
        %v2560 = vpack.c.b16 %v1604, %v1600
        %v2561 = vpack.c.b16 %v1609, %v1605
        %v2562 = vpack.c.b16 %v1610, %v1606
        %v2563 = vpack.c.b16 %v1611, %v1607
        %v2564 = vpack.c.b16 %v1612, %v1608
        %v2565 = vpack.c.b16 %v1617, %v1613
        %v2566 = vpack.c.b16 %v1618, %v1614
        %v2567 = vpack.c.b16 %v1619, %v1615
        %v2568 = vpack.c.b16 %v1620, %v1616
        %v2569 = vpack.c.b16 %v1625, %v1621
        %v2570 = vpack.c.b16 %v1626, %v1622
        %v2571 = vpack.c.b16 %v1627, %v1623
        %v2572 = vpack.c.b16 %v1628, %v1624
        %v2573 = vpack.c.b16 %v1633, %v1629
        %v2574 = vpack.c.b16 %v1634, %v1630
        %v2575 = vpack.c.b16 %v1635, %v1631
        %v2576 = vpack.c.b16 %v1636, %v1632
        %v2577 = vpack.c.b16 %v1641, %v1637
        %v2578 = vpack.c.b16 %v1642, %v1638
        %v2579 = vpack.c.b16 %v1643, %v1639
        %v2580 = vpack.c.b16 %v1644, %v1640
        %v2581 = vpack.c.b16 %v1649, %v1645
        %v2582 = vpack.c.b16 %v1650, %v1646
        %v2583 = vpack.c.b16 %v1651, %v1647
        %v2584 = vpack.c.b16 %v1652, %v1648
        %v2585 = vpack.c.b16 %v1657, %v1653
        %v2586 = vpack.c.b16 %v1658, %v1654
        %v2587 = vpack.c.b16 %v1659, %v1655
        %v2588 = vpack.c.b16 %v1660, %v1656
        %v2589 = vpack.c.b16 %v1665, %v1661
        %v2590 = vpack.c.b16 %v1666, %v1662
        %v2591 = vpack.c.b16 %v1667, %v1663
        %v2592 = vpack.c.b16 %v1668, %v1664
        %v2593 = vpack.c.b16 %v1673, %v1669
        %v2594 = vpack.c.b16 %v1674, %v1670
        %v2595 = vpack.c.b16 %v1675, %v1671
        %v2596 = vpack.c.b16 %v1676, %v1672
        %v2597 = vpack.c.b16 %v1681, %v1677
        %v2598 = vpack.c.b16 %v1682, %v1678
        %v2599 = vpack.c.b16 %v1683, %v1679
        %v2600 = vpack.c.b16 %v1684, %v1680
        %v2601 = vpack.c.b16 %v1689, %v1685
        %v2602 = vpack.c.b16 %v1690, %v1686
        %v2603 = vpack.c.b16 %v1691, %v1687
        %v2604 = vpack.c.b16 %v1692, %v1688
        %v2605 = vpack.c.b16 %v1697, %v1693
        %v2606 = vpack.c.b16 %v1698, %v1694
        %v2607 = vpack.c.b16 %v1699, %v1695
        %v2608 = vpack.c.b16 %v1700, %v1696
        %v2609 = vpack.c.b16 %v1705, %v1701
        %v2610 = vpack.c.b16 %v1706, %v1702
        %v2611 = vpack.c.b16 %v1707, %v1703
        %v2612 = vpack.c.b16 %v1708, %v1704
        %v2613 = vpack.c.b16 %v1713, %v1709
        %v2614 = vpack.c.b16 %v1714, %v1710
        %v2615 = vpack.c.b16 %v1715, %v1711
        %v2616 = vpack.c.b16 %v1716, %v1712
        %v2617 = vpack.c.b16 %v1721, %v1717
        %v2618 = vpack.c.b16 %v1722, %v1718
        %v2619 = vpack.c.b16 %v1723, %v1719
        %v2620 = vpack.c.b16 %v1724, %v1720
        %v2621 = vpack.c.b16 %v1729, %v1725
        %v2622 = vpack.c.b16 %v1730, %v1726
        %v2623 = vpack.c.b16 %v1731, %v1727
        %v2624 = vpack.c.b16 %v1732, %v1728
        %v2625 = vpack.c.b16 %v1737, %v1733
        %v2626 = vpack.c.b16 %v1738, %v1734
        %v2627 = vpack.c.b16 %v1739, %v1735
        %v2628 = vpack.c.b16 %v1740, %v1736
        %v2629 = vpack.c.b16 %v1745, %v1741
        %v2630 = vpack.c.b16 %v1746, %v1742
        %v2631 = vpack.c.b16 %v1747, %v1743
        %v2632 = vpack.c.b16 %v1748, %v1744
        %v2633 = vpack.c.b16 %v1753, %v1749
        %v2634 = vpack.c.b16 %v1754, %v1750
        %v2635 = vpack.c.b16 %v1755, %v1751
        %v2636 = vpack.c.b16 %v1756, %v1752
        %v2637 = vpack.c.b16 %v1761, %v1757
        %v2638 = vpack.c.b16 %v1762, %v1758
        %v2639 = vpack.c.b16 %v1763, %v1759
        %v2640 = vpack.c.b16 %v1764, %v1760
        %v2641 = vpack.c.b16 %v1769, %v1765
        %v2642 = vpack.c.b16 %v1770, %v1766
        %v2643 = vpack.c.b16 %v1771, %v1767
        %v2644 = vpack.c.b16 %v1772, %v1768
        %v2645 = vpack.c.b16 %v1777, %v1773
        %v2646 = vpack.c.b16 %v1778, %v1774
        %v2647 = vpack.c.b16 %v1779, %v1775
        %v2648 = vpack.c.b16 %v1780, %v1776
        %v2649 = vpack.c.b16 %v1785, %v1781
        %v2650 = vpack.c.b16 %v1786, %v1782
        %v2651 = vpack.c.b16 %v1787, %v1783
        %v2652 = vpack.c.b16 %v1788, %v1784
        %v2653 = vpack.c.b16 %v1793, %v1789
        %v2654 = vpack.c.b16 %v1794, %v1790
        %v2655 = vpack.c.b16 %v1795, %v1791
        %v2656 = vpack.c.b16 %v1796, %v1792
        %v2657 = vpack.c.b16 %v1801, %v1797
        %v2658 = vpack.c.b16 %v1802, %v1798
        %v2659 = vpack.c.b16 %v1803, %v1799
        %v2660 = vpack.c.b16 %v1804, %v1800
        %v2661 = vpack.c.b16 %v1809, %v1805
        %v2662 = vpack.c.b16 %v1810, %v1806
        %v2663 = vpack.c.b16 %v1811, %v1807
        %v2664 = vpack.c.b16 %v1812, %v1808
        %v2665 = vpack.c.b16 %v1817, %v1813
        %v2666 = vpack.c.b16 %v1818, %v1814
        %v2667 = vpack.c.b16 %v1819, %v1815
        %v2668 = vpack.c.b16 %v1820, %v1816
        %v2669 = vpack.c.b16 %v1825, %v1821
        %v2670 = vpack.c.b16 %v1826, %v1822
        %v2671 = vpack.c.b16 %v1827, %v1823
        %v2672 = vpack.c.b16 %v1828, %v1824
        %v2673 = vpack.c.b16 %v1833, %v1829
        %v2674 = vpack.c.b16 %v1834, %v1830
        %v2675 = vpack.c.b16 %v1835, %v1831
        %v2676 = vpack.c.b16 %v1836, %v1832
        %v2677 = vpack.c.b16 %v1841, %v1837
        %v2678 = vpack.c.b16 %v1842, %v1838
        %v2679 = vpack.c.b16 %v1843, %v1839
        %v2680 = vpack.c.b16 %v1844, %v1840
        %v2681 = vpack.c.b16 %v1849, %v1845
        %v2682 = vpack.c.b16 %v1850, %v1846
        %v2683 = vpack.c.b16 %v1851, %v1847
        %v2684 = vpack.c.b16 %v1852, %v1848
        %v2685 = vpack.c.b16 %v1857, %v1853
        %v2686 = vpack.c.b16 %v1858, %v1854
        %v2687 = vpack.c.b16 %v1859, %v1855
        %v2688 = vpack.c.b16 %v1860, %v1856
        %v2689 = vpack.c.b16 %v1865, %v1861
        %v2690 = vpack.c.b16 %v1866, %v1862
        %v2691 = vpack.c.b16 %v1867, %v1863
        %v2692 = vpack.c.b16 %v1868, %v1864
        %v2693 = vpack.c.b16 %v1873, %v1869
        %v2694 = vpack.c.b16 %v1874, %v1870
        %v2695 = vpack.c.b16 %v1875, %v1871
        %v2696 = vpack.c.b16 %v1876, %v1872
        %v2697 = vpack.c.b16 %v1881, %v1877
        %v2698 = vpack.c.b16 %v1882, %v1878
        %v2699 = vpack.c.b16 %v1883, %v1879
        %v2700 = vpack.c.b16 %v1884, %v1880
        %v2701 = vpack.c.b16 %v1889, %v1885
        %v2702 = vpack.c.b16 %v1890, %v1886
        %v2703 = vpack.c.b16 %v1891, %v1887
        %v2704 = vpack.c.b16 %v1892, %v1888
        %v2705 = vpack.c.b16 %v1897, %v1893
        %v2706 = vpack.c.b16 %v1898, %v1894
        %v2707 = vpack.c.b16 %v1899, %v1895
        %v2708 = vpack.c.b16 %v1900, %v1896
        %v2709 = vpack.c.b16 %v1905, %v1901
        %v2710 = vpack.c.b16 %v1906, %v1902
        %v2711 = vpack.c.b16 %v1907, %v1903
        %v2712 = vpack.c.b16 %v1908, %v1904
        %v2713 = vpack.c.b16 %v1913, %v1909
        %v2714 = vpack.c.b16 %v1914, %v1910
        %v2715 = vpack.c.b16 %v1915, %v1911
        %v2716 = vpack.c.b16 %v1916, %v1912
        %v2717 = vpack.c.b16 %v1921, %v1917
        %v2718 = vpack.c.b16 %v1922, %v1918
        %v2719 = vpack.c.b16 %v1923, %v1919
        %v2720 = vpack.c.b16 %v1924, %v1920
        %v2721 = vpack.c.b16 %v1929, %v1925
        %v2722 = vpack.c.b16 %v1930, %v1926
        %v2723 = vpack.c.b16 %v1931, %v1927
        %v2724 = vpack.c.b16 %v1932, %v1928
        %v2725 = vpack.c.b16 %v1937, %v1933
        %v2726 = vpack.c.b16 %v1938, %v1934
        %v2727 = vpack.c.b16 %v1939, %v1935
        %v2728 = vpack.c.b16 %v1940, %v1936
        %v2729 = vpack.c.b16 %v1945, %v1941
        %v2730 = vpack.c.b16 %v1946, %v1942
        %v2731 = vpack.c.b16 %v1947, %v1943
        %v2732 = vpack.c.b16 %v1948, %v1944
        %v2733 = vpack.c.b16 %v1953, %v1949
        %v2734 = vpack.c.b16 %v1954, %v1950
        %v2735 = vpack.c.b16 %v1955, %v1951
        %v2736 = vpack.c.b16 %v1956, %v1952
        %v2737 = vpack.c.b16 %v1961, %v1957
        %v2738 = vpack.c.b16 %v1962, %v1958
        %v2739 = vpack.c.b16 %v1963, %v1959
        %v2740 = vpack.c.b16 %v1964, %v1960
        %v2741 = vpack.c.b16 %v1969, %v1965
        %v2742 = vpack.c.b16 %v1970, %v1966
        %v2743 = vpack.c.b16 %v1971, %v1967
        %v2744 = vpack.c.b16 %v1972, %v1968
        %v2745 = vpack.c.b16 %v1977, %v1973
        %v2746 = vpack.c.b16 %v1978, %v1974
        %v2747 = vpack.c.b16 %v1979, %v1975
        %v2748 = vpack.c.b16 %v1980, %v1976
        %v2749 = vpack.c.b16 %v1985, %v1981
        %v2750 = vpack.c.b16 %v1986, %v1982
        %v2751 = vpack.c.b16 %v1987, %v1983
        %v2752 = vpack.c.b16 %v1988, %v1984
        %v2753 = vpack.c.b16 %v1993, %v1989
        %v2754 = vpack.c.b16 %v1994, %v1990
        %v2755 = vpack.c.b16 %v1995, %v1991
        %v2756 = vpack.c.b16 %v1996, %v1992
        %v2757 = vpack.c.b16 %v2001, %v1997
        %v2758 = vpack.c.b16 %v2002, %v1998
        %v2759 = vpack.c.b16 %v2003, %v1999
        %v2760 = vpack.c.b16 %v2004, %v2000
        %v2761 = vpack.c.b16 %v2009, %v2005
        %v2762 = vpack.c.b16 %v2010, %v2006
        %v2763 = vpack.c.b16 %v2011, %v2007
        %v2764 = vpack.c.b16 %v2012, %v2008
        %v2765 = vpack.c.b16 %v2017, %v2013
        %v2766 = vpack.c.b16 %v2018, %v2014
        %v2767 = vpack.c.b16 %v2019, %v2015
        %v2768 = vpack.c.b16 %v2020, %v2016
        %v2769 = vpack.c.b16 %v2025, %v2021
        %v2770 = vpack.c.b16 %v2026, %v2022
        %v2771 = vpack.c.b16 %v2027, %v2023
        %v2772 = vpack.c.b16 %v2028, %v2024
        %v2773 = vpack.c.b16 %v2033, %v2029
        %v2774 = vpack.c.b16 %v2034, %v2030
        %v2775 = vpack.c.b16 %v2035, %v2031
        %v2776 = vpack.c.b16 %v2036, %v2032
        %v2777 = vpack.c.b16 %v2041, %v2037
        %v2778 = vpack.c.b16 %v2042, %v2038
        %v2779 = vpack.c.b16 %v2043, %v2039
        %v2780 = vpack.c.b16 %v2044, %v2040
        %v2781 = vpack.c.b16 %v2049, %v2045
        %v2782 = vpack.c.b16 %v2050, %v2046
        %v2783 = vpack.c.b16 %v2051, %v2047
        %v2784 = vpack.c.b16 %v2052, %v2048
        %v2785 = vpack.c.b16 %v2057, %v2053
        %v2786 = vpack.c.b16 %v2058, %v2054
        %v2787 = vpack.c.b16 %v2059, %v2055
        %v2788 = vpack.c.b16 %v2060, %v2056
        %v2789 = vpack.c.b16 %v2065, %v2061
        %v2790 = vpack.c.b16 %v2066, %v2062
        %v2791 = vpack.c.b16 %v2067, %v2063
        %v2792 = vpack.c.b16 %v2068, %v2064
        %v2793 = vpack.c.b16 %v2073, %v2069
        %v2794 = vpack.c.b16 %v2074, %v2070
        %v2795 = vpack.c.b16 %v2075, %v2071
        %v2796 = vpack.c.b16 %v2076, %v2072
        %v2797 = vpack.c.b16 %v2081, %v2077
        %v2798 = vpack.c.b16 %v2082, %v2078
        %v2799 = vpack.c.b16 %v2083, %v2079
        %v2800 = vpack.c.b16 %v2084, %v2080
        %v2801 = vpack.c.b16 %v2089, %v2085
        %v2802 = vpack.c.b16 %v2090, %v2086
        %v2803 = vpack.c.b16 %v2091, %v2087
        %v2804 = vpack.c.b16 %v2092, %v2088
        %v2805 = vpack.c.b16 %v2097, %v2093
        %v2806 = vpack.c.b16 %v2098, %v2094
        %v2807 = vpack.c.b16 %v2099, %v2095
        %v2808 = vpack.c.b16 %v2100, %v2096
        %v2809 = vpack.c.b16 %v2105, %v2101
        %v2810 = vpack.c.b16 %v2106, %v2102
        %v2811 = vpack.c.b16 %v2107, %v2103
        %v2812 = vpack.c.b16 %v2108, %v2104
        %v2813 = vpack.c.b16 %v2113, %v2109
        %v2814 = vpack.c.b16 %v2114, %v2110
        %v2815 = vpack.c.b16 %v2115, %v2111
        %v2816 = vpack.c.b16 %v2116, %v2112
        %v2817 = vpack.c.b16 %v2121, %v2117
        %v2818 = vpack.c.b16 %v2122, %v2118
        %v2819 = vpack.c.b16 %v2123, %v2119
        %v2820 = vpack.c.b16 %v2124, %v2120
        %v2821 = vpack.c.b16 %v2129, %v2125
        %v2822 = vpack.c.b16 %v2130, %v2126
        %v2823 = vpack.c.b16 %v2131, %v2127
        %v2824 = vpack.c.b16 %v2132, %v2128
        %v2825 = vpack.c.b16 %v2137, %v2133
        %v2826 = vpack.c.b16 %v2138, %v2134
        %v2827 = vpack.c.b16 %v2139, %v2135
        %v2828 = vpack.c.b16 %v2140, %v2136
        %v2829 = vpack.c.b16 %v2145, %v2141
        %v2830 = vpack.c.b16 %v2146, %v2142
        %v2831 = vpack.c.b16 %v2147, %v2143
        %v2832 = vpack.c.b16 %v2148, %v2144
        %v2833 = vpack.c.b16 %v2153, %v2149
        %v2834 = vpack.c.b16 %v2154, %v2150
        %v2835 = vpack.c.b16 %v2155, %v2151
        %v2836 = vpack.c.b16 %v2156, %v2152
        %v2837 = vpack.c.b16 %v2161, %v2157
        %v2838 = vpack.c.b16 %v2162, %v2158
        %v2839 = vpack.c.b16 %v2163, %v2159
        %v2840 = vpack.c.b16 %v2164, %v2160
        %v2841 = vpack.c.b16 %v2169, %v2165
        %v2842 = vpack.c.b16 %v2170, %v2166
        %v2843 = vpack.c.b16 %v2171, %v2167
        %v2844 = vpack.c.b16 %v2172, %v2168
        %v2845 = vpack.c.b16 %v2177, %v2173
        %v2846 = vpack.c.b16 %v2178, %v2174
        %v2847 = vpack.c.b16 %v2179, %v2175
        %v2848 = vpack.c.b16 %v2180, %v2176
        %v2849 = vpack.c.b16 %v2185, %v2181
        %v2850 = vpack.c.b16 %v2186, %v2182
        %v2851 = vpack.c.b16 %v2187, %v2183
        %v2852 = vpack.c.b16 %v2188, %v2184
        %v2853 = vpack.c.b16 %v2193, %v2189
        %v2854 = vpack.c.b16 %v2194, %v2190
        %v2855 = vpack.c.b16 %v2195, %v2191
        %v2856 = vpack.c.b16 %v2196, %v2192
        %v2857 = vpack.c.b16 %v2201, %v2197
        %v2858 = vpack.c.b16 %v2202, %v2198
        %v2859 = vpack.c.b16 %v2203, %v2199
        %v2860 = vpack.c.b16 %v2204, %v2200
        %v2861 = vpack.c.b16 %v2209, %v2205
        %v2862 = vpack.c.b16 %v2210, %v2206
        %v2863 = vpack.c.b16 %v2211, %v2207
        %v2864 = vpack.c.b16 %v2212, %v2208
        %v2865 = vpack.c.b16 %v2217, %v2213
        %v2866 = vpack.c.b16 %v2218, %v2214
        %v2867 = vpack.c.b16 %v2219, %v2215
        %v2868 = vpack.c.b16 %v2220, %v2216
        %v2869 = vpack.c.b16 %v2225, %v2221
        %v2870 = vpack.c.b16 %v2226, %v2222
        %v2871 = vpack.c.b16 %v2227, %v2223
        %v2872 = vpack.c.b16 %v2228, %v2224
        %v2873 = vpack.c.b16 %v2233, %v2229
        %v2874 = vpack.c.b16 %v2234, %v2230
        %v2875 = vpack.c.b16 %v2235, %v2231
        %v2876 = vpack.c.b16 %v2236, %v2232
        %v2877 = vpack.c.b16 %v2241, %v2237
        %v2878 = vpack.c.b16 %v2242, %v2238
        %v2879 = vpack.c.b16 %v2243, %v2239
        %v2880 = vpack.c.b16 %v2244, %v2240
        %v2881 = vpack.c.b16 %v2249, %v2245
        %v2882 = vpack.c.b16 %v2250, %v2246
        %v2883 = vpack.c.b16 %v2251, %v2247
        %v2884 = vpack.c.b16 %v2252, %v2248
        %v2885 = vpack.c.b16 %v2257, %v2253
        %v2886 = vpack.c.b16 %v2258, %v2254
        %v2887 = vpack.c.b16 %v2259, %v2255
        %v2888 = vpack.c.b16 %v2260, %v2256
        %v2889 = vpack.c.b16 %v2265, %v2261
        %v2890 = vpack.c.b16 %v2266, %v2262
        %v2891 = vpack.c.b16 %v2267, %v2263
        %v2892 = vpack.c.b16 %v2268, %v2264
        %v2893 = vpack.c.b16 %v2273, %v2269
        %v2894 = vpack.c.b16 %v2274, %v2270
        %v2895 = vpack.c.b16 %v2275, %v2271
        %v2896 = vpack.c.b16 %v2276, %v2272
        %v2897 = vpack.c.b16 %v2281, %v2277
        %v2898 = vpack.c.b16 %v2282, %v2278
        %v2899 = vpack.c.b16 %v2283, %v2279
        %v2900 = vpack.c.b16 %v2284, %v2280
        %v2901 = vpack.c.b16 %v2289, %v2285
        %v2902 = vpack.c.b16 %v2290, %v2286
        %v2903 = vpack.c.b16 %v2291, %v2287
        %v2904 = vpack.c.b16 %v2292, %v2288
        %v2905 = vpack.c.b16 %v2297, %v2293
        %v2906 = vpack.c.b16 %v2298, %v2294
        %v2907 = vpack.c.b16 %v2299, %v2295
        %v2908 = vpack.c.b16 %v2300, %v2296
        %v2909 = vpack.c.b16 %v2305, %v2301
        %v2910 = vpack.c.b16 %v2306, %v2302
        %v2911 = vpack.c.b16 %v2307, %v2303
        %v2912 = vpack.c.b16 %v2308, %v2304
        %v2913 = vpack.c.b16 %v2313, %v2309
        %v2914 = vpack.c.b16 %v2314, %v2310
        %v2915 = vpack.c.b16 %v2315, %v2311
        %v2916 = vpack.c.b16 %v2316, %v2312
        %v2917 = vpack.c.b16 %v2321, %v2317
        %v2918 = vpack.c.b16 %v2322, %v2318
        %v2919 = vpack.c.b16 %v2323, %v2319
        %v2920 = vpack.c.b16 %v2324, %v2320
        %v2921 = vpack.c.b16 %v2329, %v2325
        %v2922 = vpack.c.b16 %v2330, %v2326
        %v2923 = vpack.c.b16 %v2331, %v2327
        %v2924 = vpack.c.b16 %v2332, %v2328
        %v2925 = vpack.c.b16 %v2337, %v2333
        %v2926 = vpack.c.b16 %v2338, %v2334
        %v2927 = vpack.c.b16 %v2339, %v2335
        %v2928 = vpack.c.b16 %v2340, %v2336
        %v2929 = vpack.c.b16 %v2345, %v2341
        %v2930 = vpack.c.b16 %v2346, %v2342
        %v2931 = vpack.c.b16 %v2347, %v2343
        %v2932 = vpack.c.b16 %v2348, %v2344
        %v2933 = vpack.c.b16 %v2353, %v2349
        %v2934 = vpack.c.b16 %v2354, %v2350
        %v2935 = vpack.c.b16 %v2355, %v2351
        %v2936 = vpack.c.b16 %v2356, %v2352
        %v2937 = vpack.c.b16 %v2361, %v2357
        %v2938 = vpack.c.b16 %v2362, %v2358
        %v2939 = vpack.c.b16 %v2363, %v2359
        %v2940 = vpack.c.b16 %v2364, %v2360
        %v2941 = vpack.c.b16 %v2369, %v2365
        %v2942 = vpack.c.b16 %v2370, %v2366
        %v2943 = vpack.c.b16 %v2371, %v2367
        %v2944 = vpack.c.b16 %v2372, %v2368
        %v2945 = vpack.c.b16 %v2377, %v2373
        %v2946 = vpack.c.b16 %v2378, %v2374
        %v2947 = vpack.c.b16 %v2379, %v2375
        %v2948 = vpack.c.b16 %v2380, %v2376
        %v2949 = vpack.c.b16 %v2385, %v2381
        %v2950 = vpack.c.b16 %v2386, %v2382
        %v2951 = vpack.c.b16 %v2387, %v2383
        %v2952 = vpack.c.b16 %v2388, %v2384
        %v2953 = vpack.c.b16 %v2393, %v2389
        %v2954 = vpack.c.b16 %v2394, %v2390
        %v2955 = vpack.c.b16 %v2395, %v2391
        %v2956 = vpack.c.b16 %v2396, %v2392
        %v2957 = vpack.c.b16 %v2401, %v2397
        %v2958 = vpack.c.b16 %v2402, %v2398
        %v2959 = vpack.c.b16 %v2403, %v2399
        %v2960 = vpack.c.b16 %v2404, %v2400
        %v2961 = vpack.c.b16 %v2409, %v2405
        %v2962 = vpack.c.b16 %v2410, %v2406
        %v2963 = vpack.c.b16 %v2411, %v2407
        %v2964 = vpack.c.b16 %v2412, %v2408
        %v2965 = vpack.c.b16 %v2417, %v2413
        %v2966 = vpack.c.b16 %v2418, %v2414
        %v2967 = vpack.c.b16 %v2419, %v2415
        %v2968 = vpack.c.b16 %v2420, %v2416
        %v2969 = vpack.c.b16 %v2425, %v2421
        %v2970 = vpack.c.b16 %v2426, %v2422
        %v2971 = vpack.c.b16 %v2427, %v2423
        %v2972 = vpack.c.b16 %v2428, %v2424
        %v2973 = vpack.c.b16 %v2433, %v2429
        %v2974 = vpack.c.b16 %v2434, %v2430
        %v2975 = vpack.c.b16 %v2435, %v2431
        %v2976 = vpack.c.b16 %v2436, %v2432
        %v2977 = vpack.c.b16 %v2441, %v2437
        %v2978 = vpack.c.b16 %v2442, %v2438
        %v2979 = vpack.c.b16 %v2443, %v2439
        %v2980 = vpack.c.b16 %v2444, %v2440
        %v2981 = vpack.c.b16 %v2449, %v2445
        %v2982 = vpack.c.b16 %v2450, %v2446
        %v2983 = vpack.c.b16 %v2451, %v2447
        %v2984 = vpack.c.b16 %v2452, %v2448
        %v2985 = vpack.c.b16 %v2457, %v2453
        %v2986 = vpack.c.b16 %v2458, %v2454
        %v2987 = vpack.c.b16 %v2459, %v2455
        %v2988 = vpack.c.b16 %v2460, %v2456
        %v2989 = vpack.c.b16 %v2465, %v2461
        %v2990 = vpack.c.b16 %v2466, %v2462
        %v2991 = vpack.c.b16 %v2467, %v2463
        %v2992 = vpack.c.b16 %v2468, %v2464
        %v2993 = vpack.c.b16 %v2473, %v2469
        %v2994 = vpack.c.b16 %v2474, %v2470
        %v2995 = vpack.c.b16 %v2475, %v2471
        %v2996 = vpack.c.b16 %v2476, %v2472
        %v2997 = vpack.c.b16 %v2481, %v2477
        %v2998 = vpack.c.b16 %v2482, %v2478
        %v2999 = vpack.c.b16 %v2483, %v2479
        %v3000 = vpack.c.b16 %v2484, %v2480
        %v3001 = vpack.c.b16 %v2489, %v2485
        %v3002 = vpack.c.b16 %v2490, %v2486
        %v3003 = vpack.c.b16 %v2491, %v2487
        %v3004 = vpack.c.b16 %v2492, %v2488
        %3517 = vmatprep.subr.bf16.mxu0 %v2494
        %3518 = vmatpush1.bf16.msra.mxu0 %v2493
        %3519 = vmatprep.subr.bf16.mxu0 %v2498
        %3520 = vmatpush1.bf16.msra.mxu0 %v2497
        %3521 = vmatprep.subr.bf16.mxu0 %v2502
        %3522 = vmatpush1.bf16.msra.mxu0 %v2501
        %3523 = vmatprep.subr.bf16.mxu0 %v2506
        %3524 = vmatpush1.bf16.msra.mxu0 %v2505
        %3525 = vmatprep.subr.bf16.mxu0 %v2510
        %3526 = vmatpush1.bf16.msra.mxu0 %v2509
        %3527 = vmatprep.subr.bf16.mxu0 %v2514
        %3528 = vmatpush1.bf16.msra.mxu0 %v2513
        %3529 = vmatprep.subr.bf16.mxu0 %v2518
        %3530 = vmatpush1.bf16.msra.mxu0 %v2517
        %3531 = vmatprep.subr.bf16.mxu0 %v2522
        %3532 = vmatpush1.bf16.msra.mxu0 %v2521
        %3533 = vmatprep.subr.bf16.mxu0 %v2526
        %3534 = vmatpush1.bf16.msra.mxu0 %v2525
        %3535 = vmatprep.subr.bf16.mxu0 %v2530
        %3536 = vmatpush1.bf16.msra.mxu0 %v2529
        %3537 = vmatprep.subr.bf16.mxu0 %v2534
        %3538 = vmatpush1.bf16.msra.mxu0 %v2533
        %3539 = vmatprep.subr.bf16.mxu0 %v2538
        %3540 = vmatpush1.bf16.msra.mxu0 %v2537
        %3541 = vmatprep.subr.bf16.mxu0 %v2542
        %3542 = vmatpush1.bf16.msra.mxu0 %v2541
        %3543 = vmatprep.subr.bf16.mxu0 %v2546
        %3544 = vmatpush1.bf16.msra.mxu0 %v2545
        %3545 = vmatprep.subr.bf16.mxu0 %v2550
        %3546 = vmatpush1.bf16.msra.mxu0 %v2549
        %3547 = vmatprep.subr.bf16.mxu0 %v2554
        %3548 = vmatpush1.bf16.msra.mxu0 %v2553
        %3549 = vmatprep.mubr.bf16.mxu0 %v894
        %3550 = vmatmul.mubr.bf16.gmra.mrb[0].mxu0 %v893
        %v3551 = vpop.f32.mrb[0].mxu0
        %v3552 = vadd.f32 0.0, %v3551
        %v3553 = vpop.f32.mrb[0].mxu0
        %v3554 = vadd.f32 0.0, %v3553
        %v3555 = vpop.f32.mrb[0].mxu0
        %v3556 = vadd.f32 0.0, %v3555
        %v3557 = vpop.f32.mrb[0].mxu0
        %v3558 = vadd.f32 0.0, %v3557
        %3559 = vmatprep.mubr.bf16.mxu0 %v910
        %3560 = vmatmul.mubr.bf16.gmra.mrb[0].mxu0 %v909
        %v3561 = vpop.f32.mrb[0].mxu0
        %v3562 = vadd.f32 0.0, %v3561
        %v3563 = vpop.f32.mrb[0].mxu0
        %v3564 = vadd.f32 0.0, %v3563
        %v3565 = vpop.f32.mrb[0].mxu0
        %v3566 = vpop.f32.mrb[0].mxu0
        %3567 = vdwg.mxu0
        %3568 = vmatprep.subr.bf16.mxu0 %v2558
        %3569 = vmatpush1.bf16.msra.mxu0 %v2557
        %3570 = vmatprep.subr.bf16.mxu0 %v2562
        %3571 = vmatpush1.bf16.msra.mxu0 %v2561
        %3572 = vmatprep.subr.bf16.mxu0 %v2566
        %3573 = vmatpush1.bf16.msra.mxu0 %v2565
        %3574 = vmatprep.subr.bf16.mxu0 %v2570
        %3575 = vmatpush1.bf16.msra.mxu0 %v2569
        %3576 = vmatprep.subr.bf16.mxu0 %v2574
        %3577 = vmatpush1.bf16.msra.mxu0 %v2573
        %3578 = vmatprep.subr.bf16.mxu0 %v2578
        %3579 = vmatpush1.bf16.msra.mxu0 %v2577
        %3580 = vmatprep.subr.bf16.mxu0 %v2582
        %3581 = vmatpush1.bf16.msra.mxu0 %v2581
        %3582 = vmatprep.subr.bf16.mxu0 %v2586
        %3583 = vmatpush1.bf16.msra.mxu0 %v2585
        %3584 = vmatprep.subr.bf16.mxu0 %v2590
        %3585 = vmatpush1.bf16.msra.mxu0 %v2589
        %3586 = vmatprep.subr.bf16.mxu0 %v2594
        %3587 = vmatpush1.bf16.msra.mxu0 %v2593
        %3588 = vmatprep.subr.bf16.mxu0 %v2598
        %3589 = vmatpush1.bf16.msra.mxu0 %v2597
        %3590 = vmatprep.subr.bf16.mxu0 %v2602
        %3591 = vmatpush1.bf16.msra.mxu0 %v2601
        %3592 = vmatprep.subr.bf16.mxu0 %v2606
        %3593 = vmatpush1.bf16.msra.mxu0 %v2605
        %3594 = vmatprep.subr.bf16.mxu0 %v2610
        %3595 = vmatpush1.bf16.msra.mxu0 %v2609
        %3596 = vmatprep.subr.bf16.mxu0 %v2614
        %3597 = vmatpush1.bf16.msra.mxu0 %v2613
        %3598 = vmatprep.subr.bf16.mxu0 %v2618
        %3599 = vmatpush1.bf16.msra.mxu0 %v2617
        %3600 = vmatprep.mubr.bf16.mxu0 %v896
        %3601 = vmatmul.mubr.bf16.gmra.mrb[0].mxu0 %v895
        %v3602 = vpop.f32.mrb[0].mxu0
        %v3603 = vadd.f32 %v3552, %v3602
        %v3604 = vpop.f32.mrb[0].mxu0
        %v3605 = vadd.f32 %v3554, %v3604
        %v3606 = vpop.f32.mrb[0].mxu0
        %v3607 = vadd.f32 %v3556, %v3606
        %v3608 = vpop.f32.mrb[0].mxu0
        %v3609 = vadd.f32 %v3558, %v3608
        %3610 = vmatprep.mubr.bf16.mxu0 %v912
        %3611 = vmatmul.mubr.bf16.gmra.mrb[0].mxu0 %v911
        %v3612 = vpop.f32.mrb[0].mxu0
        %v3613 = vadd.f32 %v3562, %v3612
        %v3614 = vpop.f32.mrb[0].mxu0
        %v3615 = vadd.f32 %v3564, %v3614
        %v3616 = vpop.f32.mrb[0].mxu0
        %v3617 = vpop.f32.mrb[0].mxu0
        %3618 = vdwg.mxu0
        %3619 = vmatprep.subr.bf16.mxu0 %v2622
        %3620 = vmatpush1.bf16.msra.mxu0 %v2621
        %3621 = vmatprep.subr.bf16.mxu0 %v2626
        %3622 = vmatpush1.bf16.msra.mxu0 %v2625
        %3623 = vmatprep.subr.bf16.mxu0 %v2630
        %3624 = vmatpush1.bf16.msra.mxu0 %v2629
        %3625 = vmatprep.subr.bf16.mxu0 %v2634
        %3626 = vmatpush1.bf16.msra.mxu0 %v2633
        %3627 = vmatprep.subr.bf16.mxu0 %v2638
        %3628 = vmatpush1.bf16.msra.mxu0 %v2637
        %3629 = vmatprep.subr.bf16.mxu0 %v2642
        %3630 = vmatpush1.bf16.msra.mxu0 %v2641
        %3631 = vmatprep.subr.bf16.mxu0 %v2646
        %3632 = vmatpush1.bf16.msra.mxu0 %v2645
        %3633 = vmatprep.subr.bf16.mxu0 %v2650
        %3634 = vmatpush1.bf16.msra.mxu0 %v2649
        %3635 = vmatprep.subr.bf16.mxu0 %v2654
        %3636 = vmatpush1.bf16.msra.mxu0 %v2653
        %3637 = vmatprep.subr.bf16.mxu0 %v2658
        %3638 = vmatpush1.bf16.msra.mxu0 %v2657
        %3639 = vmatprep.subr.bf16.mxu0 %v2662
        %3640 = vmatpush1.bf16.msra.mxu0 %v2661
        %3641 = vmatprep.subr.bf16.mxu0 %v2666
        %3642 = vmatpush1.bf16.msra.mxu0 %v2665
        %3643 = vmatprep.subr.bf16.mxu0 %v2670
        %3644 = vmatpush1.bf16.msra.mxu0 %v2669
        %3645 = vmatprep.subr.bf16.mxu0 %v2674
        %3646 = vmatpush1.bf16.msra.mxu0 %v2673
        %3647 = vmatprep.subr.bf16.mxu0 %v2678
        %3648 = vmatpush1.bf16.msra.mxu0 %v2677
        %3649 = vmatprep.subr.bf16.mxu0 %v2682
        %3650 = vmatpush1.bf16.msra.mxu0 %v2681
        %3651 = vmatprep.mubr.bf16.mxu0 %v898
        %3652 = vmatmul.mubr.bf16.gmra.mrb[0].mxu0 %v897
        %v3653 = vpop.f32.mrb[0].mxu0
        %v3654 = vadd.f32 %v3603, %v3653
        %v3655 = vpop.f32.mrb[0].mxu0
        %v3656 = vadd.f32 %v3605, %v3655
        %v3657 = vpop.f32.mrb[0].mxu0
        %v3658 = vadd.f32 %v3607, %v3657
        %v3659 = vpop.f32.mrb[0].mxu0
        %v3660 = vadd.f32 %v3609, %v3659
        %3661 = vmatprep.mubr.bf16.mxu0 %v914
        %3662 = vmatmul.mubr.bf16.gmra.mrb[0].mxu0 %v913
        %v3663 = vpop.f32.mrb[0].mxu0
        %v3664 = vadd.f32 %v3613, %v3663
        %v3665 = vpop.f32.mrb[0].mxu0
        %v3666 = vadd.f32 %v3615, %v3665
        %v3667 = vpop.f32.mrb[0].mxu0
        %v3668 = vpop.f32.mrb[0].mxu0
        %3669 = vdwg.mxu0
        %3670 = vmatprep.subr.bf16.mxu0 %v2686
        %3671 = vmatpush1.bf16.msra.mxu0 %v2685
        %3672 = vmatprep.subr.bf16.mxu0 %v2690
        %3673 = vmatpush1.bf16.msra.mxu0 %v2689
        %3674 = vmatprep.subr.bf16.mxu0 %v2694
        %3675 = vmatpush1.bf16.msra.mxu0 %v2693
        %3676 = vmatprep.subr.bf16.mxu0 %v2698
        %3677 = vmatpush1.bf16.msra.mxu0 %v2697
        %3678 = vmatprep.subr.bf16.mxu0 %v2702
        %3679 = vmatpush1.bf16.msra.mxu0 %v2701
        %3680 = vmatprep.subr.bf16.mxu0 %v2706
        %3681 = vmatpush1.bf16.msra.mxu0 %v2705
        %3682 = vmatprep.subr.bf16.mxu0 %v2710
        %3683 = vmatpush1.bf16.msra.mxu0 %v2709
        %3684 = vmatprep.subr.bf16.mxu0 %v2714
        %3685 = vmatpush1.bf16.msra.mxu0 %v2713
        %3686 = vmatprep.subr.bf16.mxu0 %v2718
        %3687 = vmatpush1.bf16.msra.mxu0 %v2717
        %3688 = vmatprep.subr.bf16.mxu0 %v2722
        %3689 = vmatpush1.bf16.msra.mxu0 %v2721
        %3690 = vmatprep.subr.bf16.mxu0 %v2726
        %3691 = vmatpush1.bf16.msra.mxu0 %v2725
        %3692 = vmatprep.subr.bf16.mxu0 %v2730
        %3693 = vmatpush1.bf16.msra.mxu0 %v2729
        %3694 = vmatprep.subr.bf16.mxu0 %v2734
        %3695 = vmatpush1.bf16.msra.mxu0 %v2733
        %3696 = vmatprep.subr.bf16.mxu0 %v2738
        %3697 = vmatpush1.bf16.msra.mxu0 %v2737
        %3698 = vmatprep.subr.bf16.mxu0 %v2742
        %3699 = vmatpush1.bf16.msra.mxu0 %v2741
        %3700 = vmatprep.subr.bf16.mxu0 %v2746
        %3701 = vmatpush1.bf16.msra.mxu0 %v2745
        %3702 = vmatprep.mubr.bf16.mxu0 %v900
        %3703 = vmatmul.mubr.bf16.gmra.mrb[0].mxu0 %v899
        %v3704 = vpop.f32.mrb[0].mxu0
        %v3705 = vadd.f32 %v3654, %v3704
        %v3706 = vpop.f32.mrb[0].mxu0
        %v3707 = vadd.f32 %v3656, %v3706
        %v3708 = vpop.f32.mrb[0].mxu0
        %v3709 = vadd.f32 %v3658, %v3708
        %v3710 = vpop.f32.mrb[0].mxu0
        %v3711 = vadd.f32 %v3660, %v3710
        %3712 = vmatprep.mubr.bf16.mxu0 %v916
        %3713 = vmatmul.mubr.bf16.gmra.mrb[0].mxu0 %v915
        %v3714 = vpop.f32.mrb[0].mxu0
        %v3715 = vadd.f32 %v3664, %v3714
        %v3716 = vpop.f32.mrb[0].mxu0
        %v3717 = vadd.f32 %v3666, %v3716
        %v3718 = vpop.f32.mrb[0].mxu0
        %v3719 = vpop.f32.mrb[0].mxu0
        %3720 = vdwg.mxu0
        %3721 = vmatprep.subr.bf16.mxu0 %v2750
        %3722 = vmatpush1.bf16.msra.mxu0 %v2749
        %3723 = vmatprep.subr.bf16.mxu0 %v2754
        %3724 = vmatpush1.bf16.msra.mxu0 %v2753
        %3725 = vmatprep.subr.bf16.mxu0 %v2758
        %3726 = vmatpush1.bf16.msra.mxu0 %v2757
        %3727 = vmatprep.subr.bf16.mxu0 %v2762
        %3728 = vmatpush1.bf16.msra.mxu0 %v2761
        %3729 = vmatprep.subr.bf16.mxu0 %v2766
        %3730 = vmatpush1.bf16.msra.mxu0 %v2765
        %3731 = vmatprep.subr.bf16.mxu0 %v2770
        %3732 = vmatpush1.bf16.msra.mxu0 %v2769
        %3733 = vmatprep.subr.bf16.mxu0 %v2774
        %3734 = vmatpush1.bf16.msra.mxu0 %v2773
        %3735 = vmatprep.subr.bf16.mxu0 %v2778
        %3736 = vmatpush1.bf16.msra.mxu0 %v2777
        %3737 = vmatprep.subr.bf16.mxu0 %v2782
        %3738 = vmatpush1.bf16.msra.mxu0 %v2781
        %3739 = vmatprep.subr.bf16.mxu0 %v2786
        %3740 = vmatpush1.bf16.msra.mxu0 %v2785
        %3741 = vmatprep.subr.bf16.mxu0 %v2790
        %3742 = vmatpush1.bf16.msra.mxu0 %v2789
        %3743 = vmatprep.subr.bf16.mxu0 %v2794
        %3744 = vmatpush1.bf16.msra.mxu0 %v2793
        %3745 = vmatprep.subr.bf16.mxu0 %v2798
        %3746 = vmatpush1.bf16.msra.mxu0 %v2797
        %3747 = vmatprep.subr.bf16.mxu0 %v2802
        %3748 = vmatpush1.bf16.msra.mxu0 %v2801
        %3749 = vmatprep.subr.bf16.mxu0 %v2806
        %3750 = vmatpush1.bf16.msra.mxu0 %v2805
        %3751 = vmatprep.subr.bf16.mxu0 %v2810
        %3752 = vmatpush1.bf16.msra.mxu0 %v2809
        %3753 = vmatprep.mubr.bf16.mxu0 %v902
        %3754 = vmatmul.mubr.bf16.gmra.mrb[0].mxu0 %v901
        %v3755 = vpop.f32.mrb[0].mxu0
        %v3756 = vadd.f32 %v3705, %v3755
        %v3757 = vpop.f32.mrb[0].mxu0
        %v3758 = vadd.f32 %v3707, %v3757
        %v3759 = vpop.f32.mrb[0].mxu0
        %v3760 = vadd.f32 %v3709, %v3759
        %v3761 = vpop.f32.mrb[0].mxu0
        %v3762 = vadd.f32 %v3711, %v3761
        %3763 = vmatprep.mubr.bf16.mxu0 %v918
        %3764 = vmatmul.mubr.bf16.gmra.mrb[0].mxu0 %v917
        %v3765 = vpop.f32.mrb[0].mxu0
        %v3766 = vadd.f32 %v3715, %v3765
        %v3767 = vpop.f32.mrb[0].mxu0
        %v3768 = vadd.f32 %v3717, %v3767
        %v3769 = vpop.f32.mrb[0].mxu0
        %v3770 = vpop.f32.mrb[0].mxu0
        %3771 = vdwg.mxu0
        %3772 = vmatprep.subr.bf16.mxu0 %v2814
        %3773 = vmatpush1.bf16.msra.mxu0 %v2813
        %3774 = vmatprep.subr.bf16.mxu0 %v2818
        %3775 = vmatpush1.bf16.msra.mxu0 %v2817
        %3776 = vmatprep.subr.bf16.mxu0 %v2822
        %3777 = vmatpush1.bf16.msra.mxu0 %v2821
        %3778 = vmatprep.subr.bf16.mxu0 %v2826
        %3779 = vmatpush1.bf16.msra.mxu0 %v2825
        %3780 = vmatprep.subr.bf16.mxu0 %v2830
        %3781 = vmatpush1.bf16.msra.mxu0 %v2829
        %3782 = vmatprep.subr.bf16.mxu0 %v2834
        %3783 = vmatpush1.bf16.msra.mxu0 %v2833
        %3784 = vmatprep.subr.bf16.mxu0 %v2838
        %3785 = vmatpush1.bf16.msra.mxu0 %v2837
        %3786 = vmatprep.subr.bf16.mxu0 %v2842
        %3787 = vmatpush1.bf16.msra.mxu0 %v2841
        %3788 = vmatprep.subr.bf16.mxu0 %v2846
        %3789 = vmatpush1.bf16.msra.mxu0 %v2845
        %3790 = vmatprep.subr.bf16.mxu0 %v2850
        %3791 = vmatpush1.bf16.msra.mxu0 %v2849
        %3792 = vmatprep.subr.bf16.mxu0 %v2854
        %3793 = vmatpush1.bf16.msra.mxu0 %v2853
        %3794 = vmatprep.subr.bf16.mxu0 %v2858
        %3795 = vmatpush1.bf16.msra.mxu0 %v2857
        %3796 = vmatprep.subr.bf16.mxu0 %v2862
        %3797 = vmatpush1.bf16.msra.mxu0 %v2861
        %3798 = vmatprep.subr.bf16.mxu0 %v2866
        %3799 = vmatpush1.bf16.msra.mxu0 %v2865
        %3800 = vmatprep.subr.bf16.mxu0 %v2870
        %3801 = vmatpush1.bf16.msra.mxu0 %v2869
        %3802 = vmatprep.subr.bf16.mxu0 %v2874
        %3803 = vmatpush1.bf16.msra.mxu0 %v2873
        %3804 = vmatprep.mubr.bf16.mxu0 %v904
        %3805 = vmatmul.mubr.bf16.gmra.mrb[0].mxu0 %v903
        %v3806 = vpop.f32.mrb[0].mxu0
        %v3807 = vadd.f32 %v3756, %v3806
        %v3808 = vpop.f32.mrb[0].mxu0
        %v3809 = vadd.f32 %v3758, %v3808
        %v3810 = vpop.f32.mrb[0].mxu0
        %v3811 = vadd.f32 %v3760, %v3810
        %v3812 = vpop.f32.mrb[0].mxu0
        %v3813 = vadd.f32 %v3762, %v3812
        %3814 = vmatprep.mubr.bf16.mxu0 %v920
        %3815 = vmatmul.mubr.bf16.gmra.mrb[0].mxu0 %v919
        %v3816 = vpop.f32.mrb[0].mxu0
        %v3817 = vadd.f32 %v3766, %v3816
        %v3818 = vpop.f32.mrb[0].mxu0
        %v3819 = vadd.f32 %v3768, %v3818
        %v3820 = vpop.f32.mrb[0].mxu0
        %v3821 = vpop.f32.mrb[0].mxu0
        %3822 = vdwg.mxu0
        %3823 = vmatprep.subr.bf16.mxu0 %v2878
        %3824 = vmatpush1.bf16.msra.mxu0 %v2877
        %3825 = vmatprep.subr.bf16.mxu0 %v2882
        %3826 = vmatpush1.bf16.msra.mxu0 %v2881
        %3827 = vmatprep.subr.bf16.mxu0 %v2886
        %3828 = vmatpush1.bf16.msra.mxu0 %v2885
        %3829 = vmatprep.subr.bf16.mxu0 %v2890
        %3830 = vmatpush1.bf16.msra.mxu0 %v2889
        %3831 = vmatprep.subr.bf16.mxu0 %v2894
        %3832 = vmatpush1.bf16.msra.mxu0 %v2893
        %3833 = vmatprep.subr.bf16.mxu0 %v2898
        %3834 = vmatpush1.bf16.msra.mxu0 %v2897
        %3835 = vmatprep.subr.bf16.mxu0 %v2902
        %3836 = vmatpush1.bf16.msra.mxu0 %v2901
        %3837 = vmatprep.subr.bf16.mxu0 %v2906
        %3838 = vmatpush1.bf16.msra.mxu0 %v2905
        %3839 = vmatprep.subr.bf16.mxu0 %v2910
        %3840 = vmatpush1.bf16.msra.mxu0 %v2909
        %3841 = vmatprep.subr.bf16.mxu0 %v2914
        %3842 = vmatpush1.bf16.msra.mxu0 %v2913
        %3843 = vmatprep.subr.bf16.mxu0 %v2918
        %3844 = vmatpush1.bf16.msra.mxu0 %v2917
        %3845 = vmatprep.subr.bf16.mxu0 %v2922
        %3846 = vmatpush1.bf16.msra.mxu0 %v2921
        %3847 = vmatprep.subr.bf16.mxu0 %v2926
        %3848 = vmatpush1.bf16.msra.mxu0 %v2925
        %3849 = vmatprep.subr.bf16.mxu0 %v2930
        %3850 = vmatpush1.bf16.msra.mxu0 %v2929
        %3851 = vmatprep.subr.bf16.mxu0 %v2934
        %3852 = vmatpush1.bf16.msra.mxu0 %v2933
        %3853 = vmatprep.subr.bf16.mxu0 %v2938
        %3854 = vmatpush1.bf16.msra.mxu0 %v2937
        %3855 = vmatprep.mubr.bf16.mxu0 %v906
        %3856 = vmatmul.mubr.bf16.gmra.mrb[0].mxu0 %v905
        %v3857 = vpop.f32.mrb[0].mxu0
        %v3858 = vadd.f32 %v3807, %v3857
        %v3859 = vpop.f32.mrb[0].mxu0
        %v3860 = vadd.f32 %v3809, %v3859
        %v3861 = vpop.f32.mrb[0].mxu0
        %v3862 = vadd.f32 %v3811, %v3861
        %v3863 = vpop.f32.mrb[0].mxu0
        %v3864 = vadd.f32 %v3813, %v3863
        %3865 = vmatprep.mubr.bf16.mxu0 %v922
        %3866 = vmatmul.mubr.bf16.gmra.mrb[0].mxu0 %v921
        %v3867 = vpop.f32.mrb[0].mxu0
        %v3868 = vadd.f32 %v3817, %v3867
        %v3869 = vpop.f32.mrb[0].mxu0
        %v3870 = vadd.f32 %v3819, %v3869
        %v3871 = vpop.f32.mrb[0].mxu0
        %v3872 = vpop.f32.mrb[0].mxu0
        %3873 = vdwg.mxu0
        %3874 = vmatprep.subr.bf16.mxu0 %v2942
        %3875 = vmatpush1.bf16.msra.mxu0 %v2941
        %3876 = vmatprep.subr.bf16.mxu0 %v2946
        %3877 = vmatpush1.bf16.msra.mxu0 %v2945
        %3878 = vmatprep.subr.bf16.mxu0 %v2950
        %3879 = vmatpush1.bf16.msra.mxu0 %v2949
        %3880 = vmatprep.subr.bf16.mxu0 %v2954
        %3881 = vmatpush1.bf16.msra.mxu0 %v2953
        %3882 = vmatprep.subr.bf16.mxu0 %v2958
        %3883 = vmatpush1.bf16.msra.mxu0 %v2957
        %3884 = vmatprep.subr.bf16.mxu0 %v2962
        %3885 = vmatpush1.bf16.msra.mxu0 %v2961
        %3886 = vmatprep.subr.bf16.mxu0 %v2966
        %3887 = vmatpush1.bf16.msra.mxu0 %v2965
        %3888 = vmatprep.subr.bf16.mxu0 %v2970
        %3889 = vmatpush1.bf16.msra.mxu0 %v2969
        %3890 = vmatprep.subr.bf16.mxu0 %v2974
        %3891 = vmatpush1.bf16.msra.mxu0 %v2973
        %3892 = vmatprep.subr.bf16.mxu0 %v2978
        %3893 = vmatpush1.bf16.msra.mxu0 %v2977
        %3894 = vmatprep.subr.bf16.mxu0 %v2982
        %3895 = vmatpush1.bf16.msra.mxu0 %v2981
        %3896 = vmatprep.subr.bf16.mxu0 %v2986
        %3897 = vmatpush1.bf16.msra.mxu0 %v2985
        %3898 = vmatprep.subr.bf16.mxu0 %v2990
        %3899 = vmatpush1.bf16.msra.mxu0 %v2989
        %3900 = vmatprep.subr.bf16.mxu0 %v2994
        %3901 = vmatpush1.bf16.msra.mxu0 %v2993
        %3902 = vmatprep.subr.bf16.mxu0 %v2998
        %3903 = vmatpush1.bf16.msra.mxu0 %v2997
        %3904 = vmatprep.subr.bf16.mxu0 %v3002
        %3905 = vmatpush1.bf16.msra.mxu0 %v3001
        %3906 = vmatprep.mubr.bf16.mxu0 %v908
        %3907 = vmatmul.mubr.bf16.gmra.mrb[0].mxu0 %v907
        %v3908 = vpop.f32.mrb[0].mxu0
        %v3909 = vadd.f32 %v3858, %v3908
        %v3910 = vpop.f32.mrb[0].mxu0
        %v3911 = vadd.f32 %v3860, %v3910
        %v3912 = vpop.f32.mrb[0].mxu0
        %v3913 = vadd.f32 %v3862, %v3912
        %v3914 = vpop.f32.mrb[0].mxu0
        %v3915 = vadd.f32 %v3864, %v3914
        %3916 = vmatprep.mubr.bf16.mxu0 %v924
        %3917 = vmatmul.mubr.bf16.gmra.mrb[0].mxu0 %v923
        %v3918 = vpop.f32.mrb[0].mxu0
        %v3919 = vadd.f32 %v3868, %v3918
        %v3920 = vpop.f32.mrb[0].mxu0
        %v3921 = vadd.f32 %v3870, %v3920
        %v3922 = vpop.f32.mrb[0].mxu0
        %v3923 = vpop.f32.mrb[0].mxu0
        %3924 = vdwg.mxu0
        %3925 = vmatprep.subr.bf16.mxu0 %v2496
        %3926 = vmatpush1.bf16.msra.mxu0 %v2495
        %3927 = vmatprep.subr.bf16.mxu0 %v2500
        %3928 = vmatpush1.bf16.msra.mxu0 %v2499
        %3929 = vmatprep.subr.bf16.mxu0 %v2504
        %3930 = vmatpush1.bf16.msra.mxu0 %v2503
        %3931 = vmatprep.subr.bf16.mxu0 %v2508
        %3932 = vmatpush1.bf16.msra.mxu0 %v2507
        %3933 = vmatprep.subr.bf16.mxu0 %v2512
        %3934 = vmatpush1.bf16.msra.mxu0 %v2511
        %3935 = vmatprep.subr.bf16.mxu0 %v2516
        %3936 = vmatpush1.bf16.msra.mxu0 %v2515
        %3937 = vmatprep.subr.bf16.mxu0 %v2520
        %3938 = vmatpush1.bf16.msra.mxu0 %v2519
        %3939 = vmatprep.subr.bf16.mxu0 %v2524
        %3940 = vmatpush1.bf16.msra.mxu0 %v2523
        %3941 = vmatprep.subr.bf16.mxu0 %v2528
        %3942 = vmatpush1.bf16.msra.mxu0 %v2527
        %3943 = vmatprep.subr.bf16.mxu0 %v2532
        %3944 = vmatpush1.bf16.msra.mxu0 %v2531
        %3945 = vmatprep.subr.bf16.mxu0 %v2536
        %3946 = vmatpush1.bf16.msra.mxu0 %v2535
        %3947 = vmatprep.subr.bf16.mxu0 %v2540
        %3948 = vmatpush1.bf16.msra.mxu0 %v2539
        %3949 = vmatprep.subr.bf16.mxu0 %v2544
        %3950 = vmatpush1.bf16.msra.mxu0 %v2543
        %3951 = vmatprep.subr.bf16.mxu0 %v2548
        %3952 = vmatpush1.bf16.msra.mxu0 %v2547
        %3953 = vmatprep.subr.bf16.mxu0 %v2552
        %3954 = vmatpush1.bf16.msra.mxu0 %v2551
        %3955 = vmatprep.subr.bf16.mxu0 %v2556
        %3956 = vmatpush1.bf16.msra.mxu0 %v2555
        %3957 = vmatprep.mubr.bf16.mxu0 %v894
        %3958 = vmatmul.mubr.bf16.gmra.mrb[0].mxu0 %v893
        %v3959 = vpop.f32.mrb[0].mxu0
        %v3960 = vadd.f32 0.0, %v3959
        %v3961 = vpop.f32.mrb[0].mxu0
        %v3962 = vadd.f32 0.0, %v3961
        %v3963 = vpop.f32.mrb[0].mxu0
        %v3964 = vadd.f32 0.0, %v3963
        %v3965 = vpop.f32.mrb[0].mxu0
        %v3966 = vadd.f32 0.0, %v3965
        %3967 = vmatprep.mubr.bf16.mxu0 %v910
        %3968 = vmatmul.mubr.bf16.gmra.mrb[0].mxu0 %v909
        %v3969 = vpop.f32.mrb[0].mxu0
        %v3970 = vadd.f32 0.0, %v3969
        %v3971 = vpop.f32.mrb[0].mxu0
        %v3972 = vadd.f32 0.0, %v3971
        %v3973 = vpop.f32.mrb[0].mxu0
        %v3974 = vpop.f32.mrb[0].mxu0
        %3975 = vdwg.mxu0
        %3976 = vmatprep.subr.bf16.mxu0 %v2560
        %3977 = vmatpush1.bf16.msra.mxu0 %v2559
        %3978 = vmatprep.subr.bf16.mxu0 %v2564
        %3979 = vmatpush1.bf16.msra.mxu0 %v2563
        %3980 = vmatprep.subr.bf16.mxu0 %v2568
        %3981 = vmatpush1.bf16.msra.mxu0 %v2567
        %3982 = vmatprep.subr.bf16.mxu0 %v2572
        %3983 = vmatpush1.bf16.msra.mxu0 %v2571
        %3984 = vmatprep.subr.bf16.mxu0 %v2576
        %3985 = vmatpush1.bf16.msra.mxu0 %v2575
        %3986 = vmatprep.subr.bf16.mxu0 %v2580
        %3987 = vmatpush1.bf16.msra.mxu0 %v2579
        %3988 = vmatprep.subr.bf16.mxu0 %v2584
        %3989 = vmatpush1.bf16.msra.mxu0 %v2583
        %3990 = vmatprep.subr.bf16.mxu0 %v2588
        %3991 = vmatpush1.bf16.msra.mxu0 %v2587
        %3992 = vmatprep.subr.bf16.mxu0 %v2592
        %3993 = vmatpush1.bf16.msra.mxu0 %v2591
        %3994 = vmatprep.subr.bf16.mxu0 %v2596
        %3995 = vmatpush1.bf16.msra.mxu0 %v2595
        %3996 = vmatprep.subr.bf16.mxu0 %v2600
        %3997 = vmatpush1.bf16.msra.mxu0 %v2599
        %3998 = vmatprep.subr.bf16.mxu0 %v2604
        %3999 = vmatpush1.bf16.msra.mxu0 %v2603
        %4000 = vmatprep.subr.bf16.mxu0 %v2608
        %4001 = vmatpush1.bf16.msra.mxu0 %v2607
        %4002 = vmatprep.subr.bf16.mxu0 %v2612
        %4003 = vmatpush1.bf16.msra.mxu0 %v2611
        %4004 = vmatprep.subr.bf16.mxu0 %v2616
        %4005 = vmatpush1.bf16.msra.mxu0 %v2615
        %4006 = vmatprep.subr.bf16.mxu0 %v2620
        %4007 = vmatpush1.bf16.msra.mxu0 %v2619
        %4008 = vmatprep.mubr.bf16.mxu0 %v896
        %4009 = vmatmul.mubr.bf16.gmra.mrb[0].mxu0 %v895
        %v4010 = vpop.f32.mrb[0].mxu0
        %v4011 = vadd.f32 %v3960, %v4010
        %v4012 = vpop.f32.mrb[0].mxu0
        %v4013 = vadd.f32 %v3962, %v4012
        %v4014 = vpop.f32.mrb[0].mxu0
        %v4015 = vadd.f32 %v3964, %v4014
        %v4016 = vpop.f32.mrb[0].mxu0
        %v4017 = vadd.f32 %v3966, %v4016
        %4018 = vmatprep.mubr.bf16.mxu0 %v912
        %4019 = vmatmul.mubr.bf16.gmra.mrb[0].mxu0 %v911
        %v4020 = vpop.f32.mrb[0].mxu0
        %v4021 = vadd.f32 %v3970, %v4020
        %v4022 = vpop.f32.mrb[0].mxu0
        %v4023 = vadd.f32 %v3972, %v4022
        %v4024 = vpop.f32.mrb[0].mxu0
        %v4025 = vpop.f32.mrb[0].mxu0
        %4026 = vdwg.mxu0
        %4027 = vmatprep.subr.bf16.mxu0 %v2624
        %4028 = vmatpush1.bf16.msra.mxu0 %v2623
        %4029 = vmatprep.subr.bf16.mxu0 %v2628
        %4030 = vmatpush1.bf16.msra.mxu0 %v2627
        %4031 = vmatprep.subr.bf16.mxu0 %v2632
        %4032 = vmatpush1.bf16.msra.mxu0 %v2631
        %4033 = vmatprep.subr.bf16.mxu0 %v2636
        %4034 = vmatpush1.bf16.msra.mxu0 %v2635
        %4035 = vmatprep.subr.bf16.mxu0 %v2640
        %4036 = vmatpush1.bf16.msra.mxu0 %v2639
        %4037 = vmatprep.subr.bf16.mxu0 %v2644
        %4038 = vmatpush1.bf16.msra.mxu0 %v2643
        %4039 = vmatprep.subr.bf16.mxu0 %v2648
        %4040 = vmatpush1.bf16.msra.mxu0 %v2647
        %4041 = vmatprep.subr.bf16.mxu0 %v2652
        %4042 = vmatpush1.bf16.msra.mxu0 %v2651
        %4043 = vmatprep.subr.bf16.mxu0 %v2656
        %4044 = vmatpush1.bf16.msra.mxu0 %v2655
        %4045 = vmatprep.subr.bf16.mxu0 %v2660
        %4046 = vmatpush1.bf16.msra.mxu0 %v2659
        %4047 = vmatprep.subr.bf16.mxu0 %v2664
        %4048 = vmatpush1.bf16.msra.mxu0 %v2663
        %4049 = vmatprep.subr.bf16.mxu0 %v2668
        %4050 = vmatpush1.bf16.msra.mxu0 %v2667
        %4051 = vmatprep.subr.bf16.mxu0 %v2672
        %4052 = vmatpush1.bf16.msra.mxu0 %v2671
        %4053 = vmatprep.subr.bf16.mxu0 %v2676
        %4054 = vmatpush1.bf16.msra.mxu0 %v2675
        %4055 = vmatprep.subr.bf16.mxu0 %v2680
        %4056 = vmatpush1.bf16.msra.mxu0 %v2679
        %4057 = vmatprep.subr.bf16.mxu0 %v2684
        %4058 = vmatpush1.bf16.msra.mxu0 %v2683
        %4059 = vmatprep.mubr.bf16.mxu0 %v898
        %4060 = vmatmul.mubr.bf16.gmra.mrb[0].mxu0 %v897
        %v4061 = vpop.f32.mrb[0].mxu0
        %v4062 = vadd.f32 %v4011, %v4061
        %v4063 = vpop.f32.mrb[0].mxu0
        %v4064 = vadd.f32 %v4013, %v4063
        %v4065 = vpop.f32.mrb[0].mxu0
        %v4066 = vadd.f32 %v4015, %v4065
        %v4067 = vpop.f32.mrb[0].mxu0
        %v4068 = vadd.f32 %v4017, %v4067
        %4069 = vmatprep.mubr.bf16.mxu0 %v914
        %4070 = vmatmul.mubr.bf16.gmra.mrb[0].mxu0 %v913
        %v4071 = vpop.f32.mrb[0].mxu0
        %v4072 = vadd.f32 %v4021, %v4071
        %v4073 = vpop.f32.mrb[0].mxu0
        %v4074 = vadd.f32 %v4023, %v4073
        %v4075 = vpop.f32.mrb[0].mxu0
        %v4076 = vpop.f32.mrb[0].mxu0
        %4077 = vdwg.mxu0
        %4078 = vmatprep.subr.bf16.mxu0 %v2688
        %4079 = vmatpush1.bf16.msra.mxu0 %v2687
        %4080 = vmatprep.subr.bf16.mxu0 %v2692
        %4081 = vmatpush1.bf16.msra.mxu0 %v2691
        %4082 = vmatprep.subr.bf16.mxu0 %v2696
        %4083 = vmatpush1.bf16.msra.mxu0 %v2695
        %4084 = vmatprep.subr.bf16.mxu0 %v2700
        %4085 = vmatpush1.bf16.msra.mxu0 %v2699
        %4086 = vmatprep.subr.bf16.mxu0 %v2704
        %4087 = vmatpush1.bf16.msra.mxu0 %v2703
        %4088 = vmatprep.subr.bf16.mxu0 %v2708
        %4089 = vmatpush1.bf16.msra.mxu0 %v2707
        %4090 = vmatprep.subr.bf16.mxu0 %v2712
        %4091 = vmatpush1.bf16.msra.mxu0 %v2711
        %4092 = vmatprep.subr.bf16.mxu0 %v2716
        %4093 = vmatpush1.bf16.msra.mxu0 %v2715
        %4094 = vmatprep.subr.bf16.mxu0 %v2720
        %4095 = vmatpush1.bf16.msra.mxu0 %v2719
        %4096 = vmatprep.subr.bf16.mxu0 %v2724
        %4097 = vmatpush1.bf16.msra.mxu0 %v2723
        %4098 = vmatprep.subr.bf16.mxu0 %v2728
        %4099 = vmatpush1.bf16.msra.mxu0 %v2727
        %4100 = vmatprep.subr.bf16.mxu0 %v2732
        %4101 = vmatpush1.bf16.msra.mxu0 %v2731
        %4102 = vmatprep.subr.bf16.mxu0 %v2736
        %4103 = vmatpush1.bf16.msra.mxu0 %v2735
        %4104 = vmatprep.subr.bf16.mxu0 %v2740
        %4105 = vmatpush1.bf16.msra.mxu0 %v2739
        %4106 = vmatprep.subr.bf16.mxu0 %v2744
        %4107 = vmatpush1.bf16.msra.mxu0 %v2743
        %4108 = vmatprep.subr.bf16.mxu0 %v2748
        %4109 = vmatpush1.bf16.msra.mxu0 %v2747
        %4110 = vmatprep.mubr.bf16.mxu0 %v900
        %4111 = vmatmul.mubr.bf16.gmra.mrb[0].mxu0 %v899
        %v4112 = vpop.f32.mrb[0].mxu0
        %v4113 = vadd.f32 %v4062, %v4112
        %v4114 = vpop.f32.mrb[0].mxu0
        %v4115 = vadd.f32 %v4064, %v4114
        %v4116 = vpop.f32.mrb[0].mxu0
        %v4117 = vadd.f32 %v4066, %v4116
        %v4118 = vpop.f32.mrb[0].mxu0
        %v4119 = vadd.f32 %v4068, %v4118
        %4120 = vmatprep.mubr.bf16.mxu0 %v916
        %4121 = vmatmul.mubr.bf16.gmra.mrb[0].mxu0 %v915
        %v4122 = vpop.f32.mrb[0].mxu0
        %v4123 = vadd.f32 %v4072, %v4122
        %v4124 = vpop.f32.mrb[0].mxu0
        %v4125 = vadd.f32 %v4074, %v4124
        %v4126 = vpop.f32.mrb[0].mxu0
        %v4127 = vpop.f32.mrb[0].mxu0
        %4128 = vdwg.mxu0
        %4129 = vmatprep.subr.bf16.mxu0 %v2752
        %4130 = vmatpush1.bf16.msra.mxu0 %v2751
        %4131 = vmatprep.subr.bf16.mxu0 %v2756
        %4132 = vmatpush1.bf16.msra.mxu0 %v2755
        %4133 = vmatprep.subr.bf16.mxu0 %v2760
        %4134 = vmatpush1.bf16.msra.mxu0 %v2759
        %4135 = vmatprep.subr.bf16.mxu0 %v2764
        %4136 = vmatpush1.bf16.msra.mxu0 %v2763
        %4137 = vmatprep.subr.bf16.mxu0 %v2768
        %4138 = vmatpush1.bf16.msra.mxu0 %v2767
        %4139 = vmatprep.subr.bf16.mxu0 %v2772
        %4140 = vmatpush1.bf16.msra.mxu0 %v2771
        %4141 = vmatprep.subr.bf16.mxu0 %v2776
        %4142 = vmatpush1.bf16.msra.mxu0 %v2775
        %4143 = vmatprep.subr.bf16.mxu0 %v2780
        %4144 = vmatpush1.bf16.msra.mxu0 %v2779
        %4145 = vmatprep.subr.bf16.mxu0 %v2784
        %4146 = vmatpush1.bf16.msra.mxu0 %v2783
        %4147 = vmatprep.subr.bf16.mxu0 %v2788
        %4148 = vmatpush1.bf16.msra.mxu0 %v2787
        %4149 = vmatprep.subr.bf16.mxu0 %v2792
        %4150 = vmatpush1.bf16.msra.mxu0 %v2791
        %4151 = vmatprep.subr.bf16.mxu0 %v2796
        %4152 = vmatpush1.bf16.msra.mxu0 %v2795
        %4153 = vmatprep.subr.bf16.mxu0 %v2800
        %4154 = vmatpush1.bf16.msra.mxu0 %v2799
        %4155 = vmatprep.subr.bf16.mxu0 %v2804
        %4156 = vmatpush1.bf16.msra.mxu0 %v2803
        %4157 = vmatprep.subr.bf16.mxu0 %v2808
        %4158 = vmatpush1.bf16.msra.mxu0 %v2807
        %4159 = vmatprep.subr.bf16.mxu0 %v2812
        %4160 = vmatpush1.bf16.msra.mxu0 %v2811
        %4161 = vmatprep.mubr.bf16.mxu0 %v902
        %4162 = vmatmul.mubr.bf16.gmra.mrb[0].mxu0 %v901
        %v4163 = vpop.f32.mrb[0].mxu0
        %v4164 = vadd.f32 %v4113, %v4163
        %v4165 = vpop.f32.mrb[0].mxu0
        %v4166 = vadd.f32 %v4115, %v4165
        %v4167 = vpop.f32.mrb[0].mxu0
        %v4168 = vadd.f32 %v4117, %v4167
        %v4169 = vpop.f32.mrb[0].mxu0
        %v4170 = vadd.f32 %v4119, %v4169
        %4171 = vmatprep.mubr.bf16.mxu0 %v918
        %4172 = vmatmul.mubr.bf16.gmra.mrb[0].mxu0 %v917
        %v4173 = vpop.f32.mrb[0].mxu0
        %v4174 = vadd.f32 %v4123, %v4173
        %v4175 = vpop.f32.mrb[0].mxu0
        %v4176 = vadd.f32 %v4125, %v4175
        %v4177 = vpop.f32.mrb[0].mxu0
        %v4178 = vpop.f32.mrb[0].mxu0
        %4179 = vdwg.mxu0
        %4180 = vmatprep.subr.bf16.mxu0 %v2816
        %4181 = vmatpush1.bf16.msra.mxu0 %v2815
        %4182 = vmatprep.subr.bf16.mxu0 %v2820
        %4183 = vmatpush1.bf16.msra.mxu0 %v2819
        %4184 = vmatprep.subr.bf16.mxu0 %v2824
        %4185 = vmatpush1.bf16.msra.mxu0 %v2823
        %4186 = vmatprep.subr.bf16.mxu0 %v2828
        %4187 = vmatpush1.bf16.msra.mxu0 %v2827
        %4188 = vmatprep.subr.bf16.mxu0 %v2832
        %4189 = vmatpush1.bf16.msra.mxu0 %v2831
        %4190 = vmatprep.subr.bf16.mxu0 %v2836
        %4191 = vmatpush1.bf16.msra.mxu0 %v2835
        %4192 = vmatprep.subr.bf16.mxu0 %v2840
        %4193 = vmatpush1.bf16.msra.mxu0 %v2839
        %4194 = vmatprep.subr.bf16.mxu0 %v2844
        %4195 = vmatpush1.bf16.msra.mxu0 %v2843
        %4196 = vmatprep.subr.bf16.mxu0 %v2848
        %4197 = vmatpush1.bf16.msra.mxu0 %v2847
        %4198 = vmatprep.subr.bf16.mxu0 %v2852
        %4199 = vmatpush1.bf16.msra.mxu0 %v2851
        %4200 = vmatprep.subr.bf16.mxu0 %v2856
        %4201 = vmatpush1.bf16.msra.mxu0 %v2855
        %4202 = vmatprep.subr.bf16.mxu0 %v2860
        %4203 = vmatpush1.bf16.msra.mxu0 %v2859
        %4204 = vmatprep.subr.bf16.mxu0 %v2864
        %4205 = vmatpush1.bf16.msra.mxu0 %v2863
        %4206 = vmatprep.subr.bf16.mxu0 %v2868
        %4207 = vmatpush1.bf16.msra.mxu0 %v2867
        %4208 = vmatprep.subr.bf16.mxu0 %v2872
        %4209 = vmatpush1.bf16.msra.mxu0 %v2871
        %4210 = vmatprep.subr.bf16.mxu0 %v2876
        %4211 = vmatpush1.bf16.msra.mxu0 %v2875
        %4212 = vmatprep.mubr.bf16.mxu0 %v904
        %4213 = vmatmul.mubr.bf16.gmra.mrb[0].mxu0 %v903
        %v4214 = vpop.f32.mrb[0].mxu0
        %v4215 = vadd.f32 %v4164, %v4214
        %v4216 = vpop.f32.mrb[0].mxu0
        %v4217 = vadd.f32 %v4166, %v4216
        %v4218 = vpop.f32.mrb[0].mxu0
        %v4219 = vadd.f32 %v4168, %v4218
        %v4220 = vpop.f32.mrb[0].mxu0
        %v4221 = vadd.f32 %v4170, %v4220
        %4222 = vmatprep.mubr.bf16.mxu0 %v920
        %4223 = vmatmul.mubr.bf16.gmra.mrb[0].mxu0 %v919
        %v4224 = vpop.f32.mrb[0].mxu0
        %v4225 = vadd.f32 %v4174, %v4224
        %v4226 = vpop.f32.mrb[0].mxu0
        %v4227 = vadd.f32 %v4176, %v4226
        %v4228 = vpop.f32.mrb[0].mxu0
        %v4229 = vpop.f32.mrb[0].mxu0
        %4230 = vdwg.mxu0
        %4231 = vmatprep.subr.bf16.mxu0 %v2880
        %4232 = vmatpush1.bf16.msra.mxu0 %v2879
        %4233 = vmatprep.subr.bf16.mxu0 %v2884
        %4234 = vmatpush1.bf16.msra.mxu0 %v2883
        %4235 = vmatprep.subr.bf16.mxu0 %v2888
        %4236 = vmatpush1.bf16.msra.mxu0 %v2887
        %4237 = vmatprep.subr.bf16.mxu0 %v2892
        %4238 = vmatpush1.bf16.msra.mxu0 %v2891
        %4239 = vmatprep.subr.bf16.mxu0 %v2896
        %4240 = vmatpush1.bf16.msra.mxu0 %v2895
        %4241 = vmatprep.subr.bf16.mxu0 %v2900
        %4242 = vmatpush1.bf16.msra.mxu0 %v2899
        %4243 = vmatprep.subr.bf16.mxu0 %v2904
        %4244 = vmatpush1.bf16.msra.mxu0 %v2903
        %4245 = vmatprep.subr.bf16.mxu0 %v2908
        %4246 = vmatpush1.bf16.msra.mxu0 %v2907
        %4247 = vmatprep.subr.bf16.mxu0 %v2912
        %4248 = vmatpush1.bf16.msra.mxu0 %v2911
        %4249 = vmatprep.subr.bf16.mxu0 %v2916
        %4250 = vmatpush1.bf16.msra.mxu0 %v2915
        %4251 = vmatprep.subr.bf16.mxu0 %v2920
        %4252 = vmatpush1.bf16.msra.mxu0 %v2919
        %4253 = vmatprep.subr.bf16.mxu0 %v2924
        %4254 = vmatpush1.bf16.msra.mxu0 %v2923
        %4255 = vmatprep.subr.bf16.mxu0 %v2928
        %4256 = vmatpush1.bf16.msra.mxu0 %v2927
        %4257 = vmatprep.subr.bf16.mxu0 %v2932
        %4258 = vmatpush1.bf16.msra.mxu0 %v2931
        %4259 = vmatprep.subr.bf16.mxu0 %v2936
        %4260 = vmatpush1.bf16.msra.mxu0 %v2935
        %4261 = vmatprep.subr.bf16.mxu0 %v2940
        %4262 = vmatpush1.bf16.msra.mxu0 %v2939
        %4263 = vmatprep.mubr.bf16.mxu0 %v906
        %4264 = vmatmul.mubr.bf16.gmra.mrb[0].mxu0 %v905
        %v4265 = vpop.f32.mrb[0].mxu0
        %v4266 = vadd.f32 %v4215, %v4265
        %v4267 = vpop.f32.mrb[0].mxu0
        %v4268 = vadd.f32 %v4217, %v4267
        %v4269 = vpop.f32.mrb[0].mxu0
        %v4270 = vadd.f32 %v4219, %v4269
        %v4271 = vpop.f32.mrb[0].mxu0
        %v4272 = vadd.f32 %v4221, %v4271
        %4273 = vmatprep.mubr.bf16.mxu0 %v922
        %4274 = vmatmul.mubr.bf16.gmra.mrb[0].mxu0 %v921
        %v4275 = vpop.f32.mrb[0].mxu0
        %v4276 = vadd.f32 %v4225, %v4275
        %v4277 = vpop.f32.mrb[0].mxu0
        %v4278 = vadd.f32 %v4227, %v4277
        %v4279 = vpop.f32.mrb[0].mxu0
        %v4280 = vpop.f32.mrb[0].mxu0
        %4281 = vdwg.mxu0
        %4282 = vmatprep.subr.bf16.mxu0 %v2944
        %4283 = vmatpush1.bf16.msra.mxu0 %v2943
        %4284 = vmatprep.subr.bf16.mxu0 %v2948
        %4285 = vmatpush1.bf16.msra.mxu0 %v2947
        %4286 = vmatprep.subr.bf16.mxu0 %v2952
        %4287 = vmatpush1.bf16.msra.mxu0 %v2951
        %4288 = vmatprep.subr.bf16.mxu0 %v2956
        %4289 = vmatpush1.bf16.msra.mxu0 %v2955
        %4290 = vmatprep.subr.bf16.mxu0 %v2960
        %4291 = vmatpush1.bf16.msra.mxu0 %v2959
        %4292 = vmatprep.subr.bf16.mxu0 %v2964
        %4293 = vmatpush1.bf16.msra.mxu0 %v2963
        %4294 = vmatprep.subr.bf16.mxu0 %v2968
        %4295 = vmatpush1.bf16.msra.mxu0 %v2967
        %4296 = vmatprep.subr.bf16.mxu0 %v2972
        %4297 = vmatpush1.bf16.msra.mxu0 %v2971
        %4298 = vmatprep.subr.bf16.mxu0 %v2976
        %4299 = vmatpush1.bf16.msra.mxu0 %v2975
        %4300 = vmatprep.subr.bf16.mxu0 %v2980
        %4301 = vmatpush1.bf16.msra.mxu0 %v2979
        %4302 = vmatprep.subr.bf16.mxu0 %v2984
        %4303 = vmatpush1.bf16.msra.mxu0 %v2983
        %4304 = vmatprep.subr.bf16.mxu0 %v2988
        %4305 = vmatpush1.bf16.msra.mxu0 %v2987
        %4306 = vmatprep.subr.bf16.mxu0 %v2992
        %4307 = vmatpush1.bf16.msra.mxu0 %v2991
        %4308 = vmatprep.subr.bf16.mxu0 %v2996
        %4309 = vmatpush1.bf16.msra.mxu0 %v2995
        %4310 = vmatprep.subr.bf16.mxu0 %v3000
        %4311 = vmatpush1.bf16.msra.mxu0 %v2999
        %4312 = vmatprep.subr.bf16.mxu0 %v3004
        %4313 = vmatpush1.bf16.msra.mxu0 %v3003
        %4314 = vmatprep.mubr.bf16.mxu0 %v908
        %4315 = vmatmul.mubr.bf16.gmra.mrb[0].mxu0 %v907
        %v4316 = vpop.f32.mrb[0].mxu0
        %v4317 = vadd.f32 %v4266, %v4316
        %v4318 = vpop.f32.mrb[0].mxu0
        %v4319 = vadd.f32 %v4268, %v4318
        %v4320 = vpop.f32.mrb[0].mxu0
        %v4321 = vadd.f32 %v4270, %v4320
        %v4322 = vpop.f32.mrb[0].mxu0
        %v4323 = vadd.f32 %v4272, %v4322
        %4324 = vmatprep.mubr.bf16.mxu0 %v924
        %4325 = vmatmul.mubr.bf16.gmra.mrb[0].mxu0 %v923
        %v4326 = vpop.f32.mrb[0].mxu0
        %v4327 = vadd.f32 %v4276, %v4326
        %v4328 = vpop.f32.mrb[0].mxu0
        %v4329 = vadd.f32 %v4278, %v4328
        %v4330 = vpop.f32.mrb[0].mxu0
        %v4331 = vpop.f32.mrb[0].mxu0
        %4332 = vdwg.mxu0
        %v4333 = vadd.f32 %v273, %v3909
        %v4334 = vadd.f32 %v274, %v3911
        %v4335 = vadd.f32 %v275, %v4317
        %v4336 = vadd.f32 %v276, %v4319
        %v4337 = vadd.f32 %v277, %v3913
        %v4338 = vadd.f32 %v278, %v3915
        %v4339 = vadd.f32 %v279, %v4321
        %v4340 = vadd.f32 %v280, %v4323
        %v4341 = vadd.f32 %v281, %v3919
        %v4342 = vadd.f32 %v282, %v3921
        %v4343 = vadd.f32 %v283, %v4327
        %v4344 = vadd.f32 %v284, %v4329
        %4345 = vst [vmem:[#allocation2] sm:$0xff] %v4333
        %4346 = vst [vmem:[#allocation2 + $0x8] sm:$0xff] %v4334
        %4347 = vst [vmem:[#allocation2 + $0x10] sm:$0xff] %v4335
        %4348 = vst [vmem:[#allocation2 + $0x18] sm:$0xff] %v4336
        %4349 = vst [vmem:[#allocation2 + $0x20] sm:$0xff] %v4337
        %4350 = vst [vmem:[#allocation2 + $0x28] sm:$0xff] %v4338
        %4351 = vst [vmem:[#allocation2 + $0x30] sm:$0xff] %v4339
        %4352 = vst [vmem:[#allocation2 + $0x38] sm:$0xff] %v4340
        %4353 = vst [vmem:[#allocation2 + $0x40] sm:$0xff] %v4341
        %4354 = vst [vmem:[#allocation2 + $0x48] sm:$0xff] %v4342
        %4355 = vst [vmem:[#allocation2 + $0x50] sm:$0xff] %v4343
        %4356 = vst [vmem:[#allocation2 + $0x58] sm:$0xff] %v4344
        %p4357 = scmp.eq.s32.totalorder %s18, 1
        // Predicated region
        $region56: #{_lambda_.8} parent=46 // pred_check
          %p4358 = pneg %p4357
        $region57: #{_lambda_.8} parent=46 // pred_check_branch
          %4360 = sbr.rel (%p4358) target = $region59
        $region58: #{_lambda_.8} parent=46 // pred_region
          %v4361 = vld [vmem:[#allocation2] sm:$0xff]
          %v4362 = vld [vmem:[#allocation2 + $0x8] sm:$0xff]
          %v4363 = vld [vmem:[#allocation2 + $0x10] sm:$0xff]
          %v4364 = vld [vmem:[#allocation2 + $0x18] sm:$0xff]
          %v4365 = vld [vmem:[#allocation2 + $0x20] sm:$0xff]
          %v4366 = vld [vmem:[#allocation2 + $0x28] sm:$0xff]
          %v4367 = vld [vmem:[#allocation2 + $0x30] sm:$0xff]
          %v4368 = vld [vmem:[#allocation2 + $0x38] sm:$0xff]
          %v4369 = vld [vmem:[#allocation2 + $0x40] sm:$0xff]
          %v4370 = vld [vmem:[#allocation2 + $0x48] sm:$0xff]
          %v4371 = vld [vmem:[#allocation2 + $0x50] sm:$0xff]
          %v4372 = vld [vmem:[#allocation2 + $0x58] sm:$0xff]
          %vm4373 = vcmp.ge.f32.partialorder %v4361, 0.0
          %vm4374 = vcmp.ge.f32.partialorder %v4362, 0.0
          %vm4375 = vcmp.ge.f32.partialorder %v4363, 0.0
          %vm4376 = vcmp.ge.f32.partialorder %v4364, 0.0
          %vm4377 = vcmp.ge.f32.partialorder %v4365, 0.0
          %vm4378 = vcmp.ge.f32.partialorder %v4366, 0.0
          %vm4379 = vcmp.ge.f32.partialorder %v4367, 0.0
          %vm4380 = vcmp.ge.f32.partialorder %v4368, 0.0
          %vm4381 = vcmp.ge.f32.partialorder %v4369, 0.0
          %vm4382 = vcmp.ge.f32.partialorder %v4370, 0.0
          %vm4383 = vcmp.ge.f32.partialorder %v4371, 0.0
          %vm4384 = vcmp.ge.f32.partialorder %v4372, 0.0
          %v4385 = vmul.f32 %v4361, 0.2
          %v4386 = vmul.f32 %v4362, 0.2
          %v4387 = vmul.f32 %v4363, 0.2
          %v4388 = vmul.f32 %v4364, 0.2
          %v4389 = vmul.f32 %v4365, 0.2
          %v4390 = vmul.f32 %v4366, 0.2
          %v4391 = vmul.f32 %v4367, 0.2
          %v4392 = vmul.f32 %v4368, 0.2
          %v4393 = vmul.f32 %v4369, 0.2
          %v4394 = vmul.f32 %v4370, 0.2
          %v4395 = vmul.f32 %v4371, 0.2
          %v4396 = vmul.f32 %v4372, 0.2
          %v4397 = vsel %vm4373, %v4361, %v4385
          %v4398 = vsel %vm4374, %v4362, %v4386
          %v4399 = vsel %vm4375, %v4363, %v4387
          %v4400 = vsel %vm4376, %v4364, %v4388
          %v4401 = vsel %vm4377, %v4365, %v4389
          %v4402 = vsel %vm4378, %v4366, %v4390
          %v4403 = vsel %vm4379, %v4367, %v4391
          %v4404 = vsel %vm4380, %v4368, %v4392
          %v4405 = vsel %vm4381, %v4369, %v4393
          %v4406 = vsel %vm4382, %v4370, %v4394
          %v4407 = vsel %vm4383, %v4371, %v4395
          %v4408 = vsel %vm4384, %v4372, %v4396
          %4409 = vst [vmem:[%s255] sm:$0xff] %v4397
          %4410 = vst [vmem:[%s255 + $0x8] sm:$0xff] %v4398
          %4411 = vst [vmem:[%s255 + $0x10] sm:$0xff] %v4399
          %4412 = vst [vmem:[%s255 + $0x18] sm:$0xff] %v4400
          %4413 = vst [vmem:[%s255 + $0x20] sm:$0xff] %v4401
          %4414 = vst [vmem:[%s255 + $0x28] sm:$0xff] %v4402
          %4415 = vst [vmem:[%s255 + $0x30] sm:$0xff] %v4403
          %4416 = vst [vmem:[%s255 + $0x38] sm:$0xff] %v4404
          %4417 = vst [vmem:[%s255 + $0x40] sm:$0xff] %v4405
          %4418 = vst [vmem:[%s255 + $0x48] sm:$0xff] %v4406
          %4419 = vst [vmem:[%s255 + $0x50] sm:$0xff] %v4407
          %4420 = vst [vmem:[%s255 + $0x58] sm:$0xff] %v4408
        $region59: #{_lambda_.8} parent=46 // pred_fallthru
          _
        %s4421 = smul.u32 3, %s17
        %p4422 = scmp.lt.s32.totalorder %s4421, 2
        %s4423 = scalar_select %p4422, %s4421, 2
        %s4424 = smul.addr %s4423, 4
        %s4425 = smul.addr %s4424, 8
        %s4426 = scalar_lea.vmem %s2, %s4425
        // Predicated region
        $region60: #{_lambda_.8} parent=46 // pred_check
          %p4427 = pneg %p97
        $region61: #{_lambda_.8} parent=46 // pred_check_branch
          %4429 = sbr.rel (%p4427) target = $region63
        $region62: #{_lambda_.8} parent=46 // pred_region
          %s4430 = smul.u32 3, %s17
        $region63: #{_lambda_.8} parent=46 // pred_fallthru
          _
        // Predicated region
        $region64: #{_lambda_.8} parent=46 // pred_check
          %p4431 = pneg %p97
        $region65: #{_lambda_.8} parent=46 // pred_check_branch
          %4433 = sbr.rel (%p4431) target = $region67
        $region66: #{_lambda_.8} parent=46 // pred_region
          %s4434 = smul.u32 3, %s17
          %p4435 = scmp.lt.s32.totalorder %s4434, 2
          %s4436 = scalar_select %p4435, %s4434, 2
          %s4437 = smul.addr %s4436, 4
          %s4438 = smul.addr %s4437, 8
          %s4439 = scalar_lea.vmem %s2, %s4438
        $region67: #{_lambda_.8} parent=46 // pred_fallthru
          _
      $region47: #{_lambda_.8} parent=5 // pred_fallthru
        _
      %p4440 = scmp.le.s32.totalorder 2, %s8
      // Predicated region
      $region68: #{_lambda_.8} parent=5 // pred_check
        %p4441 = pneg %p4440
      $region69: #{_lambda_.8} parent=5 // pred_check_branch
        %4443 = sbr.rel (%p4441) target = $region71
      $region70: #{_lambda_.8} parent=5 // pred_region
        %s4444 = ssub.s32 %s8, 2
      $region71: #{_lambda_.8} parent=5 // pred_fallthru
        _
    $region6: #{_lambda_.8} parent=1 // loop_footer
      %s12 = sadd.s32 1, %s8
    $region7: #{_lambda_.8} parent=1 // loop_footer_branch
      %7 = sbr.rel target = $region3
    $region8: #{_lambda_.8} parent=1 // loop_exit
      _

// kernel: _lambda_.9
$region0: #{_lambda_.9}
  #allocation0 [shape = 'u32[]', space=smem, size = 0x4, offset = 0x4, fixed_abs, tag = 'smem constant byte address 0x4 - core index']
  #allocation1 [shape = 'u32[144,128]{1,0:T(1,128)}', space=vmem, size = 0x12000, scoped, tag = 'internal scratch']
  #allocation2 [shape = 'f32[8,128]{1,0:T(8,128)}', space=vmem, size = 0x1000, scoped, tag = 'scratch operand']
  %s0 = inlined_call_operand.vmem [shape: bf16[8,8192], index: 0, kind: input, shape index: {}]
  %s1 = inlined_call_operand.vmem [shape: bf16[8192,128], index: 1, kind: input, shape index: {}]
  %s2 = inlined_call_operand.vmem [shape: f32[8,128], index: 2, kind: output, shape index: {}]
  %s3 = sld [smem:[#allocation0]]
  $region49: #{_lambda_.9} parent=0
    _
  %s5 = ssub.s32 1, %s3
  %s6 = scalar_select 0, %s5, %s3
  loop: start=0, step=1, limit=6
  $region2: #{_lambda_.9} parent=0 // loop_pre_header
    _
  $region3: #{_lambda_.9} parent=0 // loop_header
    %s8 = sphi 0, %s12
    %p9 = scmp.ge.s32.totalorder %s8, 6
    %s15 = sphi 0, %s27
    %s16 = sphi 0, %s23
    %s17 = sphi 0, %s15
    %s18 = sphi 0, %s16
    %s19 = sphi 0, %s17
    %s20 = sphi 0, %s18
    %s32 = sphi 0, %s34
    %s35 = sphi 0, %s32
    %s36 = sphi 0, %s35
    %s52 = sphi 0, %s36
    %s58 = sphi 0, %s60
    %s61 = sphi 0, %s58
    %s62 = sphi 0, %s61
    %s78 = sphi 0, %s62
    %s84 = sphi 0, %s86
    %s87 = sphi 0, %s84
    %s88 = sphi 0, %s87
    %s104 = sphi 0, %s88
  $region4: #{_lambda_.9} parent=0 // loop_header_branch
    %11 = sbr.rel (%p9) target = $region8
  $region5: #{_lambda_.9} parent=0 // loop_body
    %s13 = ssub.s32 %s8, 1
    %s14 = ssub.s32 %s8, 2
    %s21 = sadd.s32 1, %s16
    %p22 = scmp.ge.s32.totalorder %s21, 4
    %s23 = scalar_select %p22, 0, %s21
    %s24 = sadd.s32 1, %s15
    %s25 = scalar_select %p22, %s24, %s15
    %p26 = scmp.ge.s32.totalorder %s25, 1
    %s27 = scalar_select %p26, 0, %s25
    %s28 = ssub.s32 %s15, %s27
    %s29 = ssub.s32 %s16, %s23
    %s30 = sor.u32 %s28, %s29
    %p31 = scmp.eq.s32.totalorder %s30, 0
    %s33 = sadd.s32 %s32, 1
    %s34 = scalar_select %p31, %s32, %s33
    %p37 = pneg %p31
    %p38 = scmp.eq.s32.totalorder %s8, 3
    %p39 = por %p37, %p38
    %p40 = scmp.ne.s32.totalorder %s32, %s35
    %p41 = scmp.eq.s32.totalorder %s8, 0
    %p42 = por %p40, %p41
    %p43 = scmp.ne.s32.totalorder %s32, %s35
    %p44 = scmp.eq.s32.totalorder %s13, 3
    %p45 = por %p43, %p44
    %p46 = scmp.ne.s32.totalorder %s35, %s36
    %p47 = scmp.eq.s32.totalorder %s13, 0
    %p48 = por %p46, %p47
    %p49 = scmp.ne.s32.totalorder %s35, %s36
    %p50 = scmp.eq.s32.totalorder %s14, 3
    %p51 = por %p49, %p50
    %p53 = scmp.ne.s32.totalorder %s36, %s52
    %p54 = scmp.eq.s32.totalorder %s14, 0
    %p55 = por %p53, %p54
    %s56 = ssub.s32 %s16, %s23
    %p57 = scmp.eq.s32.totalorder %s56, 0
    %s59 = sadd.s32 %s58, 1
    %s60 = scalar_select %p57, %s58, %s59
    %p63 = pneg %p57
    %p64 = scmp.eq.s32.totalorder %s8, 3
    %p65 = por %p63, %p64
    %p66 = scmp.ne.s32.totalorder %s58, %s61
    %p67 = scmp.eq.s32.totalorder %s8, 0
    %p68 = por %p66, %p67
    %p69 = scmp.ne.s32.totalorder %s58, %s61
    %p70 = scmp.eq.s32.totalorder %s13, 3
    %p71 = por %p69, %p70
    %p72 = scmp.ne.s32.totalorder %s61, %s62
    %p73 = scmp.eq.s32.totalorder %s13, 0
    %p74 = por %p72, %p73
    %p75 = scmp.ne.s32.totalorder %s61, %s62
    %p76 = scmp.eq.s32.totalorder %s14, 3
    %p77 = por %p75, %p76
    %p79 = scmp.ne.s32.totalorder %s62, %s78
    %p80 = scmp.eq.s32.totalorder %s14, 0
    %p81 = por %p79, %p80
    %s82 = ssub.s32 %s15, %s27
    %p83 = scmp.eq.s32.totalorder %s82, 0
    %s85 = sadd.s32 %s84, 1
    %s86 = scalar_select %p83, %s84, %s85
    %p89 = pneg %p83
    %p90 = scmp.eq.s32.totalorder %s8, 3
    %p91 = por %p89, %p90
    %p92 = scmp.ne.s32.totalorder %s84, %s87
    %p93 = scmp.eq.s32.totalorder %s8, 0
    %p94 = por %p92, %p93
    %p95 = scmp.ne.s32.totalorder %s84, %s87
    %p96 = scmp.eq.s32.totalorder %s13, 3
    %p97 = por %p95, %p96
    %p98 = scmp.ne.s32.totalorder %s87, %s88
    %p99 = scmp.eq.s32.totalorder %s13, 0
    %p100 = por %p98, %p99
    %p101 = scmp.ne.s32.totalorder %s87, %s88
    %p102 = scmp.eq.s32.totalorder %s14, 3
    %p103 = por %p101, %p102
    %p105 = scmp.ne.s32.totalorder %s88, %s104
    %p106 = scmp.eq.s32.totalorder %s14, 0
    %p107 = por %p105, %p106
    %p108 = scmp.le.s32.totalorder 1, %s8
    %p109 = scmp.lt.s32.totalorder %s8, 5
    %p110 = pnand %p108, %p109
    %p111 = pneg %p110
    // Predicated region
    $region9: #{_lambda_.9} parent=5 // pred_check
      _
    $region10: #{_lambda_.9} parent=5 // pred_check_branch
      %113 = sbr.rel (%p110) target = $region12
    $region11: #{_lambda_.9} parent=5 // pred_region
      %s114 = ssub.s32 %s8, 1
    $region12: #{_lambda_.9} parent=5 // pred_fallthru
      _
    %p115 = scmp.lt.s32.totalorder %s8, 4
    // Predicated region
    $region13: #{_lambda_.9} parent=5 // pred_check
      %p116 = pneg %p115
    $region14: #{_lambda_.9} parent=5 // pred_check_branch
      %118 = sbr.rel (%p116) target = $region16
    $region15: #{_lambda_.9} parent=5 // pred_region
      // Predicated region
      $region17: #{_lambda_.9} parent=15 // pred_check
        %p119 = pneg %p42
      $region18: #{_lambda_.9} parent=15 // pred_check_branch
        %121 = sbr.rel (%p119) target = $region20
      $region19: #{_lambda_.9} parent=15 // pred_region
        %s122 = smul.u32 16, %s16
        %p123 = scmp.lt.s32.totalorder %s15, 0
        %s124 = scalar_select %p123, %s15, 0
        %p125 = scmp.lt.s32.totalorder %s122, 63
        %s126 = scalar_select %p125, %s122, 63
        %s127 = smul.addr %s124, 64
        %s128 = sadd.s32 %s126, %s127
        %s129 = smul.addr %s128, 4
        %s130 = scalar_lea.vmem %s0, %s129
        %s131 = smul.u32 16, %s16
      $region20: #{_lambda_.9} parent=15 // pred_fallthru
        _
      // Predicated region
      $region21: #{_lambda_.9} parent=15 // pred_check
        %p132 = pneg %p68
      $region22: #{_lambda_.9} parent=15 // pred_check_branch
        %134 = sbr.rel (%p132) target = $region24
      $region23: #{_lambda_.9} parent=15 // pred_region
        %s135 = smul.u32 256, %s16
        %p136 = scmp.lt.s32.totalorder %s135, 1023
        %s137 = scalar_select %p136, %s135, 1023
        %s138 = smul.addr %s137, 4
        %s139 = scalar_lea.vmem %s1, %s138
        %s140 = smul.u32 256, %s16
      $region24: #{_lambda_.9} parent=15 // pred_fallthru
        _
    $region16: #{_lambda_.9} parent=5 // pred_fallthru
      _
    %p141 = scmp.le.s32.totalorder 1, %s8
    %p142 = scmp.lt.s32.totalorder %s8, 5
    %p143 = pnand %p141, %p142
    %p144 = pneg %p143
    // Predicated region
    $region25: #{_lambda_.9} parent=5 // pred_check
      _
    $region26: #{_lambda_.9} parent=5 // pred_check_branch
      %146 = sbr.rel (%p143) target = $region28
    $region27: #{_lambda_.9} parent=5 // pred_region
      %s147 = ssub.s32 %s8, 1
      %s148 = smul.u32 16, %s18
      %p149 = scmp.lt.s32.totalorder %s17, 0
      %s150 = scalar_select %p149, %s17, 0
      %p151 = scmp.lt.s32.totalorder %s148, 63
      %s152 = scalar_select %p151, %s148, 63
      %s153 = smul.addr %s150, 64
      %s154 = sadd.s32 %s152, %s153
      %s155 = smul.addr %s154, 4
      %s156 = scalar_lea.vmem %s0, %s155
      %p157 = pneg %p48
      %p158 = pneg %p45
      %s159 = smul.u32 256, %s18
      %p160 = scmp.lt.s32.totalorder %s159, 1023
      %s161 = scalar_select %p160, %s159, 1023
      %s162 = smul.addr %s161, 4
      %s163 = scalar_lea.vmem %s1, %s162
      %p164 = pneg %p74
      %p165 = pneg %p71
      %p166 = pneg %p100
      %p167 = pneg %p97
      %p168 = scmp.lt.s32.totalorder %s17, 0
      %s169 = scalar_select %p168, %s17, 0
      %s170 = smul.addr %s169, 8
      %s171 = scalar_lea.vmem %s2, %s170
      %s172 = smul.u32 16, %s18
      %p173 = scmp.lt.s32.totalorder %s17, 0
      %s174 = scalar_select %p173, %s17, 0
      %p175 = scmp.lt.s32.totalorder %s172, 63
      %s176 = scalar_select %p175, %s172, 63
      %s177 = smul.addr %s174, 64
      %s178 = sadd.s32 %s176, %s177
      %s179 = smul.addr %s178, 4
      %s180 = scalar_lea.vmem %s0, %s179
      %s181 = smul.u32 16, %s18
      %s182 = smul.u32 256, %s18
      %p183 = scmp.lt.s32.totalorder %s182, 1023
      %s184 = scalar_select %p183, %s182, 1023
      %s185 = smul.addr %s184, 4
      %s186 = scalar_lea.vmem %s1, %s185
      %s187 = smul.u32 256, %s18
      %p188 = scmp.lt.s32.totalorder %s17, 0
      %s189 = scalar_select %p188, %s17, 0
      %s190 = smul.addr %s189, 8
      %s191 = scalar_lea.vmem %s2, %s190
      %p193 = scmp.eq.s32.totalorder %s18, 0
      // Predicated region
      $region29: #{_lambda_.9} parent=27 // pred_check
        %p194 = pneg %p193
      $region30: #{_lambda_.9} parent=27 // pred_check_branch
        %196 = sbr.rel (%p194) target = $region32
      $region31: #{_lambda_.9} parent=27 // pred_region
        %197 = vst [vmem:[#allocation2] sm:$0xff] 0.0
      $region32: #{_lambda_.9} parent=27 // pred_fallthru
        _
      %v198 = vld [vmem:[#allocation2] sm:$0xff]
      %v199 = vld [vmem:[%s180] sm:$0xff]
      %v200 = vld [vmem:[%s180 + $0x8] sm:$0xff]
      %v201 = vld [vmem:[%s180 + $0x10] sm:$0xff]
      %v202 = vld [vmem:[%s180 + $0x18] sm:$0xff]
      %v203 = vld [vmem:[%s180 + $0x20] sm:$0xff]
      %v204 = vld [vmem:[%s180 + $0x28] sm:$0xff]
      %v205 = vld [vmem:[%s180 + $0x30] sm:$0xff]
      %v206 = vld [vmem:[%s180 + $0x38] sm:$0xff]
      %v207 = vld [vmem:[%s186] sm:$0xf]
      %v208 = vld [vmem:[%s186 + $0x4] sm:$0xf]
      %v209 = vld [vmem:[%s186 + $0x8] sm:$0xf]
      %v210 = vld [vmem:[%s186 + $0xc] sm:$0xf]
      %v211 = vld [vmem:[%s186 + $0x10] sm:$0xf]
      %v212 = vld [vmem:[%s186 + $0x14] sm:$0xf]
      %v213 = vld [vmem:[%s186 + $0x18] sm:$0xf]
      %v214 = vld [vmem:[%s186 + $0x1c] sm:$0xf]
      %v215 = vld [vmem:[%s186 + $0x20] sm:$0xf]
      %v216 = vld [vmem:[%s186 + $0x24] sm:$0xf]
      %v217 = vld [vmem:[%s186 + $0x28] sm:$0xf]
      %v218 = vld [vmem:[%s186 + $0x2c] sm:$0xf]
      %v219 = vld [vmem:[%s186 + $0x30] sm:$0xf]
      %v220 = vld [vmem:[%s186 + $0x34] sm:$0xf]
      %v221 = vld [vmem:[%s186 + $0x38] sm:$0xf]
      %v222 = vld [vmem:[%s186 + $0x3c] sm:$0xf]
      %v223 = vld [vmem:[%s186 + $0x40] sm:$0xf]
      %v224 = vld [vmem:[%s186 + $0x44] sm:$0xf]
      %v225 = vld [vmem:[%s186 + $0x48] sm:$0xf]
      %v226 = vld [vmem:[%s186 + $0x4c] sm:$0xf]
      %v227 = vld [vmem:[%s186 + $0x50] sm:$0xf]
      %v228 = vld [vmem:[%s186 + $0x54] sm:$0xf]
      %v229 = vld [vmem:[%s186 + $0x58] sm:$0xf]
      %v230 = vld [vmem:[%s186 + $0x5c] sm:$0xf]
      %v231 = vld [vmem:[%s186 + $0x60] sm:$0xf]
      %v232 = vld [vmem:[%s186 + $0x64] sm:$0xf]
      %v233 = vld [vmem:[%s186 + $0x68] sm:$0xf]
      %v234 = vld [vmem:[%s186 + $0x6c] sm:$0xf]
      %v235 = vld [vmem:[%s186 + $0x70] sm:$0xf]
      %v236 = vld [vmem:[%s186 + $0x74] sm:$0xf]
      %v237 = vld [vmem:[%s186 + $0x78] sm:$0xf]
      %v238 = vld [vmem:[%s186 + $0x7c] sm:$0xf]
      %v239 = vld [vmem:[%s186 + $0x80] sm:$0xf]
      %v240 = vld [vmem:[%s186 + $0x84] sm:$0xf]
      %v241 = vld [vmem:[%s186 + $0x88] sm:$0xf]
      %v242 = vld [vmem:[%s186 + $0x8c] sm:$0xf]
      %v243 = vld [vmem:[%s186 + $0x90] sm:$0xf]
      %v244 = vld [vmem:[%s186 + $0x94] sm:$0xf]
      %v245 = vld [vmem:[%s186 + $0x98] sm:$0xf]
      %v246 = vld [vmem:[%s186 + $0x9c] sm:$0xf]
      %v247 = vld [vmem:[%s186 + $0xa0] sm:$0xf]
      %v248 = vld [vmem:[%s186 + $0xa4] sm:$0xf]
      %v249 = vld [vmem:[%s186 + $0xa8] sm:$0xf]
      %v250 = vld [vmem:[%s186 + $0xac] sm:$0xf]
      %v251 = vld [vmem:[%s186 + $0xb0] sm:$0xf]
      %v252 = vld [vmem:[%s186 + $0xb4] sm:$0xf]
      %v253 = vld [vmem:[%s186 + $0xb8] sm:$0xf]
      %v254 = vld [vmem:[%s186 + $0xbc] sm:$0xf]
      %v255 = vld [vmem:[%s186 + $0xc0] sm:$0xf]
      %v256 = vld [vmem:[%s186 + $0xc4] sm:$0xf]
      %v257 = vld [vmem:[%s186 + $0xc8] sm:$0xf]
      %v258 = vld [vmem:[%s186 + $0xcc] sm:$0xf]
      %v259 = vld [vmem:[%s186 + $0xd0] sm:$0xf]
      %v260 = vld [vmem:[%s186 + $0xd4] sm:$0xf]
      %v261 = vld [vmem:[%s186 + $0xd8] sm:$0xf]
      %v262 = vld [vmem:[%s186 + $0xdc] sm:$0xf]
      %v263 = vld [vmem:[%s186 + $0xe0] sm:$0xf]
      %v264 = vld [vmem:[%s186 + $0xe4] sm:$0xf]
      %v265 = vld [vmem:[%s186 + $0xe8] sm:$0xf]
      %v266 = vld [vmem:[%s186 + $0xec] sm:$0xf]
      %v267 = vld [vmem:[%s186 + $0xf0] sm:$0xf]
      %v268 = vld [vmem:[%s186 + $0xf4] sm:$0xf]
      %v269 = vld [vmem:[%s186 + $0xf8] sm:$0xf]
      %v270 = vld [vmem:[%s186 + $0xfc] sm:$0xf]
      %v271 = vld [vmem:[%s186 + $0x100] sm:$0xf]
      %v272 = vld [vmem:[%s186 + $0x104] sm:$0xf]
      %v273 = vld [vmem:[%s186 + $0x108] sm:$0xf]
      %v274 = vld [vmem:[%s186 + $0x10c] sm:$0xf]
      %v275 = vld [vmem:[%s186 + $0x110] sm:$0xf]
      %v276 = vld [vmem:[%s186 + $0x114] sm:$0xf]
      %v277 = vld [vmem:[%s186 + $0x118] sm:$0xf]
      %v278 = vld [vmem:[%s186 + $0x11c] sm:$0xf]
      %v279 = vld [vmem:[%s186 + $0x120] sm:$0xf]
      %v280 = vld [vmem:[%s186 + $0x124] sm:$0xf]
      %v281 = vld [vmem:[%s186 + $0x128] sm:$0xf]
      %v282 = vld [vmem:[%s186 + $0x12c] sm:$0xf]
      %v283 = vld [vmem:[%s186 + $0x130] sm:$0xf]
      %v284 = vld [vmem:[%s186 + $0x134] sm:$0xf]
      %v285 = vld [vmem:[%s186 + $0x138] sm:$0xf]
      %v286 = vld [vmem:[%s186 + $0x13c] sm:$0xf]
      %v287 = vld [vmem:[%s186 + $0x140] sm:$0xf]
      %v288 = vld [vmem:[%s186 + $0x144] sm:$0xf]
      %v289 = vld [vmem:[%s186 + $0x148] sm:$0xf]
      %v290 = vld [vmem:[%s186 + $0x14c] sm:$0xf]
      %v291 = vld [vmem:[%s186 + $0x150] sm:$0xf]
      %v292 = vld [vmem:[%s186 + $0x154] sm:$0xf]
      %v293 = vld [vmem:[%s186 + $0x158] sm:$0xf]
      %v294 = vld [vmem:[%s186 + $0x15c] sm:$0xf]
      %v295 = vld [vmem:[%s186 + $0x160] sm:$0xf]
      %v296 = vld [vmem:[%s186 + $0x164] sm:$0xf]
      %v297 = vld [vmem:[%s186 + $0x168] sm:$0xf]
      %v298 = vld [vmem:[%s186 + $0x16c] sm:$0xf]
      %v299 = vld [vmem:[%s186 + $0x170] sm:$0xf]
      %v300 = vld [vmem:[%s186 + $0x174] sm:$0xf]
      %v301 = vld [vmem:[%s186 + $0x178] sm:$0xf]
      %v302 = vld [vmem:[%s186 + $0x17c] sm:$0xf]
      %v303 = vld [vmem:[%s186 + $0x180] sm:$0xf]
      %v304 = vld [vmem:[%s186 + $0x184] sm:$0xf]
      %v305 = vld [vmem:[%s186 + $0x188] sm:$0xf]
      %v306 = vld [vmem:[%s186 + $0x18c] sm:$0xf]
      %v307 = vld [vmem:[%s186 + $0x190] sm:$0xf]
      %v308 = vld [vmem:[%s186 + $0x194] sm:$0xf]
      %v309 = vld [vmem:[%s186 + $0x198] sm:$0xf]
      %v310 = vld [vmem:[%s186 + $0x19c] sm:$0xf]
      %v311 = vld [vmem:[%s186 + $0x1a0] sm:$0xf]
      %v312 = vld [vmem:[%s186 + $0x1a4] sm:$0xf]
      %v313 = vld [vmem:[%s186 + $0x1a8] sm:$0xf]
      %v314 = vld [vmem:[%s186 + $0x1ac] sm:$0xf]
      %v315 = vld [vmem:[%s186 + $0x1b0] sm:$0xf]
      %v316 = vld [vmem:[%s186 + $0x1b4] sm:$0xf]
      %v317 = vld [vmem:[%s186 + $0x1b8] sm:$0xf]
      %v318 = vld [vmem:[%s186 + $0x1bc] sm:$0xf]
      %v319 = vld [vmem:[%s186 + $0x1c0] sm:$0xf]
      %v320 = vld [vmem:[%s186 + $0x1c4] sm:$0xf]
      %v321 = vld [vmem:[%s186 + $0x1c8] sm:$0xf]
      %v322 = vld [vmem:[%s186 + $0x1cc] sm:$0xf]
      %v323 = vld [vmem:[%s186 + $0x1d0] sm:$0xf]
      %v324 = vld [vmem:[%s186 + $0x1d4] sm:$0xf]
      %v325 = vld [vmem:[%s186 + $0x1d8] sm:$0xf]
      %v326 = vld [vmem:[%s186 + $0x1dc] sm:$0xf]
      %v327 = vld [vmem:[%s186 + $0x1e0] sm:$0xf]
      %v328 = vld [vmem:[%s186 + $0x1e4] sm:$0xf]
      %v329 = vld [vmem:[%s186 + $0x1e8] sm:$0xf]
      %v330 = vld [vmem:[%s186 + $0x1ec] sm:$0xf]
      %v331 = vld [vmem:[%s186 + $0x1f0] sm:$0xf]
      %v332 = vld [vmem:[%s186 + $0x1f4] sm:$0xf]
      %v333 = vld [vmem:[%s186 + $0x1f8] sm:$0xf]
      %v334 = vld [vmem:[%s186 + $0x1fc] sm:$0xf]
      %v335 = vld [vmem:[%s186 + $0x200] sm:$0xf]
      %v336 = vld [vmem:[%s186 + $0x204] sm:$0xf]
      %v337 = vld [vmem:[%s186 + $0x208] sm:$0xf]
      %v338 = vld [vmem:[%s186 + $0x20c] sm:$0xf]
      %v339 = vld [vmem:[%s186 + $0x210] sm:$0xf]
      %v340 = vld [vmem:[%s186 + $0x214] sm:$0xf]
      %v341 = vld [vmem:[%s186 + $0x218] sm:$0xf]
      %v342 = vld [vmem:[%s186 + $0x21c] sm:$0xf]
      %v343 = vld [vmem:[%s186 + $0x220] sm:$0xf]
      %v344 = vld [vmem:[%s186 + $0x224] sm:$0xf]
      %v345 = vld [vmem:[%s186 + $0x228] sm:$0xf]
      %v346 = vld [vmem:[%s186 + $0x22c] sm:$0xf]
      %v347 = vld [vmem:[%s186 + $0x230] sm:$0xf]
      %v348 = vld [vmem:[%s186 + $0x234] sm:$0xf]
      %v349 = vld [vmem:[%s186 + $0x238] sm:$0xf]
      %v350 = vld [vmem:[%s186 + $0x23c] sm:$0xf]
      %v351 = vld [vmem:[%s186 + $0x240] sm:$0xf]
      %v352 = vld [vmem:[%s186 + $0x244] sm:$0xf]
      %v353 = vld [vmem:[%s186 + $0x248] sm:$0xf]
      %v354 = vld [vmem:[%s186 + $0x24c] sm:$0xf]
      %v355 = vld [vmem:[%s186 + $0x250] sm:$0xf]
      %v356 = vld [vmem:[%s186 + $0x254] sm:$0xf]
      %v357 = vld [vmem:[%s186 + $0x258] sm:$0xf]
      %v358 = vld [vmem:[%s186 + $0x25c] sm:$0xf]
      %v359 = vld [vmem:[%s186 + $0x260] sm:$0xf]
      %v360 = vld [vmem:[%s186 + $0x264] sm:$0xf]
      %v361 = vld [vmem:[%s186 + $0x268] sm:$0xf]
      %v362 = vld [vmem:[%s186 + $0x26c] sm:$0xf]
      %v363 = vld [vmem:[%s186 + $0x270] sm:$0xf]
      %v364 = vld [vmem:[%s186 + $0x274] sm:$0xf]
      %v365 = vld [vmem:[%s186 + $0x278] sm:$0xf]
      %v366 = vld [vmem:[%s186 + $0x27c] sm:$0xf]
      %v367 = vld [vmem:[%s186 + $0x280] sm:$0xf]
      %v368 = vld [vmem:[%s186 + $0x284] sm:$0xf]
      %v369 = vld [vmem:[%s186 + $0x288] sm:$0xf]
      %v370 = vld [vmem:[%s186 + $0x28c] sm:$0xf]
      %v371 = vld [vmem:[%s186 + $0x290] sm:$0xf]
      %v372 = vld [vmem:[%s186 + $0x294] sm:$0xf]
      %v373 = vld [vmem:[%s186 + $0x298] sm:$0xf]
      %v374 = vld [vmem:[%s186 + $0x29c] sm:$0xf]
      %v375 = vld [vmem:[%s186 + $0x2a0] sm:$0xf]
      %v376 = vld [vmem:[%s186 + $0x2a4] sm:$0xf]
      %v377 = vld [vmem:[%s186 + $0x2a8] sm:$0xf]
      %v378 = vld [vmem:[%s186 + $0x2ac] sm:$0xf]
      %v379 = vld [vmem:[%s186 + $0x2b0] sm:$0xf]
      %v380 = vld [vmem:[%s186 + $0x2b4] sm:$0xf]
      %v381 = vld [vmem:[%s186 + $0x2b8] sm:$0xf]
      %v382 = vld [vmem:[%s186 + $0x2bc] sm:$0xf]
      %v383 = vld [vmem:[%s186 + $0x2c0] sm:$0xf]
      %v384 = vld [vmem:[%s186 + $0x2c4] sm:$0xf]
      %v385 = vld [vmem:[%s186 + $0x2c8] sm:$0xf]
      %v386 = vld [vmem:[%s186 + $0x2cc] sm:$0xf]
      %v387 = vld [vmem:[%s186 + $0x2d0] sm:$0xf]
      %v388 = vld [vmem:[%s186 + $0x2d4] sm:$0xf]
      %v389 = vld [vmem:[%s186 + $0x2d8] sm:$0xf]
      %v390 = vld [vmem:[%s186 + $0x2dc] sm:$0xf]
      %v391 = vld [vmem:[%s186 + $0x2e0] sm:$0xf]
      %v392 = vld [vmem:[%s186 + $0x2e4] sm:$0xf]
      %v393 = vld [vmem:[%s186 + $0x2e8] sm:$0xf]
      %v394 = vld [vmem:[%s186 + $0x2ec] sm:$0xf]
      %v395 = vld [vmem:[%s186 + $0x2f0] sm:$0xf]
      %v396 = vld [vmem:[%s186 + $0x2f4] sm:$0xf]
      %v397 = vld [vmem:[%s186 + $0x2f8] sm:$0xf]
      %v398 = vld [vmem:[%s186 + $0x2fc] sm:$0xf]
      %v399 = vld [vmem:[%s186 + $0x300] sm:$0xf]
      %v400 = vld [vmem:[%s186 + $0x304] sm:$0xf]
      %v401 = vld [vmem:[%s186 + $0x308] sm:$0xf]
      %v402 = vld [vmem:[%s186 + $0x30c] sm:$0xf]
      %v403 = vld [vmem:[%s186 + $0x310] sm:$0xf]
      %v404 = vld [vmem:[%s186 + $0x314] sm:$0xf]
      %v405 = vld [vmem:[%s186 + $0x318] sm:$0xf]
      %v406 = vld [vmem:[%s186 + $0x31c] sm:$0xf]
      %v407 = vld [vmem:[%s186 + $0x320] sm:$0xf]
      %v408 = vld [vmem:[%s186 + $0x324] sm:$0xf]
      %v409 = vld [vmem:[%s186 + $0x328] sm:$0xf]
      %v410 = vld [vmem:[%s186 + $0x32c] sm:$0xf]
      %v411 = vld [vmem:[%s186 + $0x330] sm:$0xf]
      %v412 = vld [vmem:[%s186 + $0x334] sm:$0xf]
      %v413 = vld [vmem:[%s186 + $0x338] sm:$0xf]
      %v414 = vld [vmem:[%s186 + $0x33c] sm:$0xf]
      %v415 = vld [vmem:[%s186 + $0x340] sm:$0xf]
      %v416 = vld [vmem:[%s186 + $0x344] sm:$0xf]
      %v417 = vld [vmem:[%s186 + $0x348] sm:$0xf]
      %v418 = vld [vmem:[%s186 + $0x34c] sm:$0xf]
      %v419 = vld [vmem:[%s186 + $0x350] sm:$0xf]
      %v420 = vld [vmem:[%s186 + $0x354] sm:$0xf]
      %v421 = vld [vmem:[%s186 + $0x358] sm:$0xf]
      %v422 = vld [vmem:[%s186 + $0x35c] sm:$0xf]
      %v423 = vld [vmem:[%s186 + $0x360] sm:$0xf]
      %v424 = vld [vmem:[%s186 + $0x364] sm:$0xf]
      %v425 = vld [vmem:[%s186 + $0x368] sm:$0xf]
      %v426 = vld [vmem:[%s186 + $0x36c] sm:$0xf]
      %v427 = vld [vmem:[%s186 + $0x370] sm:$0xf]
      %v428 = vld [vmem:[%s186 + $0x374] sm:$0xf]
      %v429 = vld [vmem:[%s186 + $0x378] sm:$0xf]
      %v430 = vld [vmem:[%s186 + $0x37c] sm:$0xf]
      %v431 = vld [vmem:[%s186 + $0x380] sm:$0xf]
      %v432 = vld [vmem:[%s186 + $0x384] sm:$0xf]
      %v433 = vld [vmem:[%s186 + $0x388] sm:$0xf]
      %v434 = vld [vmem:[%s186 + $0x38c] sm:$0xf]
      %v435 = vld [vmem:[%s186 + $0x390] sm:$0xf]
      %v436 = vld [vmem:[%s186 + $0x394] sm:$0xf]
      %v437 = vld [vmem:[%s186 + $0x398] sm:$0xf]
      %v438 = vld [vmem:[%s186 + $0x39c] sm:$0xf]
      %v439 = vld [vmem:[%s186 + $0x3a0] sm:$0xf]
      %v440 = vld [vmem:[%s186 + $0x3a4] sm:$0xf]
      %v441 = vld [vmem:[%s186 + $0x3a8] sm:$0xf]
      %v442 = vld [vmem:[%s186 + $0x3ac] sm:$0xf]
      %v443 = vld [vmem:[%s186 + $0x3b0] sm:$0xf]
      %v444 = vld [vmem:[%s186 + $0x3b4] sm:$0xf]
      %v445 = vld [vmem:[%s186 + $0x3b8] sm:$0xf]
      %v446 = vld [vmem:[%s186 + $0x3bc] sm:$0xf]
      %v447 = vld [vmem:[%s186 + $0x3c0] sm:$0xf]
      %v448 = vld [vmem:[%s186 + $0x3c4] sm:$0xf]
      %v449 = vld [vmem:[%s186 + $0x3c8] sm:$0xf]
      %v450 = vld [vmem:[%s186 + $0x3cc] sm:$0xf]
      %v451 = vld [vmem:[%s186 + $0x3d0] sm:$0xf]
      %v452 = vld [vmem:[%s186 + $0x3d4] sm:$0xf]
      %v453 = vld [vmem:[%s186 + $0x3d8] sm:$0xf]
      %v454 = vld [vmem:[%s186 + $0x3dc] sm:$0xf]
      %v455 = vld [vmem:[%s186 + $0x3e0] sm:$0xf]
      %v456 = vld [vmem:[%s186 + $0x3e4] sm:$0xf]
      %v457 = vld [vmem:[%s186 + $0x3e8] sm:$0xf]
      %v458 = vld [vmem:[%s186 + $0x3ec] sm:$0xf]
      %v459 = vld [vmem:[%s186 + $0x3f0] sm:$0xf]
      %v460 = vld [vmem:[%s186 + $0x3f4] sm:$0xf]
      %v461 = vld [vmem:[%s186 + $0x3f8] sm:$0xf]
      %v462 = vld [vmem:[%s186 + $0x3fc] sm:$0xf]
      %v471 = vunpack.c.l.b16 %v199
      %v472 = vunpack.c.h.b16 %v199
      %v473 = vunpack.c.l.b16 %v200
      %v474 = vunpack.c.h.b16 %v200
      %v475 = vunpack.c.l.b16 %v201
      %v476 = vunpack.c.h.b16 %v201
      %v477 = vunpack.c.l.b16 %v202
      %v478 = vunpack.c.h.b16 %v202
      %v479 = vunpack.c.l.b16 %v203
      %v480 = vunpack.c.h.b16 %v203
      %v481 = vunpack.c.l.b16 %v204
      %v482 = vunpack.c.h.b16 %v204
      %v483 = vunpack.c.l.b16 %v205
      %v484 = vunpack.c.h.b16 %v205
      %v485 = vunpack.c.l.b16 %v206
      %v486 = vunpack.c.h.b16 %v206
      %v487 = vpack.c.b16 %v471, %v471
      %v488 = vpack.c.b16 %v472, %v472
      %v489 = vpack.c.b16 %v473, %v473
      %v490 = vpack.c.b16 %v474, %v474
      %v491 = vpack.c.b16 %v475, %v475
      %v492 = vpack.c.b16 %v476, %v476
      %v493 = vpack.c.b16 %v477, %v477
      %v494 = vpack.c.b16 %v478, %v478
      %v495 = vpack.c.b16 %v479, %v479
      %v496 = vpack.c.b16 %v480, %v480
      %v497 = vpack.c.b16 %v481, %v481
      %v498 = vpack.c.b16 %v482, %v482
      %v499 = vpack.c.b16 %v483, %v483
      %v500 = vpack.c.b16 %v484, %v484
      %v501 = vpack.c.b16 %v485, %v485
      %v502 = vpack.c.b16 %v486, %v486
      %v775 = vunpack.c.l.b16 %v207
      %v776 = vunpack.c.l.b16 %v208
      %v777 = vunpack.c.l.b16 %v209
      %v778 = vunpack.c.l.b16 %v210
      %v779 = vunpack.c.l.b16 %v211
      %v780 = vunpack.c.l.b16 %v212
      %v781 = vunpack.c.l.b16 %v213
      %v782 = vunpack.c.l.b16 %v214
      %v783 = vunpack.c.l.b16 %v215
      %v784 = vunpack.c.l.b16 %v216
      %v785 = vunpack.c.l.b16 %v217
      %v786 = vunpack.c.l.b16 %v218
      %v787 = vunpack.c.l.b16 %v219
      %v788 = vunpack.c.l.b16 %v220
      %v789 = vunpack.c.l.b16 %v221
      %v790 = vunpack.c.l.b16 %v222
      %v791 = vunpack.c.l.b16 %v223
      %v792 = vunpack.c.l.b16 %v224
      %v793 = vunpack.c.l.b16 %v225
      %v794 = vunpack.c.l.b16 %v226
      %v795 = vunpack.c.l.b16 %v227
      %v796 = vunpack.c.l.b16 %v228
      %v797 = vunpack.c.l.b16 %v229
      %v798 = vunpack.c.l.b16 %v230
      %v799 = vunpack.c.l.b16 %v231
      %v800 = vunpack.c.l.b16 %v232
      %v801 = vunpack.c.l.b16 %v233
      %v802 = vunpack.c.l.b16 %v234
      %v803 = vunpack.c.l.b16 %v235
      %v804 = vunpack.c.l.b16 %v236
      %v805 = vunpack.c.l.b16 %v237
      %v806 = vunpack.c.l.b16 %v238
      %v807 = vunpack.c.l.b16 %v239
      %v808 = vunpack.c.l.b16 %v240
      %v809 = vunpack.c.l.b16 %v241
      %v810 = vunpack.c.l.b16 %v242
      %v811 = vunpack.c.l.b16 %v243
      %v812 = vunpack.c.l.b16 %v244
      %v813 = vunpack.c.l.b16 %v245
      %v814 = vunpack.c.l.b16 %v246
      %v815 = vunpack.c.l.b16 %v247
      %v816 = vunpack.c.l.b16 %v248
      %v817 = vunpack.c.l.b16 %v249
      %v818 = vunpack.c.l.b16 %v250
      %v819 = vunpack.c.l.b16 %v251
      %v820 = vunpack.c.l.b16 %v252
      %v821 = vunpack.c.l.b16 %v253
      %v822 = vunpack.c.l.b16 %v254
      %v823 = vunpack.c.l.b16 %v255
      %v824 = vunpack.c.l.b16 %v256
      %v825 = vunpack.c.l.b16 %v257
      %v826 = vunpack.c.l.b16 %v258
      %v827 = vunpack.c.l.b16 %v259
      %v828 = vunpack.c.l.b16 %v260
      %v829 = vunpack.c.l.b16 %v261
      %v830 = vunpack.c.l.b16 %v262
      %v831 = vunpack.c.l.b16 %v263
      %v832 = vunpack.c.l.b16 %v264
      %v833 = vunpack.c.l.b16 %v265
      %v834 = vunpack.c.l.b16 %v266
      %v835 = vunpack.c.l.b16 %v267
      %v836 = vunpack.c.l.b16 %v268
      %v837 = vunpack.c.l.b16 %v269
      %v838 = vunpack.c.l.b16 %v270
      %v839 = vunpack.c.l.b16 %v271
      %v840 = vunpack.c.l.b16 %v272
      %v841 = vunpack.c.l.b16 %v273
      %v842 = vunpack.c.l.b16 %v274
      %v843 = vunpack.c.l.b16 %v275
      %v844 = vunpack.c.l.b16 %v276
      %v845 = vunpack.c.l.b16 %v277
      %v846 = vunpack.c.l.b16 %v278
      %v847 = vunpack.c.l.b16 %v279
      %v848 = vunpack.c.l.b16 %v280
      %v849 = vunpack.c.l.b16 %v281
      %v850 = vunpack.c.l.b16 %v282
      %v851 = vunpack.c.l.b16 %v283
      %v852 = vunpack.c.l.b16 %v284
      %v853 = vunpack.c.l.b16 %v285
      %v854 = vunpack.c.l.b16 %v286
      %v855 = vunpack.c.l.b16 %v287
      %v856 = vunpack.c.l.b16 %v288
      %v857 = vunpack.c.l.b16 %v289
      %v858 = vunpack.c.l.b16 %v290
      %v859 = vunpack.c.l.b16 %v291
      %v860 = vunpack.c.l.b16 %v292
      %v861 = vunpack.c.l.b16 %v293
      %v862 = vunpack.c.l.b16 %v294
      %v863 = vunpack.c.l.b16 %v295
      %v864 = vunpack.c.l.b16 %v296
      %v865 = vunpack.c.l.b16 %v297
      %v866 = vunpack.c.l.b16 %v298
      %v867 = vunpack.c.l.b16 %v299
      %v868 = vunpack.c.l.b16 %v300
      %v869 = vunpack.c.l.b16 %v301
      %v870 = vunpack.c.l.b16 %v302
      %v871 = vunpack.c.l.b16 %v303
      %v872 = vunpack.c.l.b16 %v304
      %v873 = vunpack.c.l.b16 %v305
      %v874 = vunpack.c.l.b16 %v306
      %v875 = vunpack.c.l.b16 %v307
      %v876 = vunpack.c.l.b16 %v308
      %v877 = vunpack.c.l.b16 %v309
      %v878 = vunpack.c.l.b16 %v310
      %v879 = vunpack.c.l.b16 %v311
      %v880 = vunpack.c.l.b16 %v312
      %v881 = vunpack.c.l.b16 %v313
      %v882 = vunpack.c.l.b16 %v314
      %v883 = vunpack.c.l.b16 %v315
      %v884 = vunpack.c.l.b16 %v316
      %v885 = vunpack.c.l.b16 %v317
      %v886 = vunpack.c.l.b16 %v318
      %v887 = vunpack.c.l.b16 %v319
      %v888 = vunpack.c.l.b16 %v320
      %v889 = vunpack.c.l.b16 %v321
      %v890 = vunpack.c.l.b16 %v322
      %v891 = vunpack.c.l.b16 %v323
      %v892 = vunpack.c.l.b16 %v324
      %v893 = vunpack.c.l.b16 %v325
      %v894 = vunpack.c.l.b16 %v326
      %v895 = vunpack.c.l.b16 %v327
      %v896 = vunpack.c.l.b16 %v328
      %v897 = vunpack.c.l.b16 %v329
      %v898 = vunpack.c.l.b16 %v330
      %v899 = vunpack.c.l.b16 %v331
      %v900 = vunpack.c.l.b16 %v332
      %v901 = vunpack.c.l.b16 %v333
      %v902 = vunpack.c.l.b16 %v334
      %v903 = vunpack.c.l.b16 %v335
      %v904 = vunpack.c.l.b16 %v336
      %v905 = vunpack.c.l.b16 %v337
      %v906 = vunpack.c.l.b16 %v338
      %v907 = vunpack.c.l.b16 %v339
      %v908 = vunpack.c.l.b16 %v340
      %v909 = vunpack.c.l.b16 %v341
      %v910 = vunpack.c.l.b16 %v342
      %v911 = vunpack.c.l.b16 %v343
      %v912 = vunpack.c.l.b16 %v344
      %v913 = vunpack.c.l.b16 %v345
      %v914 = vunpack.c.l.b16 %v346
      %v915 = vunpack.c.l.b16 %v347
      %v916 = vunpack.c.l.b16 %v348
      %v917 = vunpack.c.l.b16 %v349
      %v918 = vunpack.c.l.b16 %v350
      %v919 = vunpack.c.l.b16 %v351
      %v920 = vunpack.c.l.b16 %v352
      %v921 = vunpack.c.l.b16 %v353
      %v922 = vunpack.c.l.b16 %v354
      %v923 = vunpack.c.l.b16 %v355
      %v924 = vunpack.c.l.b16 %v356
      %v925 = vunpack.c.l.b16 %v357
      %v926 = vunpack.c.l.b16 %v358
      %v927 = vunpack.c.l.b16 %v359
      %v928 = vunpack.c.l.b16 %v360
      %v929 = vunpack.c.l.b16 %v361
      %v930 = vunpack.c.l.b16 %v362
      %v931 = vunpack.c.l.b16 %v363
      %v932 = vunpack.c.l.b16 %v364
      %v933 = vunpack.c.l.b16 %v365
      %v934 = vunpack.c.l.b16 %v366
      %v935 = vunpack.c.l.b16 %v367
      %v936 = vunpack.c.l.b16 %v368
      %v937 = vunpack.c.l.b16 %v369
      %v938 = vunpack.c.l.b16 %v370
      %v939 = vunpack.c.l.b16 %v371
      %v940 = vunpack.c.l.b16 %v372
      %v941 = vunpack.c.l.b16 %v373
      %v942 = vunpack.c.l.b16 %v374
      %v943 = vunpack.c.l.b16 %v375
      %v944 = vunpack.c.l.b16 %v376
      %v945 = vunpack.c.l.b16 %v377
      %v946 = vunpack.c.l.b16 %v378
      %v947 = vunpack.c.l.b16 %v379
      %v948 = vunpack.c.l.b16 %v380
      %v949 = vunpack.c.l.b16 %v381
      %v950 = vunpack.c.l.b16 %v382
      %v951 = vunpack.c.l.b16 %v383
      %v952 = vunpack.c.l.b16 %v384
      %v953 = vunpack.c.l.b16 %v385
      %v954 = vunpack.c.l.b16 %v386
      %v955 = vunpack.c.l.b16 %v387
      %v956 = vunpack.c.l.b16 %v388
      %v957 = vunpack.c.l.b16 %v389
      %v958 = vunpack.c.l.b16 %v390
      %v959 = vunpack.c.l.b16 %v391
      %v960 = vunpack.c.l.b16 %v392
      %v961 = vunpack.c.l.b16 %v393
      %v962 = vunpack.c.l.b16 %v394
      %v963 = vunpack.c.l.b16 %v395
      %v964 = vunpack.c.l.b16 %v396
      %v965 = vunpack.c.l.b16 %v397
      %v966 = vunpack.c.l.b16 %v398
      %v967 = vunpack.c.l.b16 %v399
      %v968 = vunpack.c.l.b16 %v400
      %v969 = vunpack.c.l.b16 %v401
      %v970 = vunpack.c.l.b16 %v402
      %v971 = vunpack.c.l.b16 %v403
      %v972 = vunpack.c.l.b16 %v404
      %v973 = vunpack.c.l.b16 %v405
      %v974 = vunpack.c.l.b16 %v406
      %v975 = vunpack.c.l.b16 %v407
      %v976 = vunpack.c.l.b16 %v408
      %v977 = vunpack.c.l.b16 %v409
      %v978 = vunpack.c.l.b16 %v410
      %v979 = vunpack.c.l.b16 %v411
      %v980 = vunpack.c.l.b16 %v412
      %v981 = vunpack.c.l.b16 %v413
      %v982 = vunpack.c.l.b16 %v414
      %v983 = vunpack.c.l.b16 %v415
      %v984 = vunpack.c.l.b16 %v416
      %v985 = vunpack.c.l.b16 %v417
      %v986 = vunpack.c.l.b16 %v418
      %v987 = vunpack.c.l.b16 %v419
      %v988 = vunpack.c.l.b16 %v420
      %v989 = vunpack.c.l.b16 %v421
      %v990 = vunpack.c.l.b16 %v422
      %v991 = vunpack.c.l.b16 %v423
      %v992 = vunpack.c.l.b16 %v424
      %v993 = vunpack.c.l.b16 %v425
      %v994 = vunpack.c.l.b16 %v426
      %v995 = vunpack.c.l.b16 %v427
      %v996 = vunpack.c.l.b16 %v428
      %v997 = vunpack.c.l.b16 %v429
      %v998 = vunpack.c.l.b16 %v430
      %v999 = vunpack.c.l.b16 %v431
      %v1000 = vunpack.c.l.b16 %v432
      %v1001 = vunpack.c.l.b16 %v433
      %v1002 = vunpack.c.l.b16 %v434
      %v1003 = vunpack.c.l.b16 %v435
      %v1004 = vunpack.c.l.b16 %v436
      %v1005 = vunpack.c.l.b16 %v437
      %v1006 = vunpack.c.l.b16 %v438
      %v1007 = vunpack.c.l.b16 %v439
      %v1008 = vunpack.c.l.b16 %v440
      %v1009 = vunpack.c.l.b16 %v441
      %v1010 = vunpack.c.l.b16 %v442
      %v1011 = vunpack.c.l.b16 %v443
      %v1012 = vunpack.c.l.b16 %v444
      %v1013 = vunpack.c.l.b16 %v445
      %v1014 = vunpack.c.l.b16 %v446
      %v1015 = vunpack.c.l.b16 %v447
      %v1016 = vunpack.c.l.b16 %v448
      %v1017 = vunpack.c.l.b16 %v449
      %v1018 = vunpack.c.l.b16 %v450
      %v1019 = vunpack.c.l.b16 %v451
      %v1020 = vunpack.c.l.b16 %v452
      %v1021 = vunpack.c.l.b16 %v453
      %v1022 = vunpack.c.l.b16 %v454
      %v1023 = vunpack.c.l.b16 %v455
      %v1024 = vunpack.c.l.b16 %v456
      %v1025 = vunpack.c.l.b16 %v457
      %v1026 = vunpack.c.l.b16 %v458
      %v1027 = vunpack.c.l.b16 %v459
      %v1028 = vunpack.c.l.b16 %v460
      %v1029 = vunpack.c.l.b16 %v461
      %v1030 = vunpack.c.l.b16 %v462
      %v1031 = vpack.c.b16 %v776, %v775
      %v1032 = vpack.c.b16 %v778, %v777
      %v1033 = vpack.c.b16 %v780, %v779
      %v1034 = vpack.c.b16 %v782, %v781
      %v1035 = vpack.c.b16 %v784, %v783
      %v1036 = vpack.c.b16 %v786, %v785
      %v1037 = vpack.c.b16 %v788, %v787
      %v1038 = vpack.c.b16 %v790, %v789
      %v1039 = vpack.c.b16 %v792, %v791
      %v1040 = vpack.c.b16 %v794, %v793
      %v1041 = vpack.c.b16 %v796, %v795
      %v1042 = vpack.c.b16 %v798, %v797
      %v1043 = vpack.c.b16 %v800, %v799
      %v1044 = vpack.c.b16 %v802, %v801
      %v1045 = vpack.c.b16 %v804, %v803
      %v1046 = vpack.c.b16 %v806, %v805
      %v1047 = vpack.c.b16 %v808, %v807
      %v1048 = vpack.c.b16 %v810, %v809
      %v1049 = vpack.c.b16 %v812, %v811
      %v1050 = vpack.c.b16 %v814, %v813
      %v1051 = vpack.c.b16 %v816, %v815
      %v1052 = vpack.c.b16 %v818, %v817
      %v1053 = vpack.c.b16 %v820, %v819
      %v1054 = vpack.c.b16 %v822, %v821
      %v1055 = vpack.c.b16 %v824, %v823
      %v1056 = vpack.c.b16 %v826, %v825
      %v1057 = vpack.c.b16 %v828, %v827
      %v1058 = vpack.c.b16 %v830, %v829
      %v1059 = vpack.c.b16 %v832, %v831
      %v1060 = vpack.c.b16 %v834, %v833
      %v1061 = vpack.c.b16 %v836, %v835
      %v1062 = vpack.c.b16 %v838, %v837
      %v1063 = vpack.c.b16 %v840, %v839
      %v1064 = vpack.c.b16 %v842, %v841
      %v1065 = vpack.c.b16 %v844, %v843
      %v1066 = vpack.c.b16 %v846, %v845
      %v1067 = vpack.c.b16 %v848, %v847
      %v1068 = vpack.c.b16 %v850, %v849
      %v1069 = vpack.c.b16 %v852, %v851
      %v1070 = vpack.c.b16 %v854, %v853
      %v1071 = vpack.c.b16 %v856, %v855
      %v1072 = vpack.c.b16 %v858, %v857
      %v1073 = vpack.c.b16 %v860, %v859
      %v1074 = vpack.c.b16 %v862, %v861
      %v1075 = vpack.c.b16 %v864, %v863
      %v1076 = vpack.c.b16 %v866, %v865
      %v1077 = vpack.c.b16 %v868, %v867
      %v1078 = vpack.c.b16 %v870, %v869
      %v1079 = vpack.c.b16 %v872, %v871
      %v1080 = vpack.c.b16 %v874, %v873
      %v1081 = vpack.c.b16 %v876, %v875
      %v1082 = vpack.c.b16 %v878, %v877
      %v1083 = vpack.c.b16 %v880, %v879
      %v1084 = vpack.c.b16 %v882, %v881
      %v1085 = vpack.c.b16 %v884, %v883
      %v1086 = vpack.c.b16 %v886, %v885
      %v1087 = vpack.c.b16 %v888, %v887
      %v1088 = vpack.c.b16 %v890, %v889
      %v1089 = vpack.c.b16 %v892, %v891
      %v1090 = vpack.c.b16 %v894, %v893
      %v1091 = vpack.c.b16 %v896, %v895
      %v1092 = vpack.c.b16 %v898, %v897
      %v1093 = vpack.c.b16 %v900, %v899
      %v1094 = vpack.c.b16 %v902, %v901
      %v1095 = vpack.c.b16 %v904, %v903
      %v1096 = vpack.c.b16 %v906, %v905
      %v1097 = vpack.c.b16 %v908, %v907
      %v1098 = vpack.c.b16 %v910, %v909
      %v1099 = vpack.c.b16 %v912, %v911
      %v1100 = vpack.c.b16 %v914, %v913
      %v1101 = vpack.c.b16 %v916, %v915
      %v1102 = vpack.c.b16 %v918, %v917
      %v1103 = vpack.c.b16 %v920, %v919
      %v1104 = vpack.c.b16 %v922, %v921
      %v1105 = vpack.c.b16 %v924, %v923
      %v1106 = vpack.c.b16 %v926, %v925
      %v1107 = vpack.c.b16 %v928, %v927
      %v1108 = vpack.c.b16 %v930, %v929
      %v1109 = vpack.c.b16 %v932, %v931
      %v1110 = vpack.c.b16 %v934, %v933
      %v1111 = vpack.c.b16 %v936, %v935
      %v1112 = vpack.c.b16 %v938, %v937
      %v1113 = vpack.c.b16 %v940, %v939
      %v1114 = vpack.c.b16 %v942, %v941
      %v1115 = vpack.c.b16 %v944, %v943
      %v1116 = vpack.c.b16 %v946, %v945
      %v1117 = vpack.c.b16 %v948, %v947
      %v1118 = vpack.c.b16 %v950, %v949
      %v1119 = vpack.c.b16 %v952, %v951
      %v1120 = vpack.c.b16 %v954, %v953
      %v1121 = vpack.c.b16 %v956, %v955
      %v1122 = vpack.c.b16 %v958, %v957
      %v1123 = vpack.c.b16 %v960, %v959
      %v1124 = vpack.c.b16 %v962, %v961
      %v1125 = vpack.c.b16 %v964, %v963
      %v1126 = vpack.c.b16 %v966, %v965
      %v1127 = vpack.c.b16 %v968, %v967
      %v1128 = vpack.c.b16 %v970, %v969
      %v1129 = vpack.c.b16 %v972, %v971
      %v1130 = vpack.c.b16 %v974, %v973
      %v1131 = vpack.c.b16 %v976, %v975
      %v1132 = vpack.c.b16 %v978, %v977
      %v1133 = vpack.c.b16 %v980, %v979
      %v1134 = vpack.c.b16 %v982, %v981
      %v1135 = vpack.c.b16 %v984, %v983
      %v1136 = vpack.c.b16 %v986, %v985
      %v1137 = vpack.c.b16 %v988, %v987
      %v1138 = vpack.c.b16 %v990, %v989
      %v1139 = vpack.c.b16 %v992, %v991
      %v1140 = vpack.c.b16 %v994, %v993
      %v1141 = vpack.c.b16 %v996, %v995
      %v1142 = vpack.c.b16 %v998, %v997
      %v1143 = vpack.c.b16 %v1000, %v999
      %v1144 = vpack.c.b16 %v1002, %v1001
      %v1145 = vpack.c.b16 %v1004, %v1003
      %v1146 = vpack.c.b16 %v1006, %v1005
      %v1147 = vpack.c.b16 %v1008, %v1007
      %v1148 = vpack.c.b16 %v1010, %v1009
      %v1149 = vpack.c.b16 %v1012, %v1011
      %v1150 = vpack.c.b16 %v1014, %v1013
      %v1151 = vpack.c.b16 %v1016, %v1015
      %v1152 = vpack.c.b16 %v1018, %v1017
      %v1153 = vpack.c.b16 %v1020, %v1019
      %v1154 = vpack.c.b16 %v1022, %v1021
      %v1155 = vpack.c.b16 %v1024, %v1023
      %v1156 = vpack.c.b16 %v1026, %v1025
      %v1157 = vpack.c.b16 %v1028, %v1027
      %v1158 = vpack.c.b16 %v1030, %v1029
      %1287 = vmatprep.subr.bf16.mxu0 0
      %1288 = vmatpush1.bf16.msra.mxu0 %v1031
      %1289 = vmatprep.subr.bf16.mxu0 0
      %1290 = vmatpush1.bf16.msra.mxu0 %v1032
      %1291 = vmatprep.subr.bf16.mxu0 0
      %1292 = vmatpush1.bf16.msra.mxu0 %v1033
      %1293 = vmatprep.subr.bf16.mxu0 0
      %1294 = vmatpush1.bf16.msra.mxu0 %v1034
      %1295 = vmatprep.subr.bf16.mxu0 0
      %1296 = vmatpush1.bf16.msra.mxu0 %v1035
      %1297 = vmatprep.subr.bf16.mxu0 0
      %1298 = vmatpush1.bf16.msra.mxu0 %v1036
      %1299 = vmatprep.subr.bf16.mxu0 0
      %1300 = vmatpush1.bf16.msra.mxu0 %v1037
      %1301 = vmatprep.subr.bf16.mxu0 0
      %1302 = vmatpush1.bf16.msra.mxu0 %v1038
      %1303 = vmatprep.subr.bf16.mxu0 0
      %1304 = vmatpush1.bf16.msra.mxu0 %v1039
      %1305 = vmatprep.subr.bf16.mxu0 0
      %1306 = vmatpush1.bf16.msra.mxu0 %v1040
      %1307 = vmatprep.subr.bf16.mxu0 0
      %1308 = vmatpush1.bf16.msra.mxu0 %v1041
      %1309 = vmatprep.subr.bf16.mxu0 0
      %1310 = vmatpush1.bf16.msra.mxu0 %v1042
      %1311 = vmatprep.subr.bf16.mxu0 0
      %1312 = vmatpush1.bf16.msra.mxu0 %v1043
      %1313 = vmatprep.subr.bf16.mxu0 0
      %1314 = vmatpush1.bf16.msra.mxu0 %v1044
      %1315 = vmatprep.subr.bf16.mxu0 0
      %1316 = vmatpush1.bf16.msra.mxu0 %v1045
      %1317 = vmatprep.subr.bf16.mxu0 0
      %1318 = vmatpush1.bf16.msra.mxu0 %v1046
      %1319 = vmatprep.mubr.bf16.mxu0 %v488
      %1320 = vmatmul.mubr.bf16.gmra.mrb[0].mxu0 %v487
      %v1321 = vpop.f32.mrb[0].mxu0
      %v1322 = vadd.f32 0.0, %v1321
      %v1323 = vpop.f32.mrb[0].mxu0
      %v1324 = vpop.f32.mrb[0].mxu0
      %v1325 = vpop.f32.mrb[0].mxu0
      %1326 = vdwg.mxu0
      %1327 = vmatprep.subr.bf16.mxu0 0
      %1328 = vmatpush1.bf16.msra.mxu0 %v1047
      %1329 = vmatprep.subr.bf16.mxu0 0
      %1330 = vmatpush1.bf16.msra.mxu0 %v1048
      %1331 = vmatprep.subr.bf16.mxu0 0
      %1332 = vmatpush1.bf16.msra.mxu0 %v1049
      %1333 = vmatprep.subr.bf16.mxu0 0
      %1334 = vmatpush1.bf16.msra.mxu0 %v1050
      %1335 = vmatprep.subr.bf16.mxu0 0
      %1336 = vmatpush1.bf16.msra.mxu0 %v1051
      %1337 = vmatprep.subr.bf16.mxu0 0
      %1338 = vmatpush1.bf16.msra.mxu0 %v1052
      %1339 = vmatprep.subr.bf16.mxu0 0
      %1340 = vmatpush1.bf16.msra.mxu0 %v1053
      %1341 = vmatprep.subr.bf16.mxu0 0
      %1342 = vmatpush1.bf16.msra.mxu0 %v1054
      %1343 = vmatprep.subr.bf16.mxu0 0
      %1344 = vmatpush1.bf16.msra.mxu0 %v1055
      %1345 = vmatprep.subr.bf16.mxu0 0
      %1346 = vmatpush1.bf16.msra.mxu0 %v1056
      %1347 = vmatprep.subr.bf16.mxu0 0
      %1348 = vmatpush1.bf16.msra.mxu0 %v1057
      %1349 = vmatprep.subr.bf16.mxu0 0
      %1350 = vmatpush1.bf16.msra.mxu0 %v1058
      %1351 = vmatprep.subr.bf16.mxu0 0
      %1352 = vmatpush1.bf16.msra.mxu0 %v1059
      %1353 = vmatprep.subr.bf16.mxu0 0
      %1354 = vmatpush1.bf16.msra.mxu0 %v1060
      %1355 = vmatprep.subr.bf16.mxu0 0
      %1356 = vmatpush1.bf16.msra.mxu0 %v1061
      %1357 = vmatprep.subr.bf16.mxu0 0
      %1358 = vmatpush1.bf16.msra.mxu0 %v1062
      %1359 = vmatprep.mubr.bf16.mxu0 %v490
      %1360 = vmatmul.mubr.bf16.gmra.mrb[0].mxu0 %v489
      %v1361 = vpop.f32.mrb[0].mxu0
      %v1362 = vadd.f32 %v1322, %v1361
      %v1363 = vpop.f32.mrb[0].mxu0
      %v1364 = vpop.f32.mrb[0].mxu0
      %v1365 = vpop.f32.mrb[0].mxu0
      %1366 = vdwg.mxu0
      %1367 = vmatprep.subr.bf16.mxu0 0
      %1368 = vmatpush1.bf16.msra.mxu0 %v1063
      %1369 = vmatprep.subr.bf16.mxu0 0
      %1370 = vmatpush1.bf16.msra.mxu0 %v1064
      %1371 = vmatprep.subr.bf16.mxu0 0
      %1372 = vmatpush1.bf16.msra.mxu0 %v1065
      %1373 = vmatprep.subr.bf16.mxu0 0
      %1374 = vmatpush1.bf16.msra.mxu0 %v1066
      %1375 = vmatprep.subr.bf16.mxu0 0
      %1376 = vmatpush1.bf16.msra.mxu0 %v1067
      %1377 = vmatprep.subr.bf16.mxu0 0
      %1378 = vmatpush1.bf16.msra.mxu0 %v1068
      %1379 = vmatprep.subr.bf16.mxu0 0
      %1380 = vmatpush1.bf16.msra.mxu0 %v1069
      %1381 = vmatprep.subr.bf16.mxu0 0
      %1382 = vmatpush1.bf16.msra.mxu0 %v1070
      %1383 = vmatprep.subr.bf16.mxu0 0
      %1384 = vmatpush1.bf16.msra.mxu0 %v1071
      %1385 = vmatprep.subr.bf16.mxu0 0
      %1386 = vmatpush1.bf16.msra.mxu0 %v1072
      %1387 = vmatprep.subr.bf16.mxu0 0
      %1388 = vmatpush1.bf16.msra.mxu0 %v1073
      %1389 = vmatprep.subr.bf16.mxu0 0
      %1390 = vmatpush1.bf16.msra.mxu0 %v1074
      %1391 = vmatprep.subr.bf16.mxu0 0
      %1392 = vmatpush1.bf16.msra.mxu0 %v1075
      %1393 = vmatprep.subr.bf16.mxu0 0
      %1394 = vmatpush1.bf16.msra.mxu0 %v1076
      %1395 = vmatprep.subr.bf16.mxu0 0
      %1396 = vmatpush1.bf16.msra.mxu0 %v1077
      %1397 = vmatprep.subr.bf16.mxu0 0
      %1398 = vmatpush1.bf16.msra.mxu0 %v1078
      %1399 = vmatprep.mubr.bf16.mxu0 %v492
      %1400 = vmatmul.mubr.bf16.gmra.mrb[0].mxu0 %v491
      %v1401 = vpop.f32.mrb[0].mxu0
      %v1402 = vadd.f32 %v1362, %v1401
      %v1403 = vpop.f32.mrb[0].mxu0
      %v1404 = vpop.f32.mrb[0].mxu0
      %v1405 = vpop.f32.mrb[0].mxu0
      %1406 = vdwg.mxu0
      %1407 = vmatprep.subr.bf16.mxu0 0
      %1408 = vmatpush1.bf16.msra.mxu0 %v1079
      %1409 = vmatprep.subr.bf16.mxu0 0
      %1410 = vmatpush1.bf16.msra.mxu0 %v1080
      %1411 = vmatprep.subr.bf16.mxu0 0
      %1412 = vmatpush1.bf16.msra.mxu0 %v1081
      %1413 = vmatprep.subr.bf16.mxu0 0
      %1414 = vmatpush1.bf16.msra.mxu0 %v1082
      %1415 = vmatprep.subr.bf16.mxu0 0
      %1416 = vmatpush1.bf16.msra.mxu0 %v1083
      %1417 = vmatprep.subr.bf16.mxu0 0
      %1418 = vmatpush1.bf16.msra.mxu0 %v1084
      %1419 = vmatprep.subr.bf16.mxu0 0
      %1420 = vmatpush1.bf16.msra.mxu0 %v1085
      %1421 = vmatprep.subr.bf16.mxu0 0
      %1422 = vmatpush1.bf16.msra.mxu0 %v1086
      %1423 = vmatprep.subr.bf16.mxu0 0
      %1424 = vmatpush1.bf16.msra.mxu0 %v1087
      %1425 = vmatprep.subr.bf16.mxu0 0
      %1426 = vmatpush1.bf16.msra.mxu0 %v1088
      %1427 = vmatprep.subr.bf16.mxu0 0
      %1428 = vmatpush1.bf16.msra.mxu0 %v1089
      %1429 = vmatprep.subr.bf16.mxu0 0
      %1430 = vmatpush1.bf16.msra.mxu0 %v1090
      %1431 = vmatprep.subr.bf16.mxu0 0
      %1432 = vmatpush1.bf16.msra.mxu0 %v1091
      %1433 = vmatprep.subr.bf16.mxu0 0
      %1434 = vmatpush1.bf16.msra.mxu0 %v1092
      %1435 = vmatprep.subr.bf16.mxu0 0
      %1436 = vmatpush1.bf16.msra.mxu0 %v1093
      %1437 = vmatprep.subr.bf16.mxu0 0
      %1438 = vmatpush1.bf16.msra.mxu0 %v1094
      %1439 = vmatprep.mubr.bf16.mxu0 %v494
      %1440 = vmatmul.mubr.bf16.gmra.mrb[0].mxu0 %v493
      %v1441 = vpop.f32.mrb[0].mxu0
      %v1442 = vadd.f32 %v1402, %v1441
      %v1443 = vpop.f32.mrb[0].mxu0
      %v1444 = vpop.f32.mrb[0].mxu0
      %v1445 = vpop.f32.mrb[0].mxu0
      %1446 = vdwg.mxu0
      %1447 = vmatprep.subr.bf16.mxu0 0
      %1448 = vmatpush1.bf16.msra.mxu0 %v1095
      %1449 = vmatprep.subr.bf16.mxu0 0
      %1450 = vmatpush1.bf16.msra.mxu0 %v1096
      %1451 = vmatprep.subr.bf16.mxu0 0
      %1452 = vmatpush1.bf16.msra.mxu0 %v1097
      %1453 = vmatprep.subr.bf16.mxu0 0
      %1454 = vmatpush1.bf16.msra.mxu0 %v1098
      %1455 = vmatprep.subr.bf16.mxu0 0
      %1456 = vmatpush1.bf16.msra.mxu0 %v1099
      %1457 = vmatprep.subr.bf16.mxu0 0
      %1458 = vmatpush1.bf16.msra.mxu0 %v1100
      %1459 = vmatprep.subr.bf16.mxu0 0
      %1460 = vmatpush1.bf16.msra.mxu0 %v1101
      %1461 = vmatprep.subr.bf16.mxu0 0
      %1462 = vmatpush1.bf16.msra.mxu0 %v1102
      %1463 = vmatprep.subr.bf16.mxu0 0
      %1464 = vmatpush1.bf16.msra.mxu0 %v1103
      %1465 = vmatprep.subr.bf16.mxu0 0
      %1466 = vmatpush1.bf16.msra.mxu0 %v1104
      %1467 = vmatprep.subr.bf16.mxu0 0
      %1468 = vmatpush1.bf16.msra.mxu0 %v1105
      %1469 = vmatprep.subr.bf16.mxu0 0
      %1470 = vmatpush1.bf16.msra.mxu0 %v1106
      %1471 = vmatprep.subr.bf16.mxu0 0
      %1472 = vmatpush1.bf16.msra.mxu0 %v1107
      %1473 = vmatprep.subr.bf16.mxu0 0
      %1474 = vmatpush1.bf16.msra.mxu0 %v1108
      %1475 = vmatprep.subr.bf16.mxu0 0
      %1476 = vmatpush1.bf16.msra.mxu0 %v1109
      %1477 = vmatprep.subr.bf16.mxu0 0
      %1478 = vmatpush1.bf16.msra.mxu0 %v1110
      %1479 = vmatprep.mubr.bf16.mxu0 %v496
      %1480 = vmatmul.mubr.bf16.gmra.mrb[0].mxu0 %v495
      %v1481 = vpop.f32.mrb[0].mxu0
      %v1482 = vadd.f32 %v1442, %v1481
      %v1483 = vpop.f32.mrb[0].mxu0
      %v1484 = vpop.f32.mrb[0].mxu0
      %v1485 = vpop.f32.mrb[0].mxu0
      %1486 = vdwg.mxu0
      %1487 = vmatprep.subr.bf16.mxu0 0
      %1488 = vmatpush1.bf16.msra.mxu0 %v1111
      %1489 = vmatprep.subr.bf16.mxu0 0
      %1490 = vmatpush1.bf16.msra.mxu0 %v1112
      %1491 = vmatprep.subr.bf16.mxu0 0
      %1492 = vmatpush1.bf16.msra.mxu0 %v1113
      %1493 = vmatprep.subr.bf16.mxu0 0
      %1494 = vmatpush1.bf16.msra.mxu0 %v1114
      %1495 = vmatprep.subr.bf16.mxu0 0
      %1496 = vmatpush1.bf16.msra.mxu0 %v1115
      %1497 = vmatprep.subr.bf16.mxu0 0
      %1498 = vmatpush1.bf16.msra.mxu0 %v1116
      %1499 = vmatprep.subr.bf16.mxu0 0
      %1500 = vmatpush1.bf16.msra.mxu0 %v1117
      %1501 = vmatprep.subr.bf16.mxu0 0
      %1502 = vmatpush1.bf16.msra.mxu0 %v1118
      %1503 = vmatprep.subr.bf16.mxu0 0
      %1504 = vmatpush1.bf16.msra.mxu0 %v1119
      %1505 = vmatprep.subr.bf16.mxu0 0
      %1506 = vmatpush1.bf16.msra.mxu0 %v1120
      %1507 = vmatprep.subr.bf16.mxu0 0
      %1508 = vmatpush1.bf16.msra.mxu0 %v1121
      %1509 = vmatprep.subr.bf16.mxu0 0
      %1510 = vmatpush1.bf16.msra.mxu0 %v1122
      %1511 = vmatprep.subr.bf16.mxu0 0
      %1512 = vmatpush1.bf16.msra.mxu0 %v1123
      %1513 = vmatprep.subr.bf16.mxu0 0
      %1514 = vmatpush1.bf16.msra.mxu0 %v1124
      %1515 = vmatprep.subr.bf16.mxu0 0
      %1516 = vmatpush1.bf16.msra.mxu0 %v1125
      %1517 = vmatprep.subr.bf16.mxu0 0
      %1518 = vmatpush1.bf16.msra.mxu0 %v1126
      %1519 = vmatprep.mubr.bf16.mxu0 %v498
      %1520 = vmatmul.mubr.bf16.gmra.mrb[0].mxu0 %v497
      %v1521 = vpop.f32.mrb[0].mxu0
      %v1522 = vadd.f32 %v1482, %v1521
      %v1523 = vpop.f32.mrb[0].mxu0
      %v1524 = vpop.f32.mrb[0].mxu0
      %v1525 = vpop.f32.mrb[0].mxu0
      %1526 = vdwg.mxu0
      %1527 = vmatprep.subr.bf16.mxu0 0
      %1528 = vmatpush1.bf16.msra.mxu0 %v1127
      %1529 = vmatprep.subr.bf16.mxu0 0
      %1530 = vmatpush1.bf16.msra.mxu0 %v1128
      %1531 = vmatprep.subr.bf16.mxu0 0
      %1532 = vmatpush1.bf16.msra.mxu0 %v1129
      %1533 = vmatprep.subr.bf16.mxu0 0
      %1534 = vmatpush1.bf16.msra.mxu0 %v1130
      %1535 = vmatprep.subr.bf16.mxu0 0
      %1536 = vmatpush1.bf16.msra.mxu0 %v1131
      %1537 = vmatprep.subr.bf16.mxu0 0
      %1538 = vmatpush1.bf16.msra.mxu0 %v1132
      %1539 = vmatprep.subr.bf16.mxu0 0
      %1540 = vmatpush1.bf16.msra.mxu0 %v1133
      %1541 = vmatprep.subr.bf16.mxu0 0
      %1542 = vmatpush1.bf16.msra.mxu0 %v1134
      %1543 = vmatprep.subr.bf16.mxu0 0
      %1544 = vmatpush1.bf16.msra.mxu0 %v1135
      %1545 = vmatprep.subr.bf16.mxu0 0
      %1546 = vmatpush1.bf16.msra.mxu0 %v1136
      %1547 = vmatprep.subr.bf16.mxu0 0
      %1548 = vmatpush1.bf16.msra.mxu0 %v1137
      %1549 = vmatprep.subr.bf16.mxu0 0
      %1550 = vmatpush1.bf16.msra.mxu0 %v1138
      %1551 = vmatprep.subr.bf16.mxu0 0
      %1552 = vmatpush1.bf16.msra.mxu0 %v1139
      %1553 = vmatprep.subr.bf16.mxu0 0
      %1554 = vmatpush1.bf16.msra.mxu0 %v1140
      %1555 = vmatprep.subr.bf16.mxu0 0
      %1556 = vmatpush1.bf16.msra.mxu0 %v1141
      %1557 = vmatprep.subr.bf16.mxu0 0
      %1558 = vmatpush1.bf16.msra.mxu0 %v1142
      %1559 = vmatprep.mubr.bf16.mxu0 %v500
      %1560 = vmatmul.mubr.bf16.gmra.mrb[0].mxu0 %v499
      %v1561 = vpop.f32.mrb[0].mxu0
      %v1562 = vadd.f32 %v1522, %v1561
      %v1563 = vpop.f32.mrb[0].mxu0
      %v1564 = vpop.f32.mrb[0].mxu0
      %v1565 = vpop.f32.mrb[0].mxu0
      %1566 = vdwg.mxu0
      %1567 = vmatprep.subr.bf16.mxu0 0
      %1568 = vmatpush1.bf16.msra.mxu0 %v1143
      %1569 = vmatprep.subr.bf16.mxu0 0
      %1570 = vmatpush1.bf16.msra.mxu0 %v1144
      %1571 = vmatprep.subr.bf16.mxu0 0
      %1572 = vmatpush1.bf16.msra.mxu0 %v1145
      %1573 = vmatprep.subr.bf16.mxu0 0
      %1574 = vmatpush1.bf16.msra.mxu0 %v1146
      %1575 = vmatprep.subr.bf16.mxu0 0
      %1576 = vmatpush1.bf16.msra.mxu0 %v1147
      %1577 = vmatprep.subr.bf16.mxu0 0
      %1578 = vmatpush1.bf16.msra.mxu0 %v1148
      %1579 = vmatprep.subr.bf16.mxu0 0
      %1580 = vmatpush1.bf16.msra.mxu0 %v1149
      %1581 = vmatprep.subr.bf16.mxu0 0
      %1582 = vmatpush1.bf16.msra.mxu0 %v1150
      %1583 = vmatprep.subr.bf16.mxu0 0
      %1584 = vmatpush1.bf16.msra.mxu0 %v1151
      %1585 = vmatprep.subr.bf16.mxu0 0
      %1586 = vmatpush1.bf16.msra.mxu0 %v1152
      %1587 = vmatprep.subr.bf16.mxu0 0
      %1588 = vmatpush1.bf16.msra.mxu0 %v1153
      %1589 = vmatprep.subr.bf16.mxu0 0
      %1590 = vmatpush1.bf16.msra.mxu0 %v1154
      %1591 = vmatprep.subr.bf16.mxu0 0
      %1592 = vmatpush1.bf16.msra.mxu0 %v1155
      %1593 = vmatprep.subr.bf16.mxu0 0
      %1594 = vmatpush1.bf16.msra.mxu0 %v1156
      %1595 = vmatprep.subr.bf16.mxu0 0
      %1596 = vmatpush1.bf16.msra.mxu0 %v1157
      %1597 = vmatprep.subr.bf16.mxu0 0
      %1598 = vmatpush1.bf16.msra.mxu0 %v1158
      %1599 = vmatprep.mubr.bf16.mxu0 %v502
      %1600 = vmatmul.mubr.bf16.gmra.mrb[0].mxu0 %v501
      %v1601 = vpop.f32.mrb[0].mxu0
      %v1602 = vadd.f32 %v1562, %v1601
      %v1603 = vpop.f32.mrb[0].mxu0
      %v1604 = vpop.f32.mrb[0].mxu0
      %v1605 = vpop.f32.mrb[0].mxu0
      %1606 = vdwg.mxu0
      %v1607 = vadd.f32 %v198, %v1602
      %1608 = vst [vmem:[#allocation2] sm:$0xff] %v1607
      %p1609 = scmp.eq.s32.totalorder %s18, 3
      // Predicated region
      $region33: #{_lambda_.9} parent=27 // pred_check
        %p1610 = pneg %p1609
      $region34: #{_lambda_.9} parent=27 // pred_check_branch
        %1612 = sbr.rel (%p1610) target = $region36
      $region35: #{_lambda_.9} parent=27 // pred_region
        %v1613 = vld [vmem:[#allocation2] sm:$0xff]
        %1614 = vst [vmem:[%s191] sm:$0xff] %v1613
      $region36: #{_lambda_.9} parent=27 // pred_fallthru
        _
      %p1615 = scmp.lt.s32.totalorder %s17, 0
      %s1616 = scalar_select %p1615, %s17, 0
      %s1617 = smul.addr %s1616, 8
      %s1618 = scalar_lea.vmem %s2, %s1617
      // Predicated region
      $region37: #{_lambda_.9} parent=27 // pred_check
        %p1619 = pneg %p97
      $region38: #{_lambda_.9} parent=27 // pred_check_branch
        %1621 = sbr.rel (%p1619) target = $region40
      $region39: #{_lambda_.9} parent=27 // pred_region
        _
      $region40: #{_lambda_.9} parent=27 // pred_fallthru
        _
      // Predicated region
      $region41: #{_lambda_.9} parent=27 // pred_check
        %p1622 = pneg %p97
      $region42: #{_lambda_.9} parent=27 // pred_check_branch
        %1624 = sbr.rel (%p1622) target = $region44
      $region43: #{_lambda_.9} parent=27 // pred_region
        %p1625 = scmp.lt.s32.totalorder %s17, 0
        %s1626 = scalar_select %p1625, %s17, 0
        %s1627 = smul.addr %s1626, 8
        %s1628 = scalar_lea.vmem %s2, %s1627
      $region44: #{_lambda_.9} parent=27 // pred_fallthru
        _
    $region28: #{_lambda_.9} parent=5 // pred_fallthru
      _
    %p1629 = scmp.le.s32.totalorder 2, %s8
    // Predicated region
    $region45: #{_lambda_.9} parent=5 // pred_check
      %p1630 = pneg %p1629
    $region46: #{_lambda_.9} parent=5 // pred_check_branch
      %1632 = sbr.rel (%p1630) target = $region48
    $region47: #{_lambda_.9} parent=5 // pred_region
      %s1633 = ssub.s32 %s8, 2
    $region48: #{_lambda_.9} parent=5 // pred_fallthru
      _
  $region6: #{_lambda_.9} parent=0 // loop_footer
    %s12 = sadd.s32 1, %s8
  $region7: #{_lambda_.9} parent=0 // loop_footer_branch
    %7 = sbr.rel target = $region3
  $region8: #{_lambda_.9} parent=0 // loop_exit
    _

</llo_original>
